<compile_context>
chip_gen: v6e
topology: v6e:2x2x1
jax: 0.10.0
libtpu: 0.0.40
codegen_flags: <defaults>
</compile_context>

<pallas_src>
import functools

import jax
import jax.numpy as jnp
from jax import lax
from jax.experimental import pallas as pl
from jax.experimental.pallas import tpu as pltpu


def _unet_up_kernel(x1_ref, u2_ref, w1a_ref, w1b_ref, b1_ref, w2_ref, b2_ref,
                    o_ref, h1_ref, *, H, W):
    # x1_ref : (1, H*W, C1)  inputs1, NHWC flattened over (H, W)
    # u2_ref : (1, H*W, C2)  nearest-2x-upsampled inputs2, NHWC flattened
    # w1a_ref: (3, 3, C1, Cout)  conv1 weights acting on the inputs1 channels
    # w1b_ref: (3, 3, C2, Cout)  conv1 weights acting on the upsampled channels
    # b1_ref : (1, Cout)
    # w2_ref : (3, 3, Cout, Cout),  b2_ref: (1, Cout)
    # o_ref  : (1, H*W, Cout)  final zero-padded output, flattened over (H, W)
    # h1_ref : (M1, Cout) VMEM scratch, conv1 activations in flat row-stride-W
    #          form (columns [W-2, W) of each row are unused garbage)
    Cout = o_ref.shape[2]
    Wo1 = W - 2
    Wo2 = W - 4
    M1 = (H - 2) * W - 2            # flat extent of conv1 output (row stride W)
    M2 = (H - 4) * W - 4            # flat extent of conv2 output (row stride W)
    PAD = 2 * W + 2                 # flat offset of output pixel (2, 2)
    f32 = jnp.float32

    # Hoisted weight / bias loads (each tap tile is read exactly once).
    w1a = w1a_ref[...]              # (3, 3, C1, Cout)
    w1b = w1b_ref[...]              # (3, 3, C2, Cout)
    w2 = w2_ref[...]                # (3, 3, Cout, Cout)
    b1 = b1_ref[...].astype(f32)    # (1, Cout)
    b2 = b2_ref[...].astype(f32)    # (1, Cout)

    # ---- conv1 + bias + ReLU: 9 taps x 2 inputs, each one big 2-D matmul ----
    acc1 = None
    for dy in range(3):
        for dx in range(3):
            off = dy * W + dx
            d = jnp.dot(x1_ref[0, off:off + M1, :], w1a[dy, dx],
                        preferred_element_type=f32)
            d = d + jnp.dot(u2_ref[0, off:off + M1, :], w1b[dy, dx],
                            preferred_element_type=f32)
            acc1 = d if acc1 is None else acc1 + d
    h1_ref[...] = jnp.maximum(acc1 + b1, 0.0)            # (M1, Cout)

    # ---- conv2 + bias + ReLU on the flat conv1 activations ----
    acc2 = None
    for dy in range(3):
        for dx in range(3):
            off = dy * W + dx
            d = jnp.dot(h1_ref[off:off + M2, :], w2[dy, dx],
                        preferred_element_type=f32)
            acc2 = d if acc2 is None else acc2 + d
    y2 = jnp.maximum(acc2 + b2, 0.0)                     # (M2, Cout)

    # Mask the row-wrap columns; they land exactly on the left/right zero
    # padding of F.pad(..., [2, 2, 2, 2]).
    col = lax.broadcasted_iota(jnp.int32, (M2, 1), 0) % W
    y2 = jnp.where(col < Wo2, y2, 0.0).astype(o_ref.dtype)

    # Zero only the top/bottom borders; one big store for the padded interior.
    zeros_edge = jnp.zeros((PAD, Cout), o_ref.dtype)
    o_ref[0, 0:PAD, :] = zeros_edge
    o_ref[0, PAD:PAD + M2, :] = y2
    o_ref[0, PAD + M2:H * W, :] = zeros_edge


def unet_up_forward_nhwc(x1_nhwc, x2_nhwc, params):
    """x1_nhwc: (N, H, W, C1); x2_nhwc: (N, H//2, W//2, C2) -> (N, H, W, Cout)."""
    w1, b1, w2, b2 = params                 # w1: (3, 3, C1+C2, Cout) HWIO
    N, H, W, C1 = x1_nhwc.shape
    C2 = x2_nhwc.shape[3]
    Cout = w1.shape[3]
    assert x2_nhwc.shape[1] * 2 == H and x2_nhwc.shape[2] * 2 == W
    assert H >= 6 and W >= 6 and w1.shape[2] == C1 + C2

    # Nearest 2x upsample of inputs2: one fused XLA broadcast pass.  The
    # channel concat with inputs1 is fused into the kernel via the w1 split.
    u2 = jnp.repeat(jnp.repeat(x2_nhwc, 2, axis=1), 2, axis=2)   # (N, H, W, C2)

    # Flatten (H, W) so each conv tap is a single contiguous matmul slab.
    x1f = x1_nhwc.reshape(N, H * W, C1)
    u2f = u2.reshape(N, H * W, C2)
    w1a, w1b = w1[:, :, :C1, :], w1[:, :, C1:, :]
    M1 = (H - 2) * W - 2

    kernel = functools.partial(_unet_up_kernel, H=H, W=W)
    out_flat = pl.pallas_call(
        kernel,
        out_shape=jax.ShapeDtypeStruct((N, H * W, Cout), x1_nhwc.dtype),
        grid_spec=pltpu.PrefetchScalarGridSpec(
            num_scalar_prefetch=0,
            grid=(N,),
            in_specs=[
                pl.BlockSpec((1, H * W, C1), lambda n: (n, 0, 0)),
                pl.BlockSpec((1, H * W, C2), lambda n: (n, 0, 0)),
                pl.BlockSpec((3, 3, C1, Cout), lambda n: (0, 0, 0, 0)),
                pl.BlockSpec((3, 3, C2, Cout), lambda n: (0, 0, 0, 0)),
                pl.BlockSpec((1, Cout), lambda n: (0, 0)),
                pl.BlockSpec((3, 3, Cout, Cout), lambda n: (0, 0, 0, 0)),
                pl.BlockSpec((1, Cout), lambda n: (0, 0)),
            ],
            out_specs=pl.BlockSpec((1, H * W, Cout), lambda n: (n, 0, 0)),
            scratch_shapes=[pltpu.VMEM((M1, Cout), jnp.float32)],
        ),
        compiler_params=pltpu.CompilerParams(
            dimension_semantics=("parallel",)),
    )(x1f, u2f, w1a, w1b, b1, w2, b2)
    return out_flat.reshape(N, H, W, Cout)


def unet_up_forward(inputs1, inputs2, params):
    """NCHW wrapper matching the PyTorch module exactly.

    inputs1: (N, C1, H, W); inputs2: (N, C2, H//2, W//2).  The NCHW<->NHWC
    transposes are boundary-layout glue for PyTorch compatibility; a real JAX
    NHWC pipeline should call unet_up_forward_nhwc directly.
    """
    x1 = jnp.transpose(inputs1, (0, 2, 3, 1))
    x2 = jnp.transpose(inputs2, (0, 2, 3, 1))
    out = unet_up_forward_nhwc(x1, x2, params)
    return jnp.transpose(out, (0, 3, 1, 2))


def _reference(inputs1, inputs2, params):
    """Plain-JAX reference of the same forward pass (for verification)."""
    w1, b1, w2, b2 = params
    up2 = jnp.repeat(jnp.repeat(inputs2, 2, axis=2), 2, axis=3)
    x = jnp.concatenate([inputs1, up2], axis=1)
    dn = jax.lax.conv_dimension_numbers(x.shape, w1.shape,
                                        ('NCHW', 'HWIO', 'NCHW'))
    y = jax.lax.conv_general_dilated(x, w1, (1, 1), 'VALID',
                                     dimension_numbers=dn)
    y = jnp.maximum(y + b1.reshape(1, -1, 1, 1), 0.0)
    dn2 = jax.lax.conv_dimension_numbers(y.shape, w2.shape,
                                         ('NCHW', 'HWIO', 'NCHW'))
    y = jax.lax.conv_general_dilated(y, w2, (1, 1), 'VALID',
                                     dimension_numbers=dn2)
    y = jnp.maximum(y + b2.reshape(1, -1, 1, 1), 0.0)
    return jnp.pad(y, ((0, 0), (0, 0), (2, 2), (2, 2)))


def _init_params(key, in_size, out_size):
    """Deterministic Conv2d-style (uniform +-1/sqrt(fan_in)) init; HWIO layout."""
    k1, k2, k3, k4 = jax.random.split(key, 4)
    bound1 = 1.0 / jnp.sqrt(in_size * 9.0)
    bound2 = 1.0 / jnp.sqrt(out_size * 9.0)
    w1 = jax.random.uniform(k1, (3, 3, in_size, out_size), jnp.float32,
                            -bound1, bound1)
    b1 = jax.random.uniform(k2, (1, out_size), jnp.float32, -bound1, bound1)
    w2 = jax.random.uniform(k3, (3, 3, out_size, out_size), jnp.float32,
                            -bound2, bound2)
    b2 = jax.random.uniform(k4, (1, out_size), jnp.float32, -bound2, bound2)
    return w1, b1, w2, b2


if __name__ == "__main__":
    key = jax.random.PRNGKey(0)
    kx1, kx2, kp = jax.random.split(key, 3)

    N, C1, C2, H, W = 2, 8, 4, 16, 16       # in_size = C1 + C2 = 12
    in_size, out_size = C1 + C2, 8

    inputs1 = jax.random.normal(kx1, (N, C1, H, W), jnp.float32)
    inputs2 = jax.random.normal(kx2, (N, C2, H // 2, W // 2), jnp.float32)
    params = _init_params(kp, in_size, out_size)

    out = unet_up_forward(inputs1, inputs2, params)
    out = jax.block_until_ready(out)

    ref = jax.block_until_ready(_reference(inputs1, inputs2, params))
    assert out.shape == (N, out_size, H, W), out.shape
    assert jnp.allclose(out, ref, rtol=1e-4, atol=1e-4), \
        float(jnp.max(jnp.abs(out - ref)))

    print("KERNEL_OK")
</pallas_src>

<mosaic_0001>
module attributes {stable_mosaic.version = 11 : i64} {
  func.func @_unet_up_kernel(%arg0: i32, %arg1: memref<1x256x8xf32, #tpu.memory_space<vmem>>, %arg2: memref<1x256x4xf32, #tpu.memory_space<vmem>>, %arg3: memref<3x3x8x8xf32, #tpu.memory_space<vmem>>, %arg4: memref<3x3x4x8xf32, #tpu.memory_space<vmem>>, %arg5: memref<1x8xf32, #tpu.memory_space<vmem>>, %arg6: memref<3x3x8x8xf32, #tpu.memory_space<vmem>>, %arg7: memref<1x8xf32, #tpu.memory_space<vmem>>, %arg8: memref<1x256x8xf32, #tpu.memory_space<vmem>>, %arg9: memref<222x8xf32, #tpu.memory_space<vmem>>) attributes {dimension_semantics = [#tpu.dimension_semantics<parallel>], iteration_bounds = array<i64: 2>, scalar_prefetch = 0 : i64, scratch_operands = 1 : i64, tpu.core_type = #tpu.core_type<tc>, window_params = [{transform_indices = @transform_0, window_bounds = array<i64: 1, 256, 8>}, {transform_indices = @transform_1, window_bounds = array<i64: 1, 256, 4>}, {pipeline_mode = #tpu.pipeline_mode<synchronous>, transform_indices = @transform_2, window_bounds = array<i64: 3, 3, 8, 8>}, {pipeline_mode = #tpu.pipeline_mode<synchronous>, transform_indices = @transform_3, window_bounds = array<i64: 3, 3, 4, 8>}, {pipeline_mode = #tpu.pipeline_mode<synchronous>, transform_indices = @transform_4, window_bounds = array<i64: 1, 8>}, {pipeline_mode = #tpu.pipeline_mode<synchronous>, transform_indices = @transform_5, window_bounds = array<i64: 3, 3, 8, 8>}, {pipeline_mode = #tpu.pipeline_mode<synchronous>, transform_indices = @transform_6, window_bounds = array<i64: 1, 8>}, {transform_indices = @transform_7, window_bounds = array<i64: 1, 256, 8>}]} {
    %c0 = arith.constant 0 : index
    %c0_0 = arith.constant 0 : index
    %c0_1 = arith.constant 0 : index
    %c0_2 = arith.constant 0 : index
    %0 = vector.load %arg3[%c0, %c0_0, %c0_1, %c0_2] : memref<3x3x8x8xf32, #tpu.memory_space<vmem>>, vector<3x3x8x8xf32>
    %c0_3 = arith.constant 0 : index
    %c0_4 = arith.constant 0 : index
    %c0_5 = arith.constant 0 : index
    %c0_6 = arith.constant 0 : index
    %1 = vector.load %arg4[%c0_3, %c0_4, %c0_5, %c0_6] : memref<3x3x4x8xf32, #tpu.memory_space<vmem>>, vector<3x3x4x8xf32>
    %c0_7 = arith.constant 0 : index
    %c0_8 = arith.constant 0 : index
    %c0_9 = arith.constant 0 : index
    %c0_10 = arith.constant 0 : index
    %2 = vector.load %arg6[%c0_7, %c0_8, %c0_9, %c0_10] : memref<3x3x8x8xf32, #tpu.memory_space<vmem>>, vector<3x3x8x8xf32>
    %c0_11 = arith.constant 0 : index
    %c0_12 = arith.constant 0 : index
    %3 = vector.load %arg5[%c0_11, %c0_12] : memref<1x8xf32, #tpu.memory_space<vmem>>, vector<1x8xf32>
    %c0_13 = arith.constant 0 : index
    %c0_14 = arith.constant 0 : index
    %4 = vector.load %arg7[%c0_13, %c0_14] : memref<1x8xf32, #tpu.memory_space<vmem>>, vector<1x8xf32>
    %c0_15 = arith.constant 0 : index
    %c0_16 = arith.constant 0 : index
    %c0_17 = arith.constant 0 : index
    %5 = vector.load %arg1[%c0_15, %c0_16, %c0_17] : memref<1x256x8xf32, #tpu.memory_space<vmem>>, vector<1x222x8xf32>
    %6 = vector.shape_cast %5 : vector<1x222x8xf32> to vector<222x8xf32>
    %7 = vector.extract_strided_slice %0 {offsets = [0, 0, 0, 0], sizes = [1, 1, 8, 8], strides = [1, 1, 1, 1]} : vector<3x3x8x8xf32> to vector<1x1x8x8xf32>
    %8 = vector.shape_cast %7 : vector<1x1x8x8xf32> to vector<8x8xf32>
    %cst = arith.constant dense<0.000000e+00> : vector<222x8xf32>
    %9 = tpu.matmul %6, %8, %cst {dimension_numbers = #tpu.dot_dimension_numbers<[1], [0], [0], [1], [0, 0, 1, 1], [], []>} : vector<222x8xf32>, vector<8x8xf32>, vector<222x8xf32> -> vector<222x8xf32>
    %c0_18 = arith.constant 0 : index
    %c0_19 = arith.constant 0 : index
    %c0_20 = arith.constant 0 : index
    %10 = vector.load %arg2[%c0_18, %c0_19, %c0_20] : memref<1x256x4xf32, #tpu.memory_space<vmem>>, vector<1x222x4xf32>
    %11 = vector.shape_cast %10 : vector<1x222x4xf32> to vector<222x4xf32>
    %12 = vector.extract_strided_slice %1 {offsets = [0, 0, 0, 0], sizes = [1, 1, 4, 8], strides = [1, 1, 1, 1]} : vector<3x3x4x8xf32> to vector<1x1x4x8xf32>
    %13 = vector.shape_cast %12 : vector<1x1x4x8xf32> to vector<4x8xf32>
    %cst_21 = arith.constant dense<0.000000e+00> : vector<222x8xf32>
    %14 = tpu.matmul %11, %13, %cst_21 {dimension_numbers = #tpu.dot_dimension_numbers<[1], [0], [0], [1], [0, 0, 1, 1], [], []>} : vector<222x4xf32>, vector<4x8xf32>, vector<222x8xf32> -> vector<222x8xf32>
    %15 = arith.addf %9, %14 : vector<222x8xf32>
    %c0_22 = arith.constant 0 : index
    %c1 = arith.constant 1 : index
    %c0_23 = arith.constant 0 : index
    %16 = vector.load %arg1[%c0_22, %c1, %c0_23] : memref<1x256x8xf32, #tpu.memory_space<vmem>>, vector<1x222x8xf32>
    %17 = vector.shape_cast %16 : vector<1x222x8xf32> to vector<222x8xf32>
    %18 = vector.extract_strided_slice %0 {offsets = [0, 1, 0, 0], sizes = [1, 1, 8, 8], strides = [1, 1, 1, 1]} : vector<3x3x8x8xf32> to vector<1x1x8x8xf32>
    %19 = vector.shape_cast %18 : vector<1x1x8x8xf32> to vector<8x8xf32>
    %cst_24 = arith.constant dense<0.000000e+00> : vector<222x8xf32>
    %20 = tpu.matmul %17, %19, %cst_24 {dimension_numbers = #tpu.dot_dimension_numbers<[1], [0], [0], [1], [0, 0, 1, 1], [], []>} : vector<222x8xf32>, vector<8x8xf32>, vector<222x8xf32> -> vector<222x8xf32>
    %c0_25 = arith.constant 0 : index
    %c1_26 = arith.constant 1 : index
    %c0_27 = arith.constant 0 : index
    %21 = vector.load %arg2[%c0_25, %c1_26, %c0_27] : memref<1x256x4xf32, #tpu.memory_space<vmem>>, vector<1x222x4xf32>
    %22 = vector.shape_cast %21 : vector<1x222x4xf32> to vector<222x4xf32>
    %23 = vector.extract_strided_slice %1 {offsets = [0, 1, 0, 0], sizes = [1, 1, 4, 8], strides = [1, 1, 1, 1]} : vector<3x3x4x8xf32> to vector<1x1x4x8xf32>
    %24 = vector.shape_cast %23 : vector<1x1x4x8xf32> to vector<4x8xf32>
    %cst_28 = arith.constant dense<0.000000e+00> : vector<222x8xf32>
    %25 = tpu.matmul %22, %24, %cst_28 {dimension_numbers = #tpu.dot_dimension_numbers<[1], [0], [0], [1], [0, 0, 1, 1], [], []>} : vector<222x4xf32>, vector<4x8xf32>, vector<222x8xf32> -> vector<222x8xf32>
    %26 = arith.addf %20, %25 : vector<222x8xf32>
    %27 = arith.addf %15, %26 : vector<222x8xf32>
    %c0_29 = arith.constant 0 : index
    %c2 = arith.constant 2 : index
    %c0_30 = arith.constant 0 : index
    %28 = vector.load %arg1[%c0_29, %c2, %c0_30] : memref<1x256x8xf32, #tpu.memory_space<vmem>>, vector<1x222x8xf32>
    %29 = vector.shape_cast %28 : vector<1x222x8xf32> to vector<222x8xf32>
    %30 = vector.extract_strided_slice %0 {offsets = [0, 2, 0, 0], sizes = [1, 1, 8, 8], strides = [1, 1, 1, 1]} : vector<3x3x8x8xf32> to vector<1x1x8x8xf32>
    %31 = vector.shape_cast %30 : vector<1x1x8x8xf32> to vector<8x8xf32>
    %cst_31 = arith.constant dense<0.000000e+00> : vector<222x8xf32>
    %32 = tpu.matmul %29, %31, %cst_31 {dimension_numbers = #tpu.dot_dimension_numbers<[1], [0], [0], [1], [0, 0, 1, 1], [], []>} : vector<222x8xf32>, vector<8x8xf32>, vector<222x8xf32> -> vector<222x8xf32>
    %c0_32 = arith.constant 0 : index
    %c2_33 = arith.constant 2 : index
    %c0_34 = arith.constant 0 : index
    %33 = vector.load %arg2[%c0_32, %c2_33, %c0_34] : memref<1x256x4xf32, #tpu.memory_space<vmem>>, vector<1x222x4xf32>
    %34 = vector.shape_cast %33 : vector<1x222x4xf32> to vector<222x4xf32>
    %35 = vector.extract_strided_slice %1 {offsets = [0, 2, 0, 0], sizes = [1, 1, 4, 8], strides = [1, 1, 1, 1]} : vector<3x3x4x8xf32> to vector<1x1x4x8xf32>
    %36 = vector.shape_cast %35 : vector<1x1x4x8xf32> to vector<4x8xf32>
    %cst_35 = arith.constant dense<0.000000e+00> : vector<222x8xf32>
    %37 = tpu.matmul %34, %36, %cst_35 {dimension_numbers = #tpu.dot_dimension_numbers<[1], [0], [0], [1], [0, 0, 1, 1], [], []>} : vector<222x4xf32>, vector<4x8xf32>, vector<222x8xf32> -> vector<222x8xf32>
    %38 = arith.addf %32, %37 : vector<222x8xf32>
    %39 = arith.addf %27, %38 : vector<222x8xf32>
    %c0_36 = arith.constant 0 : index
    %c16 = arith.constant 16 : index
    %c0_37 = arith.constant 0 : index
    %40 = vector.load %arg1[%c0_36, %c16, %c0_37] : memref<1x256x8xf32, #tpu.memory_space<vmem>>, vector<1x222x8xf32>
    %41 = vector.shape_cast %40 : vector<1x222x8xf32> to vector<222x8xf32>
    %42 = vector.extract_strided_slice %0 {offsets = [1, 0, 0, 0], sizes = [1, 1, 8, 8], strides = [1, 1, 1, 1]} : vector<3x3x8x8xf32> to vector<1x1x8x8xf32>
    %43 = vector.shape_cast %42 : vector<1x1x8x8xf32> to vector<8x8xf32>
    %cst_38 = arith.constant dense<0.000000e+00> : vector<222x8xf32>
    %44 = tpu.matmul %41, %43, %cst_38 {dimension_numbers = #tpu.dot_dimension_numbers<[1], [0], [0], [1], [0, 0, 1, 1], [], []>} : vector<222x8xf32>, vector<8x8xf32>, vector<222x8xf32> -> vector<222x8xf32>
    %c0_39 = arith.constant 0 : index
    %c16_40 = arith.constant 16 : index
    %c0_41 = arith.constant 0 : index
    %45 = vector.load %arg2[%c0_39, %c16_40, %c0_41] : memref<1x256x4xf32, #tpu.memory_space<vmem>>, vector<1x222x4xf32>
    %46 = vector.shape_cast %45 : vector<1x222x4xf32> to vector<222x4xf32>
    %47 = vector.extract_strided_slice %1 {offsets = [1, 0, 0, 0], sizes = [1, 1, 4, 8], strides = [1, 1, 1, 1]} : vector<3x3x4x8xf32> to vector<1x1x4x8xf32>
    %48 = vector.shape_cast %47 : vector<1x1x4x8xf32> to vector<4x8xf32>
    %cst_42 = arith.constant dense<0.000000e+00> : vector<222x8xf32>
    %49 = tpu.matmul %46, %48, %cst_42 {dimension_numbers = #tpu.dot_dimension_numbers<[1], [0], [0], [1], [0, 0, 1, 1], [], []>} : vector<222x4xf32>, vector<4x8xf32>, vector<222x8xf32> -> vector<222x8xf32>
    %50 = arith.addf %44, %49 : vector<222x8xf32>
    %51 = arith.addf %39, %50 : vector<222x8xf32>
    %c0_43 = arith.constant 0 : index
    %c17 = arith.constant 17 : index
    %c0_44 = arith.constant 0 : index
    %52 = vector.load %arg1[%c0_43, %c17, %c0_44] : memref<1x256x8xf32, #tpu.memory_space<vmem>>, vector<1x222x8xf32>
    %53 = vector.shape_cast %52 : vector<1x222x8xf32> to vector<222x8xf32>
    %54 = vector.extract_strided_slice %0 {offsets = [1, 1, 0, 0], sizes = [1, 1, 8, 8], strides = [1, 1, 1, 1]} : vector<3x3x8x8xf32> to vector<1x1x8x8xf32>
    %55 = vector.shape_cast %54 : vector<1x1x8x8xf32> to vector<8x8xf32>
    %cst_45 = arith.constant dense<0.000000e+00> : vector<222x8xf32>
    %56 = tpu.matmul %53, %55, %cst_45 {dimension_numbers = #tpu.dot_dimension_numbers<[1], [0], [0], [1], [0, 0, 1, 1], [], []>} : vector<222x8xf32>, vector<8x8xf32>, vector<222x8xf32> -> vector<222x8xf32>
    %c0_46 = arith.constant 0 : index
    %c17_47 = arith.constant 17 : index
    %c0_48 = arith.constant 0 : index
    %57 = vector.load %arg2[%c0_46, %c17_47, %c0_48] : memref<1x256x4xf32, #tpu.memory_space<vmem>>, vector<1x222x4xf32>
    %58 = vector.shape_cast %57 : vector<1x222x4xf32> to vector<222x4xf32>
    %59 = vector.extract_strided_slice %1 {offsets = [1, 1, 0, 0], sizes = [1, 1, 4, 8], strides = [1, 1, 1, 1]} : vector<3x3x4x8xf32> to vector<1x1x4x8xf32>
    %60 = vector.shape_cast %59 : vector<1x1x4x8xf32> to vector<4x8xf32>
    %cst_49 = arith.constant dense<0.000000e+00> : vector<222x8xf32>
    %61 = tpu.matmul %58, %60, %cst_49 {dimension_numbers = #tpu.dot_dimension_numbers<[1], [0], [0], [1], [0, 0, 1, 1], [], []>} : vector<222x4xf32>, vector<4x8xf32>, vector<222x8xf32> -> vector<222x8xf32>
    %62 = arith.addf %56, %61 : vector<222x8xf32>
    %63 = arith.addf %51, %62 : vector<222x8xf32>
    %c0_50 = arith.constant 0 : index
    %c18 = arith.constant 18 : index
    %c0_51 = arith.constant 0 : index
    %64 = vector.load %arg1[%c0_50, %c18, %c0_51] : memref<1x256x8xf32, #tpu.memory_space<vmem>>, vector<1x222x8xf32>
    %65 = vector.shape_cast %64 : vector<1x222x8xf32> to vector<222x8xf32>
    %66 = vector.extract_strided_slice %0 {offsets = [1, 2, 0, 0], sizes = [1, 1, 8, 8], strides = [1, 1, 1, 1]} : vector<3x3x8x8xf32> to vector<1x1x8x8xf32>
    %67 = vector.shape_cast %66 : vector<1x1x8x8xf32> to vector<8x8xf32>
    %cst_52 = arith.constant dense<0.000000e+00> : vector<222x8xf32>
    %68 = tpu.matmul %65, %67, %cst_52 {dimension_numbers = #tpu.dot_dimension_numbers<[1], [0], [0], [1], [0, 0, 1, 1], [], []>} : vector<222x8xf32>, vector<8x8xf32>, vector<222x8xf32> -> vector<222x8xf32>
    %c0_53 = arith.constant 0 : index
    %c18_54 = arith.constant 18 : index
    %c0_55 = arith.constant 0 : index
    %69 = vector.load %arg2[%c0_53, %c18_54, %c0_55] : memref<1x256x4xf32, #tpu.memory_space<vmem>>, vector<1x222x4xf32>
    %70 = vector.shape_cast %69 : vector<1x222x4xf32> to vector<222x4xf32>
    %71 = vector.extract_strided_slice %1 {offsets = [1, 2, 0, 0], sizes = [1, 1, 4, 8], strides = [1, 1, 1, 1]} : vector<3x3x4x8xf32> to vector<1x1x4x8xf32>
    %72 = vector.shape_cast %71 : vector<1x1x4x8xf32> to vector<4x8xf32>
    %cst_56 = arith.constant dense<0.000000e+00> : vector<222x8xf32>
    %73 = tpu.matmul %70, %72, %cst_56 {dimension_numbers = #tpu.dot_dimension_numbers<[1], [0], [0], [1], [0, 0, 1, 1], [], []>} : vector<222x4xf32>, vector<4x8xf32>, vector<222x8xf32> -> vector<222x8xf32>
    %74 = arith.addf %68, %73 : vector<222x8xf32>
    %75 = arith.addf %63, %74 : vector<222x8xf32>
    %c0_57 = arith.constant 0 : index
    %c32 = arith.constant 32 : index
    %c0_58 = arith.constant 0 : index
    %76 = vector.load %arg1[%c0_57, %c32, %c0_58] : memref<1x256x8xf32, #tpu.memory_space<vmem>>, vector<1x222x8xf32>
    %77 = vector.shape_cast %76 : vector<1x222x8xf32> to vector<222x8xf32>
    %78 = vector.extract_strided_slice %0 {offsets = [2, 0, 0, 0], sizes = [1, 1, 8, 8], strides = [1, 1, 1, 1]} : vector<3x3x8x8xf32> to vector<1x1x8x8xf32>
    %79 = vector.shape_cast %78 : vector<1x1x8x8xf32> to vector<8x8xf32>
    %cst_59 = arith.constant dense<0.000000e+00> : vector<222x8xf32>
    %80 = tpu.matmul %77, %79, %cst_59 {dimension_numbers = #tpu.dot_dimension_numbers<[1], [0], [0], [1], [0, 0, 1, 1], [], []>} : vector<222x8xf32>, vector<8x8xf32>, vector<222x8xf32> -> vector<222x8xf32>
    %c0_60 = arith.constant 0 : index
    %c32_61 = arith.constant 32 : index
    %c0_62 = arith.constant 0 : index
    %81 = vector.load %arg2[%c0_60, %c32_61, %c0_62] : memref<1x256x4xf32, #tpu.memory_space<vmem>>, vector<1x222x4xf32>
    %82 = vector.shape_cast %81 : vector<1x222x4xf32> to vector<222x4xf32>
    %83 = vector.extract_strided_slice %1 {offsets = [2, 0, 0, 0], sizes = [1, 1, 4, 8], strides = [1, 1, 1, 1]} : vector<3x3x4x8xf32> to vector<1x1x4x8xf32>
    %84 = vector.shape_cast %83 : vector<1x1x4x8xf32> to vector<4x8xf32>
    %cst_63 = arith.constant dense<0.000000e+00> : vector<222x8xf32>
    %85 = tpu.matmul %82, %84, %cst_63 {dimension_numbers = #tpu.dot_dimension_numbers<[1], [0], [0], [1], [0, 0, 1, 1], [], []>} : vector<222x4xf32>, vector<4x8xf32>, vector<222x8xf32> -> vector<222x8xf32>
    %86 = arith.addf %80, %85 : vector<222x8xf32>
    %87 = arith.addf %75, %86 : vector<222x8xf32>
    %c0_64 = arith.constant 0 : index
    %c33 = arith.constant 33 : index
    %c0_65 = arith.constant 0 : index
    %88 = vector.load %arg1[%c0_64, %c33, %c0_65] : memref<1x256x8xf32, #tpu.memory_space<vmem>>, vector<1x222x8xf32>
    %89 = vector.shape_cast %88 : vector<1x222x8xf32> to vector<222x8xf32>
    %90 = vector.extract_strided_slice %0 {offsets = [2, 1, 0, 0], sizes = [1, 1, 8, 8], strides = [1, 1, 1, 1]} : vector<3x3x8x8xf32> to vector<1x1x8x8xf32>
    %91 = vector.shape_cast %90 : vector<1x1x8x8xf32> to vector<8x8xf32>
    %cst_66 = arith.constant dense<0.000000e+00> : vector<222x8xf32>
    %92 = tpu.matmul %89, %91, %cst_66 {dimension_numbers = #tpu.dot_dimension_numbers<[1], [0], [0], [1], [0, 0, 1, 1], [], []>} : vector<222x8xf32>, vector<8x8xf32>, vector<222x8xf32> -> vector<222x8xf32>
    %c0_67 = arith.constant 0 : index
    %c33_68 = arith.constant 33 : index
    %c0_69 = arith.constant 0 : index
    %93 = vector.load %arg2[%c0_67, %c33_68, %c0_69] : memref<1x256x4xf32, #tpu.memory_space<vmem>>, vector<1x222x4xf32>
    %94 = vector.shape_cast %93 : vector<1x222x4xf32> to vector<222x4xf32>
    %95 = vector.extract_strided_slice %1 {offsets = [2, 1, 0, 0], sizes = [1, 1, 4, 8], strides = [1, 1, 1, 1]} : vector<3x3x4x8xf32> to vector<1x1x4x8xf32>
    %96 = vector.shape_cast %95 : vector<1x1x4x8xf32> to vector<4x8xf32>
    %cst_70 = arith.constant dense<0.000000e+00> : vector<222x8xf32>
    %97 = tpu.matmul %94, %96, %cst_70 {dimension_numbers = #tpu.dot_dimension_numbers<[1], [0], [0], [1], [0, 0, 1, 1], [], []>} : vector<222x4xf32>, vector<4x8xf32>, vector<222x8xf32> -> vector<222x8xf32>
    %98 = arith.addf %92, %97 : vector<222x8xf32>
    %99 = arith.addf %87, %98 : vector<222x8xf32>
    %c0_71 = arith.constant 0 : index
    %c34 = arith.constant 34 : index
    %c0_72 = arith.constant 0 : index
    %100 = vector.load %arg1[%c0_71, %c34, %c0_72] : memref<1x256x8xf32, #tpu.memory_space<vmem>>, vector<1x222x8xf32>
    %101 = vector.shape_cast %100 : vector<1x222x8xf32> to vector<222x8xf32>
    %102 = vector.extract_strided_slice %0 {offsets = [2, 2, 0, 0], sizes = [1, 1, 8, 8], strides = [1, 1, 1, 1]} : vector<3x3x8x8xf32> to vector<1x1x8x8xf32>
    %103 = vector.shape_cast %102 : vector<1x1x8x8xf32> to vector<8x8xf32>
    %cst_73 = arith.constant dense<0.000000e+00> : vector<222x8xf32>
    %104 = tpu.matmul %101, %103, %cst_73 {dimension_numbers = #tpu.dot_dimension_numbers<[1], [0], [0], [1], [0, 0, 1, 1], [], []>} : vector<222x8xf32>, vector<8x8xf32>, vector<222x8xf32> -> vector<222x8xf32>
    %c0_74 = arith.constant 0 : index
    %c34_75 = arith.constant 34 : index
    %c0_76 = arith.constant 0 : index
    %105 = vector.load %arg2[%c0_74, %c34_75, %c0_76] : memref<1x256x4xf32, #tpu.memory_space<vmem>>, vector<1x222x4xf32>
    %106 = vector.shape_cast %105 : vector<1x222x4xf32> to vector<222x4xf32>
    %107 = vector.extract_strided_slice %1 {offsets = [2, 2, 0, 0], sizes = [1, 1, 4, 8], strides = [1, 1, 1, 1]} : vector<3x3x4x8xf32> to vector<1x1x4x8xf32>
    %108 = vector.shape_cast %107 : vector<1x1x4x8xf32> to vector<4x8xf32>
    %cst_77 = arith.constant dense<0.000000e+00> : vector<222x8xf32>
    %109 = tpu.matmul %106, %108, %cst_77 {dimension_numbers = #tpu.dot_dimension_numbers<[1], [0], [0], [1], [0, 0, 1, 1], [], []>} : vector<222x4xf32>, vector<4x8xf32>, vector<222x8xf32> -> vector<222x8xf32>
    %110 = arith.addf %104, %109 : vector<222x8xf32>
    %111 = arith.addf %99, %110 : vector<222x8xf32>
    %112 = vector.broadcast %3 : vector<1x8xf32> to vector<222x8xf32>
    %113 = arith.addf %111, %112 : vector<222x8xf32>
    %cst_78 = arith.constant 0.000000e+00 : f32
    %114 = vector.broadcast %cst_78 : f32 to vector<222x8xf32>
    %115 = arith.maximumf %113, %114 : vector<222x8xf32>
    %c0_79 = arith.constant 0 : index
    %c0_80 = arith.constant 0 : index
    %116 = vector.load %arg9[%c0_79, %c0_80] : memref<222x8xf32, #tpu.memory_space<vmem>>, vector<222x8xf32>
    tpu.vector_store %arg9[%c0_79, %c0_80], %115 {strides = array<i32>} : memref<222x8xf32, #tpu.memory_space<vmem>>, vector<222x8xf32>,
    %c0_81 = arith.constant 0 : index
    %c0_82 = arith.constant 0 : index
    %117 = vector.load %arg9[%c0_81, %c0_82] : memref<222x8xf32, #tpu.memory_space<vmem>>, vector<188x8xf32>
    %118 = vector.extract_strided_slice %2 {offsets = [0, 0, 0, 0], sizes = [1, 1, 8, 8], strides = [1, 1, 1, 1]} : vector<3x3x8x8xf32> to vector<1x1x8x8xf32>
    %119 = vector.shape_cast %118 : vector<1x1x8x8xf32> to vector<8x8xf32>
    %cst_83 = arith.constant dense<0.000000e+00> : vector<188x8xf32>
    %120 = tpu.matmul %117, %119, %cst_83 {dimension_numbers = #tpu.dot_dimension_numbers<[1], [0], [0], [1], [0, 0, 1, 1], [], []>} : vector<188x8xf32>, vector<8x8xf32>, vector<188x8xf32> -> vector<188x8xf32>
    %c1_84 = arith.constant 1 : index
    %c0_85 = arith.constant 0 : index
    %121 = vector.load %arg9[%c1_84, %c0_85] : memref<222x8xf32, #tpu.memory_space<vmem>>, vector<188x8xf32>
    %122 = vector.extract_strided_slice %2 {offsets = [0, 1, 0, 0], sizes = [1, 1, 8, 8], strides = [1, 1, 1, 1]} : vector<3x3x8x8xf32> to vector<1x1x8x8xf32>
    %123 = vector.shape_cast %122 : vector<1x1x8x8xf32> to vector<8x8xf32>
    %cst_86 = arith.constant dense<0.000000e+00> : vector<188x8xf32>
    %124 = tpu.matmul %121, %123, %cst_86 {dimension_numbers = #tpu.dot_dimension_numbers<[1], [0], [0], [1], [0, 0, 1, 1], [], []>} : vector<188x8xf32>, vector<8x8xf32>, vector<188x8xf32> -> vector<188x8xf32>
    %125 = arith.addf %120, %124 : vector<188x8xf32>
    %c2_87 = arith.constant 2 : index
    %c0_88 = arith.constant 0 : index
    %126 = vector.load %arg9[%c2_87, %c0_88] : memref<222x8xf32, #tpu.memory_space<vmem>>, vector<188x8xf32>
    %127 = vector.extract_strided_slice %2 {offsets = [0, 2, 0, 0], sizes = [1, 1, 8, 8], strides = [1, 1, 1, 1]} : vector<3x3x8x8xf32> to vector<1x1x8x8xf32>
    %128 = vector.shape_cast %127 : vector<1x1x8x8xf32> to vector<8x8xf32>
    %cst_89 = arith.constant dense<0.000000e+00> : vector<188x8xf32>
    %129 = tpu.matmul %126, %128, %cst_89 {dimension_numbers = #tpu.dot_dimension_numbers<[1], [0], [0], [1], [0, 0, 1, 1], [], []>} : vector<188x8xf32>, vector<8x8xf32>, vector<188x8xf32> -> vector<188x8xf32>
    %130 = arith.addf %125, %129 : vector<188x8xf32>
    %c16_90 = arith.constant 16 : index
    %c0_91 = arith.constant 0 : index
    %131 = vector.load %arg9[%c16_90, %c0_91] : memref<222x8xf32, #tpu.memory_space<vmem>>, vector<188x8xf32>
    %132 = vector.extract_strided_slice %2 {offsets = [1, 0, 0, 0], sizes = [1, 1, 8, 8], strides = [1, 1, 1, 1]} : vector<3x3x8x8xf32> to vector<1x1x8x8xf32>
    %133 = vector.shape_cast %132 : vector<1x1x8x8xf32> to vector<8x8xf32>
    %cst_92 = arith.constant dense<0.000000e+00> : vector<188x8xf32>
    %134 = tpu.matmul %131, %133, %cst_92 {dimension_numbers = #tpu.dot_dimension_numbers<[1], [0], [0], [1], [0, 0, 1, 1], [], []>} : vector<188x8xf32>, vector<8x8xf32>, vector<188x8xf32> -> vector<188x8xf32>
    %135 = arith.addf %130, %134 : vector<188x8xf32>
    %c17_93 = arith.constant 17 : index
    %c0_94 = arith.constant 0 : index
    %136 = vector.load %arg9[%c17_93, %c0_94] : memref<222x8xf32, #tpu.memory_space<vmem>>, vector<188x8xf32>
    %137 = vector.extract_strided_slice %2 {offsets = [1, 1, 0, 0], sizes = [1, 1, 8, 8], strides = [1, 1, 1, 1]} : vector<3x3x8x8xf32> to vector<1x1x8x8xf32>
    %138 = vector.shape_cast %137 : vector<1x1x8x8xf32> to vector<8x8xf32>
    %cst_95 = arith.constant dense<0.000000e+00> : vector<188x8xf32>
    %139 = tpu.matmul %136, %138, %cst_95 {dimension_numbers = #tpu.dot_dimension_numbers<[1], [0], [0], [1], [0, 0, 1, 1], [], []>} : vector<188x8xf32>, vector<8x8xf32>, vector<188x8xf32> -> vector<188x8xf32>
    %140 = arith.addf %135, %139 : vector<188x8xf32>
    %c18_96 = arith.constant 18 : index
    %c0_97 = arith.constant 0 : index
    %141 = vector.load %arg9[%c18_96, %c0_97] : memref<222x8xf32, #tpu.memory_space<vmem>>, vector<188x8xf32>
    %142 = vector.extract_strided_slice %2 {offsets = [1, 2, 0, 0], sizes = [1, 1, 8, 8], strides = [1, 1, 1, 1]} : vector<3x3x8x8xf32> to vector<1x1x8x8xf32>
    %143 = vector.shape_cast %142 : vector<1x1x8x8xf32> to vector<8x8xf32>
    %cst_98 = arith.constant dense<0.000000e+00> : vector<188x8xf32>
    %144 = tpu.matmul %141, %143, %cst_98 {dimension_numbers = #tpu.dot_dimension_numbers<[1], [0], [0], [1], [0, 0, 1, 1], [], []>} : vector<188x8xf32>, vector<8x8xf32>, vector<188x8xf32> -> vector<188x8xf32>
    %145 = arith.addf %140, %144 : vector<188x8xf32>
    %c32_99 = arith.constant 32 : index
    %c0_100 = arith.constant 0 : index
    %146 = vector.load %arg9[%c32_99, %c0_100] : memref<222x8xf32, #tpu.memory_space<vmem>>, vector<188x8xf32>
    %147 = vector.extract_strided_slice %2 {offsets = [2, 0, 0, 0], sizes = [1, 1, 8, 8], strides = [1, 1, 1, 1]} : vector<3x3x8x8xf32> to vector<1x1x8x8xf32>
    %148 = vector.shape_cast %147 : vector<1x1x8x8xf32> to vector<8x8xf32>
    %cst_101 = arith.constant dense<0.000000e+00> : vector<188x8xf32>
    %149 = tpu.matmul %146, %148, %cst_101 {dimension_numbers = #tpu.dot_dimension_numbers<[1], [0], [0], [1], [0, 0, 1, 1], [], []>} : vector<188x8xf32>, vector<8x8xf32>, vector<188x8xf32> -> vector<188x8xf32>
    %150 = arith.addf %145, %149 : vector<188x8xf32>
    %c33_102 = arith.constant 33 : index
    %c0_103 = arith.constant 0 : index
    %151 = vector.load %arg9[%c33_102, %c0_103] : memref<222x8xf32, #tpu.memory_space<vmem>>, vector<188x8xf32>
    %152 = vector.extract_strided_slice %2 {offsets = [2, 1, 0, 0], sizes = [1, 1, 8, 8], strides = [1, 1, 1, 1]} : vector<3x3x8x8xf32> to vector<1x1x8x8xf32>
    %153 = vector.shape_cast %152 : vector<1x1x8x8xf32> to vector<8x8xf32>
    %cst_104 = arith.constant dense<0.000000e+00> : vector<188x8xf32>
    %154 = tpu.matmul %151, %153, %cst_104 {dimension_numbers = #tpu.dot_dimension_numbers<[1], [0], [0], [1], [0, 0, 1, 1], [], []>} : vector<188x8xf32>, vector<8x8xf32>, vector<188x8xf32> -> vector<188x8xf32>
    %155 = arith.addf %150, %154 : vector<188x8xf32>
    %c34_105 = arith.constant 34 : index
    %c0_106 = arith.constant 0 : index
    %156 = vector.load %arg9[%c34_105, %c0_106] : memref<222x8xf32, #tpu.memory_space<vmem>>, vector<188x8xf32>
    %157 = vector.extract_strided_slice %2 {offsets = [2, 2, 0, 0], sizes = [1, 1, 8, 8], strides = [1, 1, 1, 1]} : vector<3x3x8x8xf32> to vector<1x1x8x8xf32>
    %158 = vector.shape_cast %157 : vector<1x1x8x8xf32> to vector<8x8xf32>
    %cst_107 = arith.constant dense<0.000000e+00> : vector<188x8xf32>
    %159 = tpu.matmul %156, %158, %cst_107 {dimension_numbers = #tpu.dot_dimension_numbers<[1], [0], [0], [1], [0, 0, 1, 1], [], []>} : vector<188x8xf32>, vector<8x8xf32>, vector<188x8xf32> -> vector<188x8xf32>
    %160 = arith.addf %155, %159 : vector<188x8xf32>
    %161 = vector.broadcast %4 : vector<1x8xf32> to vector<188x8xf32>
    %162 = arith.addf %160, %161 : vector<188x8xf32>
    %cst_108 = arith.constant 0.000000e+00 : f32
    %163 = vector.broadcast %cst_108 : f32 to vector<188x8xf32>
    %164 = arith.maximumf %162, %163 : vector<188x8xf32>
    %165 = tpu.iota {dimensions = array<i32: 0>} : vector<188x1xi32>
    %c16_i32 = arith.constant 16 : i32
    %c0_i32 = arith.constant 0 : i32
    %166 = arith.cmpi eq, %c16_i32, %c0_i32 : i32
    %c1_i32 = arith.constant 1 : i32
    %167 = arith.select %166, %c1_i32, %c16_i32 : i32
    %168 = vector.broadcast %167 : i32 to vector<188x1xi32>
    %169 = arith.remsi %165, %168 : vector<188x1xi32>
    %c0_i32_109 = arith.constant 0 : i32
    %170 = vector.broadcast %c0_i32_109 : i32 to vector<188x1xi32>
    %171 = arith.cmpi ne, %169, %170 : vector<188x1xi32>
    %c0_i32_110 = arith.constant 0 : i32
    %172 = vector.broadcast %c0_i32_110 : i32 to vector<188x1xi32>
    %173 = arith.cmpi slt, %169, %172 : vector<188x1xi32>
    %c0_i32_111 = arith.constant 0 : i32
    %174 = arith.cmpi slt, %167, %c0_i32_111 : i32
    %175 = vector.broadcast %174 : i1 to vector<188x1xi1>
    %176 = vector.broadcast %175 : vector<188x1xi1> to vector<188x1xi1>
    %177 = arith.xori %173, %176 : vector<188x1xi1>
    %178 = arith.andi %177, %171 : vector<188x1xi1>
    %179 = vector.broadcast %167 : i32 to vector<188x1xi32>
    %180 = arith.addi %169, %179 : vector<188x1xi32>
    %181 = arith.select %178, %180, %169 : vector<188x1xi1>, vector<188x1xi32>
    %c12_i32 = arith.constant 12 : i32
    %182 = vector.broadcast %c12_i32 : i32 to vector<188x1xi32>
    %183 = arith.cmpi slt, %181, %182 : vector<188x1xi32>
    %cst_112 = arith.constant 0.000000e+00 : f32
    %184 = vector.shape_cast %183 : vector<188x1xi1> to vector<188x1xi1>
    %185 = vector.broadcast %184 : vector<188x1xi1> to vector<188x8xi1>
    %186 = vector.broadcast %cst_112 : f32 to vector<188x8xf32>
    %187 = arith.select %185, %164, %186 : vector<188x8xi1>, vector<188x8xf32>
    %cst_113 = arith.constant 0.000000e+00 : f32
    %188 = vector.broadcast %cst_113 : f32 to vector<34x8xf32>
    %c0_114 = arith.constant 0 : index
    %c0_115 = arith.constant 0 : index
    %c0_116 = arith.constant 0 : index
    %189 = vector.load %arg8[%c0_114, %c0_115, %c0_116] : memref<1x256x8xf32, #tpu.memory_space<vmem>>, vector<1x34x8xf32>
    %190 = vector.shape_cast %189 : vector<1x34x8xf32> to vector<34x8xf32>
    %191 = vector.shape_cast %188 : vector<34x8xf32> to vector<1x34x8xf32>
    tpu.vector_store %arg8[%c0_114, %c0_115, %c0_116], %191 {strides = array<i32>} : memref<1x256x8xf32, #tpu.memory_space<vmem>>, vector<1x34x8xf32>,
    %c0_117 = arith.constant 0 : index
    %c34_118 = arith.constant 34 : index
    %c0_119 = arith.constant 0 : index
    %192 = vector.load %arg8[%c0_117, %c34_118, %c0_119] : memref<1x256x8xf32, #tpu.memory_space<vmem>>, vector<1x188x8xf32>
    %193 = vector.shape_cast %192 : vector<1x188x8xf32> to vector<188x8xf32>
    %194 = vector.shape_cast %187 : vector<188x8xf32> to vector<1x188x8xf32>
    tpu.vector_store %arg8[%c0_117, %c34_118, %c0_119], %194 {strides = array<i32>} : memref<1x256x8xf32, #tpu.memory_space<vmem>>, vector<1x188x8xf32>,
    %c0_120 = arith.constant 0 : index
    %c222 = arith.constant 222 : index
    %c0_121 = arith.constant 0 : index
    %195 = vector.load %arg8[%c0_120, %c222, %c0_121] : memref<1x256x8xf32, #tpu.memory_space<vmem>>, vector<1x34x8xf32>
    %196 = vector.shape_cast %195 : vector<1x34x8xf32> to vector<34x8xf32>
    %197 = vector.shape_cast %188 : vector<34x8xf32> to vector<1x34x8xf32>
    tpu.vector_store %arg8[%c0_120, %c222, %c0_121], %197 {strides = array<i32>} : memref<1x256x8xf32, #tpu.memory_space<vmem>>, vector<1x34x8xf32>,
    return
  }
  func.func @transform_0(%arg0: i32) -> (i32, i32, i32) {
    %c0_i32 = arith.constant 0 : i32
    %c0_i32_0 = arith.constant 0 : i32
    %c0_i32_1 = arith.constant 0 : i32
    return %arg0, %c0_i32, %c0_i32_0 : i32, i32, i32
  }
  func.func @transform_1(%arg0: i32) -> (i32, i32, i32) {
    %c0_i32 = arith.constant 0 : i32
    %c0_i32_0 = arith.constant 0 : i32
    %c0_i32_1 = arith.constant 0 : i32
    return %arg0, %c0_i32, %c0_i32_0 : i32, i32, i32
  }
  func.func @transform_2(%arg0: i32) -> (i32, i32, i32, i32) {
    %c0_i32 = arith.constant 0 : i32
    %c0_i32_0 = arith.constant 0 : i32
    %c0_i32_1 = arith.constant 0 : i32
    %c0_i32_2 = arith.constant 0 : i32
    %c0_i32_3 = arith.constant 0 : i32
    return %c0_i32, %c0_i32_0, %c0_i32_1, %c0_i32_2 : i32, i32, i32, i32
  }
  func.func @transform_3(%arg0: i32) -> (i32, i32, i32, i32) {
    %c0_i32 = arith.constant 0 : i32
    %c0_i32_0 = arith.constant 0 : i32
    %c0_i32_1 = arith.constant 0 : i32
    %c0_i32_2 = arith.constant 0 : i32
    %c0_i32_3 = arith.constant 0 : i32
    return %c0_i32, %c0_i32_0, %c0_i32_1, %c0_i32_2 : i32, i32, i32, i32
  }
  func.func @transform_4(%arg0: i32) -> (i32, i32) {
    %c0_i32 = arith.constant 0 : i32
    %c0_i32_0 = arith.constant 0 : i32
    %c0_i32_1 = arith.constant 0 : i32
    return %c0_i32, %c0_i32_0 : i32, i32
  }
  func.func @transform_5(%arg0: i32) -> (i32, i32, i32, i32) {
    %c0_i32 = arith.constant 0 : i32
    %c0_i32_0 = arith.constant 0 : i32
    %c0_i32_1 = arith.constant 0 : i32
    %c0_i32_2 = arith.constant 0 : i32
    %c0_i32_3 = arith.constant 0 : i32
    return %c0_i32, %c0_i32_0, %c0_i32_1, %c0_i32_2 : i32, i32, i32, i32
  }
  func.func @transform_6(%arg0: i32) -> (i32, i32) {
    %c0_i32 = arith.constant 0 : i32
    %c0_i32_0 = arith.constant 0 : i32
    %c0_i32_1 = arith.constant 0 : i32
    return %c0_i32, %c0_i32_0 : i32, i32
  }
  func.func @transform_7(%arg0: i32) -> (i32, i32, i32) {
    %c0_i32 = arith.constant 0 : i32
    %c0_i32_0 = arith.constant 0 : i32
    %c0_i32_1 = arith.constant 0 : i32
    return %arg0, %c0_i32, %c0_i32_0 : i32, i32, i32
  }
}

</mosaic_0001>

<llo_original>
// kernel: tpu_custom_call.1
$region0: #{tpu_custom_call.1}
  #allocation0 [shape = 'u32[]', space=smem, size = 0x4, offset = 0x4, fixed_abs, tag = 'smem constant byte address 0x4 - core index']
  #allocation1 [shape = 'u32[144,128]{1,0:T(1,128)}', space=vmem, size = 0x12000, scoped, tag = 'internal scratch']
  #allocation2 [shape = 'f32[222,8]{1,0:T(8,128)}', space=vmem, size = 0x1c000, scoped, tag = 'scratch operand']
  %s0 = inlined_call_operand.vmem [shape: f32[2,256,8], index: 0, kind: input, shape index: {}]
  %s1 = inlined_call_operand.vmem [shape: f32[2,256,4], index: 1, kind: input, shape index: {}]
  %s2 = inlined_call_operand.vmem [shape: f32[3,3,8,8], index: 2, kind: input, shape index: {}]
  %s3 = inlined_call_operand.vmem [shape: f32[3,3,4,8], index: 3, kind: input, shape index: {}]
  %s4 = inlined_call_operand.vmem [shape: f32[1,8], index: 4, kind: input, shape index: {}]
  %s5 = inlined_call_operand.vmem [shape: f32[3,3,8,8], index: 5, kind: input, shape index: {}]
  %s6 = inlined_call_operand.vmem [shape: f32[1,8], index: 6, kind: input, shape index: {}]
  %s7 = inlined_call_operand.vmem [shape: f32[2,256,8], index: 7, kind: output, shape index: {}]
  %s8 = sld [smem:[#allocation0]]
  $region61: #{tpu_custom_call.1} parent=0
    _
  %s10 = ssub.s32 1, %s8
  %s11 = scalar_select 0, %s10, %s8
  loop: start=0, step=1, limit=4
  $region2: #{tpu_custom_call.1} parent=0 // loop_pre_header
    _
  $region3: #{tpu_custom_call.1} parent=0 // loop_header
    %s13 = sphi 0, %s17
    %p14 = scmp.ge.s32.totalorder %s13, 4
    %s23 = sphi 0, %s25
    %s26 = sphi 0, %s23
    %s27 = sphi 0, %s26
    %s43 = sphi 0, %s27
    %s49 = sphi 0, %s51
    %s52 = sphi 0, %s49
    %s53 = sphi 0, %s52
    %s69 = sphi 0, %s53
    %s73 = sphi 0, %s73
    %s75 = sphi 0, %s73
    %s76 = sphi 0, %s75
    %s90 = sphi 0, %s76
    %s94 = sphi 0, %s94
    %s96 = sphi 0, %s94
    %s97 = sphi 0, %s96
    %s111 = sphi 0, %s97
    %s115 = sphi 0, %s115
    %s117 = sphi 0, %s115
    %s118 = sphi 0, %s117
    %s132 = sphi 0, %s118
    %s136 = sphi 0, %s136
    %s138 = sphi 0, %s136
    %s139 = sphi 0, %s138
    %s153 = sphi 0, %s139
    %s157 = sphi 0, %s157
    %s159 = sphi 0, %s157
    %s160 = sphi 0, %s159
    %s174 = sphi 0, %s160
    %s180 = sphi 0, %s182
    %s183 = sphi 0, %s180
    %s184 = sphi 0, %s183
    %s200 = sphi 0, %s184
  $region4: #{tpu_custom_call.1} parent=0 // loop_header_branch
    %16 = sbr.rel (%p14) target = $region8
  $region5: #{tpu_custom_call.1} parent=0 // loop_body
    %s18 = ssub.s32 %s13, 1
    %s19 = ssub.s32 %s13, 2
    %s20 = sadd.s32 %s13, 1
    %s21 = ssub.s32 %s13, %s20
    %p22 = scmp.eq.s32.totalorder %s21, 0
    %s24 = sadd.s32 %s23, 1
    %s25 = scalar_select %p22, %s23, %s24
    %p28 = pneg %p22
    %p29 = scmp.eq.s32.totalorder %s13, 1
    %p30 = por %p28, %p29
    %p31 = scmp.ne.s32.totalorder %s23, %s26
    %p32 = scmp.eq.s32.totalorder %s13, 0
    %p33 = por %p31, %p32
    %p34 = scmp.ne.s32.totalorder %s23, %s26
    %p35 = scmp.eq.s32.totalorder %s18, 1
    %p36 = por %p34, %p35
    %p37 = scmp.ne.s32.totalorder %s26, %s27
    %p38 = scmp.eq.s32.totalorder %s18, 0
    %p39 = por %p37, %p38
    %p40 = scmp.ne.s32.totalorder %s26, %s27
    %p41 = scmp.eq.s32.totalorder %s19, 1
    %p42 = por %p40, %p41
    %p44 = scmp.ne.s32.totalorder %s27, %s43
    %p45 = scmp.eq.s32.totalorder %s19, 0
    %p46 = por %p44, %p45
    %s47 = ssub.s32 %s13, %s20
    %p48 = scmp.eq.s32.totalorder %s47, 0
    %s50 = sadd.s32 %s49, 1
    %s51 = scalar_select %p48, %s49, %s50
    %p54 = pneg %p48
    %p55 = scmp.eq.s32.totalorder %s13, 1
    %p56 = por %p54, %p55
    %p57 = scmp.ne.s32.totalorder %s49, %s52
    %p58 = scmp.eq.s32.totalorder %s13, 0
    %p59 = por %p57, %p58
    %p60 = scmp.ne.s32.totalorder %s49, %s52
    %p61 = scmp.eq.s32.totalorder %s18, 1
    %p62 = por %p60, %p61
    %p63 = scmp.ne.s32.totalorder %s52, %s53
    %p64 = scmp.eq.s32.totalorder %s18, 0
    %p65 = por %p63, %p64
    %p66 = scmp.ne.s32.totalorder %s52, %s53
    %p67 = scmp.eq.s32.totalorder %s19, 1
    %p68 = por %p66, %p67
    %p70 = scmp.ne.s32.totalorder %s53, %s69
    %p71 = scmp.eq.s32.totalorder %s19, 0
    %p72 = por %p70, %p71
    %s74 = sadd.s32 %s73, 1
    %p77 = scmp.eq.s32.totalorder %s13, 1
    %p78 = scmp.ne.s32.totalorder %s73, %s75
    %p79 = scmp.eq.s32.totalorder %s13, 0
    %p80 = por %p78, %p79
    %p81 = scmp.ne.s32.totalorder %s73, %s75
    %p82 = scmp.eq.s32.totalorder %s18, 1
    %p83 = por %p81, %p82
    %p84 = scmp.ne.s32.totalorder %s75, %s76
    %p85 = scmp.eq.s32.totalorder %s18, 0
    %p86 = por %p84, %p85
    %p87 = scmp.ne.s32.totalorder %s75, %s76
    %p88 = scmp.eq.s32.totalorder %s19, 1
    %p89 = por %p87, %p88
    %p91 = scmp.ne.s32.totalorder %s76, %s90
    %p92 = scmp.eq.s32.totalorder %s19, 0
    %p93 = por %p91, %p92
    %s95 = sadd.s32 %s94, 1
    %p98 = scmp.eq.s32.totalorder %s13, 1
    %p99 = scmp.ne.s32.totalorder %s94, %s96
    %p100 = scmp.eq.s32.totalorder %s13, 0
    %p101 = por %p99, %p100
    %p102 = scmp.ne.s32.totalorder %s94, %s96
    %p103 = scmp.eq.s32.totalorder %s18, 1
    %p104 = por %p102, %p103
    %p105 = scmp.ne.s32.totalorder %s96, %s97
    %p106 = scmp.eq.s32.totalorder %s18, 0
    %p107 = por %p105, %p106
    %p108 = scmp.ne.s32.totalorder %s96, %s97
    %p109 = scmp.eq.s32.totalorder %s19, 1
    %p110 = por %p108, %p109
    %p112 = scmp.ne.s32.totalorder %s97, %s111
    %p113 = scmp.eq.s32.totalorder %s19, 0
    %p114 = por %p112, %p113
    %s116 = sadd.s32 %s115, 1
    %p119 = scmp.eq.s32.totalorder %s13, 1
    %p120 = scmp.ne.s32.totalorder %s115, %s117
    %p121 = scmp.eq.s32.totalorder %s13, 0
    %p122 = por %p120, %p121
    %p123 = scmp.ne.s32.totalorder %s115, %s117
    %p124 = scmp.eq.s32.totalorder %s18, 1
    %p125 = por %p123, %p124
    %p126 = scmp.ne.s32.totalorder %s117, %s118
    %p127 = scmp.eq.s32.totalorder %s18, 0
    %p128 = por %p126, %p127
    %p129 = scmp.ne.s32.totalorder %s117, %s118
    %p130 = scmp.eq.s32.totalorder %s19, 1
    %p131 = por %p129, %p130
    %p133 = scmp.ne.s32.totalorder %s118, %s132
    %p134 = scmp.eq.s32.totalorder %s19, 0
    %p135 = por %p133, %p134
    %s137 = sadd.s32 %s136, 1
    %p140 = scmp.eq.s32.totalorder %s13, 1
    %p141 = scmp.ne.s32.totalorder %s136, %s138
    %p142 = scmp.eq.s32.totalorder %s13, 0
    %p143 = por %p141, %p142
    %p144 = scmp.ne.s32.totalorder %s136, %s138
    %p145 = scmp.eq.s32.totalorder %s18, 1
    %p146 = por %p144, %p145
    %p147 = scmp.ne.s32.totalorder %s138, %s139
    %p148 = scmp.eq.s32.totalorder %s18, 0
    %p149 = por %p147, %p148
    %p150 = scmp.ne.s32.totalorder %s138, %s139
    %p151 = scmp.eq.s32.totalorder %s19, 1
    %p152 = por %p150, %p151
    %p154 = scmp.ne.s32.totalorder %s139, %s153
    %p155 = scmp.eq.s32.totalorder %s19, 0
    %p156 = por %p154, %p155
    %s158 = sadd.s32 %s157, 1
    %p161 = scmp.eq.s32.totalorder %s13, 1
    %p162 = scmp.ne.s32.totalorder %s157, %s159
    %p163 = scmp.eq.s32.totalorder %s13, 0
    %p164 = por %p162, %p163
    %p165 = scmp.ne.s32.totalorder %s157, %s159
    %p166 = scmp.eq.s32.totalorder %s18, 1
    %p167 = por %p165, %p166
    %p168 = scmp.ne.s32.totalorder %s159, %s160
    %p169 = scmp.eq.s32.totalorder %s18, 0
    %p170 = por %p168, %p169
    %p171 = scmp.ne.s32.totalorder %s159, %s160
    %p172 = scmp.eq.s32.totalorder %s19, 1
    %p173 = por %p171, %p172
    %p175 = scmp.ne.s32.totalorder %s160, %s174
    %p176 = scmp.eq.s32.totalorder %s19, 0
    %p177 = por %p175, %p176
    %s178 = ssub.s32 %s13, %s20
    %p179 = scmp.eq.s32.totalorder %s178, 0
    %s181 = sadd.s32 %s180, 1
    %s182 = scalar_select %p179, %s180, %s181
    %p185 = pneg %p179
    %p186 = scmp.eq.s32.totalorder %s13, 1
    %p187 = por %p185, %p186
    %p188 = scmp.ne.s32.totalorder %s180, %s183
    %p189 = scmp.eq.s32.totalorder %s13, 0
    %p190 = por %p188, %p189
    %p191 = scmp.ne.s32.totalorder %s180, %s183
    %p192 = scmp.eq.s32.totalorder %s18, 1
    %p193 = por %p191, %p192
    %p194 = scmp.ne.s32.totalorder %s183, %s184
    %p195 = scmp.eq.s32.totalorder %s18, 0
    %p196 = por %p194, %p195
    %p197 = scmp.ne.s32.totalorder %s183, %s184
    %p198 = scmp.eq.s32.totalorder %s19, 1
    %p199 = por %p197, %p198
    %p201 = scmp.ne.s32.totalorder %s184, %s200
    %p202 = scmp.eq.s32.totalorder %s19, 0
    %p203 = por %p201, %p202
    %p204 = scmp.le.s32.totalorder 1, %s13
    %p205 = scmp.lt.s32.totalorder %s13, 3
    %p206 = pnand %p204, %p205
    %p207 = pneg %p206
    // Predicated region
    $region9: #{tpu_custom_call.1} parent=5 // pred_check
      _
    $region10: #{tpu_custom_call.1} parent=5 // pred_check_branch
      %209 = sbr.rel (%p206) target = $region12
    $region11: #{tpu_custom_call.1} parent=5 // pred_region
      %s210 = ssub.s32 %s13, 1
      // Predicated region
      $region13: #{tpu_custom_call.1} parent=11 // pred_check
        %p211 = pneg %p86
      $region14: #{tpu_custom_call.1} parent=11 // pred_check_branch
        %213 = sbr.rel (%p211) target = $region16
      $region15: #{tpu_custom_call.1} parent=11 // pred_region
        _
      $region16: #{tpu_custom_call.1} parent=11 // pred_fallthru
        _
      // Predicated region
      $region17: #{tpu_custom_call.1} parent=11 // pred_check
        %p214 = pneg %p107
      $region18: #{tpu_custom_call.1} parent=11 // pred_check_branch
        %216 = sbr.rel (%p214) target = $region20
      $region19: #{tpu_custom_call.1} parent=11 // pred_region
        _
      $region20: #{tpu_custom_call.1} parent=11 // pred_fallthru
        _
      // Predicated region
      $region21: #{tpu_custom_call.1} parent=11 // pred_check
        %p217 = pneg %p128
      $region22: #{tpu_custom_call.1} parent=11 // pred_check_branch
        %219 = sbr.rel (%p217) target = $region24
      $region23: #{tpu_custom_call.1} parent=11 // pred_region
        _
      $region24: #{tpu_custom_call.1} parent=11 // pred_fallthru
        _
      // Predicated region
      $region25: #{tpu_custom_call.1} parent=11 // pred_check
        %p220 = pneg %p149
      $region26: #{tpu_custom_call.1} parent=11 // pred_check_branch
        %222 = sbr.rel (%p220) target = $region28
      $region27: #{tpu_custom_call.1} parent=11 // pred_region
        _
      $region28: #{tpu_custom_call.1} parent=11 // pred_fallthru
        _
      // Predicated region
      $region29: #{tpu_custom_call.1} parent=11 // pred_check
        %p223 = pneg %p170
      $region30: #{tpu_custom_call.1} parent=11 // pred_check_branch
        %225 = sbr.rel (%p223) target = $region32
      $region31: #{tpu_custom_call.1} parent=11 // pred_region
        _
      $region32: #{tpu_custom_call.1} parent=11 // pred_fallthru
        _
    $region12: #{tpu_custom_call.1} parent=5 // pred_fallthru
      _
    %p226 = scmp.lt.s32.totalorder %s13, 2
    // Predicated region
    $region33: #{tpu_custom_call.1} parent=5 // pred_check
      %p227 = pneg %p226
    $region34: #{tpu_custom_call.1} parent=5 // pred_check_branch
      %229 = sbr.rel (%p227) target = $region36
    $region35: #{tpu_custom_call.1} parent=5 // pred_region
      // Predicated region
      $region37: #{tpu_custom_call.1} parent=35 // pred_check
        %p230 = pneg %p33
      $region38: #{tpu_custom_call.1} parent=35 // pred_check_branch
        %232 = sbr.rel (%p230) target = $region40
      $region39: #{tpu_custom_call.1} parent=35 // pred_region
        %p233 = scmp.lt.s32.totalorder %s13, 1
        %s234 = scalar_select %p233, %s13, 1
        %s235 = smul.addr %s234, 32
        %s236 = smul.addr %s235, 8
        %s237 = scalar_lea.vmem %s0, %s236
      $region40: #{tpu_custom_call.1} parent=35 // pred_fallthru
        _
      // Predicated region
      $region41: #{tpu_custom_call.1} parent=35 // pred_check
        %p238 = pneg %p59
      $region42: #{tpu_custom_call.1} parent=35 // pred_check_branch
        %240 = sbr.rel (%p238) target = $region44
      $region43: #{tpu_custom_call.1} parent=35 // pred_region
        %p241 = scmp.lt.s32.totalorder %s13, 1
        %s242 = scalar_select %p241, %s13, 1
        %s243 = smul.addr %s242, 32
        %s244 = smul.addr %s243, 8
        %s245 = scalar_lea.vmem %s1, %s244
      $region44: #{tpu_custom_call.1} parent=35 // pred_fallthru
        _
    $region36: #{tpu_custom_call.1} parent=5 // pred_fallthru
      _
    %p246 = scmp.le.s32.totalorder 1, %s13
    %p247 = scmp.lt.s32.totalorder %s13, 3
    %p248 = pnand %p246, %p247
    %p249 = pneg %p248
    // Predicated region
    $region45: #{tpu_custom_call.1} parent=5 // pred_check
      _
    $region46: #{tpu_custom_call.1} parent=5 // pred_check_branch
      %251 = sbr.rel (%p248) target = $region48
    $region47: #{tpu_custom_call.1} parent=5 // pred_region
      %s252 = ssub.s32 %s13, 1
      %p253 = scmp.lt.s32.totalorder %s18, 1
      %s254 = scalar_select %p253, %s18, 1
      %s255 = smul.addr %s254, 32
      %s256 = smul.addr %s255, 8
      %s257 = scalar_lea.vmem %s0, %s256
      %p258 = pneg %p39
      %p259 = pneg %p36
      %p260 = scmp.lt.s32.totalorder %s18, 1
      %s261 = scalar_select %p260, %s18, 1
      %s262 = smul.addr %s261, 32
      %s263 = smul.addr %s262, 8
      %s264 = scalar_lea.vmem %s1, %s263
      %p265 = pneg %p65
      %p266 = pneg %p62
      %p267 = pneg %p86
      %p268 = pneg %p83
      %p269 = pneg %p107
      %p270 = pneg %p104
      %p271 = pneg %p128
      %p272 = pneg %p125
      %p273 = pneg %p149
      %p274 = pneg %p146
      %p275 = pneg %p170
      %p276 = pneg %p167
      %p277 = pneg %p196
      %p278 = pneg %p193
      %p279 = scmp.lt.s32.totalorder %s18, 1
      %s280 = scalar_select %p279, %s18, 1
      %s281 = smul.addr %s280, 32
      %s282 = smul.addr %s281, 8
      %s283 = scalar_lea.vmem %s7, %s282
      %p284 = scmp.lt.s32.totalorder %s18, 1
      %s285 = scalar_select %p284, %s18, 1
      %s286 = smul.addr %s285, 32
      %s287 = smul.addr %s286, 8
      %s288 = scalar_lea.vmem %s0, %s287
      %p289 = scmp.lt.s32.totalorder %s18, 1
      %s290 = scalar_select %p289, %s18, 1
      %s291 = smul.addr %s290, 32
      %s292 = smul.addr %s291, 8
      %s293 = scalar_lea.vmem %s1, %s292
      %p294 = scmp.lt.s32.totalorder %s18, 1
      %s295 = scalar_select %p294, %s18, 1
      %s296 = smul.addr %s295, 32
      %s297 = smul.addr %s296, 8
      %s298 = scalar_lea.vmem %s7, %s297
      %v299 = vld [vmem:[%s2] sm:$0xff]
      %v300 = vld [vmem:[%s2 + $0x8] sm:$0xff]
      %v301 = vld [vmem:[%s2 + $0x10] sm:$0xff]
      %v302 = vld [vmem:[%s2 + $0x18] sm:$0xff]
      %v303 = vld [vmem:[%s2 + $0x20] sm:$0xff]
      %v304 = vld [vmem:[%s2 + $0x28] sm:$0xff]
      %v305 = vld [vmem:[%s2 + $0x30] sm:$0xff]
      %v306 = vld [vmem:[%s2 + $0x38] sm:$0xff]
      %v307 = vld [vmem:[%s2 + $0x40] sm:$0xff]
      %v308 = vld [vmem:[%s3] sm:$0xf]
      %v309 = vld [vmem:[%s3 + $0x4] sm:$0xf]
      %v310 = vld [vmem:[%s3 + $0x8] sm:$0xf]
      %v311 = vld [vmem:[%s3 + $0xc] sm:$0xf]
      %v312 = vld [vmem:[%s3 + $0x10] sm:$0xf]
      %v313 = vld [vmem:[%s3 + $0x14] sm:$0xf]
      %v314 = vld [vmem:[%s3 + $0x18] sm:$0xf]
      %v315 = vld [vmem:[%s3 + $0x1c] sm:$0xf]
      %v316 = vld [vmem:[%s3 + $0x20] sm:$0xf]
      %v317 = vld [vmem:[%s5] sm:$0xff]
      %v318 = vld [vmem:[%s5 + $0x8] sm:$0xff]
      %v319 = vld [vmem:[%s5 + $0x10] sm:$0xff]
      %v320 = vld [vmem:[%s5 + $0x18] sm:$0xff]
      %v321 = vld [vmem:[%s5 + $0x20] sm:$0xff]
      %v322 = vld [vmem:[%s5 + $0x28] sm:$0xff]
      %v323 = vld [vmem:[%s5 + $0x30] sm:$0xff]
      %v324 = vld [vmem:[%s5 + $0x38] sm:$0xff]
      %v325 = vld [vmem:[%s5 + $0x40] sm:$0xff]
      %v326 = vld [vmem:[%s4] sm:$0x1]
      %v327 = vld [vmem:[%s6] sm:$0x1]
      %v328 = vld [vmem:[%s288] sm:$0xff]
      %v329 = vld [vmem:[%s288 + $0x8] sm:$0xff]
      %v330 = vld [vmem:[%s288 + $0x10] sm:$0xff]
      %v331 = vld [vmem:[%s288 + $0x18] sm:$0xff]
      %v332 = vld [vmem:[%s288 + $0x20] sm:$0xff]
      %v333 = vld [vmem:[%s288 + $0x28] sm:$0xff]
      %v334 = vld [vmem:[%s288 + $0x30] sm:$0xff]
      %v335 = vld [vmem:[%s288 + $0x38] sm:$0xff]
      %v336 = vld [vmem:[%s288 + $0x40] sm:$0xff]
      %v337 = vld [vmem:[%s288 + $0x48] sm:$0xff]
      %v338 = vld [vmem:[%s288 + $0x50] sm:$0xff]
      %v339 = vld [vmem:[%s288 + $0x58] sm:$0xff]
      %v340 = vld [vmem:[%s288 + $0x60] sm:$0xff]
      %v341 = vld [vmem:[%s288 + $0x68] sm:$0xff]
      %v342 = vld [vmem:[%s288 + $0x70] sm:$0xff]
      %v343 = vld [vmem:[%s288 + $0x78] sm:$0xff]
      %v344 = vld [vmem:[%s288 + $0x80] sm:$0xff]
      %v345 = vld [vmem:[%s288 + $0x88] sm:$0xff]
      %v346 = vld [vmem:[%s288 + $0x90] sm:$0xff]
      %v347 = vld [vmem:[%s288 + $0x98] sm:$0xff]
      %v348 = vld [vmem:[%s288 + $0xa0] sm:$0xff]
      %v349 = vld [vmem:[%s288 + $0xa8] sm:$0xff]
      %v350 = vld [vmem:[%s288 + $0xb0] sm:$0xff]
      %v351 = vld [vmem:[%s288 + $0xb8] sm:$0xff]
      %v352 = vld [vmem:[%s288 + $0xc0] sm:$0xff]
      %v353 = vld [vmem:[%s288 + $0xc8] sm:$0xff]
      %v354 = vld [vmem:[%s288 + $0xd0] sm:$0xff]
      %v355 = vld [vmem:[%s288 + $0xd8] sm:$0x3f]
      %v356 = vld [vmem:[%s293] sm:$0xff]
      %v357 = vld [vmem:[%s293 + $0x8] sm:$0xff]
      %v358 = vld [vmem:[%s293 + $0x10] sm:$0xff]
      %v359 = vld [vmem:[%s293 + $0x18] sm:$0xff]
      %v360 = vld [vmem:[%s293 + $0x20] sm:$0xff]
      %v361 = vld [vmem:[%s293 + $0x28] sm:$0xff]
      %v362 = vld [vmem:[%s293 + $0x30] sm:$0xff]
      %v363 = vld [vmem:[%s293 + $0x38] sm:$0xff]
      %v364 = vld [vmem:[%s293 + $0x40] sm:$0xff]
      %v365 = vld [vmem:[%s293 + $0x48] sm:$0xff]
      %v366 = vld [vmem:[%s293 + $0x50] sm:$0xff]
      %v367 = vld [vmem:[%s293 + $0x58] sm:$0xff]
      %v368 = vld [vmem:[%s293 + $0x60] sm:$0xff]
      %v369 = vld [vmem:[%s293 + $0x68] sm:$0xff]
      %v370 = vld [vmem:[%s293 + $0x70] sm:$0xff]
      %v371 = vld [vmem:[%s293 + $0x78] sm:$0xff]
      %v372 = vld [vmem:[%s293 + $0x80] sm:$0xff]
      %v373 = vld [vmem:[%s293 + $0x88] sm:$0xff]
      %v374 = vld [vmem:[%s293 + $0x90] sm:$0xff]
      %v375 = vld [vmem:[%s293 + $0x98] sm:$0xff]
      %v376 = vld [vmem:[%s293 + $0xa0] sm:$0xff]
      %v377 = vld [vmem:[%s293 + $0xa8] sm:$0xff]
      %v378 = vld [vmem:[%s293 + $0xb0] sm:$0xff]
      %v379 = vld [vmem:[%s293 + $0xb8] sm:$0xff]
      %v380 = vld [vmem:[%s293 + $0xc0] sm:$0xff]
      %v381 = vld [vmem:[%s293 + $0xc8] sm:$0xff]
      %v382 = vld [vmem:[%s293 + $0xd0] sm:$0xff]
      %v383 = vld [vmem:[%s293 + $0xd8] sm:$0x3f]
      %vm384 = vcmask 31744
      %v386 = vsel %vm384, %v356, 0
      %v389 = vsel %vm384, %v357, 0
      %v392 = vsel %vm384, %v358, 0
      %v395 = vsel %vm384, %v359, 0
      %v398 = vsel %vm384, %v360, 0
      %v401 = vsel %vm384, %v361, 0
      %v404 = vsel %vm384, %v362, 0
      %v407 = vsel %vm384, %v363, 0
      %v410 = vsel %vm384, %v364, 0
      %v413 = vsel %vm384, %v365, 0
      %v416 = vsel %vm384, %v366, 0
      %v419 = vsel %vm384, %v367, 0
      %v422 = vsel %vm384, %v368, 0
      %v425 = vsel %vm384, %v369, 0
      %v428 = vsel %vm384, %v370, 0
      %v431 = vsel %vm384, %v371, 0
      %v434 = vsel %vm384, %v372, 0
      %v437 = vsel %vm384, %v373, 0
      %v440 = vsel %vm384, %v374, 0
      %v443 = vsel %vm384, %v375, 0
      %v446 = vsel %vm384, %v376, 0
      %v449 = vsel %vm384, %v377, 0
      %v452 = vsel %vm384, %v378, 0
      %v455 = vsel %vm384, %v379, 0
      %v458 = vsel %vm384, %v380, 0
      %v461 = vsel %vm384, %v381, 0
      %v464 = vsel %vm384, %v382, 0
      %v467 = vsel %vm384, %v383, 0
      %vm469 = vcmask 1043456
      %v471 = vsel %vm469, %v308, 0
      %473 = vmatprep.subr.mxu0 0.0
      %474 = vmatpush1.msra.mxu0 0.0
      %475 = vmatprep.subr.mxu0 0.0
      %476 = vmatpush1.msra.mxu0 0.0
      %477 = vmatprep.subr.mxu0 0.0
      %478 = vmatpush1.msra.mxu0 0.0
      %479 = vmatprep.subr.mxu0 0.0
      %480 = vmatpush1.msra.mxu0 0.0
      %481 = vmatprep.subr.mxu0 0.0
      %482 = vmatpush1.msra.mxu0 0.0
      %483 = vmatprep.subr.mxu0 0.0
      %484 = vmatpush1.msra.mxu0 0.0
      %485 = vmatprep.subr.mxu0 0.0
      %486 = vmatpush1.msra.mxu0 0.0
      %487 = vmatprep.subr.mxu0 0.0
      %488 = vmatpush1.msra.mxu0 0.0
      %489 = vmatprep.subr.mxu0 0.0
      %490 = vmatpush1.msra.mxu0 0.0
      %491 = vmatprep.subr.mxu0 0.0
      %492 = vmatpush1.msra.mxu0 0.0
      %493 = vmatprep.subr.mxu0 0.0
      %494 = vmatpush1.msra.mxu0 0.0
      %495 = vmatprep.subr.mxu0 0.0
      %496 = vmatpush1.msra.mxu0 0.0
      %497 = vmatprep.subr.mxu0 0.0
      %498 = vmatpush1.msra.mxu0 0.0
      %499 = vmatprep.subr.mxu0 0.0
      %500 = vmatpush1.msra.mxu0 0.0
      %501 = vmatprep.subr.mxu0 0.0
      %502 = vmatpush1.msra.mxu0 0.0
      %503 = vmatprep.subr.mxu0 0.0
      %504 = vmatpush1.msra.mxu0 %v471
      %505 = vmatprep.subr.mxu0 0.0
      %506 = vmatpush2.msra.mxu0 0.0
      %507 = vmatprep.subr.mxu0 0.0
      %508 = vmatpush2.msra.mxu0 0.0
      %509 = vmatprep.subr.mxu0 0.0
      %510 = vmatpush2.msra.mxu0 0.0
      %511 = vmatprep.subr.mxu0 0.0
      %512 = vmatpush2.msra.mxu0 0.0
      %513 = vmatprep.subr.mxu0 0.0
      %514 = vmatpush2.msra.mxu0 0.0
      %515 = vmatprep.subr.mxu0 0.0
      %516 = vmatpush2.msra.mxu0 0.0
      %517 = vmatprep.subr.mxu0 0.0
      %518 = vmatpush2.msra.mxu0 0.0
      %519 = vmatprep.subr.mxu0 0.0
      %520 = vmatpush2.msra.mxu0 0.0
      %521 = vmatprep.subr.mxu0 0.0
      %522 = vmatpush2.msra.mxu0 0.0
      %523 = vmatprep.subr.mxu0 0.0
      %524 = vmatpush2.msra.mxu0 0.0
      %525 = vmatprep.subr.mxu0 0.0
      %526 = vmatpush2.msra.mxu0 0.0
      %527 = vmatprep.subr.mxu0 0.0
      %528 = vmatpush2.msra.mxu0 0.0
      %529 = vmatprep.subr.mxu0 0.0
      %530 = vmatpush2.msra.mxu0 0.0
      %531 = vmatprep.subr.mxu0 0.0
      %532 = vmatpush2.msra.mxu0 0.0
      %533 = vmatprep.subr.mxu0 0.0
      %534 = vmatpush2.msra.mxu0 0.0
      %535 = vmatprep.subr.mxu0 0.0
      %536 = vmatpush2.msra.mxu0 0.0
      %537 = vmatprep.mubr.f32.mxu0 0.0
      %538 = vmatmul.mubr.f32.gmra.mxu0 %v386
      %v539 = vpop.f32.mrf.mxu0
      %v540 = vadd.f32 0.0, %v539
      %v541 = vpop.f32.mrf.mxu0
      %542 = vmatprep.mubr.f32.mxu0 0.0
      %543 = vmatmul.mubr.f32.gmra.mxu0 %v389
      %v544 = vpop.f32.mrf.mxu0
      %v545 = vadd.f32 0.0, %v544
      %v546 = vpop.f32.mrf.mxu0
      %547 = vmatprep.mubr.f32.mxu0 0.0
      %548 = vmatmul.mubr.f32.gmra.mxu0 %v392
      %v549 = vpop.f32.mrf.mxu0
      %v550 = vadd.f32 0.0, %v549
      %v551 = vpop.f32.mrf.mxu0
      %552 = vmatprep.mubr.f32.mxu0 0.0
      %553 = vmatmul.mubr.f32.gmra.mxu0 %v395
      %v554 = vpop.f32.mrf.mxu0
      %v555 = vadd.f32 0.0, %v554
      %v556 = vpop.f32.mrf.mxu0
      %557 = vmatprep.mubr.f32.mxu0 0.0
      %558 = vmatmul.mubr.f32.gmra.mxu0 %v398
      %v559 = vpop.f32.mrf.mxu0
      %v560 = vadd.f32 0.0, %v559
      %v561 = vpop.f32.mrf.mxu0
      %562 = vmatprep.mubr.f32.mxu0 0.0
      %563 = vmatmul.mubr.f32.gmra.mxu0 %v401
      %v564 = vpop.f32.mrf.mxu0
      %v565 = vadd.f32 0.0, %v564
      %v566 = vpop.f32.mrf.mxu0
      %567 = vmatprep.mubr.f32.mxu0 0.0
      %568 = vmatmul.mubr.f32.gmra.mxu0 %v404
      %v569 = vpop.f32.mrf.mxu0
      %v570 = vadd.f32 0.0, %v569
      %v571 = vpop.f32.mrf.mxu0
      %572 = vmatprep.mubr.f32.mxu0 0.0
      %573 = vmatmul.mubr.f32.gmra.mxu0 %v407
      %v574 = vpop.f32.mrf.mxu0
      %v575 = vadd.f32 0.0, %v574
      %v576 = vpop.f32.mrf.mxu0
      %577 = vmatprep.mubr.f32.mxu0 0.0
      %578 = vmatmul.mubr.f32.gmra.mxu0 %v410
      %v579 = vpop.f32.mrf.mxu0
      %v580 = vadd.f32 0.0, %v579
      %v581 = vpop.f32.mrf.mxu0
      %582 = vmatprep.mubr.f32.mxu0 0.0
      %583 = vmatmul.mubr.f32.gmra.mxu0 %v413
      %v584 = vpop.f32.mrf.mxu0
      %v585 = vadd.f32 0.0, %v584
      %v586 = vpop.f32.mrf.mxu0
      %587 = vmatprep.mubr.f32.mxu0 0.0
      %588 = vmatmul.mubr.f32.gmra.mxu0 %v416
      %v589 = vpop.f32.mrf.mxu0
      %v590 = vadd.f32 0.0, %v589
      %v591 = vpop.f32.mrf.mxu0
      %592 = vmatprep.mubr.f32.mxu0 0.0
      %593 = vmatmul.mubr.f32.gmra.mxu0 %v419
      %v594 = vpop.f32.mrf.mxu0
      %v595 = vadd.f32 0.0, %v594
      %v596 = vpop.f32.mrf.mxu0
      %597 = vmatprep.mubr.f32.mxu0 0.0
      %598 = vmatmul.mubr.f32.gmra.mxu0 %v422
      %v599 = vpop.f32.mrf.mxu0
      %v600 = vadd.f32 0.0, %v599
      %v601 = vpop.f32.mrf.mxu0
      %602 = vmatprep.mubr.f32.mxu0 0.0
      %603 = vmatmul.mubr.f32.gmra.mxu0 %v425
      %v604 = vpop.f32.mrf.mxu0
      %v605 = vadd.f32 0.0, %v604
      %v606 = vpop.f32.mrf.mxu0
      %607 = vmatprep.mubr.f32.mxu0 0.0
      %608 = vmatmul.mubr.f32.gmra.mxu0 %v428
      %v609 = vpop.f32.mrf.mxu0
      %v610 = vadd.f32 0.0, %v609
      %v611 = vpop.f32.mrf.mxu0
      %612 = vmatprep.mubr.f32.mxu0 0.0
      %613 = vmatmul.mubr.f32.gmra.mxu0 %v431
      %v614 = vpop.f32.mrf.mxu0
      %v615 = vadd.f32 0.0, %v614
      %v616 = vpop.f32.mrf.mxu0
      %617 = vmatprep.mubr.f32.mxu0 0.0
      %618 = vmatmul.mubr.f32.gmra.mxu0 %v434
      %v619 = vpop.f32.mrf.mxu0
      %v620 = vadd.f32 0.0, %v619
      %v621 = vpop.f32.mrf.mxu0
      %622 = vmatprep.mubr.f32.mxu0 0.0
      %623 = vmatmul.mubr.f32.gmra.mxu0 %v437
      %v624 = vpop.f32.mrf.mxu0
      %v625 = vadd.f32 0.0, %v624
      %v626 = vpop.f32.mrf.mxu0
      %627 = vmatprep.mubr.f32.mxu0 0.0
      %628 = vmatmul.mubr.f32.gmra.mxu0 %v440
      %v629 = vpop.f32.mrf.mxu0
      %v630 = vadd.f32 0.0, %v629
      %v631 = vpop.f32.mrf.mxu0
      %632 = vmatprep.mubr.f32.mxu0 0.0
      %633 = vmatmul.mubr.f32.gmra.mxu0 %v443
      %v634 = vpop.f32.mrf.mxu0
      %v635 = vadd.f32 0.0, %v634
      %v636 = vpop.f32.mrf.mxu0
      %637 = vmatprep.mubr.f32.mxu0 0.0
      %638 = vmatmul.mubr.f32.gmra.mxu0 %v446
      %v639 = vpop.f32.mrf.mxu0
      %v640 = vadd.f32 0.0, %v639
      %v641 = vpop.f32.mrf.mxu0
      %642 = vmatprep.mubr.f32.mxu0 0.0
      %643 = vmatmul.mubr.f32.gmra.mxu0 %v449
      %v644 = vpop.f32.mrf.mxu0
      %v645 = vadd.f32 0.0, %v644
      %v646 = vpop.f32.mrf.mxu0
      %647 = vmatprep.mubr.f32.mxu0 0.0
      %648 = vmatmul.mubr.f32.gmra.mxu0 %v452
      %v649 = vpop.f32.mrf.mxu0
      %v650 = vadd.f32 0.0, %v649
      %v651 = vpop.f32.mrf.mxu0
      %652 = vmatprep.mubr.f32.mxu0 0.0
      %653 = vmatmul.mubr.f32.gmra.mxu0 %v455
      %v654 = vpop.f32.mrf.mxu0
      %v655 = vadd.f32 0.0, %v654
      %v656 = vpop.f32.mrf.mxu0
      %657 = vmatprep.mubr.f32.mxu0 0.0
      %658 = vmatmul.mubr.f32.gmra.mxu0 %v458
      %v659 = vpop.f32.mrf.mxu0
      %v660 = vadd.f32 0.0, %v659
      %v661 = vpop.f32.mrf.mxu0
      %662 = vmatprep.mubr.f32.mxu0 0.0
      %663 = vmatmul.mubr.f32.gmra.mxu0 %v461
      %v664 = vpop.f32.mrf.mxu0
      %v665 = vadd.f32 0.0, %v664
      %v666 = vpop.f32.mrf.mxu0
      %667 = vmatprep.mubr.f32.mxu0 0.0
      %668 = vmatmul.mubr.f32.gmra.mxu0 %v464
      %v669 = vpop.f32.mrf.mxu0
      %v670 = vadd.f32 0.0, %v669
      %v671 = vpop.f32.mrf.mxu0
      %672 = vmatprep.mubr.f32.mxu0 0.0
      %673 = vmatmul.mubr.f32.gmra.mxu0 %v467
      %v674 = vpop.f32.mrf.mxu0
      %v675 = vadd.f32 0.0, %v674
      %v676 = vpop.f32.mrf.mxu0
      %677 = vdwg.mxu0
      %vm678 = vcmask 64512
      %v680 = vsel %vm678, %v328, 0
      %v683 = vsel %vm678, %v329, 0
      %v686 = vsel %vm678, %v330, 0
      %v689 = vsel %vm678, %v331, 0
      %v692 = vsel %vm678, %v332, 0
      %v695 = vsel %vm678, %v333, 0
      %v698 = vsel %vm678, %v334, 0
      %v701 = vsel %vm678, %v335, 0
      %v704 = vsel %vm678, %v336, 0
      %v707 = vsel %vm678, %v337, 0
      %v710 = vsel %vm678, %v338, 0
      %v713 = vsel %vm678, %v339, 0
      %v716 = vsel %vm678, %v340, 0
      %v719 = vsel %vm678, %v341, 0
      %v722 = vsel %vm678, %v342, 0
      %v725 = vsel %vm678, %v343, 0
      %v728 = vsel %vm678, %v344, 0
      %v731 = vsel %vm678, %v345, 0
      %v734 = vsel %vm678, %v346, 0
      %v737 = vsel %vm678, %v347, 0
      %v740 = vsel %vm678, %v348, 0
      %v743 = vsel %vm678, %v349, 0
      %v746 = vsel %vm678, %v350, 0
      %v749 = vsel %vm678, %v351, 0
      %v752 = vsel %vm678, %v352, 0
      %v755 = vsel %vm678, %v353, 0
      %v758 = vsel %vm678, %v354, 0
      %v761 = vsel %vm678, %v355, 0
      %763 = vmatprep.subr.mxu0 0.0
      %764 = vmatpush1.msra.mxu0 0.0
      %765 = vmatprep.subr.mxu0 0.0
      %766 = vmatpush1.msra.mxu0 0.0
      %767 = vmatprep.subr.mxu0 0.0
      %768 = vmatpush1.msra.mxu0 0.0
      %769 = vmatprep.subr.mxu0 0.0
      %770 = vmatpush1.msra.mxu0 0.0
      %771 = vmatprep.subr.mxu0 0.0
      %772 = vmatpush1.msra.mxu0 0.0
      %773 = vmatprep.subr.mxu0 0.0
      %774 = vmatpush1.msra.mxu0 0.0
      %775 = vmatprep.subr.mxu0 0.0
      %776 = vmatpush1.msra.mxu0 0.0
      %777 = vmatprep.subr.mxu0 0.0
      %778 = vmatpush1.msra.mxu0 0.0
      %779 = vmatprep.subr.mxu0 0.0
      %780 = vmatpush1.msra.mxu0 0.0
      %781 = vmatprep.subr.mxu0 0.0
      %782 = vmatpush1.msra.mxu0 0.0
      %783 = vmatprep.subr.mxu0 0.0
      %784 = vmatpush1.msra.mxu0 0.0
      %785 = vmatprep.subr.mxu0 0.0
      %786 = vmatpush1.msra.mxu0 0.0
      %787 = vmatprep.subr.mxu0 0.0
      %788 = vmatpush1.msra.mxu0 0.0
      %789 = vmatprep.subr.mxu0 0.0
      %790 = vmatpush1.msra.mxu0 0.0
      %791 = vmatprep.subr.mxu0 0.0
      %792 = vmatpush1.msra.mxu0 0.0
      %793 = vmatprep.subr.mxu0 0.0
      %794 = vmatpush1.msra.mxu0 %v299
      %795 = vmatprep.subr.mxu0 0.0
      %796 = vmatpush2.msra.mxu0 0.0
      %797 = vmatprep.subr.mxu0 0.0
      %798 = vmatpush2.msra.mxu0 0.0
      %799 = vmatprep.subr.mxu0 0.0
      %800 = vmatpush2.msra.mxu0 0.0
      %801 = vmatprep.subr.mxu0 0.0
      %802 = vmatpush2.msra.mxu0 0.0
      %803 = vmatprep.subr.mxu0 0.0
      %804 = vmatpush2.msra.mxu0 0.0
      %805 = vmatprep.subr.mxu0 0.0
      %806 = vmatpush2.msra.mxu0 0.0
      %807 = vmatprep.subr.mxu0 0.0
      %808 = vmatpush2.msra.mxu0 0.0
      %809 = vmatprep.subr.mxu0 0.0
      %810 = vmatpush2.msra.mxu0 0.0
      %811 = vmatprep.subr.mxu0 0.0
      %812 = vmatpush2.msra.mxu0 0.0
      %813 = vmatprep.subr.mxu0 0.0
      %814 = vmatpush2.msra.mxu0 0.0
      %815 = vmatprep.subr.mxu0 0.0
      %816 = vmatpush2.msra.mxu0 0.0
      %817 = vmatprep.subr.mxu0 0.0
      %818 = vmatpush2.msra.mxu0 0.0
      %819 = vmatprep.subr.mxu0 0.0
      %820 = vmatpush2.msra.mxu0 0.0
      %821 = vmatprep.subr.mxu0 0.0
      %822 = vmatpush2.msra.mxu0 0.0
      %823 = vmatprep.subr.mxu0 0.0
      %824 = vmatpush2.msra.mxu0 0.0
      %825 = vmatprep.subr.mxu0 0.0
      %826 = vmatpush2.msra.mxu0 0.0
      %827 = vmatprep.mubr.f32.mxu0 0.0
      %828 = vmatmul.mubr.f32.gmra.mxu0 %v680
      %v829 = vpop.f32.mrf.mxu0
      %v830 = vadd.f32 %v540, %v829
      %v831 = vpop.f32.mrf.mxu0
      %832 = vmatprep.mubr.f32.mxu0 0.0
      %833 = vmatmul.mubr.f32.gmra.mxu0 %v683
      %v834 = vpop.f32.mrf.mxu0
      %v835 = vadd.f32 %v545, %v834
      %v836 = vpop.f32.mrf.mxu0
      %837 = vmatprep.mubr.f32.mxu0 0.0
      %838 = vmatmul.mubr.f32.gmra.mxu0 %v686
      %v839 = vpop.f32.mrf.mxu0
      %v840 = vadd.f32 %v550, %v839
      %v841 = vpop.f32.mrf.mxu0
      %842 = vmatprep.mubr.f32.mxu0 0.0
      %843 = vmatmul.mubr.f32.gmra.mxu0 %v689
      %v844 = vpop.f32.mrf.mxu0
      %v845 = vadd.f32 %v555, %v844
      %v846 = vpop.f32.mrf.mxu0
      %847 = vmatprep.mubr.f32.mxu0 0.0
      %848 = vmatmul.mubr.f32.gmra.mxu0 %v692
      %v849 = vpop.f32.mrf.mxu0
      %v850 = vadd.f32 %v560, %v849
      %v851 = vpop.f32.mrf.mxu0
      %852 = vmatprep.mubr.f32.mxu0 0.0
      %853 = vmatmul.mubr.f32.gmra.mxu0 %v695
      %v854 = vpop.f32.mrf.mxu0
      %v855 = vadd.f32 %v565, %v854
      %v856 = vpop.f32.mrf.mxu0
      %857 = vmatprep.mubr.f32.mxu0 0.0
      %858 = vmatmul.mubr.f32.gmra.mxu0 %v698
      %v859 = vpop.f32.mrf.mxu0
      %v860 = vadd.f32 %v570, %v859
      %v861 = vpop.f32.mrf.mxu0
      %862 = vmatprep.mubr.f32.mxu0 0.0
      %863 = vmatmul.mubr.f32.gmra.mxu0 %v701
      %v864 = vpop.f32.mrf.mxu0
      %v865 = vadd.f32 %v575, %v864
      %v866 = vpop.f32.mrf.mxu0
      %867 = vmatprep.mubr.f32.mxu0 0.0
      %868 = vmatmul.mubr.f32.gmra.mxu0 %v704
      %v869 = vpop.f32.mrf.mxu0
      %v870 = vadd.f32 %v580, %v869
      %v871 = vpop.f32.mrf.mxu0
      %872 = vmatprep.mubr.f32.mxu0 0.0
      %873 = vmatmul.mubr.f32.gmra.mxu0 %v707
      %v874 = vpop.f32.mrf.mxu0
      %v875 = vadd.f32 %v585, %v874
      %v876 = vpop.f32.mrf.mxu0
      %877 = vmatprep.mubr.f32.mxu0 0.0
      %878 = vmatmul.mubr.f32.gmra.mxu0 %v710
      %v879 = vpop.f32.mrf.mxu0
      %v880 = vadd.f32 %v590, %v879
      %v881 = vpop.f32.mrf.mxu0
      %882 = vmatprep.mubr.f32.mxu0 0.0
      %883 = vmatmul.mubr.f32.gmra.mxu0 %v713
      %v884 = vpop.f32.mrf.mxu0
      %v885 = vadd.f32 %v595, %v884
      %v886 = vpop.f32.mrf.mxu0
      %887 = vmatprep.mubr.f32.mxu0 0.0
      %888 = vmatmul.mubr.f32.gmra.mxu0 %v716
      %v889 = vpop.f32.mrf.mxu0
      %v890 = vadd.f32 %v600, %v889
      %v891 = vpop.f32.mrf.mxu0
      %892 = vmatprep.mubr.f32.mxu0 0.0
      %893 = vmatmul.mubr.f32.gmra.mxu0 %v719
      %v894 = vpop.f32.mrf.mxu0
      %v895 = vadd.f32 %v605, %v894
      %v896 = vpop.f32.mrf.mxu0
      %897 = vmatprep.mubr.f32.mxu0 0.0
      %898 = vmatmul.mubr.f32.gmra.mxu0 %v722
      %v899 = vpop.f32.mrf.mxu0
      %v900 = vadd.f32 %v610, %v899
      %v901 = vpop.f32.mrf.mxu0
      %902 = vmatprep.mubr.f32.mxu0 0.0
      %903 = vmatmul.mubr.f32.gmra.mxu0 %v725
      %v904 = vpop.f32.mrf.mxu0
      %v905 = vadd.f32 %v615, %v904
      %v906 = vpop.f32.mrf.mxu0
      %907 = vmatprep.mubr.f32.mxu0 0.0
      %908 = vmatmul.mubr.f32.gmra.mxu0 %v728
      %v909 = vpop.f32.mrf.mxu0
      %v910 = vadd.f32 %v620, %v909
      %v911 = vpop.f32.mrf.mxu0
      %912 = vmatprep.mubr.f32.mxu0 0.0
      %913 = vmatmul.mubr.f32.gmra.mxu0 %v731
      %v914 = vpop.f32.mrf.mxu0
      %v915 = vadd.f32 %v625, %v914
      %v916 = vpop.f32.mrf.mxu0
      %917 = vmatprep.mubr.f32.mxu0 0.0
      %918 = vmatmul.mubr.f32.gmra.mxu0 %v734
      %v919 = vpop.f32.mrf.mxu0
      %v920 = vadd.f32 %v630, %v919
      %v921 = vpop.f32.mrf.mxu0
      %922 = vmatprep.mubr.f32.mxu0 0.0
      %923 = vmatmul.mubr.f32.gmra.mxu0 %v737
      %v924 = vpop.f32.mrf.mxu0
      %v925 = vadd.f32 %v635, %v924
      %v926 = vpop.f32.mrf.mxu0
      %927 = vmatprep.mubr.f32.mxu0 0.0
      %928 = vmatmul.mubr.f32.gmra.mxu0 %v740
      %v929 = vpop.f32.mrf.mxu0
      %v930 = vadd.f32 %v640, %v929
      %v931 = vpop.f32.mrf.mxu0
      %932 = vmatprep.mubr.f32.mxu0 0.0
      %933 = vmatmul.mubr.f32.gmra.mxu0 %v743
      %v934 = vpop.f32.mrf.mxu0
      %v935 = vadd.f32 %v645, %v934
      %v936 = vpop.f32.mrf.mxu0
      %937 = vmatprep.mubr.f32.mxu0 0.0
      %938 = vmatmul.mubr.f32.gmra.mxu0 %v746
      %v939 = vpop.f32.mrf.mxu0
      %v940 = vadd.f32 %v650, %v939
      %v941 = vpop.f32.mrf.mxu0
      %942 = vmatprep.mubr.f32.mxu0 0.0
      %943 = vmatmul.mubr.f32.gmra.mxu0 %v749
      %v944 = vpop.f32.mrf.mxu0
      %v945 = vadd.f32 %v655, %v944
      %v946 = vpop.f32.mrf.mxu0
      %947 = vmatprep.mubr.f32.mxu0 0.0
      %948 = vmatmul.mubr.f32.gmra.mxu0 %v752
      %v949 = vpop.f32.mrf.mxu0
      %v950 = vadd.f32 %v660, %v949
      %v951 = vpop.f32.mrf.mxu0
      %952 = vmatprep.mubr.f32.mxu0 0.0
      %953 = vmatmul.mubr.f32.gmra.mxu0 %v755
      %v954 = vpop.f32.mrf.mxu0
      %v955 = vadd.f32 %v665, %v954
      %v956 = vpop.f32.mrf.mxu0
      %957 = vmatprep.mubr.f32.mxu0 0.0
      %958 = vmatmul.mubr.f32.gmra.mxu0 %v758
      %v959 = vpop.f32.mrf.mxu0
      %v960 = vadd.f32 %v670, %v959
      %v961 = vpop.f32.mrf.mxu0
      %962 = vmatprep.mubr.f32.mxu0 0.0
      %963 = vmatmul.mubr.f32.gmra.mxu0 %v761
      %v964 = vpop.f32.mrf.mxu0
      %v965 = vadd.f32 %v675, %v964
      %v966 = vpop.f32.mrf.mxu0
      %967 = vdwg.mxu0
      %v968 = vld [vmem:[%s288 + $0x1] sm:$0xff]
      %v969 = vld [vmem:[%s288 + $0x9] sm:$0xff]
      %v970 = vld [vmem:[%s288 + $0x11] sm:$0xff]
      %v971 = vld [vmem:[%s288 + $0x19] sm:$0xff]
      %v972 = vld [vmem:[%s288 + $0x21] sm:$0xff]
      %v973 = vld [vmem:[%s288 + $0x29] sm:$0xff]
      %v974 = vld [vmem:[%s288 + $0x31] sm:$0xff]
      %v975 = vld [vmem:[%s288 + $0x39] sm:$0xff]
      %v976 = vld [vmem:[%s288 + $0x41] sm:$0xff]
      %v977 = vld [vmem:[%s288 + $0x49] sm:$0xff]
      %v978 = vld [vmem:[%s288 + $0x51] sm:$0xff]
      %v979 = vld [vmem:[%s288 + $0x59] sm:$0xff]
      %v980 = vld [vmem:[%s288 + $0x61] sm:$0xff]
      %v981 = vld [vmem:[%s288 + $0x69] sm:$0xff]
      %v982 = vld [vmem:[%s288 + $0x71] sm:$0xff]
      %v983 = vld [vmem:[%s288 + $0x79] sm:$0xff]
      %v984 = vld [vmem:[%s288 + $0x81] sm:$0xff]
      %v985 = vld [vmem:[%s288 + $0x89] sm:$0xff]
      %v986 = vld [vmem:[%s288 + $0x91] sm:$0xff]
      %v987 = vld [vmem:[%s288 + $0x99] sm:$0xff]
      %v988 = vld [vmem:[%s288 + $0xa1] sm:$0xff]
      %v989 = vld [vmem:[%s288 + $0xa9] sm:$0xff]
      %v990 = vld [vmem:[%s288 + $0xb1] sm:$0xff]
      %v991 = vld [vmem:[%s288 + $0xb9] sm:$0xff]
      %v992 = vld [vmem:[%s288 + $0xc1] sm:$0xff]
      %v993 = vld [vmem:[%s288 + $0xc9] sm:$0xff]
      %v994 = vld [vmem:[%s288 + $0xd1] sm:$0xff]
      %v995 = vld [vmem:[%s288 + $0xd9] sm:$0x3f]
      %v996 = vld [vmem:[%s293 + $0x1] sm:$0xff]
      %v997 = vld [vmem:[%s293 + $0x9] sm:$0xff]
      %v998 = vld [vmem:[%s293 + $0x11] sm:$0xff]
      %v999 = vld [vmem:[%s293 + $0x19] sm:$0xff]
      %v1000 = vld [vmem:[%s293 + $0x21] sm:$0xff]
      %v1001 = vld [vmem:[%s293 + $0x29] sm:$0xff]
      %v1002 = vld [vmem:[%s293 + $0x31] sm:$0xff]
      %v1003 = vld [vmem:[%s293 + $0x39] sm:$0xff]
      %v1004 = vld [vmem:[%s293 + $0x41] sm:$0xff]
      %v1005 = vld [vmem:[%s293 + $0x49] sm:$0xff]
      %v1006 = vld [vmem:[%s293 + $0x51] sm:$0xff]
      %v1007 = vld [vmem:[%s293 + $0x59] sm:$0xff]
      %v1008 = vld [vmem:[%s293 + $0x61] sm:$0xff]
      %v1009 = vld [vmem:[%s293 + $0x69] sm:$0xff]
      %v1010 = vld [vmem:[%s293 + $0x71] sm:$0xff]
      %v1011 = vld [vmem:[%s293 + $0x79] sm:$0xff]
      %v1012 = vld [vmem:[%s293 + $0x81] sm:$0xff]
      %v1013 = vld [vmem:[%s293 + $0x89] sm:$0xff]
      %v1014 = vld [vmem:[%s293 + $0x91] sm:$0xff]
      %v1015 = vld [vmem:[%s293 + $0x99] sm:$0xff]
      %v1016 = vld [vmem:[%s293 + $0xa1] sm:$0xff]
      %v1017 = vld [vmem:[%s293 + $0xa9] sm:$0xff]
      %v1018 = vld [vmem:[%s293 + $0xb1] sm:$0xff]
      %v1019 = vld [vmem:[%s293 + $0xb9] sm:$0xff]
      %v1020 = vld [vmem:[%s293 + $0xc1] sm:$0xff]
      %v1021 = vld [vmem:[%s293 + $0xc9] sm:$0xff]
      %v1022 = vld [vmem:[%s293 + $0xd1] sm:$0xff]
      %v1023 = vld [vmem:[%s293 + $0xd9] sm:$0x3f]
      %v1025 = vsel %vm384, %v996, 0
      %v1028 = vsel %vm384, %v997, 0
      %v1031 = vsel %vm384, %v998, 0
      %v1034 = vsel %vm384, %v999, 0
      %v1037 = vsel %vm384, %v1000, 0
      %v1040 = vsel %vm384, %v1001, 0
      %v1043 = vsel %vm384, %v1002, 0
      %v1046 = vsel %vm384, %v1003, 0
      %v1049 = vsel %vm384, %v1004, 0
      %v1052 = vsel %vm384, %v1005, 0
      %v1055 = vsel %vm384, %v1006, 0
      %v1058 = vsel %vm384, %v1007, 0
      %v1061 = vsel %vm384, %v1008, 0
      %v1064 = vsel %vm384, %v1009, 0
      %v1067 = vsel %vm384, %v1010, 0
      %v1070 = vsel %vm384, %v1011, 0
      %v1073 = vsel %vm384, %v1012, 0
      %v1076 = vsel %vm384, %v1013, 0
      %v1079 = vsel %vm384, %v1014, 0
      %v1082 = vsel %vm384, %v1015, 0
      %v1085 = vsel %vm384, %v1016, 0
      %v1088 = vsel %vm384, %v1017, 0
      %v1091 = vsel %vm384, %v1018, 0
      %v1094 = vsel %vm384, %v1019, 0
      %v1097 = vsel %vm384, %v1020, 0
      %v1100 = vsel %vm384, %v1021, 0
      %v1103 = vsel %vm384, %v1022, 0
      %v1106 = vsel %vm384, %v1023, 0
      %v1109 = vsel %vm469, %v309, 0
      %1111 = vmatprep.subr.mxu0 0.0
      %1112 = vmatpush1.msra.mxu0 0.0
      %1113 = vmatprep.subr.mxu0 0.0
      %1114 = vmatpush1.msra.mxu0 0.0
      %1115 = vmatprep.subr.mxu0 0.0
      %1116 = vmatpush1.msra.mxu0 0.0
      %1117 = vmatprep.subr.mxu0 0.0
      %1118 = vmatpush1.msra.mxu0 0.0
      %1119 = vmatprep.subr.mxu0 0.0
      %1120 = vmatpush1.msra.mxu0 0.0
      %1121 = vmatprep.subr.mxu0 0.0
      %1122 = vmatpush1.msra.mxu0 0.0
      %1123 = vmatprep.subr.mxu0 0.0
      %1124 = vmatpush1.msra.mxu0 0.0
      %1125 = vmatprep.subr.mxu0 0.0
      %1126 = vmatpush1.msra.mxu0 0.0
      %1127 = vmatprep.subr.mxu0 0.0
      %1128 = vmatpush1.msra.mxu0 0.0
      %1129 = vmatprep.subr.mxu0 0.0
      %1130 = vmatpush1.msra.mxu0 0.0
      %1131 = vmatprep.subr.mxu0 0.0
      %1132 = vmatpush1.msra.mxu0 0.0
      %1133 = vmatprep.subr.mxu0 0.0
      %1134 = vmatpush1.msra.mxu0 0.0
      %1135 = vmatprep.subr.mxu0 0.0
      %1136 = vmatpush1.msra.mxu0 0.0
      %1137 = vmatprep.subr.mxu0 0.0
      %1138 = vmatpush1.msra.mxu0 0.0
      %1139 = vmatprep.subr.mxu0 0.0
      %1140 = vmatpush1.msra.mxu0 0.0
      %1141 = vmatprep.subr.mxu0 0.0
      %1142 = vmatpush1.msra.mxu0 %v1109
      %1143 = vmatprep.subr.mxu0 0.0
      %1144 = vmatpush2.msra.mxu0 0.0
      %1145 = vmatprep.subr.mxu0 0.0
      %1146 = vmatpush2.msra.mxu0 0.0
      %1147 = vmatprep.subr.mxu0 0.0
      %1148 = vmatpush2.msra.mxu0 0.0
      %1149 = vmatprep.subr.mxu0 0.0
      %1150 = vmatpush2.msra.mxu0 0.0
      %1151 = vmatprep.subr.mxu0 0.0
      %1152 = vmatpush2.msra.mxu0 0.0
      %1153 = vmatprep.subr.mxu0 0.0
      %1154 = vmatpush2.msra.mxu0 0.0
      %1155 = vmatprep.subr.mxu0 0.0
      %1156 = vmatpush2.msra.mxu0 0.0
      %1157 = vmatprep.subr.mxu0 0.0
      %1158 = vmatpush2.msra.mxu0 0.0
      %1159 = vmatprep.subr.mxu0 0.0
      %1160 = vmatpush2.msra.mxu0 0.0
      %1161 = vmatprep.subr.mxu0 0.0
      %1162 = vmatpush2.msra.mxu0 0.0
      %1163 = vmatprep.subr.mxu0 0.0
      %1164 = vmatpush2.msra.mxu0 0.0
      %1165 = vmatprep.subr.mxu0 0.0
      %1166 = vmatpush2.msra.mxu0 0.0
      %1167 = vmatprep.subr.mxu0 0.0
      %1168 = vmatpush2.msra.mxu0 0.0
      %1169 = vmatprep.subr.mxu0 0.0
      %1170 = vmatpush2.msra.mxu0 0.0
      %1171 = vmatprep.subr.mxu0 0.0
      %1172 = vmatpush2.msra.mxu0 0.0
      %1173 = vmatprep.subr.mxu0 0.0
      %1174 = vmatpush2.msra.mxu0 0.0
      %1175 = vmatprep.mubr.f32.mxu0 0.0
      %1176 = vmatmul.mubr.f32.gmra.mxu0 %v1025
      %v1177 = vpop.f32.mrf.mxu0
      %v1178 = vadd.f32 0.0, %v1177
      %v1179 = vpop.f32.mrf.mxu0
      %1180 = vmatprep.mubr.f32.mxu0 0.0
      %1181 = vmatmul.mubr.f32.gmra.mxu0 %v1028
      %v1182 = vpop.f32.mrf.mxu0
      %v1183 = vadd.f32 0.0, %v1182
      %v1184 = vpop.f32.mrf.mxu0
      %1185 = vmatprep.mubr.f32.mxu0 0.0
      %1186 = vmatmul.mubr.f32.gmra.mxu0 %v1031
      %v1187 = vpop.f32.mrf.mxu0
      %v1188 = vadd.f32 0.0, %v1187
      %v1189 = vpop.f32.mrf.mxu0
      %1190 = vmatprep.mubr.f32.mxu0 0.0
      %1191 = vmatmul.mubr.f32.gmra.mxu0 %v1034
      %v1192 = vpop.f32.mrf.mxu0
      %v1193 = vadd.f32 0.0, %v1192
      %v1194 = vpop.f32.mrf.mxu0
      %1195 = vmatprep.mubr.f32.mxu0 0.0
      %1196 = vmatmul.mubr.f32.gmra.mxu0 %v1037
      %v1197 = vpop.f32.mrf.mxu0
      %v1198 = vadd.f32 0.0, %v1197
      %v1199 = vpop.f32.mrf.mxu0
      %1200 = vmatprep.mubr.f32.mxu0 0.0
      %1201 = vmatmul.mubr.f32.gmra.mxu0 %v1040
      %v1202 = vpop.f32.mrf.mxu0
      %v1203 = vadd.f32 0.0, %v1202
      %v1204 = vpop.f32.mrf.mxu0
      %1205 = vmatprep.mubr.f32.mxu0 0.0
      %1206 = vmatmul.mubr.f32.gmra.mxu0 %v1043
      %v1207 = vpop.f32.mrf.mxu0
      %v1208 = vadd.f32 0.0, %v1207
      %v1209 = vpop.f32.mrf.mxu0
      %1210 = vmatprep.mubr.f32.mxu0 0.0
      %1211 = vmatmul.mubr.f32.gmra.mxu0 %v1046
      %v1212 = vpop.f32.mrf.mxu0
      %v1213 = vadd.f32 0.0, %v1212
      %v1214 = vpop.f32.mrf.mxu0
      %1215 = vmatprep.mubr.f32.mxu0 0.0
      %1216 = vmatmul.mubr.f32.gmra.mxu0 %v1049
      %v1217 = vpop.f32.mrf.mxu0
      %v1218 = vadd.f32 0.0, %v1217
      %v1219 = vpop.f32.mrf.mxu0
      %1220 = vmatprep.mubr.f32.mxu0 0.0
      %1221 = vmatmul.mubr.f32.gmra.mxu0 %v1052
      %v1222 = vpop.f32.mrf.mxu0
      %v1223 = vadd.f32 0.0, %v1222
      %v1224 = vpop.f32.mrf.mxu0
      %1225 = vmatprep.mubr.f32.mxu0 0.0
      %1226 = vmatmul.mubr.f32.gmra.mxu0 %v1055
      %v1227 = vpop.f32.mrf.mxu0
      %v1228 = vadd.f32 0.0, %v1227
      %v1229 = vpop.f32.mrf.mxu0
      %1230 = vmatprep.mubr.f32.mxu0 0.0
      %1231 = vmatmul.mubr.f32.gmra.mxu0 %v1058
      %v1232 = vpop.f32.mrf.mxu0
      %v1233 = vadd.f32 0.0, %v1232
      %v1234 = vpop.f32.mrf.mxu0
      %1235 = vmatprep.mubr.f32.mxu0 0.0
      %1236 = vmatmul.mubr.f32.gmra.mxu0 %v1061
      %v1237 = vpop.f32.mrf.mxu0
      %v1238 = vadd.f32 0.0, %v1237
      %v1239 = vpop.f32.mrf.mxu0
      %1240 = vmatprep.mubr.f32.mxu0 0.0
      %1241 = vmatmul.mubr.f32.gmra.mxu0 %v1064
      %v1242 = vpop.f32.mrf.mxu0
      %v1243 = vadd.f32 0.0, %v1242
      %v1244 = vpop.f32.mrf.mxu0
      %1245 = vmatprep.mubr.f32.mxu0 0.0
      %1246 = vmatmul.mubr.f32.gmra.mxu0 %v1067
      %v1247 = vpop.f32.mrf.mxu0
      %v1248 = vadd.f32 0.0, %v1247
      %v1249 = vpop.f32.mrf.mxu0
      %1250 = vmatprep.mubr.f32.mxu0 0.0
      %1251 = vmatmul.mubr.f32.gmra.mxu0 %v1070
      %v1252 = vpop.f32.mrf.mxu0
      %v1253 = vadd.f32 0.0, %v1252
      %v1254 = vpop.f32.mrf.mxu0
      %1255 = vmatprep.mubr.f32.mxu0 0.0
      %1256 = vmatmul.mubr.f32.gmra.mxu0 %v1073
      %v1257 = vpop.f32.mrf.mxu0
      %v1258 = vadd.f32 0.0, %v1257
      %v1259 = vpop.f32.mrf.mxu0
      %1260 = vmatprep.mubr.f32.mxu0 0.0
      %1261 = vmatmul.mubr.f32.gmra.mxu0 %v1076
      %v1262 = vpop.f32.mrf.mxu0
      %v1263 = vadd.f32 0.0, %v1262
      %v1264 = vpop.f32.mrf.mxu0
      %1265 = vmatprep.mubr.f32.mxu0 0.0
      %1266 = vmatmul.mubr.f32.gmra.mxu0 %v1079
      %v1267 = vpop.f32.mrf.mxu0
      %v1268 = vadd.f32 0.0, %v1267
      %v1269 = vpop.f32.mrf.mxu0
      %1270 = vmatprep.mubr.f32.mxu0 0.0
      %1271 = vmatmul.mubr.f32.gmra.mxu0 %v1082
      %v1272 = vpop.f32.mrf.mxu0
      %v1273 = vadd.f32 0.0, %v1272
      %v1274 = vpop.f32.mrf.mxu0
      %1275 = vmatprep.mubr.f32.mxu0 0.0
      %1276 = vmatmul.mubr.f32.gmra.mxu0 %v1085
      %v1277 = vpop.f32.mrf.mxu0
      %v1278 = vadd.f32 0.0, %v1277
      %v1279 = vpop.f32.mrf.mxu0
      %1280 = vmatprep.mubr.f32.mxu0 0.0
      %1281 = vmatmul.mubr.f32.gmra.mxu0 %v1088
      %v1282 = vpop.f32.mrf.mxu0
      %v1283 = vadd.f32 0.0, %v1282
      %v1284 = vpop.f32.mrf.mxu0
      %1285 = vmatprep.mubr.f32.mxu0 0.0
      %1286 = vmatmul.mubr.f32.gmra.mxu0 %v1091
      %v1287 = vpop.f32.mrf.mxu0
      %v1288 = vadd.f32 0.0, %v1287
      %v1289 = vpop.f32.mrf.mxu0
      %1290 = vmatprep.mubr.f32.mxu0 0.0
      %1291 = vmatmul.mubr.f32.gmra.mxu0 %v1094
      %v1292 = vpop.f32.mrf.mxu0
      %v1293 = vadd.f32 0.0, %v1292
      %v1294 = vpop.f32.mrf.mxu0
      %1295 = vmatprep.mubr.f32.mxu0 0.0
      %1296 = vmatmul.mubr.f32.gmra.mxu0 %v1097
      %v1297 = vpop.f32.mrf.mxu0
      %v1298 = vadd.f32 0.0, %v1297
      %v1299 = vpop.f32.mrf.mxu0
      %1300 = vmatprep.mubr.f32.mxu0 0.0
      %1301 = vmatmul.mubr.f32.gmra.mxu0 %v1100
      %v1302 = vpop.f32.mrf.mxu0
      %v1303 = vadd.f32 0.0, %v1302
      %v1304 = vpop.f32.mrf.mxu0
      %1305 = vmatprep.mubr.f32.mxu0 0.0
      %1306 = vmatmul.mubr.f32.gmra.mxu0 %v1103
      %v1307 = vpop.f32.mrf.mxu0
      %v1308 = vadd.f32 0.0, %v1307
      %v1309 = vpop.f32.mrf.mxu0
      %1310 = vmatprep.mubr.f32.mxu0 0.0
      %1311 = vmatmul.mubr.f32.gmra.mxu0 %v1106
      %v1312 = vpop.f32.mrf.mxu0
      %v1313 = vadd.f32 0.0, %v1312
      %v1314 = vpop.f32.mrf.mxu0
      %1315 = vdwg.mxu0
      %v1317 = vsel %vm678, %v968, 0
      %v1320 = vsel %vm678, %v969, 0
      %v1323 = vsel %vm678, %v970, 0
      %v1326 = vsel %vm678, %v971, 0
      %v1329 = vsel %vm678, %v972, 0
      %v1332 = vsel %vm678, %v973, 0
      %v1335 = vsel %vm678, %v974, 0
      %v1338 = vsel %vm678, %v975, 0
      %v1341 = vsel %vm678, %v976, 0
      %v1344 = vsel %vm678, %v977, 0
      %v1347 = vsel %vm678, %v978, 0
      %v1350 = vsel %vm678, %v979, 0
      %v1353 = vsel %vm678, %v980, 0
      %v1356 = vsel %vm678, %v981, 0
      %v1359 = vsel %vm678, %v982, 0
      %v1362 = vsel %vm678, %v983, 0
      %v1365 = vsel %vm678, %v984, 0
      %v1368 = vsel %vm678, %v985, 0
      %v1371 = vsel %vm678, %v986, 0
      %v1374 = vsel %vm678, %v987, 0
      %v1377 = vsel %vm678, %v988, 0
      %v1380 = vsel %vm678, %v989, 0
      %v1383 = vsel %vm678, %v990, 0
      %v1386 = vsel %vm678, %v991, 0
      %v1389 = vsel %vm678, %v992, 0
      %v1392 = vsel %vm678, %v993, 0
      %v1395 = vsel %vm678, %v994, 0
      %v1398 = vsel %vm678, %v995, 0
      %1400 = vmatprep.subr.mxu0 0.0
      %1401 = vmatpush1.msra.mxu0 0.0
      %1402 = vmatprep.subr.mxu0 0.0
      %1403 = vmatpush1.msra.mxu0 0.0
      %1404 = vmatprep.subr.mxu0 0.0
      %1405 = vmatpush1.msra.mxu0 0.0
      %1406 = vmatprep.subr.mxu0 0.0
      %1407 = vmatpush1.msra.mxu0 0.0
      %1408 = vmatprep.subr.mxu0 0.0
      %1409 = vmatpush1.msra.mxu0 0.0
      %1410 = vmatprep.subr.mxu0 0.0
      %1411 = vmatpush1.msra.mxu0 0.0
      %1412 = vmatprep.subr.mxu0 0.0
      %1413 = vmatpush1.msra.mxu0 0.0
      %1414 = vmatprep.subr.mxu0 0.0
      %1415 = vmatpush1.msra.mxu0 0.0
      %1416 = vmatprep.subr.mxu0 0.0
      %1417 = vmatpush1.msra.mxu0 0.0
      %1418 = vmatprep.subr.mxu0 0.0
      %1419 = vmatpush1.msra.mxu0 0.0
      %1420 = vmatprep.subr.mxu0 0.0
      %1421 = vmatpush1.msra.mxu0 0.0
      %1422 = vmatprep.subr.mxu0 0.0
      %1423 = vmatpush1.msra.mxu0 0.0
      %1424 = vmatprep.subr.mxu0 0.0
      %1425 = vmatpush1.msra.mxu0 0.0
      %1426 = vmatprep.subr.mxu0 0.0
      %1427 = vmatpush1.msra.mxu0 0.0
      %1428 = vmatprep.subr.mxu0 0.0
      %1429 = vmatpush1.msra.mxu0 0.0
      %1430 = vmatprep.subr.mxu0 0.0
      %1431 = vmatpush1.msra.mxu0 %v300
      %1432 = vmatprep.subr.mxu0 0.0
      %1433 = vmatpush2.msra.mxu0 0.0
      %1434 = vmatprep.subr.mxu0 0.0
      %1435 = vmatpush2.msra.mxu0 0.0
      %1436 = vmatprep.subr.mxu0 0.0
      %1437 = vmatpush2.msra.mxu0 0.0
      %1438 = vmatprep.subr.mxu0 0.0
      %1439 = vmatpush2.msra.mxu0 0.0
      %1440 = vmatprep.subr.mxu0 0.0
      %1441 = vmatpush2.msra.mxu0 0.0
      %1442 = vmatprep.subr.mxu0 0.0
      %1443 = vmatpush2.msra.mxu0 0.0
      %1444 = vmatprep.subr.mxu0 0.0
      %1445 = vmatpush2.msra.mxu0 0.0
      %1446 = vmatprep.subr.mxu0 0.0
      %1447 = vmatpush2.msra.mxu0 0.0
      %1448 = vmatprep.subr.mxu0 0.0
      %1449 = vmatpush2.msra.mxu0 0.0
      %1450 = vmatprep.subr.mxu0 0.0
      %1451 = vmatpush2.msra.mxu0 0.0
      %1452 = vmatprep.subr.mxu0 0.0
      %1453 = vmatpush2.msra.mxu0 0.0
      %1454 = vmatprep.subr.mxu0 0.0
      %1455 = vmatpush2.msra.mxu0 0.0
      %1456 = vmatprep.subr.mxu0 0.0
      %1457 = vmatpush2.msra.mxu0 0.0
      %1458 = vmatprep.subr.mxu0 0.0
      %1459 = vmatpush2.msra.mxu0 0.0
      %1460 = vmatprep.subr.mxu0 0.0
      %1461 = vmatpush2.msra.mxu0 0.0
      %1462 = vmatprep.subr.mxu0 0.0
      %1463 = vmatpush2.msra.mxu0 0.0
      %1464 = vmatprep.mubr.f32.mxu0 0.0
      %1465 = vmatmul.mubr.f32.gmra.mxu0 %v1317
      %v1466 = vpop.f32.mrf.mxu0
      %v1467 = vadd.f32 %v1178, %v1466
      %v1468 = vpop.f32.mrf.mxu0
      %1469 = vmatprep.mubr.f32.mxu0 0.0
      %1470 = vmatmul.mubr.f32.gmra.mxu0 %v1320
      %v1471 = vpop.f32.mrf.mxu0
      %v1472 = vadd.f32 %v1183, %v1471
      %v1473 = vpop.f32.mrf.mxu0
      %1474 = vmatprep.mubr.f32.mxu0 0.0
      %1475 = vmatmul.mubr.f32.gmra.mxu0 %v1323
      %v1476 = vpop.f32.mrf.mxu0
      %v1477 = vadd.f32 %v1188, %v1476
      %v1478 = vpop.f32.mrf.mxu0
      %1479 = vmatprep.mubr.f32.mxu0 0.0
      %1480 = vmatmul.mubr.f32.gmra.mxu0 %v1326
      %v1481 = vpop.f32.mrf.mxu0
      %v1482 = vadd.f32 %v1193, %v1481
      %v1483 = vpop.f32.mrf.mxu0
      %1484 = vmatprep.mubr.f32.mxu0 0.0
      %1485 = vmatmul.mubr.f32.gmra.mxu0 %v1329
      %v1486 = vpop.f32.mrf.mxu0
      %v1487 = vadd.f32 %v1198, %v1486
      %v1488 = vpop.f32.mrf.mxu0
      %1489 = vmatprep.mubr.f32.mxu0 0.0
      %1490 = vmatmul.mubr.f32.gmra.mxu0 %v1332
      %v1491 = vpop.f32.mrf.mxu0
      %v1492 = vadd.f32 %v1203, %v1491
      %v1493 = vpop.f32.mrf.mxu0
      %1494 = vmatprep.mubr.f32.mxu0 0.0
      %1495 = vmatmul.mubr.f32.gmra.mxu0 %v1335
      %v1496 = vpop.f32.mrf.mxu0
      %v1497 = vadd.f32 %v1208, %v1496
      %v1498 = vpop.f32.mrf.mxu0
      %1499 = vmatprep.mubr.f32.mxu0 0.0
      %1500 = vmatmul.mubr.f32.gmra.mxu0 %v1338
      %v1501 = vpop.f32.mrf.mxu0
      %v1502 = vadd.f32 %v1213, %v1501
      %v1503 = vpop.f32.mrf.mxu0
      %1504 = vmatprep.mubr.f32.mxu0 0.0
      %1505 = vmatmul.mubr.f32.gmra.mxu0 %v1341
      %v1506 = vpop.f32.mrf.mxu0
      %v1507 = vadd.f32 %v1218, %v1506
      %v1508 = vpop.f32.mrf.mxu0
      %1509 = vmatprep.mubr.f32.mxu0 0.0
      %1510 = vmatmul.mubr.f32.gmra.mxu0 %v1344
      %v1511 = vpop.f32.mrf.mxu0
      %v1512 = vadd.f32 %v1223, %v1511
      %v1513 = vpop.f32.mrf.mxu0
      %1514 = vmatprep.mubr.f32.mxu0 0.0
      %1515 = vmatmul.mubr.f32.gmra.mxu0 %v1347
      %v1516 = vpop.f32.mrf.mxu0
      %v1517 = vadd.f32 %v1228, %v1516
      %v1518 = vpop.f32.mrf.mxu0
      %1519 = vmatprep.mubr.f32.mxu0 0.0
      %1520 = vmatmul.mubr.f32.gmra.mxu0 %v1350
      %v1521 = vpop.f32.mrf.mxu0
      %v1522 = vadd.f32 %v1233, %v1521
      %v1523 = vpop.f32.mrf.mxu0
      %1524 = vmatprep.mubr.f32.mxu0 0.0
      %1525 = vmatmul.mubr.f32.gmra.mxu0 %v1353
      %v1526 = vpop.f32.mrf.mxu0
      %v1527 = vadd.f32 %v1238, %v1526
      %v1528 = vpop.f32.mrf.mxu0
      %1529 = vmatprep.mubr.f32.mxu0 0.0
      %1530 = vmatmul.mubr.f32.gmra.mxu0 %v1356
      %v1531 = vpop.f32.mrf.mxu0
      %v1532 = vadd.f32 %v1243, %v1531
      %v1533 = vpop.f32.mrf.mxu0
      %1534 = vmatprep.mubr.f32.mxu0 0.0
      %1535 = vmatmul.mubr.f32.gmra.mxu0 %v1359
      %v1536 = vpop.f32.mrf.mxu0
      %v1537 = vadd.f32 %v1248, %v1536
      %v1538 = vpop.f32.mrf.mxu0
      %1539 = vmatprep.mubr.f32.mxu0 0.0
      %1540 = vmatmul.mubr.f32.gmra.mxu0 %v1362
      %v1541 = vpop.f32.mrf.mxu0
      %v1542 = vadd.f32 %v1253, %v1541
      %v1543 = vpop.f32.mrf.mxu0
      %1544 = vmatprep.mubr.f32.mxu0 0.0
      %1545 = vmatmul.mubr.f32.gmra.mxu0 %v1365
      %v1546 = vpop.f32.mrf.mxu0
      %v1547 = vadd.f32 %v1258, %v1546
      %v1548 = vpop.f32.mrf.mxu0
      %1549 = vmatprep.mubr.f32.mxu0 0.0
      %1550 = vmatmul.mubr.f32.gmra.mxu0 %v1368
      %v1551 = vpop.f32.mrf.mxu0
      %v1552 = vadd.f32 %v1263, %v1551
      %v1553 = vpop.f32.mrf.mxu0
      %1554 = vmatprep.mubr.f32.mxu0 0.0
      %1555 = vmatmul.mubr.f32.gmra.mxu0 %v1371
      %v1556 = vpop.f32.mrf.mxu0
      %v1557 = vadd.f32 %v1268, %v1556
      %v1558 = vpop.f32.mrf.mxu0
      %1559 = vmatprep.mubr.f32.mxu0 0.0
      %1560 = vmatmul.mubr.f32.gmra.mxu0 %v1374
      %v1561 = vpop.f32.mrf.mxu0
      %v1562 = vadd.f32 %v1273, %v1561
      %v1563 = vpop.f32.mrf.mxu0
      %1564 = vmatprep.mubr.f32.mxu0 0.0
      %1565 = vmatmul.mubr.f32.gmra.mxu0 %v1377
      %v1566 = vpop.f32.mrf.mxu0
      %v1567 = vadd.f32 %v1278, %v1566
      %v1568 = vpop.f32.mrf.mxu0
      %1569 = vmatprep.mubr.f32.mxu0 0.0
      %1570 = vmatmul.mubr.f32.gmra.mxu0 %v1380
      %v1571 = vpop.f32.mrf.mxu0
      %v1572 = vadd.f32 %v1283, %v1571
      %v1573 = vpop.f32.mrf.mxu0
      %1574 = vmatprep.mubr.f32.mxu0 0.0
      %1575 = vmatmul.mubr.f32.gmra.mxu0 %v1383
      %v1576 = vpop.f32.mrf.mxu0
      %v1577 = vadd.f32 %v1288, %v1576
      %v1578 = vpop.f32.mrf.mxu0
      %1579 = vmatprep.mubr.f32.mxu0 0.0
      %1580 = vmatmul.mubr.f32.gmra.mxu0 %v1386
      %v1581 = vpop.f32.mrf.mxu0
      %v1582 = vadd.f32 %v1293, %v1581
      %v1583 = vpop.f32.mrf.mxu0
      %1584 = vmatprep.mubr.f32.mxu0 0.0
      %1585 = vmatmul.mubr.f32.gmra.mxu0 %v1389
      %v1586 = vpop.f32.mrf.mxu0
      %v1587 = vadd.f32 %v1298, %v1586
      %v1588 = vpop.f32.mrf.mxu0
      %1589 = vmatprep.mubr.f32.mxu0 0.0
      %1590 = vmatmul.mubr.f32.gmra.mxu0 %v1392
      %v1591 = vpop.f32.mrf.mxu0
      %v1592 = vadd.f32 %v1303, %v1591
      %v1593 = vpop.f32.mrf.mxu0
      %1594 = vmatprep.mubr.f32.mxu0 0.0
      %1595 = vmatmul.mubr.f32.gmra.mxu0 %v1395
      %v1596 = vpop.f32.mrf.mxu0
      %v1597 = vadd.f32 %v1308, %v1596
      %v1598 = vpop.f32.mrf.mxu0
      %1599 = vmatprep.mubr.f32.mxu0 0.0
      %1600 = vmatmul.mubr.f32.gmra.mxu0 %v1398
      %v1601 = vpop.f32.mrf.mxu0
      %v1602 = vadd.f32 %v1313, %v1601
      %v1603 = vpop.f32.mrf.mxu0
      %1604 = vdwg.mxu0
      %v1605 = vadd.f32 %v830, %v1467
      %v1606 = vadd.f32 %v835, %v1472
      %v1607 = vadd.f32 %v840, %v1477
      %v1608 = vadd.f32 %v845, %v1482
      %v1609 = vadd.f32 %v850, %v1487
      %v1610 = vadd.f32 %v855, %v1492
      %v1611 = vadd.f32 %v860, %v1497
      %v1612 = vadd.f32 %v865, %v1502
      %v1613 = vadd.f32 %v870, %v1507
      %v1614 = vadd.f32 %v875, %v1512
      %v1615 = vadd.f32 %v880, %v1517
      %v1616 = vadd.f32 %v885, %v1522
      %v1617 = vadd.f32 %v890, %v1527
      %v1618 = vadd.f32 %v895, %v1532
      %v1619 = vadd.f32 %v900, %v1537
      %v1620 = vadd.f32 %v905, %v1542
      %v1621 = vadd.f32 %v910, %v1547
      %v1622 = vadd.f32 %v915, %v1552
      %v1623 = vadd.f32 %v920, %v1557
      %v1624 = vadd.f32 %v925, %v1562
      %v1625 = vadd.f32 %v930, %v1567
      %v1626 = vadd.f32 %v935, %v1572
      %v1627 = vadd.f32 %v940, %v1577
      %v1628 = vadd.f32 %v945, %v1582
      %v1629 = vadd.f32 %v950, %v1587
      %v1630 = vadd.f32 %v955, %v1592
      %v1631 = vadd.f32 %v960, %v1597
      %v1632 = vadd.f32 %v965, %v1602
      %v1633 = vld [vmem:[%s288 + $0x2] sm:$0xff]
      %v1634 = vld [vmem:[%s288 + $0xa] sm:$0xff]
      %v1635 = vld [vmem:[%s288 + $0x12] sm:$0xff]
      %v1636 = vld [vmem:[%s288 + $0x1a] sm:$0xff]
      %v1637 = vld [vmem:[%s288 + $0x22] sm:$0xff]
      %v1638 = vld [vmem:[%s288 + $0x2a] sm:$0xff]
      %v1639 = vld [vmem:[%s288 + $0x32] sm:$0xff]
      %v1640 = vld [vmem:[%s288 + $0x3a] sm:$0xff]
      %v1641 = vld [vmem:[%s288 + $0x42] sm:$0xff]
      %v1642 = vld [vmem:[%s288 + $0x4a] sm:$0xff]
      %v1643 = vld [vmem:[%s288 + $0x52] sm:$0xff]
      %v1644 = vld [vmem:[%s288 + $0x5a] sm:$0xff]
      %v1645 = vld [vmem:[%s288 + $0x62] sm:$0xff]
      %v1646 = vld [vmem:[%s288 + $0x6a] sm:$0xff]
      %v1647 = vld [vmem:[%s288 + $0x72] sm:$0xff]
      %v1648 = vld [vmem:[%s288 + $0x7a] sm:$0xff]
      %v1649 = vld [vmem:[%s288 + $0x82] sm:$0xff]
      %v1650 = vld [vmem:[%s288 + $0x8a] sm:$0xff]
      %v1651 = vld [vmem:[%s288 + $0x92] sm:$0xff]
      %v1652 = vld [vmem:[%s288 + $0x9a] sm:$0xff]
      %v1653 = vld [vmem:[%s288 + $0xa2] sm:$0xff]
      %v1654 = vld [vmem:[%s288 + $0xaa] sm:$0xff]
      %v1655 = vld [vmem:[%s288 + $0xb2] sm:$0xff]
      %v1656 = vld [vmem:[%s288 + $0xba] sm:$0xff]
      %v1657 = vld [vmem:[%s288 + $0xc2] sm:$0xff]
      %v1658 = vld [vmem:[%s288 + $0xca] sm:$0xff]
      %v1659 = vld [vmem:[%s288 + $0xd2] sm:$0xff]
      %v1660 = vld [vmem:[%s288 + $0xda] sm:$0x3f]
      %v1661 = vld [vmem:[%s293 + $0x2] sm:$0xff]
      %v1662 = vld [vmem:[%s293 + $0xa] sm:$0xff]
      %v1663 = vld [vmem:[%s293 + $0x12] sm:$0xff]
      %v1664 = vld [vmem:[%s293 + $0x1a] sm:$0xff]
      %v1665 = vld [vmem:[%s293 + $0x22] sm:$0xff]
      %v1666 = vld [vmem:[%s293 + $0x2a] sm:$0xff]
      %v1667 = vld [vmem:[%s293 + $0x32] sm:$0xff]
      %v1668 = vld [vmem:[%s293 + $0x3a] sm:$0xff]
      %v1669 = vld [vmem:[%s293 + $0x42] sm:$0xff]
      %v1670 = vld [vmem:[%s293 + $0x4a] sm:$0xff]
      %v1671 = vld [vmem:[%s293 + $0x52] sm:$0xff]
      %v1672 = vld [vmem:[%s293 + $0x5a] sm:$0xff]
      %v1673 = vld [vmem:[%s293 + $0x62] sm:$0xff]
      %v1674 = vld [vmem:[%s293 + $0x6a] sm:$0xff]
      %v1675 = vld [vmem:[%s293 + $0x72] sm:$0xff]
      %v1676 = vld [vmem:[%s293 + $0x7a] sm:$0xff]
      %v1677 = vld [vmem:[%s293 + $0x82] sm:$0xff]
      %v1678 = vld [vmem:[%s293 + $0x8a] sm:$0xff]
      %v1679 = vld [vmem:[%s293 + $0x92] sm:$0xff]
      %v1680 = vld [vmem:[%s293 + $0x9a] sm:$0xff]
      %v1681 = vld [vmem:[%s293 + $0xa2] sm:$0xff]
      %v1682 = vld [vmem:[%s293 + $0xaa] sm:$0xff]
      %v1683 = vld [vmem:[%s293 + $0xb2] sm:$0xff]
      %v1684 = vld [vmem:[%s293 + $0xba] sm:$0xff]
      %v1685 = vld [vmem:[%s293 + $0xc2] sm:$0xff]
      %v1686 = vld [vmem:[%s293 + $0xca] sm:$0xff]
      %v1687 = vld [vmem:[%s293 + $0xd2] sm:$0xff]
      %v1688 = vld [vmem:[%s293 + $0xda] sm:$0x3f]
      %v1690 = vsel %vm384, %v1661, 0
      %v1693 = vsel %vm384, %v1662, 0
      %v1696 = vsel %vm384, %v1663, 0
      %v1699 = vsel %vm384, %v1664, 0
      %v1702 = vsel %vm384, %v1665, 0
      %v1705 = vsel %vm384, %v1666, 0
      %v1708 = vsel %vm384, %v1667, 0
      %v1711 = vsel %vm384, %v1668, 0
      %v1714 = vsel %vm384, %v1669, 0
      %v1717 = vsel %vm384, %v1670, 0
      %v1720 = vsel %vm384, %v1671, 0
      %v1723 = vsel %vm384, %v1672, 0
      %v1726 = vsel %vm384, %v1673, 0
      %v1729 = vsel %vm384, %v1674, 0
      %v1732 = vsel %vm384, %v1675, 0
      %v1735 = vsel %vm384, %v1676, 0
      %v1738 = vsel %vm384, %v1677, 0
      %v1741 = vsel %vm384, %v1678, 0
      %v1744 = vsel %vm384, %v1679, 0
      %v1747 = vsel %vm384, %v1680, 0
      %v1750 = vsel %vm384, %v1681, 0
      %v1753 = vsel %vm384, %v1682, 0
      %v1756 = vsel %vm384, %v1683, 0
      %v1759 = vsel %vm384, %v1684, 0
      %v1762 = vsel %vm384, %v1685, 0
      %v1765 = vsel %vm384, %v1686, 0
      %v1768 = vsel %vm384, %v1687, 0
      %v1771 = vsel %vm384, %v1688, 0
      %v1774 = vsel %vm469, %v310, 0
      %1776 = vmatprep.subr.mxu0 0.0
      %1777 = vmatpush1.msra.mxu0 0.0
      %1778 = vmatprep.subr.mxu0 0.0
      %1779 = vmatpush1.msra.mxu0 0.0
      %1780 = vmatprep.subr.mxu0 0.0
      %1781 = vmatpush1.msra.mxu0 0.0
      %1782 = vmatprep.subr.mxu0 0.0
      %1783 = vmatpush1.msra.mxu0 0.0
      %1784 = vmatprep.subr.mxu0 0.0
      %1785 = vmatpush1.msra.mxu0 0.0
      %1786 = vmatprep.subr.mxu0 0.0
      %1787 = vmatpush1.msra.mxu0 0.0
      %1788 = vmatprep.subr.mxu0 0.0
      %1789 = vmatpush1.msra.mxu0 0.0
      %1790 = vmatprep.subr.mxu0 0.0
      %1791 = vmatpush1.msra.mxu0 0.0
      %1792 = vmatprep.subr.mxu0 0.0
      %1793 = vmatpush1.msra.mxu0 0.0
      %1794 = vmatprep.subr.mxu0 0.0
      %1795 = vmatpush1.msra.mxu0 0.0
      %1796 = vmatprep.subr.mxu0 0.0
      %1797 = vmatpush1.msra.mxu0 0.0
      %1798 = vmatprep.subr.mxu0 0.0
      %1799 = vmatpush1.msra.mxu0 0.0
      %1800 = vmatprep.subr.mxu0 0.0
      %1801 = vmatpush1.msra.mxu0 0.0
      %1802 = vmatprep.subr.mxu0 0.0
      %1803 = vmatpush1.msra.mxu0 0.0
      %1804 = vmatprep.subr.mxu0 0.0
      %1805 = vmatpush1.msra.mxu0 0.0
      %1806 = vmatprep.subr.mxu0 0.0
      %1807 = vmatpush1.msra.mxu0 %v1774
      %1808 = vmatprep.subr.mxu0 0.0
      %1809 = vmatpush2.msra.mxu0 0.0
      %1810 = vmatprep.subr.mxu0 0.0
      %1811 = vmatpush2.msra.mxu0 0.0
      %1812 = vmatprep.subr.mxu0 0.0
      %1813 = vmatpush2.msra.mxu0 0.0
      %1814 = vmatprep.subr.mxu0 0.0
      %1815 = vmatpush2.msra.mxu0 0.0
      %1816 = vmatprep.subr.mxu0 0.0
      %1817 = vmatpush2.msra.mxu0 0.0
      %1818 = vmatprep.subr.mxu0 0.0
      %1819 = vmatpush2.msra.mxu0 0.0
      %1820 = vmatprep.subr.mxu0 0.0
      %1821 = vmatpush2.msra.mxu0 0.0
      %1822 = vmatprep.subr.mxu0 0.0
      %1823 = vmatpush2.msra.mxu0 0.0
      %1824 = vmatprep.subr.mxu0 0.0
      %1825 = vmatpush2.msra.mxu0 0.0
      %1826 = vmatprep.subr.mxu0 0.0
      %1827 = vmatpush2.msra.mxu0 0.0
      %1828 = vmatprep.subr.mxu0 0.0
      %1829 = vmatpush2.msra.mxu0 0.0
      %1830 = vmatprep.subr.mxu0 0.0
      %1831 = vmatpush2.msra.mxu0 0.0
      %1832 = vmatprep.subr.mxu0 0.0
      %1833 = vmatpush2.msra.mxu0 0.0
      %1834 = vmatprep.subr.mxu0 0.0
      %1835 = vmatpush2.msra.mxu0 0.0
      %1836 = vmatprep.subr.mxu0 0.0
      %1837 = vmatpush2.msra.mxu0 0.0
      %1838 = vmatprep.subr.mxu0 0.0
      %1839 = vmatpush2.msra.mxu0 0.0
      %1840 = vmatprep.mubr.f32.mxu0 0.0
      %1841 = vmatmul.mubr.f32.gmra.mxu0 %v1690
      %v1842 = vpop.f32.mrf.mxu0
      %v1843 = vadd.f32 0.0, %v1842
      %v1844 = vpop.f32.mrf.mxu0
      %1845 = vmatprep.mubr.f32.mxu0 0.0
      %1846 = vmatmul.mubr.f32.gmra.mxu0 %v1693
      %v1847 = vpop.f32.mrf.mxu0
      %v1848 = vadd.f32 0.0, %v1847
      %v1849 = vpop.f32.mrf.mxu0
      %1850 = vmatprep.mubr.f32.mxu0 0.0
      %1851 = vmatmul.mubr.f32.gmra.mxu0 %v1696
      %v1852 = vpop.f32.mrf.mxu0
      %v1853 = vadd.f32 0.0, %v1852
      %v1854 = vpop.f32.mrf.mxu0
      %1855 = vmatprep.mubr.f32.mxu0 0.0
      %1856 = vmatmul.mubr.f32.gmra.mxu0 %v1699
      %v1857 = vpop.f32.mrf.mxu0
      %v1858 = vadd.f32 0.0, %v1857
      %v1859 = vpop.f32.mrf.mxu0
      %1860 = vmatprep.mubr.f32.mxu0 0.0
      %1861 = vmatmul.mubr.f32.gmra.mxu0 %v1702
      %v1862 = vpop.f32.mrf.mxu0
      %v1863 = vadd.f32 0.0, %v1862
      %v1864 = vpop.f32.mrf.mxu0
      %1865 = vmatprep.mubr.f32.mxu0 0.0
      %1866 = vmatmul.mubr.f32.gmra.mxu0 %v1705
      %v1867 = vpop.f32.mrf.mxu0
      %v1868 = vadd.f32 0.0, %v1867
      %v1869 = vpop.f32.mrf.mxu0
      %1870 = vmatprep.mubr.f32.mxu0 0.0
      %1871 = vmatmul.mubr.f32.gmra.mxu0 %v1708
      %v1872 = vpop.f32.mrf.mxu0
      %v1873 = vadd.f32 0.0, %v1872
      %v1874 = vpop.f32.mrf.mxu0
      %1875 = vmatprep.mubr.f32.mxu0 0.0
      %1876 = vmatmul.mubr.f32.gmra.mxu0 %v1711
      %v1877 = vpop.f32.mrf.mxu0
      %v1878 = vadd.f32 0.0, %v1877
      %v1879 = vpop.f32.mrf.mxu0
      %1880 = vmatprep.mubr.f32.mxu0 0.0
      %1881 = vmatmul.mubr.f32.gmra.mxu0 %v1714
      %v1882 = vpop.f32.mrf.mxu0
      %v1883 = vadd.f32 0.0, %v1882
      %v1884 = vpop.f32.mrf.mxu0
      %1885 = vmatprep.mubr.f32.mxu0 0.0
      %1886 = vmatmul.mubr.f32.gmra.mxu0 %v1717
      %v1887 = vpop.f32.mrf.mxu0
      %v1888 = vadd.f32 0.0, %v1887
      %v1889 = vpop.f32.mrf.mxu0
      %1890 = vmatprep.mubr.f32.mxu0 0.0
      %1891 = vmatmul.mubr.f32.gmra.mxu0 %v1720
      %v1892 = vpop.f32.mrf.mxu0
      %v1893 = vadd.f32 0.0, %v1892
      %v1894 = vpop.f32.mrf.mxu0
      %1895 = vmatprep.mubr.f32.mxu0 0.0
      %1896 = vmatmul.mubr.f32.gmra.mxu0 %v1723
      %v1897 = vpop.f32.mrf.mxu0
      %v1898 = vadd.f32 0.0, %v1897
      %v1899 = vpop.f32.mrf.mxu0
      %1900 = vmatprep.mubr.f32.mxu0 0.0
      %1901 = vmatmul.mubr.f32.gmra.mxu0 %v1726
      %v1902 = vpop.f32.mrf.mxu0
      %v1903 = vadd.f32 0.0, %v1902
      %v1904 = vpop.f32.mrf.mxu0
      %1905 = vmatprep.mubr.f32.mxu0 0.0
      %1906 = vmatmul.mubr.f32.gmra.mxu0 %v1729
      %v1907 = vpop.f32.mrf.mxu0
      %v1908 = vadd.f32 0.0, %v1907
      %v1909 = vpop.f32.mrf.mxu0
      %1910 = vmatprep.mubr.f32.mxu0 0.0
      %1911 = vmatmul.mubr.f32.gmra.mxu0 %v1732
      %v1912 = vpop.f32.mrf.mxu0
      %v1913 = vadd.f32 0.0, %v1912
      %v1914 = vpop.f32.mrf.mxu0
      %1915 = vmatprep.mubr.f32.mxu0 0.0
      %1916 = vmatmul.mubr.f32.gmra.mxu0 %v1735
      %v1917 = vpop.f32.mrf.mxu0
      %v1918 = vadd.f32 0.0, %v1917
      %v1919 = vpop.f32.mrf.mxu0
      %1920 = vmatprep.mubr.f32.mxu0 0.0
      %1921 = vmatmul.mubr.f32.gmra.mxu0 %v1738
      %v1922 = vpop.f32.mrf.mxu0
      %v1923 = vadd.f32 0.0, %v1922
      %v1924 = vpop.f32.mrf.mxu0
      %1925 = vmatprep.mubr.f32.mxu0 0.0
      %1926 = vmatmul.mubr.f32.gmra.mxu0 %v1741
      %v1927 = vpop.f32.mrf.mxu0
      %v1928 = vadd.f32 0.0, %v1927
      %v1929 = vpop.f32.mrf.mxu0
      %1930 = vmatprep.mubr.f32.mxu0 0.0
      %1931 = vmatmul.mubr.f32.gmra.mxu0 %v1744
      %v1932 = vpop.f32.mrf.mxu0
      %v1933 = vadd.f32 0.0, %v1932
      %v1934 = vpop.f32.mrf.mxu0
      %1935 = vmatprep.mubr.f32.mxu0 0.0
      %1936 = vmatmul.mubr.f32.gmra.mxu0 %v1747
      %v1937 = vpop.f32.mrf.mxu0
      %v1938 = vadd.f32 0.0, %v1937
      %v1939 = vpop.f32.mrf.mxu0
      %1940 = vmatprep.mubr.f32.mxu0 0.0
      %1941 = vmatmul.mubr.f32.gmra.mxu0 %v1750
      %v1942 = vpop.f32.mrf.mxu0
      %v1943 = vadd.f32 0.0, %v1942
      %v1944 = vpop.f32.mrf.mxu0
      %1945 = vmatprep.mubr.f32.mxu0 0.0
      %1946 = vmatmul.mubr.f32.gmra.mxu0 %v1753
      %v1947 = vpop.f32.mrf.mxu0
      %v1948 = vadd.f32 0.0, %v1947
      %v1949 = vpop.f32.mrf.mxu0
      %1950 = vmatprep.mubr.f32.mxu0 0.0
      %1951 = vmatmul.mubr.f32.gmra.mxu0 %v1756
      %v1952 = vpop.f32.mrf.mxu0
      %v1953 = vadd.f32 0.0, %v1952
      %v1954 = vpop.f32.mrf.mxu0
      %1955 = vmatprep.mubr.f32.mxu0 0.0
      %1956 = vmatmul.mubr.f32.gmra.mxu0 %v1759
      %v1957 = vpop.f32.mrf.mxu0
      %v1958 = vadd.f32 0.0, %v1957
      %v1959 = vpop.f32.mrf.mxu0
      %1960 = vmatprep.mubr.f32.mxu0 0.0
      %1961 = vmatmul.mubr.f32.gmra.mxu0 %v1762
      %v1962 = vpop.f32.mrf.mxu0
      %v1963 = vadd.f32 0.0, %v1962
      %v1964 = vpop.f32.mrf.mxu0
      %1965 = vmatprep.mubr.f32.mxu0 0.0
      %1966 = vmatmul.mubr.f32.gmra.mxu0 %v1765
      %v1967 = vpop.f32.mrf.mxu0
      %v1968 = vadd.f32 0.0, %v1967
      %v1969 = vpop.f32.mrf.mxu0
      %1970 = vmatprep.mubr.f32.mxu0 0.0
      %1971 = vmatmul.mubr.f32.gmra.mxu0 %v1768
      %v1972 = vpop.f32.mrf.mxu0
      %v1973 = vadd.f32 0.0, %v1972
      %v1974 = vpop.f32.mrf.mxu0
      %1975 = vmatprep.mubr.f32.mxu0 0.0
      %1976 = vmatmul.mubr.f32.gmra.mxu0 %v1771
      %v1977 = vpop.f32.mrf.mxu0
      %v1978 = vadd.f32 0.0, %v1977
      %v1979 = vpop.f32.mrf.mxu0
      %1980 = vdwg.mxu0
      %v1982 = vsel %vm678, %v1633, 0
      %v1985 = vsel %vm678, %v1634, 0
      %v1988 = vsel %vm678, %v1635, 0
      %v1991 = vsel %vm678, %v1636, 0
      %v1994 = vsel %vm678, %v1637, 0
      %v1997 = vsel %vm678, %v1638, 0
      %v2000 = vsel %vm678, %v1639, 0
      %v2003 = vsel %vm678, %v1640, 0
      %v2006 = vsel %vm678, %v1641, 0
      %v2009 = vsel %vm678, %v1642, 0
      %v2012 = vsel %vm678, %v1643, 0
      %v2015 = vsel %vm678, %v1644, 0
      %v2018 = vsel %vm678, %v1645, 0
      %v2021 = vsel %vm678, %v1646, 0
      %v2024 = vsel %vm678, %v1647, 0
      %v2027 = vsel %vm678, %v1648, 0
      %v2030 = vsel %vm678, %v1649, 0
      %v2033 = vsel %vm678, %v1650, 0
      %v2036 = vsel %vm678, %v1651, 0
      %v2039 = vsel %vm678, %v1652, 0
      %v2042 = vsel %vm678, %v1653, 0
      %v2045 = vsel %vm678, %v1654, 0
      %v2048 = vsel %vm678, %v1655, 0
      %v2051 = vsel %vm678, %v1656, 0
      %v2054 = vsel %vm678, %v1657, 0
      %v2057 = vsel %vm678, %v1658, 0
      %v2060 = vsel %vm678, %v1659, 0
      %v2063 = vsel %vm678, %v1660, 0
      %2065 = vmatprep.subr.mxu0 0.0
      %2066 = vmatpush1.msra.mxu0 0.0
      %2067 = vmatprep.subr.mxu0 0.0
      %2068 = vmatpush1.msra.mxu0 0.0
      %2069 = vmatprep.subr.mxu0 0.0
      %2070 = vmatpush1.msra.mxu0 0.0
      %2071 = vmatprep.subr.mxu0 0.0
      %2072 = vmatpush1.msra.mxu0 0.0
      %2073 = vmatprep.subr.mxu0 0.0
      %2074 = vmatpush1.msra.mxu0 0.0
      %2075 = vmatprep.subr.mxu0 0.0
      %2076 = vmatpush1.msra.mxu0 0.0
      %2077 = vmatprep.subr.mxu0 0.0
      %2078 = vmatpush1.msra.mxu0 0.0
      %2079 = vmatprep.subr.mxu0 0.0
      %2080 = vmatpush1.msra.mxu0 0.0
      %2081 = vmatprep.subr.mxu0 0.0
      %2082 = vmatpush1.msra.mxu0 0.0
      %2083 = vmatprep.subr.mxu0 0.0
      %2084 = vmatpush1.msra.mxu0 0.0
      %2085 = vmatprep.subr.mxu0 0.0
      %2086 = vmatpush1.msra.mxu0 0.0
      %2087 = vmatprep.subr.mxu0 0.0
      %2088 = vmatpush1.msra.mxu0 0.0
      %2089 = vmatprep.subr.mxu0 0.0
      %2090 = vmatpush1.msra.mxu0 0.0
      %2091 = vmatprep.subr.mxu0 0.0
      %2092 = vmatpush1.msra.mxu0 0.0
      %2093 = vmatprep.subr.mxu0 0.0
      %2094 = vmatpush1.msra.mxu0 0.0
      %2095 = vmatprep.subr.mxu0 0.0
      %2096 = vmatpush1.msra.mxu0 %v301
      %2097 = vmatprep.subr.mxu0 0.0
      %2098 = vmatpush2.msra.mxu0 0.0
      %2099 = vmatprep.subr.mxu0 0.0
      %2100 = vmatpush2.msra.mxu0 0.0
      %2101 = vmatprep.subr.mxu0 0.0
      %2102 = vmatpush2.msra.mxu0 0.0
      %2103 = vmatprep.subr.mxu0 0.0
      %2104 = vmatpush2.msra.mxu0 0.0
      %2105 = vmatprep.subr.mxu0 0.0
      %2106 = vmatpush2.msra.mxu0 0.0
      %2107 = vmatprep.subr.mxu0 0.0
      %2108 = vmatpush2.msra.mxu0 0.0
      %2109 = vmatprep.subr.mxu0 0.0
      %2110 = vmatpush2.msra.mxu0 0.0
      %2111 = vmatprep.subr.mxu0 0.0
      %2112 = vmatpush2.msra.mxu0 0.0
      %2113 = vmatprep.subr.mxu0 0.0
      %2114 = vmatpush2.msra.mxu0 0.0
      %2115 = vmatprep.subr.mxu0 0.0
      %2116 = vmatpush2.msra.mxu0 0.0
      %2117 = vmatprep.subr.mxu0 0.0
      %2118 = vmatpush2.msra.mxu0 0.0
      %2119 = vmatprep.subr.mxu0 0.0
      %2120 = vmatpush2.msra.mxu0 0.0
      %2121 = vmatprep.subr.mxu0 0.0
      %2122 = vmatpush2.msra.mxu0 0.0
      %2123 = vmatprep.subr.mxu0 0.0
      %2124 = vmatpush2.msra.mxu0 0.0
      %2125 = vmatprep.subr.mxu0 0.0
      %2126 = vmatpush2.msra.mxu0 0.0
      %2127 = vmatprep.subr.mxu0 0.0
      %2128 = vmatpush2.msra.mxu0 0.0
      %2129 = vmatprep.mubr.f32.mxu0 0.0
      %2130 = vmatmul.mubr.f32.gmra.mxu0 %v1982
      %v2131 = vpop.f32.mrf.mxu0
      %v2132 = vadd.f32 %v1843, %v2131
      %v2133 = vpop.f32.mrf.mxu0
      %2134 = vmatprep.mubr.f32.mxu0 0.0
      %2135 = vmatmul.mubr.f32.gmra.mxu0 %v1985
      %v2136 = vpop.f32.mrf.mxu0
      %v2137 = vadd.f32 %v1848, %v2136
      %v2138 = vpop.f32.mrf.mxu0
      %2139 = vmatprep.mubr.f32.mxu0 0.0
      %2140 = vmatmul.mubr.f32.gmra.mxu0 %v1988
      %v2141 = vpop.f32.mrf.mxu0
      %v2142 = vadd.f32 %v1853, %v2141
      %v2143 = vpop.f32.mrf.mxu0
      %2144 = vmatprep.mubr.f32.mxu0 0.0
      %2145 = vmatmul.mubr.f32.gmra.mxu0 %v1991
      %v2146 = vpop.f32.mrf.mxu0
      %v2147 = vadd.f32 %v1858, %v2146
      %v2148 = vpop.f32.mrf.mxu0
      %2149 = vmatprep.mubr.f32.mxu0 0.0
      %2150 = vmatmul.mubr.f32.gmra.mxu0 %v1994
      %v2151 = vpop.f32.mrf.mxu0
      %v2152 = vadd.f32 %v1863, %v2151
      %v2153 = vpop.f32.mrf.mxu0
      %2154 = vmatprep.mubr.f32.mxu0 0.0
      %2155 = vmatmul.mubr.f32.gmra.mxu0 %v1997
      %v2156 = vpop.f32.mrf.mxu0
      %v2157 = vadd.f32 %v1868, %v2156
      %v2158 = vpop.f32.mrf.mxu0
      %2159 = vmatprep.mubr.f32.mxu0 0.0
      %2160 = vmatmul.mubr.f32.gmra.mxu0 %v2000
      %v2161 = vpop.f32.mrf.mxu0
      %v2162 = vadd.f32 %v1873, %v2161
      %v2163 = vpop.f32.mrf.mxu0
      %2164 = vmatprep.mubr.f32.mxu0 0.0
      %2165 = vmatmul.mubr.f32.gmra.mxu0 %v2003
      %v2166 = vpop.f32.mrf.mxu0
      %v2167 = vadd.f32 %v1878, %v2166
      %v2168 = vpop.f32.mrf.mxu0
      %2169 = vmatprep.mubr.f32.mxu0 0.0
      %2170 = vmatmul.mubr.f32.gmra.mxu0 %v2006
      %v2171 = vpop.f32.mrf.mxu0
      %v2172 = vadd.f32 %v1883, %v2171
      %v2173 = vpop.f32.mrf.mxu0
      %2174 = vmatprep.mubr.f32.mxu0 0.0
      %2175 = vmatmul.mubr.f32.gmra.mxu0 %v2009
      %v2176 = vpop.f32.mrf.mxu0
      %v2177 = vadd.f32 %v1888, %v2176
      %v2178 = vpop.f32.mrf.mxu0
      %2179 = vmatprep.mubr.f32.mxu0 0.0
      %2180 = vmatmul.mubr.f32.gmra.mxu0 %v2012
      %v2181 = vpop.f32.mrf.mxu0
      %v2182 = vadd.f32 %v1893, %v2181
      %v2183 = vpop.f32.mrf.mxu0
      %2184 = vmatprep.mubr.f32.mxu0 0.0
      %2185 = vmatmul.mubr.f32.gmra.mxu0 %v2015
      %v2186 = vpop.f32.mrf.mxu0
      %v2187 = vadd.f32 %v1898, %v2186
      %v2188 = vpop.f32.mrf.mxu0
      %2189 = vmatprep.mubr.f32.mxu0 0.0
      %2190 = vmatmul.mubr.f32.gmra.mxu0 %v2018
      %v2191 = vpop.f32.mrf.mxu0
      %v2192 = vadd.f32 %v1903, %v2191
      %v2193 = vpop.f32.mrf.mxu0
      %2194 = vmatprep.mubr.f32.mxu0 0.0
      %2195 = vmatmul.mubr.f32.gmra.mxu0 %v2021
      %v2196 = vpop.f32.mrf.mxu0
      %v2197 = vadd.f32 %v1908, %v2196
      %v2198 = vpop.f32.mrf.mxu0
      %2199 = vmatprep.mubr.f32.mxu0 0.0
      %2200 = vmatmul.mubr.f32.gmra.mxu0 %v2024
      %v2201 = vpop.f32.mrf.mxu0
      %v2202 = vadd.f32 %v1913, %v2201
      %v2203 = vpop.f32.mrf.mxu0
      %2204 = vmatprep.mubr.f32.mxu0 0.0
      %2205 = vmatmul.mubr.f32.gmra.mxu0 %v2027
      %v2206 = vpop.f32.mrf.mxu0
      %v2207 = vadd.f32 %v1918, %v2206
      %v2208 = vpop.f32.mrf.mxu0
      %2209 = vmatprep.mubr.f32.mxu0 0.0
      %2210 = vmatmul.mubr.f32.gmra.mxu0 %v2030
      %v2211 = vpop.f32.mrf.mxu0
      %v2212 = vadd.f32 %v1923, %v2211
      %v2213 = vpop.f32.mrf.mxu0
      %2214 = vmatprep.mubr.f32.mxu0 0.0
      %2215 = vmatmul.mubr.f32.gmra.mxu0 %v2033
      %v2216 = vpop.f32.mrf.mxu0
      %v2217 = vadd.f32 %v1928, %v2216
      %v2218 = vpop.f32.mrf.mxu0
      %2219 = vmatprep.mubr.f32.mxu0 0.0
      %2220 = vmatmul.mubr.f32.gmra.mxu0 %v2036
      %v2221 = vpop.f32.mrf.mxu0
      %v2222 = vadd.f32 %v1933, %v2221
      %v2223 = vpop.f32.mrf.mxu0
      %2224 = vmatprep.mubr.f32.mxu0 0.0
      %2225 = vmatmul.mubr.f32.gmra.mxu0 %v2039
      %v2226 = vpop.f32.mrf.mxu0
      %v2227 = vadd.f32 %v1938, %v2226
      %v2228 = vpop.f32.mrf.mxu0
      %2229 = vmatprep.mubr.f32.mxu0 0.0
      %2230 = vmatmul.mubr.f32.gmra.mxu0 %v2042
      %v2231 = vpop.f32.mrf.mxu0
      %v2232 = vadd.f32 %v1943, %v2231
      %v2233 = vpop.f32.mrf.mxu0
      %2234 = vmatprep.mubr.f32.mxu0 0.0
      %2235 = vmatmul.mubr.f32.gmra.mxu0 %v2045
      %v2236 = vpop.f32.mrf.mxu0
      %v2237 = vadd.f32 %v1948, %v2236
      %v2238 = vpop.f32.mrf.mxu0
      %2239 = vmatprep.mubr.f32.mxu0 0.0
      %2240 = vmatmul.mubr.f32.gmra.mxu0 %v2048
      %v2241 = vpop.f32.mrf.mxu0
      %v2242 = vadd.f32 %v1953, %v2241
      %v2243 = vpop.f32.mrf.mxu0
      %2244 = vmatprep.mubr.f32.mxu0 0.0
      %2245 = vmatmul.mubr.f32.gmra.mxu0 %v2051
      %v2246 = vpop.f32.mrf.mxu0
      %v2247 = vadd.f32 %v1958, %v2246
      %v2248 = vpop.f32.mrf.mxu0
      %2249 = vmatprep.mubr.f32.mxu0 0.0
      %2250 = vmatmul.mubr.f32.gmra.mxu0 %v2054
      %v2251 = vpop.f32.mrf.mxu0
      %v2252 = vadd.f32 %v1963, %v2251
      %v2253 = vpop.f32.mrf.mxu0
      %2254 = vmatprep.mubr.f32.mxu0 0.0
      %2255 = vmatmul.mubr.f32.gmra.mxu0 %v2057
      %v2256 = vpop.f32.mrf.mxu0
      %v2257 = vadd.f32 %v1968, %v2256
      %v2258 = vpop.f32.mrf.mxu0
      %2259 = vmatprep.mubr.f32.mxu0 0.0
      %2260 = vmatmul.mubr.f32.gmra.mxu0 %v2060
      %v2261 = vpop.f32.mrf.mxu0
      %v2262 = vadd.f32 %v1973, %v2261
      %v2263 = vpop.f32.mrf.mxu0
      %2264 = vmatprep.mubr.f32.mxu0 0.0
      %2265 = vmatmul.mubr.f32.gmra.mxu0 %v2063
      %v2266 = vpop.f32.mrf.mxu0
      %v2267 = vadd.f32 %v1978, %v2266
      %v2268 = vpop.f32.mrf.mxu0
      %2269 = vdwg.mxu0
      %v2270 = vadd.f32 %v1605, %v2132
      %v2271 = vadd.f32 %v1606, %v2137
      %v2272 = vadd.f32 %v1607, %v2142
      %v2273 = vadd.f32 %v1608, %v2147
      %v2274 = vadd.f32 %v1609, %v2152
      %v2275 = vadd.f32 %v1610, %v2157
      %v2276 = vadd.f32 %v1611, %v2162
      %v2277 = vadd.f32 %v1612, %v2167
      %v2278 = vadd.f32 %v1613, %v2172
      %v2279 = vadd.f32 %v1614, %v2177
      %v2280 = vadd.f32 %v1615, %v2182
      %v2281 = vadd.f32 %v1616, %v2187
      %v2282 = vadd.f32 %v1617, %v2192
      %v2283 = vadd.f32 %v1618, %v2197
      %v2284 = vadd.f32 %v1619, %v2202
      %v2285 = vadd.f32 %v1620, %v2207
      %v2286 = vadd.f32 %v1621, %v2212
      %v2287 = vadd.f32 %v1622, %v2217
      %v2288 = vadd.f32 %v1623, %v2222
      %v2289 = vadd.f32 %v1624, %v2227
      %v2290 = vadd.f32 %v1625, %v2232
      %v2291 = vadd.f32 %v1626, %v2237
      %v2292 = vadd.f32 %v1627, %v2242
      %v2293 = vadd.f32 %v1628, %v2247
      %v2294 = vadd.f32 %v1629, %v2252
      %v2295 = vadd.f32 %v1630, %v2257
      %v2296 = vadd.f32 %v1631, %v2262
      %v2297 = vadd.f32 %v1632, %v2267
      %v2298 = vld [vmem:[%s288 + $0x10] sm:$0xff]
      %v2299 = vld [vmem:[%s288 + $0x18] sm:$0xff]
      %v2300 = vld [vmem:[%s288 + $0x20] sm:$0xff]
      %v2301 = vld [vmem:[%s288 + $0x28] sm:$0xff]
      %v2302 = vld [vmem:[%s288 + $0x30] sm:$0xff]
      %v2303 = vld [vmem:[%s288 + $0x38] sm:$0xff]
      %v2304 = vld [vmem:[%s288 + $0x40] sm:$0xff]
      %v2305 = vld [vmem:[%s288 + $0x48] sm:$0xff]
      %v2306 = vld [vmem:[%s288 + $0x50] sm:$0xff]
      %v2307 = vld [vmem:[%s288 + $0x58] sm:$0xff]
      %v2308 = vld [vmem:[%s288 + $0x60] sm:$0xff]
      %v2309 = vld [vmem:[%s288 + $0x68] sm:$0xff]
      %v2310 = vld [vmem:[%s288 + $0x70] sm:$0xff]
      %v2311 = vld [vmem:[%s288 + $0x78] sm:$0xff]
      %v2312 = vld [vmem:[%s288 + $0x80] sm:$0xff]
      %v2313 = vld [vmem:[%s288 + $0x88] sm:$0xff]
      %v2314 = vld [vmem:[%s288 + $0x90] sm:$0xff]
      %v2315 = vld [vmem:[%s288 + $0x98] sm:$0xff]
      %v2316 = vld [vmem:[%s288 + $0xa0] sm:$0xff]
      %v2317 = vld [vmem:[%s288 + $0xa8] sm:$0xff]
      %v2318 = vld [vmem:[%s288 + $0xb0] sm:$0xff]
      %v2319 = vld [vmem:[%s288 + $0xb8] sm:$0xff]
      %v2320 = vld [vmem:[%s288 + $0xc0] sm:$0xff]
      %v2321 = vld [vmem:[%s288 + $0xc8] sm:$0xff]
      %v2322 = vld [vmem:[%s288 + $0xd0] sm:$0xff]
      %v2323 = vld [vmem:[%s288 + $0xd8] sm:$0xff]
      %v2324 = vld [vmem:[%s288 + $0xe0] sm:$0xff]
      %v2325 = vld [vmem:[%s288 + $0xe8] sm:$0x3f]
      %v2326 = vld [vmem:[%s293 + $0x10] sm:$0xff]
      %v2327 = vld [vmem:[%s293 + $0x18] sm:$0xff]
      %v2328 = vld [vmem:[%s293 + $0x20] sm:$0xff]
      %v2329 = vld [vmem:[%s293 + $0x28] sm:$0xff]
      %v2330 = vld [vmem:[%s293 + $0x30] sm:$0xff]
      %v2331 = vld [vmem:[%s293 + $0x38] sm:$0xff]
      %v2332 = vld [vmem:[%s293 + $0x40] sm:$0xff]
      %v2333 = vld [vmem:[%s293 + $0x48] sm:$0xff]
      %v2334 = vld [vmem:[%s293 + $0x50] sm:$0xff]
      %v2335 = vld [vmem:[%s293 + $0x58] sm:$0xff]
      %v2336 = vld [vmem:[%s293 + $0x60] sm:$0xff]
      %v2337 = vld [vmem:[%s293 + $0x68] sm:$0xff]
      %v2338 = vld [vmem:[%s293 + $0x70] sm:$0xff]
      %v2339 = vld [vmem:[%s293 + $0x78] sm:$0xff]
      %v2340 = vld [vmem:[%s293 + $0x80] sm:$0xff]
      %v2341 = vld [vmem:[%s293 + $0x88] sm:$0xff]
      %v2342 = vld [vmem:[%s293 + $0x90] sm:$0xff]
      %v2343 = vld [vmem:[%s293 + $0x98] sm:$0xff]
      %v2344 = vld [vmem:[%s293 + $0xa0] sm:$0xff]
      %v2345 = vld [vmem:[%s293 + $0xa8] sm:$0xff]
      %v2346 = vld [vmem:[%s293 + $0xb0] sm:$0xff]
      %v2347 = vld [vmem:[%s293 + $0xb8] sm:$0xff]
      %v2348 = vld [vmem:[%s293 + $0xc0] sm:$0xff]
      %v2349 = vld [vmem:[%s293 + $0xc8] sm:$0xff]
      %v2350 = vld [vmem:[%s293 + $0xd0] sm:$0xff]
      %v2351 = vld [vmem:[%s293 + $0xd8] sm:$0xff]
      %v2352 = vld [vmem:[%s293 + $0xe0] sm:$0xff]
      %v2353 = vld [vmem:[%s293 + $0xe8] sm:$0x3f]
      %v2355 = vsel %vm384, %v2326, 0
      %v2358 = vsel %vm384, %v2327, 0
      %v2361 = vsel %vm384, %v2328, 0
      %v2364 = vsel %vm384, %v2329, 0
      %v2367 = vsel %vm384, %v2330, 0
      %v2370 = vsel %vm384, %v2331, 0
      %v2373 = vsel %vm384, %v2332, 0
      %v2376 = vsel %vm384, %v2333, 0
      %v2379 = vsel %vm384, %v2334, 0
      %v2382 = vsel %vm384, %v2335, 0
      %v2385 = vsel %vm384, %v2336, 0
      %v2388 = vsel %vm384, %v2337, 0
      %v2391 = vsel %vm384, %v2338, 0
      %v2394 = vsel %vm384, %v2339, 0
      %v2397 = vsel %vm384, %v2340, 0
      %v2400 = vsel %vm384, %v2341, 0
      %v2403 = vsel %vm384, %v2342, 0
      %v2406 = vsel %vm384, %v2343, 0
      %v2409 = vsel %vm384, %v2344, 0
      %v2412 = vsel %vm384, %v2345, 0
      %v2415 = vsel %vm384, %v2346, 0
      %v2418 = vsel %vm384, %v2347, 0
      %v2421 = vsel %vm384, %v2348, 0
      %v2424 = vsel %vm384, %v2349, 0
      %v2427 = vsel %vm384, %v2350, 0
      %v2430 = vsel %vm384, %v2351, 0
      %v2433 = vsel %vm384, %v2352, 0
      %v2436 = vsel %vm384, %v2353, 0
      %v2439 = vsel %vm469, %v311, 0
      %2441 = vmatprep.subr.mxu0 0.0
      %2442 = vmatpush1.msra.mxu0 0.0
      %2443 = vmatprep.subr.mxu0 0.0
      %2444 = vmatpush1.msra.mxu0 0.0
      %2445 = vmatprep.subr.mxu0 0.0
      %2446 = vmatpush1.msra.mxu0 0.0
      %2447 = vmatprep.subr.mxu0 0.0
      %2448 = vmatpush1.msra.mxu0 0.0
      %2449 = vmatprep.subr.mxu0 0.0
      %2450 = vmatpush1.msra.mxu0 0.0
      %2451 = vmatprep.subr.mxu0 0.0
      %2452 = vmatpush1.msra.mxu0 0.0
      %2453 = vmatprep.subr.mxu0 0.0
      %2454 = vmatpush1.msra.mxu0 0.0
      %2455 = vmatprep.subr.mxu0 0.0
      %2456 = vmatpush1.msra.mxu0 0.0
      %2457 = vmatprep.subr.mxu0 0.0
      %2458 = vmatpush1.msra.mxu0 0.0
      %2459 = vmatprep.subr.mxu0 0.0
      %2460 = vmatpush1.msra.mxu0 0.0
      %2461 = vmatprep.subr.mxu0 0.0
      %2462 = vmatpush1.msra.mxu0 0.0
      %2463 = vmatprep.subr.mxu0 0.0
      %2464 = vmatpush1.msra.mxu0 0.0
      %2465 = vmatprep.subr.mxu0 0.0
      %2466 = vmatpush1.msra.mxu0 0.0
      %2467 = vmatprep.subr.mxu0 0.0
      %2468 = vmatpush1.msra.mxu0 0.0
      %2469 = vmatprep.subr.mxu0 0.0
      %2470 = vmatpush1.msra.mxu0 0.0
      %2471 = vmatprep.subr.mxu0 0.0
      %2472 = vmatpush1.msra.mxu0 %v2439
      %2473 = vmatprep.subr.mxu0 0.0
      %2474 = vmatpush2.msra.mxu0 0.0
      %2475 = vmatprep.subr.mxu0 0.0
      %2476 = vmatpush2.msra.mxu0 0.0
      %2477 = vmatprep.subr.mxu0 0.0
      %2478 = vmatpush2.msra.mxu0 0.0
      %2479 = vmatprep.subr.mxu0 0.0
      %2480 = vmatpush2.msra.mxu0 0.0
      %2481 = vmatprep.subr.mxu0 0.0
      %2482 = vmatpush2.msra.mxu0 0.0
      %2483 = vmatprep.subr.mxu0 0.0
      %2484 = vmatpush2.msra.mxu0 0.0
      %2485 = vmatprep.subr.mxu0 0.0
      %2486 = vmatpush2.msra.mxu0 0.0
      %2487 = vmatprep.subr.mxu0 0.0
      %2488 = vmatpush2.msra.mxu0 0.0
      %2489 = vmatprep.subr.mxu0 0.0
      %2490 = vmatpush2.msra.mxu0 0.0
      %2491 = vmatprep.subr.mxu0 0.0
      %2492 = vmatpush2.msra.mxu0 0.0
      %2493 = vmatprep.subr.mxu0 0.0
      %2494 = vmatpush2.msra.mxu0 0.0
      %2495 = vmatprep.subr.mxu0 0.0
      %2496 = vmatpush2.msra.mxu0 0.0
      %2497 = vmatprep.subr.mxu0 0.0
      %2498 = vmatpush2.msra.mxu0 0.0
      %2499 = vmatprep.subr.mxu0 0.0
      %2500 = vmatpush2.msra.mxu0 0.0
      %2501 = vmatprep.subr.mxu0 0.0
      %2502 = vmatpush2.msra.mxu0 0.0
      %2503 = vmatprep.subr.mxu0 0.0
      %2504 = vmatpush2.msra.mxu0 0.0
      %2505 = vmatprep.mubr.f32.mxu0 0.0
      %2506 = vmatmul.mubr.f32.gmra.mxu0 %v2355
      %v2507 = vpop.f32.mrf.mxu0
      %v2508 = vadd.f32 0.0, %v2507
      %v2509 = vpop.f32.mrf.mxu0
      %2510 = vmatprep.mubr.f32.mxu0 0.0
      %2511 = vmatmul.mubr.f32.gmra.mxu0 %v2358
      %v2512 = vpop.f32.mrf.mxu0
      %v2513 = vadd.f32 0.0, %v2512
      %v2514 = vpop.f32.mrf.mxu0
      %2515 = vmatprep.mubr.f32.mxu0 0.0
      %2516 = vmatmul.mubr.f32.gmra.mxu0 %v2361
      %v2517 = vpop.f32.mrf.mxu0
      %v2518 = vadd.f32 0.0, %v2517
      %v2519 = vpop.f32.mrf.mxu0
      %2520 = vmatprep.mubr.f32.mxu0 0.0
      %2521 = vmatmul.mubr.f32.gmra.mxu0 %v2364
      %v2522 = vpop.f32.mrf.mxu0
      %v2523 = vadd.f32 0.0, %v2522
      %v2524 = vpop.f32.mrf.mxu0
      %2525 = vmatprep.mubr.f32.mxu0 0.0
      %2526 = vmatmul.mubr.f32.gmra.mxu0 %v2367
      %v2527 = vpop.f32.mrf.mxu0
      %v2528 = vadd.f32 0.0, %v2527
      %v2529 = vpop.f32.mrf.mxu0
      %2530 = vmatprep.mubr.f32.mxu0 0.0
      %2531 = vmatmul.mubr.f32.gmra.mxu0 %v2370
      %v2532 = vpop.f32.mrf.mxu0
      %v2533 = vadd.f32 0.0, %v2532
      %v2534 = vpop.f32.mrf.mxu0
      %2535 = vmatprep.mubr.f32.mxu0 0.0
      %2536 = vmatmul.mubr.f32.gmra.mxu0 %v2373
      %v2537 = vpop.f32.mrf.mxu0
      %v2538 = vadd.f32 0.0, %v2537
      %v2539 = vpop.f32.mrf.mxu0
      %2540 = vmatprep.mubr.f32.mxu0 0.0
      %2541 = vmatmul.mubr.f32.gmra.mxu0 %v2376
      %v2542 = vpop.f32.mrf.mxu0
      %v2543 = vadd.f32 0.0, %v2542
      %v2544 = vpop.f32.mrf.mxu0
      %2545 = vmatprep.mubr.f32.mxu0 0.0
      %2546 = vmatmul.mubr.f32.gmra.mxu0 %v2379
      %v2547 = vpop.f32.mrf.mxu0
      %v2548 = vadd.f32 0.0, %v2547
      %v2549 = vpop.f32.mrf.mxu0
      %2550 = vmatprep.mubr.f32.mxu0 0.0
      %2551 = vmatmul.mubr.f32.gmra.mxu0 %v2382
      %v2552 = vpop.f32.mrf.mxu0
      %v2553 = vadd.f32 0.0, %v2552
      %v2554 = vpop.f32.mrf.mxu0
      %2555 = vmatprep.mubr.f32.mxu0 0.0
      %2556 = vmatmul.mubr.f32.gmra.mxu0 %v2385
      %v2557 = vpop.f32.mrf.mxu0
      %v2558 = vadd.f32 0.0, %v2557
      %v2559 = vpop.f32.mrf.mxu0
      %2560 = vmatprep.mubr.f32.mxu0 0.0
      %2561 = vmatmul.mubr.f32.gmra.mxu0 %v2388
      %v2562 = vpop.f32.mrf.mxu0
      %v2563 = vadd.f32 0.0, %v2562
      %v2564 = vpop.f32.mrf.mxu0
      %2565 = vmatprep.mubr.f32.mxu0 0.0
      %2566 = vmatmul.mubr.f32.gmra.mxu0 %v2391
      %v2567 = vpop.f32.mrf.mxu0
      %v2568 = vadd.f32 0.0, %v2567
      %v2569 = vpop.f32.mrf.mxu0
      %2570 = vmatprep.mubr.f32.mxu0 0.0
      %2571 = vmatmul.mubr.f32.gmra.mxu0 %v2394
      %v2572 = vpop.f32.mrf.mxu0
      %v2573 = vadd.f32 0.0, %v2572
      %v2574 = vpop.f32.mrf.mxu0
      %2575 = vmatprep.mubr.f32.mxu0 0.0
      %2576 = vmatmul.mubr.f32.gmra.mxu0 %v2397
      %v2577 = vpop.f32.mrf.mxu0
      %v2578 = vadd.f32 0.0, %v2577
      %v2579 = vpop.f32.mrf.mxu0
      %2580 = vmatprep.mubr.f32.mxu0 0.0
      %2581 = vmatmul.mubr.f32.gmra.mxu0 %v2400
      %v2582 = vpop.f32.mrf.mxu0
      %v2583 = vadd.f32 0.0, %v2582
      %v2584 = vpop.f32.mrf.mxu0
      %2585 = vmatprep.mubr.f32.mxu0 0.0
      %2586 = vmatmul.mubr.f32.gmra.mxu0 %v2403
      %v2587 = vpop.f32.mrf.mxu0
      %v2588 = vadd.f32 0.0, %v2587
      %v2589 = vpop.f32.mrf.mxu0
      %2590 = vmatprep.mubr.f32.mxu0 0.0
      %2591 = vmatmul.mubr.f32.gmra.mxu0 %v2406
      %v2592 = vpop.f32.mrf.mxu0
      %v2593 = vadd.f32 0.0, %v2592
      %v2594 = vpop.f32.mrf.mxu0
      %2595 = vmatprep.mubr.f32.mxu0 0.0
      %2596 = vmatmul.mubr.f32.gmra.mxu0 %v2409
      %v2597 = vpop.f32.mrf.mxu0
      %v2598 = vadd.f32 0.0, %v2597
      %v2599 = vpop.f32.mrf.mxu0
      %2600 = vmatprep.mubr.f32.mxu0 0.0
      %2601 = vmatmul.mubr.f32.gmra.mxu0 %v2412
      %v2602 = vpop.f32.mrf.mxu0
      %v2603 = vadd.f32 0.0, %v2602
      %v2604 = vpop.f32.mrf.mxu0
      %2605 = vmatprep.mubr.f32.mxu0 0.0
      %2606 = vmatmul.mubr.f32.gmra.mxu0 %v2415
      %v2607 = vpop.f32.mrf.mxu0
      %v2608 = vadd.f32 0.0, %v2607
      %v2609 = vpop.f32.mrf.mxu0
      %2610 = vmatprep.mubr.f32.mxu0 0.0
      %2611 = vmatmul.mubr.f32.gmra.mxu0 %v2418
      %v2612 = vpop.f32.mrf.mxu0
      %v2613 = vadd.f32 0.0, %v2612
      %v2614 = vpop.f32.mrf.mxu0
      %2615 = vmatprep.mubr.f32.mxu0 0.0
      %2616 = vmatmul.mubr.f32.gmra.mxu0 %v2421
      %v2617 = vpop.f32.mrf.mxu0
      %v2618 = vadd.f32 0.0, %v2617
      %v2619 = vpop.f32.mrf.mxu0
      %2620 = vmatprep.mubr.f32.mxu0 0.0
      %2621 = vmatmul.mubr.f32.gmra.mxu0 %v2424
      %v2622 = vpop.f32.mrf.mxu0
      %v2623 = vadd.f32 0.0, %v2622
      %v2624 = vpop.f32.mrf.mxu0
      %2625 = vmatprep.mubr.f32.mxu0 0.0
      %2626 = vmatmul.mubr.f32.gmra.mxu0 %v2427
      %v2627 = vpop.f32.mrf.mxu0
      %v2628 = vadd.f32 0.0, %v2627
      %v2629 = vpop.f32.mrf.mxu0
      %2630 = vmatprep.mubr.f32.mxu0 0.0
      %2631 = vmatmul.mubr.f32.gmra.mxu0 %v2430
      %v2632 = vpop.f32.mrf.mxu0
      %v2633 = vadd.f32 0.0, %v2632
      %v2634 = vpop.f32.mrf.mxu0
      %2635 = vmatprep.mubr.f32.mxu0 0.0
      %2636 = vmatmul.mubr.f32.gmra.mxu0 %v2433
      %v2637 = vpop.f32.mrf.mxu0
      %v2638 = vadd.f32 0.0, %v2637
      %v2639 = vpop.f32.mrf.mxu0
      %2640 = vmatprep.mubr.f32.mxu0 0.0
      %2641 = vmatmul.mubr.f32.gmra.mxu0 %v2436
      %v2642 = vpop.f32.mrf.mxu0
      %v2643 = vadd.f32 0.0, %v2642
      %v2644 = vpop.f32.mrf.mxu0
      %2645 = vdwg.mxu0
      %v2647 = vsel %vm678, %v2298, 0
      %v2650 = vsel %vm678, %v2299, 0
      %v2653 = vsel %vm678, %v2300, 0
      %v2656 = vsel %vm678, %v2301, 0
      %v2659 = vsel %vm678, %v2302, 0
      %v2662 = vsel %vm678, %v2303, 0
      %v2665 = vsel %vm678, %v2304, 0
      %v2668 = vsel %vm678, %v2305, 0
      %v2671 = vsel %vm678, %v2306, 0
      %v2674 = vsel %vm678, %v2307, 0
      %v2677 = vsel %vm678, %v2308, 0
      %v2680 = vsel %vm678, %v2309, 0
      %v2683 = vsel %vm678, %v2310, 0
      %v2686 = vsel %vm678, %v2311, 0
      %v2689 = vsel %vm678, %v2312, 0
      %v2692 = vsel %vm678, %v2313, 0
      %v2695 = vsel %vm678, %v2314, 0
      %v2698 = vsel %vm678, %v2315, 0
      %v2701 = vsel %vm678, %v2316, 0
      %v2704 = vsel %vm678, %v2317, 0
      %v2707 = vsel %vm678, %v2318, 0
      %v2710 = vsel %vm678, %v2319, 0
      %v2713 = vsel %vm678, %v2320, 0
      %v2716 = vsel %vm678, %v2321, 0
      %v2719 = vsel %vm678, %v2322, 0
      %v2722 = vsel %vm678, %v2323, 0
      %v2725 = vsel %vm678, %v2324, 0
      %v2728 = vsel %vm678, %v2325, 0
      %2730 = vmatprep.subr.mxu0 0.0
      %2731 = vmatpush1.msra.mxu0 0.0
      %2732 = vmatprep.subr.mxu0 0.0
      %2733 = vmatpush1.msra.mxu0 0.0
      %2734 = vmatprep.subr.mxu0 0.0
      %2735 = vmatpush1.msra.mxu0 0.0
      %2736 = vmatprep.subr.mxu0 0.0
      %2737 = vmatpush1.msra.mxu0 0.0
      %2738 = vmatprep.subr.mxu0 0.0
      %2739 = vmatpush1.msra.mxu0 0.0
      %2740 = vmatprep.subr.mxu0 0.0
      %2741 = vmatpush1.msra.mxu0 0.0
      %2742 = vmatprep.subr.mxu0 0.0
      %2743 = vmatpush1.msra.mxu0 0.0
      %2744 = vmatprep.subr.mxu0 0.0
      %2745 = vmatpush1.msra.mxu0 0.0
      %2746 = vmatprep.subr.mxu0 0.0
      %2747 = vmatpush1.msra.mxu0 0.0
      %2748 = vmatprep.subr.mxu0 0.0
      %2749 = vmatpush1.msra.mxu0 0.0
      %2750 = vmatprep.subr.mxu0 0.0
      %2751 = vmatpush1.msra.mxu0 0.0
      %2752 = vmatprep.subr.mxu0 0.0
      %2753 = vmatpush1.msra.mxu0 0.0
      %2754 = vmatprep.subr.mxu0 0.0
      %2755 = vmatpush1.msra.mxu0 0.0
      %2756 = vmatprep.subr.mxu0 0.0
      %2757 = vmatpush1.msra.mxu0 0.0
      %2758 = vmatprep.subr.mxu0 0.0
      %2759 = vmatpush1.msra.mxu0 0.0
      %2760 = vmatprep.subr.mxu0 0.0
      %2761 = vmatpush1.msra.mxu0 %v302
      %2762 = vmatprep.subr.mxu0 0.0
      %2763 = vmatpush2.msra.mxu0 0.0
      %2764 = vmatprep.subr.mxu0 0.0
      %2765 = vmatpush2.msra.mxu0 0.0
      %2766 = vmatprep.subr.mxu0 0.0
      %2767 = vmatpush2.msra.mxu0 0.0
      %2768 = vmatprep.subr.mxu0 0.0
      %2769 = vmatpush2.msra.mxu0 0.0
      %2770 = vmatprep.subr.mxu0 0.0
      %2771 = vmatpush2.msra.mxu0 0.0
      %2772 = vmatprep.subr.mxu0 0.0
      %2773 = vmatpush2.msra.mxu0 0.0
      %2774 = vmatprep.subr.mxu0 0.0
      %2775 = vmatpush2.msra.mxu0 0.0
      %2776 = vmatprep.subr.mxu0 0.0
      %2777 = vmatpush2.msra.mxu0 0.0
      %2778 = vmatprep.subr.mxu0 0.0
      %2779 = vmatpush2.msra.mxu0 0.0
      %2780 = vmatprep.subr.mxu0 0.0
      %2781 = vmatpush2.msra.mxu0 0.0
      %2782 = vmatprep.subr.mxu0 0.0
      %2783 = vmatpush2.msra.mxu0 0.0
      %2784 = vmatprep.subr.mxu0 0.0
      %2785 = vmatpush2.msra.mxu0 0.0
      %2786 = vmatprep.subr.mxu0 0.0
      %2787 = vmatpush2.msra.mxu0 0.0
      %2788 = vmatprep.subr.mxu0 0.0
      %2789 = vmatpush2.msra.mxu0 0.0
      %2790 = vmatprep.subr.mxu0 0.0
      %2791 = vmatpush2.msra.mxu0 0.0
      %2792 = vmatprep.subr.mxu0 0.0
      %2793 = vmatpush2.msra.mxu0 0.0
      %2794 = vmatprep.mubr.f32.mxu0 0.0
      %2795 = vmatmul.mubr.f32.gmra.mxu0 %v2647
      %v2796 = vpop.f32.mrf.mxu0
      %v2797 = vadd.f32 %v2508, %v2796
      %v2798 = vpop.f32.mrf.mxu0
      %2799 = vmatprep.mubr.f32.mxu0 0.0
      %2800 = vmatmul.mubr.f32.gmra.mxu0 %v2650
      %v2801 = vpop.f32.mrf.mxu0
      %v2802 = vadd.f32 %v2513, %v2801
      %v2803 = vpop.f32.mrf.mxu0
      %2804 = vmatprep.mubr.f32.mxu0 0.0
      %2805 = vmatmul.mubr.f32.gmra.mxu0 %v2653
      %v2806 = vpop.f32.mrf.mxu0
      %v2807 = vadd.f32 %v2518, %v2806
      %v2808 = vpop.f32.mrf.mxu0
      %2809 = vmatprep.mubr.f32.mxu0 0.0
      %2810 = vmatmul.mubr.f32.gmra.mxu0 %v2656
      %v2811 = vpop.f32.mrf.mxu0
      %v2812 = vadd.f32 %v2523, %v2811
      %v2813 = vpop.f32.mrf.mxu0
      %2814 = vmatprep.mubr.f32.mxu0 0.0
      %2815 = vmatmul.mubr.f32.gmra.mxu0 %v2659
      %v2816 = vpop.f32.mrf.mxu0
      %v2817 = vadd.f32 %v2528, %v2816
      %v2818 = vpop.f32.mrf.mxu0
      %2819 = vmatprep.mubr.f32.mxu0 0.0
      %2820 = vmatmul.mubr.f32.gmra.mxu0 %v2662
      %v2821 = vpop.f32.mrf.mxu0
      %v2822 = vadd.f32 %v2533, %v2821
      %v2823 = vpop.f32.mrf.mxu0
      %2824 = vmatprep.mubr.f32.mxu0 0.0
      %2825 = vmatmul.mubr.f32.gmra.mxu0 %v2665
      %v2826 = vpop.f32.mrf.mxu0
      %v2827 = vadd.f32 %v2538, %v2826
      %v2828 = vpop.f32.mrf.mxu0
      %2829 = vmatprep.mubr.f32.mxu0 0.0
      %2830 = vmatmul.mubr.f32.gmra.mxu0 %v2668
      %v2831 = vpop.f32.mrf.mxu0
      %v2832 = vadd.f32 %v2543, %v2831
      %v2833 = vpop.f32.mrf.mxu0
      %2834 = vmatprep.mubr.f32.mxu0 0.0
      %2835 = vmatmul.mubr.f32.gmra.mxu0 %v2671
      %v2836 = vpop.f32.mrf.mxu0
      %v2837 = vadd.f32 %v2548, %v2836
      %v2838 = vpop.f32.mrf.mxu0
      %2839 = vmatprep.mubr.f32.mxu0 0.0
      %2840 = vmatmul.mubr.f32.gmra.mxu0 %v2674
      %v2841 = vpop.f32.mrf.mxu0
      %v2842 = vadd.f32 %v2553, %v2841
      %v2843 = vpop.f32.mrf.mxu0
      %2844 = vmatprep.mubr.f32.mxu0 0.0
      %2845 = vmatmul.mubr.f32.gmra.mxu0 %v2677
      %v2846 = vpop.f32.mrf.mxu0
      %v2847 = vadd.f32 %v2558, %v2846
      %v2848 = vpop.f32.mrf.mxu0
      %2849 = vmatprep.mubr.f32.mxu0 0.0
      %2850 = vmatmul.mubr.f32.gmra.mxu0 %v2680
      %v2851 = vpop.f32.mrf.mxu0
      %v2852 = vadd.f32 %v2563, %v2851
      %v2853 = vpop.f32.mrf.mxu0
      %2854 = vmatprep.mubr.f32.mxu0 0.0
      %2855 = vmatmul.mubr.f32.gmra.mxu0 %v2683
      %v2856 = vpop.f32.mrf.mxu0
      %v2857 = vadd.f32 %v2568, %v2856
      %v2858 = vpop.f32.mrf.mxu0
      %2859 = vmatprep.mubr.f32.mxu0 0.0
      %2860 = vmatmul.mubr.f32.gmra.mxu0 %v2686
      %v2861 = vpop.f32.mrf.mxu0
      %v2862 = vadd.f32 %v2573, %v2861
      %v2863 = vpop.f32.mrf.mxu0
      %2864 = vmatprep.mubr.f32.mxu0 0.0
      %2865 = vmatmul.mubr.f32.gmra.mxu0 %v2689
      %v2866 = vpop.f32.mrf.mxu0
      %v2867 = vadd.f32 %v2578, %v2866
      %v2868 = vpop.f32.mrf.mxu0
      %2869 = vmatprep.mubr.f32.mxu0 0.0
      %2870 = vmatmul.mubr.f32.gmra.mxu0 %v2692
      %v2871 = vpop.f32.mrf.mxu0
      %v2872 = vadd.f32 %v2583, %v2871
      %v2873 = vpop.f32.mrf.mxu0
      %2874 = vmatprep.mubr.f32.mxu0 0.0
      %2875 = vmatmul.mubr.f32.gmra.mxu0 %v2695
      %v2876 = vpop.f32.mrf.mxu0
      %v2877 = vadd.f32 %v2588, %v2876
      %v2878 = vpop.f32.mrf.mxu0
      %2879 = vmatprep.mubr.f32.mxu0 0.0
      %2880 = vmatmul.mubr.f32.gmra.mxu0 %v2698
      %v2881 = vpop.f32.mrf.mxu0
      %v2882 = vadd.f32 %v2593, %v2881
      %v2883 = vpop.f32.mrf.mxu0
      %2884 = vmatprep.mubr.f32.mxu0 0.0
      %2885 = vmatmul.mubr.f32.gmra.mxu0 %v2701
      %v2886 = vpop.f32.mrf.mxu0
      %v2887 = vadd.f32 %v2598, %v2886
      %v2888 = vpop.f32.mrf.mxu0
      %2889 = vmatprep.mubr.f32.mxu0 0.0
      %2890 = vmatmul.mubr.f32.gmra.mxu0 %v2704
      %v2891 = vpop.f32.mrf.mxu0
      %v2892 = vadd.f32 %v2603, %v2891
      %v2893 = vpop.f32.mrf.mxu0
      %2894 = vmatprep.mubr.f32.mxu0 0.0
      %2895 = vmatmul.mubr.f32.gmra.mxu0 %v2707
      %v2896 = vpop.f32.mrf.mxu0
      %v2897 = vadd.f32 %v2608, %v2896
      %v2898 = vpop.f32.mrf.mxu0
      %2899 = vmatprep.mubr.f32.mxu0 0.0
      %2900 = vmatmul.mubr.f32.gmra.mxu0 %v2710
      %v2901 = vpop.f32.mrf.mxu0
      %v2902 = vadd.f32 %v2613, %v2901
      %v2903 = vpop.f32.mrf.mxu0
      %2904 = vmatprep.mubr.f32.mxu0 0.0
      %2905 = vmatmul.mubr.f32.gmra.mxu0 %v2713
      %v2906 = vpop.f32.mrf.mxu0
      %v2907 = vadd.f32 %v2618, %v2906
      %v2908 = vpop.f32.mrf.mxu0
      %2909 = vmatprep.mubr.f32.mxu0 0.0
      %2910 = vmatmul.mubr.f32.gmra.mxu0 %v2716
      %v2911 = vpop.f32.mrf.mxu0
      %v2912 = vadd.f32 %v2623, %v2911
      %v2913 = vpop.f32.mrf.mxu0
      %2914 = vmatprep.mubr.f32.mxu0 0.0
      %2915 = vmatmul.mubr.f32.gmra.mxu0 %v2719
      %v2916 = vpop.f32.mrf.mxu0
      %v2917 = vadd.f32 %v2628, %v2916
      %v2918 = vpop.f32.mrf.mxu0
      %2919 = vmatprep.mubr.f32.mxu0 0.0
      %2920 = vmatmul.mubr.f32.gmra.mxu0 %v2722
      %v2921 = vpop.f32.mrf.mxu0
      %v2922 = vadd.f32 %v2633, %v2921
      %v2923 = vpop.f32.mrf.mxu0
      %2924 = vmatprep.mubr.f32.mxu0 0.0
      %2925 = vmatmul.mubr.f32.gmra.mxu0 %v2725
      %v2926 = vpop.f32.mrf.mxu0
      %v2927 = vadd.f32 %v2638, %v2926
      %v2928 = vpop.f32.mrf.mxu0
      %2929 = vmatprep.mubr.f32.mxu0 0.0
      %2930 = vmatmul.mubr.f32.gmra.mxu0 %v2728
      %v2931 = vpop.f32.mrf.mxu0
      %v2932 = vadd.f32 %v2643, %v2931
      %v2933 = vpop.f32.mrf.mxu0
      %2934 = vdwg.mxu0
      %v2935 = vadd.f32 %v2270, %v2797
      %v2936 = vadd.f32 %v2271, %v2802
      %v2937 = vadd.f32 %v2272, %v2807
      %v2938 = vadd.f32 %v2273, %v2812
      %v2939 = vadd.f32 %v2274, %v2817
      %v2940 = vadd.f32 %v2275, %v2822
      %v2941 = vadd.f32 %v2276, %v2827
      %v2942 = vadd.f32 %v2277, %v2832
      %v2943 = vadd.f32 %v2278, %v2837
      %v2944 = vadd.f32 %v2279, %v2842
      %v2945 = vadd.f32 %v2280, %v2847
      %v2946 = vadd.f32 %v2281, %v2852
      %v2947 = vadd.f32 %v2282, %v2857
      %v2948 = vadd.f32 %v2283, %v2862
      %v2949 = vadd.f32 %v2284, %v2867
      %v2950 = vadd.f32 %v2285, %v2872
      %v2951 = vadd.f32 %v2286, %v2877
      %v2952 = vadd.f32 %v2287, %v2882
      %v2953 = vadd.f32 %v2288, %v2887
      %v2954 = vadd.f32 %v2289, %v2892
      %v2955 = vadd.f32 %v2290, %v2897
      %v2956 = vadd.f32 %v2291, %v2902
      %v2957 = vadd.f32 %v2292, %v2907
      %v2958 = vadd.f32 %v2293, %v2912
      %v2959 = vadd.f32 %v2294, %v2917
      %v2960 = vadd.f32 %v2295, %v2922
      %v2961 = vadd.f32 %v2296, %v2927
      %v2962 = vadd.f32 %v2297, %v2932
      %v2963 = vld [vmem:[%s288 + $0x11] sm:$0xff]
      %v2964 = vld [vmem:[%s288 + $0x19] sm:$0xff]
      %v2965 = vld [vmem:[%s288 + $0x21] sm:$0xff]
      %v2966 = vld [vmem:[%s288 + $0x29] sm:$0xff]
      %v2967 = vld [vmem:[%s288 + $0x31] sm:$0xff]
      %v2968 = vld [vmem:[%s288 + $0x39] sm:$0xff]
      %v2969 = vld [vmem:[%s288 + $0x41] sm:$0xff]
      %v2970 = vld [vmem:[%s288 + $0x49] sm:$0xff]
      %v2971 = vld [vmem:[%s288 + $0x51] sm:$0xff]
      %v2972 = vld [vmem:[%s288 + $0x59] sm:$0xff]
      %v2973 = vld [vmem:[%s288 + $0x61] sm:$0xff]
      %v2974 = vld [vmem:[%s288 + $0x69] sm:$0xff]
      %v2975 = vld [vmem:[%s288 + $0x71] sm:$0xff]
      %v2976 = vld [vmem:[%s288 + $0x79] sm:$0xff]
      %v2977 = vld [vmem:[%s288 + $0x81] sm:$0xff]
      %v2978 = vld [vmem:[%s288 + $0x89] sm:$0xff]
      %v2979 = vld [vmem:[%s288 + $0x91] sm:$0xff]
      %v2980 = vld [vmem:[%s288 + $0x99] sm:$0xff]
      %v2981 = vld [vmem:[%s288 + $0xa1] sm:$0xff]
      %v2982 = vld [vmem:[%s288 + $0xa9] sm:$0xff]
      %v2983 = vld [vmem:[%s288 + $0xb1] sm:$0xff]
      %v2984 = vld [vmem:[%s288 + $0xb9] sm:$0xff]
      %v2985 = vld [vmem:[%s288 + $0xc1] sm:$0xff]
      %v2986 = vld [vmem:[%s288 + $0xc9] sm:$0xff]
      %v2987 = vld [vmem:[%s288 + $0xd1] sm:$0xff]
      %v2988 = vld [vmem:[%s288 + $0xd9] sm:$0xff]
      %v2989 = vld [vmem:[%s288 + $0xe1] sm:$0xff]
      %v2990 = vld [vmem:[%s288 + $0xe9] sm:$0x3f]
      %v2991 = vld [vmem:[%s293 + $0x11] sm:$0xff]
      %v2992 = vld [vmem:[%s293 + $0x19] sm:$0xff]
      %v2993 = vld [vmem:[%s293 + $0x21] sm:$0xff]
      %v2994 = vld [vmem:[%s293 + $0x29] sm:$0xff]
      %v2995 = vld [vmem:[%s293 + $0x31] sm:$0xff]
      %v2996 = vld [vmem:[%s293 + $0x39] sm:$0xff]
      %v2997 = vld [vmem:[%s293 + $0x41] sm:$0xff]
      %v2998 = vld [vmem:[%s293 + $0x49] sm:$0xff]
      %v2999 = vld [vmem:[%s293 + $0x51] sm:$0xff]
      %v3000 = vld [vmem:[%s293 + $0x59] sm:$0xff]
      %v3001 = vld [vmem:[%s293 + $0x61] sm:$0xff]
      %v3002 = vld [vmem:[%s293 + $0x69] sm:$0xff]
      %v3003 = vld [vmem:[%s293 + $0x71] sm:$0xff]
      %v3004 = vld [vmem:[%s293 + $0x79] sm:$0xff]
      %v3005 = vld [vmem:[%s293 + $0x81] sm:$0xff]
      %v3006 = vld [vmem:[%s293 + $0x89] sm:$0xff]
      %v3007 = vld [vmem:[%s293 + $0x91] sm:$0xff]
      %v3008 = vld [vmem:[%s293 + $0x99] sm:$0xff]
      %v3009 = vld [vmem:[%s293 + $0xa1] sm:$0xff]
      %v3010 = vld [vmem:[%s293 + $0xa9] sm:$0xff]
      %v3011 = vld [vmem:[%s293 + $0xb1] sm:$0xff]
      %v3012 = vld [vmem:[%s293 + $0xb9] sm:$0xff]
      %v3013 = vld [vmem:[%s293 + $0xc1] sm:$0xff]
      %v3014 = vld [vmem:[%s293 + $0xc9] sm:$0xff]
      %v3015 = vld [vmem:[%s293 + $0xd1] sm:$0xff]
      %v3016 = vld [vmem:[%s293 + $0xd9] sm:$0xff]
      %v3017 = vld [vmem:[%s293 + $0xe1] sm:$0xff]
      %v3018 = vld [vmem:[%s293 + $0xe9] sm:$0x3f]
      %v3020 = vsel %vm384, %v2991, 0
      %v3023 = vsel %vm384, %v2992, 0
      %v3026 = vsel %vm384, %v2993, 0
      %v3029 = vsel %vm384, %v2994, 0
      %v3032 = vsel %vm384, %v2995, 0
      %v3035 = vsel %vm384, %v2996, 0
      %v3038 = vsel %vm384, %v2997, 0
      %v3041 = vsel %vm384, %v2998, 0
      %v3044 = vsel %vm384, %v2999, 0
      %v3047 = vsel %vm384, %v3000, 0
      %v3050 = vsel %vm384, %v3001, 0
      %v3053 = vsel %vm384, %v3002, 0
      %v3056 = vsel %vm384, %v3003, 0
      %v3059 = vsel %vm384, %v3004, 0
      %v3062 = vsel %vm384, %v3005, 0
      %v3065 = vsel %vm384, %v3006, 0
      %v3068 = vsel %vm384, %v3007, 0
      %v3071 = vsel %vm384, %v3008, 0
      %v3074 = vsel %vm384, %v3009, 0
      %v3077 = vsel %vm384, %v3010, 0
      %v3080 = vsel %vm384, %v3011, 0
      %v3083 = vsel %vm384, %v3012, 0
      %v3086 = vsel %vm384, %v3013, 0
      %v3089 = vsel %vm384, %v3014, 0
      %v3092 = vsel %vm384, %v3015, 0
      %v3095 = vsel %vm384, %v3016, 0
      %v3098 = vsel %vm384, %v3017, 0
      %v3101 = vsel %vm384, %v3018, 0
      %v3104 = vsel %vm469, %v312, 0
      %3106 = vmatprep.subr.mxu0 0.0
      %3107 = vmatpush1.msra.mxu0 0.0
      %3108 = vmatprep.subr.mxu0 0.0
      %3109 = vmatpush1.msra.mxu0 0.0
      %3110 = vmatprep.subr.mxu0 0.0
      %3111 = vmatpush1.msra.mxu0 0.0
      %3112 = vmatprep.subr.mxu0 0.0
      %3113 = vmatpush1.msra.mxu0 0.0
      %3114 = vmatprep.subr.mxu0 0.0
      %3115 = vmatpush1.msra.mxu0 0.0
      %3116 = vmatprep.subr.mxu0 0.0
      %3117 = vmatpush1.msra.mxu0 0.0
      %3118 = vmatprep.subr.mxu0 0.0
      %3119 = vmatpush1.msra.mxu0 0.0
      %3120 = vmatprep.subr.mxu0 0.0
      %3121 = vmatpush1.msra.mxu0 0.0
      %3122 = vmatprep.subr.mxu0 0.0
      %3123 = vmatpush1.msra.mxu0 0.0
      %3124 = vmatprep.subr.mxu0 0.0
      %3125 = vmatpush1.msra.mxu0 0.0
      %3126 = vmatprep.subr.mxu0 0.0
      %3127 = vmatpush1.msra.mxu0 0.0
      %3128 = vmatprep.subr.mxu0 0.0
      %3129 = vmatpush1.msra.mxu0 0.0
      %3130 = vmatprep.subr.mxu0 0.0
      %3131 = vmatpush1.msra.mxu0 0.0
      %3132 = vmatprep.subr.mxu0 0.0
      %3133 = vmatpush1.msra.mxu0 0.0
      %3134 = vmatprep.subr.mxu0 0.0
      %3135 = vmatpush1.msra.mxu0 0.0
      %3136 = vmatprep.subr.mxu0 0.0
      %3137 = vmatpush1.msra.mxu0 %v3104
      %3138 = vmatprep.subr.mxu0 0.0
      %3139 = vmatpush2.msra.mxu0 0.0
      %3140 = vmatprep.subr.mxu0 0.0
      %3141 = vmatpush2.msra.mxu0 0.0
      %3142 = vmatprep.subr.mxu0 0.0
      %3143 = vmatpush2.msra.mxu0 0.0
      %3144 = vmatprep.subr.mxu0 0.0
      %3145 = vmatpush2.msra.mxu0 0.0
      %3146 = vmatprep.subr.mxu0 0.0
      %3147 = vmatpush2.msra.mxu0 0.0
      %3148 = vmatprep.subr.mxu0 0.0
      %3149 = vmatpush2.msra.mxu0 0.0
      %3150 = vmatprep.subr.mxu0 0.0
      %3151 = vmatpush2.msra.mxu0 0.0
      %3152 = vmatprep.subr.mxu0 0.0
      %3153 = vmatpush2.msra.mxu0 0.0
      %3154 = vmatprep.subr.mxu0 0.0
      %3155 = vmatpush2.msra.mxu0 0.0
      %3156 = vmatprep.subr.mxu0 0.0
      %3157 = vmatpush2.msra.mxu0 0.0
      %3158 = vmatprep.subr.mxu0 0.0
      %3159 = vmatpush2.msra.mxu0 0.0
      %3160 = vmatprep.subr.mxu0 0.0
      %3161 = vmatpush2.msra.mxu0 0.0
      %3162 = vmatprep.subr.mxu0 0.0
      %3163 = vmatpush2.msra.mxu0 0.0
      %3164 = vmatprep.subr.mxu0 0.0
      %3165 = vmatpush2.msra.mxu0 0.0
      %3166 = vmatprep.subr.mxu0 0.0
      %3167 = vmatpush2.msra.mxu0 0.0
      %3168 = vmatprep.subr.mxu0 0.0
      %3169 = vmatpush2.msra.mxu0 0.0
      %3170 = vmatprep.mubr.f32.mxu0 0.0
      %3171 = vmatmul.mubr.f32.gmra.mxu0 %v3020
      %v3172 = vpop.f32.mrf.mxu0
      %v3173 = vadd.f32 0.0, %v3172
      %v3174 = vpop.f32.mrf.mxu0
      %3175 = vmatprep.mubr.f32.mxu0 0.0
      %3176 = vmatmul.mubr.f32.gmra.mxu0 %v3023
      %v3177 = vpop.f32.mrf.mxu0
      %v3178 = vadd.f32 0.0, %v3177
      %v3179 = vpop.f32.mrf.mxu0
      %3180 = vmatprep.mubr.f32.mxu0 0.0
      %3181 = vmatmul.mubr.f32.gmra.mxu0 %v3026
      %v3182 = vpop.f32.mrf.mxu0
      %v3183 = vadd.f32 0.0, %v3182
      %v3184 = vpop.f32.mrf.mxu0
      %3185 = vmatprep.mubr.f32.mxu0 0.0
      %3186 = vmatmul.mubr.f32.gmra.mxu0 %v3029
      %v3187 = vpop.f32.mrf.mxu0
      %v3188 = vadd.f32 0.0, %v3187
      %v3189 = vpop.f32.mrf.mxu0
      %3190 = vmatprep.mubr.f32.mxu0 0.0
      %3191 = vmatmul.mubr.f32.gmra.mxu0 %v3032
      %v3192 = vpop.f32.mrf.mxu0
      %v3193 = vadd.f32 0.0, %v3192
      %v3194 = vpop.f32.mrf.mxu0
      %3195 = vmatprep.mubr.f32.mxu0 0.0
      %3196 = vmatmul.mubr.f32.gmra.mxu0 %v3035
      %v3197 = vpop.f32.mrf.mxu0
      %v3198 = vadd.f32 0.0, %v3197
      %v3199 = vpop.f32.mrf.mxu0
      %3200 = vmatprep.mubr.f32.mxu0 0.0
      %3201 = vmatmul.mubr.f32.gmra.mxu0 %v3038
      %v3202 = vpop.f32.mrf.mxu0
      %v3203 = vadd.f32 0.0, %v3202
      %v3204 = vpop.f32.mrf.mxu0
      %3205 = vmatprep.mubr.f32.mxu0 0.0
      %3206 = vmatmul.mubr.f32.gmra.mxu0 %v3041
      %v3207 = vpop.f32.mrf.mxu0
      %v3208 = vadd.f32 0.0, %v3207
      %v3209 = vpop.f32.mrf.mxu0
      %3210 = vmatprep.mubr.f32.mxu0 0.0
      %3211 = vmatmul.mubr.f32.gmra.mxu0 %v3044
      %v3212 = vpop.f32.mrf.mxu0
      %v3213 = vadd.f32 0.0, %v3212
      %v3214 = vpop.f32.mrf.mxu0
      %3215 = vmatprep.mubr.f32.mxu0 0.0
      %3216 = vmatmul.mubr.f32.gmra.mxu0 %v3047
      %v3217 = vpop.f32.mrf.mxu0
      %v3218 = vadd.f32 0.0, %v3217
      %v3219 = vpop.f32.mrf.mxu0
      %3220 = vmatprep.mubr.f32.mxu0 0.0
      %3221 = vmatmul.mubr.f32.gmra.mxu0 %v3050
      %v3222 = vpop.f32.mrf.mxu0
      %v3223 = vadd.f32 0.0, %v3222
      %v3224 = vpop.f32.mrf.mxu0
      %3225 = vmatprep.mubr.f32.mxu0 0.0
      %3226 = vmatmul.mubr.f32.gmra.mxu0 %v3053
      %v3227 = vpop.f32.mrf.mxu0
      %v3228 = vadd.f32 0.0, %v3227
      %v3229 = vpop.f32.mrf.mxu0
      %3230 = vmatprep.mubr.f32.mxu0 0.0
      %3231 = vmatmul.mubr.f32.gmra.mxu0 %v3056
      %v3232 = vpop.f32.mrf.mxu0
      %v3233 = vadd.f32 0.0, %v3232
      %v3234 = vpop.f32.mrf.mxu0
      %3235 = vmatprep.mubr.f32.mxu0 0.0
      %3236 = vmatmul.mubr.f32.gmra.mxu0 %v3059
      %v3237 = vpop.f32.mrf.mxu0
      %v3238 = vadd.f32 0.0, %v3237
      %v3239 = vpop.f32.mrf.mxu0
      %3240 = vmatprep.mubr.f32.mxu0 0.0
      %3241 = vmatmul.mubr.f32.gmra.mxu0 %v3062
      %v3242 = vpop.f32.mrf.mxu0
      %v3243 = vadd.f32 0.0, %v3242
      %v3244 = vpop.f32.mrf.mxu0
      %3245 = vmatprep.mubr.f32.mxu0 0.0
      %3246 = vmatmul.mubr.f32.gmra.mxu0 %v3065
      %v3247 = vpop.f32.mrf.mxu0
      %v3248 = vadd.f32 0.0, %v3247
      %v3249 = vpop.f32.mrf.mxu0
      %3250 = vmatprep.mubr.f32.mxu0 0.0
      %3251 = vmatmul.mubr.f32.gmra.mxu0 %v3068
      %v3252 = vpop.f32.mrf.mxu0
      %v3253 = vadd.f32 0.0, %v3252
      %v3254 = vpop.f32.mrf.mxu0
      %3255 = vmatprep.mubr.f32.mxu0 0.0
      %3256 = vmatmul.mubr.f32.gmra.mxu0 %v3071
      %v3257 = vpop.f32.mrf.mxu0
      %v3258 = vadd.f32 0.0, %v3257
      %v3259 = vpop.f32.mrf.mxu0
      %3260 = vmatprep.mubr.f32.mxu0 0.0
      %3261 = vmatmul.mubr.f32.gmra.mxu0 %v3074
      %v3262 = vpop.f32.mrf.mxu0
      %v3263 = vadd.f32 0.0, %v3262
      %v3264 = vpop.f32.mrf.mxu0
      %3265 = vmatprep.mubr.f32.mxu0 0.0
      %3266 = vmatmul.mubr.f32.gmra.mxu0 %v3077
      %v3267 = vpop.f32.mrf.mxu0
      %v3268 = vadd.f32 0.0, %v3267
      %v3269 = vpop.f32.mrf.mxu0
      %3270 = vmatprep.mubr.f32.mxu0 0.0
      %3271 = vmatmul.mubr.f32.gmra.mxu0 %v3080
      %v3272 = vpop.f32.mrf.mxu0
      %v3273 = vadd.f32 0.0, %v3272
      %v3274 = vpop.f32.mrf.mxu0
      %3275 = vmatprep.mubr.f32.mxu0 0.0
      %3276 = vmatmul.mubr.f32.gmra.mxu0 %v3083
      %v3277 = vpop.f32.mrf.mxu0
      %v3278 = vadd.f32 0.0, %v3277
      %v3279 = vpop.f32.mrf.mxu0
      %3280 = vmatprep.mubr.f32.mxu0 0.0
      %3281 = vmatmul.mubr.f32.gmra.mxu0 %v3086
      %v3282 = vpop.f32.mrf.mxu0
      %v3283 = vadd.f32 0.0, %v3282
      %v3284 = vpop.f32.mrf.mxu0
      %3285 = vmatprep.mubr.f32.mxu0 0.0
      %3286 = vmatmul.mubr.f32.gmra.mxu0 %v3089
      %v3287 = vpop.f32.mrf.mxu0
      %v3288 = vadd.f32 0.0, %v3287
      %v3289 = vpop.f32.mrf.mxu0
      %3290 = vmatprep.mubr.f32.mxu0 0.0
      %3291 = vmatmul.mubr.f32.gmra.mxu0 %v3092
      %v3292 = vpop.f32.mrf.mxu0
      %v3293 = vadd.f32 0.0, %v3292
      %v3294 = vpop.f32.mrf.mxu0
      %3295 = vmatprep.mubr.f32.mxu0 0.0
      %3296 = vmatmul.mubr.f32.gmra.mxu0 %v3095
      %v3297 = vpop.f32.mrf.mxu0
      %v3298 = vadd.f32 0.0, %v3297
      %v3299 = vpop.f32.mrf.mxu0
      %3300 = vmatprep.mubr.f32.mxu0 0.0
      %3301 = vmatmul.mubr.f32.gmra.mxu0 %v3098
      %v3302 = vpop.f32.mrf.mxu0
      %v3303 = vadd.f32 0.0, %v3302
      %v3304 = vpop.f32.mrf.mxu0
      %3305 = vmatprep.mubr.f32.mxu0 0.0
      %3306 = vmatmul.mubr.f32.gmra.mxu0 %v3101
      %v3307 = vpop.f32.mrf.mxu0
      %v3308 = vadd.f32 0.0, %v3307
      %v3309 = vpop.f32.mrf.mxu0
      %3310 = vdwg.mxu0
      %v3312 = vsel %vm678, %v2963, 0
      %v3315 = vsel %vm678, %v2964, 0
      %v3318 = vsel %vm678, %v2965, 0
      %v3321 = vsel %vm678, %v2966, 0
      %v3324 = vsel %vm678, %v2967, 0
      %v3327 = vsel %vm678, %v2968, 0
      %v3330 = vsel %vm678, %v2969, 0
      %v3333 = vsel %vm678, %v2970, 0
      %v3336 = vsel %vm678, %v2971, 0
      %v3339 = vsel %vm678, %v2972, 0
      %v3342 = vsel %vm678, %v2973, 0
      %v3345 = vsel %vm678, %v2974, 0
      %v3348 = vsel %vm678, %v2975, 0
      %v3351 = vsel %vm678, %v2976, 0
      %v3354 = vsel %vm678, %v2977, 0
      %v3357 = vsel %vm678, %v2978, 0
      %v3360 = vsel %vm678, %v2979, 0
      %v3363 = vsel %vm678, %v2980, 0
      %v3366 = vsel %vm678, %v2981, 0
      %v3369 = vsel %vm678, %v2982, 0
      %v3372 = vsel %vm678, %v2983, 0
      %v3375 = vsel %vm678, %v2984, 0
      %v3378 = vsel %vm678, %v2985, 0
      %v3381 = vsel %vm678, %v2986, 0
      %v3384 = vsel %vm678, %v2987, 0
      %v3387 = vsel %vm678, %v2988, 0
      %v3390 = vsel %vm678, %v2989, 0
      %v3393 = vsel %vm678, %v2990, 0
      %3395 = vmatprep.subr.mxu0 0.0
      %3396 = vmatpush1.msra.mxu0 0.0
      %3397 = vmatprep.subr.mxu0 0.0
      %3398 = vmatpush1.msra.mxu0 0.0
      %3399 = vmatprep.subr.mxu0 0.0
      %3400 = vmatpush1.msra.mxu0 0.0
      %3401 = vmatprep.subr.mxu0 0.0
      %3402 = vmatpush1.msra.mxu0 0.0
      %3403 = vmatprep.subr.mxu0 0.0
      %3404 = vmatpush1.msra.mxu0 0.0
      %3405 = vmatprep.subr.mxu0 0.0
      %3406 = vmatpush1.msra.mxu0 0.0
      %3407 = vmatprep.subr.mxu0 0.0
      %3408 = vmatpush1.msra.mxu0 0.0
      %3409 = vmatprep.subr.mxu0 0.0
      %3410 = vmatpush1.msra.mxu0 0.0
      %3411 = vmatprep.subr.mxu0 0.0
      %3412 = vmatpush1.msra.mxu0 0.0
      %3413 = vmatprep.subr.mxu0 0.0
      %3414 = vmatpush1.msra.mxu0 0.0
      %3415 = vmatprep.subr.mxu0 0.0
      %3416 = vmatpush1.msra.mxu0 0.0
      %3417 = vmatprep.subr.mxu0 0.0
      %3418 = vmatpush1.msra.mxu0 0.0
      %3419 = vmatprep.subr.mxu0 0.0
      %3420 = vmatpush1.msra.mxu0 0.0
      %3421 = vmatprep.subr.mxu0 0.0
      %3422 = vmatpush1.msra.mxu0 0.0
      %3423 = vmatprep.subr.mxu0 0.0
      %3424 = vmatpush1.msra.mxu0 0.0
      %3425 = vmatprep.subr.mxu0 0.0
      %3426 = vmatpush1.msra.mxu0 %v303
      %3427 = vmatprep.subr.mxu0 0.0
      %3428 = vmatpush2.msra.mxu0 0.0
      %3429 = vmatprep.subr.mxu0 0.0
      %3430 = vmatpush2.msra.mxu0 0.0
      %3431 = vmatprep.subr.mxu0 0.0
      %3432 = vmatpush2.msra.mxu0 0.0
      %3433 = vmatprep.subr.mxu0 0.0
      %3434 = vmatpush2.msra.mxu0 0.0
      %3435 = vmatprep.subr.mxu0 0.0
      %3436 = vmatpush2.msra.mxu0 0.0
      %3437 = vmatprep.subr.mxu0 0.0
      %3438 = vmatpush2.msra.mxu0 0.0
      %3439 = vmatprep.subr.mxu0 0.0
      %3440 = vmatpush2.msra.mxu0 0.0
      %3441 = vmatprep.subr.mxu0 0.0
      %3442 = vmatpush2.msra.mxu0 0.0
      %3443 = vmatprep.subr.mxu0 0.0
      %3444 = vmatpush2.msra.mxu0 0.0
      %3445 = vmatprep.subr.mxu0 0.0
      %3446 = vmatpush2.msra.mxu0 0.0
      %3447 = vmatprep.subr.mxu0 0.0
      %3448 = vmatpush2.msra.mxu0 0.0
      %3449 = vmatprep.subr.mxu0 0.0
      %3450 = vmatpush2.msra.mxu0 0.0
      %3451 = vmatprep.subr.mxu0 0.0
      %3452 = vmatpush2.msra.mxu0 0.0
      %3453 = vmatprep.subr.mxu0 0.0
      %3454 = vmatpush2.msra.mxu0 0.0
      %3455 = vmatprep.subr.mxu0 0.0
      %3456 = vmatpush2.msra.mxu0 0.0
      %3457 = vmatprep.subr.mxu0 0.0
      %3458 = vmatpush2.msra.mxu0 0.0
      %3459 = vmatprep.mubr.f32.mxu0 0.0
      %3460 = vmatmul.mubr.f32.gmra.mxu0 %v3312
      %v3461 = vpop.f32.mrf.mxu0
      %v3462 = vadd.f32 %v3173, %v3461
      %v3463 = vpop.f32.mrf.mxu0
      %3464 = vmatprep.mubr.f32.mxu0 0.0
      %3465 = vmatmul.mubr.f32.gmra.mxu0 %v3315
      %v3466 = vpop.f32.mrf.mxu0
      %v3467 = vadd.f32 %v3178, %v3466
      %v3468 = vpop.f32.mrf.mxu0
      %3469 = vmatprep.mubr.f32.mxu0 0.0
      %3470 = vmatmul.mubr.f32.gmra.mxu0 %v3318
      %v3471 = vpop.f32.mrf.mxu0
      %v3472 = vadd.f32 %v3183, %v3471
      %v3473 = vpop.f32.mrf.mxu0
      %3474 = vmatprep.mubr.f32.mxu0 0.0
      %3475 = vmatmul.mubr.f32.gmra.mxu0 %v3321
      %v3476 = vpop.f32.mrf.mxu0
      %v3477 = vadd.f32 %v3188, %v3476
      %v3478 = vpop.f32.mrf.mxu0
      %3479 = vmatprep.mubr.f32.mxu0 0.0
      %3480 = vmatmul.mubr.f32.gmra.mxu0 %v3324
      %v3481 = vpop.f32.mrf.mxu0
      %v3482 = vadd.f32 %v3193, %v3481
      %v3483 = vpop.f32.mrf.mxu0
      %3484 = vmatprep.mubr.f32.mxu0 0.0
      %3485 = vmatmul.mubr.f32.gmra.mxu0 %v3327
      %v3486 = vpop.f32.mrf.mxu0
      %v3487 = vadd.f32 %v3198, %v3486
      %v3488 = vpop.f32.mrf.mxu0
      %3489 = vmatprep.mubr.f32.mxu0 0.0
      %3490 = vmatmul.mubr.f32.gmra.mxu0 %v3330
      %v3491 = vpop.f32.mrf.mxu0
      %v3492 = vadd.f32 %v3203, %v3491
      %v3493 = vpop.f32.mrf.mxu0
      %3494 = vmatprep.mubr.f32.mxu0 0.0
      %3495 = vmatmul.mubr.f32.gmra.mxu0 %v3333
      %v3496 = vpop.f32.mrf.mxu0
      %v3497 = vadd.f32 %v3208, %v3496
      %v3498 = vpop.f32.mrf.mxu0
      %3499 = vmatprep.mubr.f32.mxu0 0.0
      %3500 = vmatmul.mubr.f32.gmra.mxu0 %v3336
      %v3501 = vpop.f32.mrf.mxu0
      %v3502 = vadd.f32 %v3213, %v3501
      %v3503 = vpop.f32.mrf.mxu0
      %3504 = vmatprep.mubr.f32.mxu0 0.0
      %3505 = vmatmul.mubr.f32.gmra.mxu0 %v3339
      %v3506 = vpop.f32.mrf.mxu0
      %v3507 = vadd.f32 %v3218, %v3506
      %v3508 = vpop.f32.mrf.mxu0
      %3509 = vmatprep.mubr.f32.mxu0 0.0
      %3510 = vmatmul.mubr.f32.gmra.mxu0 %v3342
      %v3511 = vpop.f32.mrf.mxu0
      %v3512 = vadd.f32 %v3223, %v3511
      %v3513 = vpop.f32.mrf.mxu0
      %3514 = vmatprep.mubr.f32.mxu0 0.0
      %3515 = vmatmul.mubr.f32.gmra.mxu0 %v3345
      %v3516 = vpop.f32.mrf.mxu0
      %v3517 = vadd.f32 %v3228, %v3516
      %v3518 = vpop.f32.mrf.mxu0
      %3519 = vmatprep.mubr.f32.mxu0 0.0
      %3520 = vmatmul.mubr.f32.gmra.mxu0 %v3348
      %v3521 = vpop.f32.mrf.mxu0
      %v3522 = vadd.f32 %v3233, %v3521
      %v3523 = vpop.f32.mrf.mxu0
      %3524 = vmatprep.mubr.f32.mxu0 0.0
      %3525 = vmatmul.mubr.f32.gmra.mxu0 %v3351
      %v3526 = vpop.f32.mrf.mxu0
      %v3527 = vadd.f32 %v3238, %v3526
      %v3528 = vpop.f32.mrf.mxu0
      %3529 = vmatprep.mubr.f32.mxu0 0.0
      %3530 = vmatmul.mubr.f32.gmra.mxu0 %v3354
      %v3531 = vpop.f32.mrf.mxu0
      %v3532 = vadd.f32 %v3243, %v3531
      %v3533 = vpop.f32.mrf.mxu0
      %3534 = vmatprep.mubr.f32.mxu0 0.0
      %3535 = vmatmul.mubr.f32.gmra.mxu0 %v3357
      %v3536 = vpop.f32.mrf.mxu0
      %v3537 = vadd.f32 %v3248, %v3536
      %v3538 = vpop.f32.mrf.mxu0
      %3539 = vmatprep.mubr.f32.mxu0 0.0
      %3540 = vmatmul.mubr.f32.gmra.mxu0 %v3360
      %v3541 = vpop.f32.mrf.mxu0
      %v3542 = vadd.f32 %v3253, %v3541
      %v3543 = vpop.f32.mrf.mxu0
      %3544 = vmatprep.mubr.f32.mxu0 0.0
      %3545 = vmatmul.mubr.f32.gmra.mxu0 %v3363
      %v3546 = vpop.f32.mrf.mxu0
      %v3547 = vadd.f32 %v3258, %v3546
      %v3548 = vpop.f32.mrf.mxu0
      %3549 = vmatprep.mubr.f32.mxu0 0.0
      %3550 = vmatmul.mubr.f32.gmra.mxu0 %v3366
      %v3551 = vpop.f32.mrf.mxu0
      %v3552 = vadd.f32 %v3263, %v3551
      %v3553 = vpop.f32.mrf.mxu0
      %3554 = vmatprep.mubr.f32.mxu0 0.0
      %3555 = vmatmul.mubr.f32.gmra.mxu0 %v3369
      %v3556 = vpop.f32.mrf.mxu0
      %v3557 = vadd.f32 %v3268, %v3556
      %v3558 = vpop.f32.mrf.mxu0
      %3559 = vmatprep.mubr.f32.mxu0 0.0
      %3560 = vmatmul.mubr.f32.gmra.mxu0 %v3372
      %v3561 = vpop.f32.mrf.mxu0
      %v3562 = vadd.f32 %v3273, %v3561
      %v3563 = vpop.f32.mrf.mxu0
      %3564 = vmatprep.mubr.f32.mxu0 0.0
      %3565 = vmatmul.mubr.f32.gmra.mxu0 %v3375
      %v3566 = vpop.f32.mrf.mxu0
      %v3567 = vadd.f32 %v3278, %v3566
      %v3568 = vpop.f32.mrf.mxu0
      %3569 = vmatprep.mubr.f32.mxu0 0.0
      %3570 = vmatmul.mubr.f32.gmra.mxu0 %v3378
      %v3571 = vpop.f32.mrf.mxu0
      %v3572 = vadd.f32 %v3283, %v3571
      %v3573 = vpop.f32.mrf.mxu0
      %3574 = vmatprep.mubr.f32.mxu0 0.0
      %3575 = vmatmul.mubr.f32.gmra.mxu0 %v3381
      %v3576 = vpop.f32.mrf.mxu0
      %v3577 = vadd.f32 %v3288, %v3576
      %v3578 = vpop.f32.mrf.mxu0
      %3579 = vmatprep.mubr.f32.mxu0 0.0
      %3580 = vmatmul.mubr.f32.gmra.mxu0 %v3384
      %v3581 = vpop.f32.mrf.mxu0
      %v3582 = vadd.f32 %v3293, %v3581
      %v3583 = vpop.f32.mrf.mxu0
      %3584 = vmatprep.mubr.f32.mxu0 0.0
      %3585 = vmatmul.mubr.f32.gmra.mxu0 %v3387
      %v3586 = vpop.f32.mrf.mxu0
      %v3587 = vadd.f32 %v3298, %v3586
      %v3588 = vpop.f32.mrf.mxu0
      %3589 = vmatprep.mubr.f32.mxu0 0.0
      %3590 = vmatmul.mubr.f32.gmra.mxu0 %v3390
      %v3591 = vpop.f32.mrf.mxu0
      %v3592 = vadd.f32 %v3303, %v3591
      %v3593 = vpop.f32.mrf.mxu0
      %3594 = vmatprep.mubr.f32.mxu0 0.0
      %3595 = vmatmul.mubr.f32.gmra.mxu0 %v3393
      %v3596 = vpop.f32.mrf.mxu0
      %v3597 = vadd.f32 %v3308, %v3596
      %v3598 = vpop.f32.mrf.mxu0
      %3599 = vdwg.mxu0
      %v3600 = vadd.f32 %v2935, %v3462
      %v3601 = vadd.f32 %v2936, %v3467
      %v3602 = vadd.f32 %v2937, %v3472
      %v3603 = vadd.f32 %v2938, %v3477
      %v3604 = vadd.f32 %v2939, %v3482
      %v3605 = vadd.f32 %v2940, %v3487
      %v3606 = vadd.f32 %v2941, %v3492
      %v3607 = vadd.f32 %v2942, %v3497
      %v3608 = vadd.f32 %v2943, %v3502
      %v3609 = vadd.f32 %v2944, %v3507
      %v3610 = vadd.f32 %v2945, %v3512
      %v3611 = vadd.f32 %v2946, %v3517
      %v3612 = vadd.f32 %v2947, %v3522
      %v3613 = vadd.f32 %v2948, %v3527
      %v3614 = vadd.f32 %v2949, %v3532
      %v3615 = vadd.f32 %v2950, %v3537
      %v3616 = vadd.f32 %v2951, %v3542
      %v3617 = vadd.f32 %v2952, %v3547
      %v3618 = vadd.f32 %v2953, %v3552
      %v3619 = vadd.f32 %v2954, %v3557
      %v3620 = vadd.f32 %v2955, %v3562
      %v3621 = vadd.f32 %v2956, %v3567
      %v3622 = vadd.f32 %v2957, %v3572
      %v3623 = vadd.f32 %v2958, %v3577
      %v3624 = vadd.f32 %v2959, %v3582
      %v3625 = vadd.f32 %v2960, %v3587
      %v3626 = vadd.f32 %v2961, %v3592
      %v3627 = vadd.f32 %v2962, %v3597
      %v3628 = vld [vmem:[%s288 + $0x12] sm:$0xff]
      %v3629 = vld [vmem:[%s288 + $0x1a] sm:$0xff]
      %v3630 = vld [vmem:[%s288 + $0x22] sm:$0xff]
      %v3631 = vld [vmem:[%s288 + $0x2a] sm:$0xff]
      %v3632 = vld [vmem:[%s288 + $0x32] sm:$0xff]
      %v3633 = vld [vmem:[%s288 + $0x3a] sm:$0xff]
      %v3634 = vld [vmem:[%s288 + $0x42] sm:$0xff]
      %v3635 = vld [vmem:[%s288 + $0x4a] sm:$0xff]
      %v3636 = vld [vmem:[%s288 + $0x52] sm:$0xff]
      %v3637 = vld [vmem:[%s288 + $0x5a] sm:$0xff]
      %v3638 = vld [vmem:[%s288 + $0x62] sm:$0xff]
      %v3639 = vld [vmem:[%s288 + $0x6a] sm:$0xff]
      %v3640 = vld [vmem:[%s288 + $0x72] sm:$0xff]
      %v3641 = vld [vmem:[%s288 + $0x7a] sm:$0xff]
      %v3642 = vld [vmem:[%s288 + $0x82] sm:$0xff]
      %v3643 = vld [vmem:[%s288 + $0x8a] sm:$0xff]
      %v3644 = vld [vmem:[%s288 + $0x92] sm:$0xff]
      %v3645 = vld [vmem:[%s288 + $0x9a] sm:$0xff]
      %v3646 = vld [vmem:[%s288 + $0xa2] sm:$0xff]
      %v3647 = vld [vmem:[%s288 + $0xaa] sm:$0xff]
      %v3648 = vld [vmem:[%s288 + $0xb2] sm:$0xff]
      %v3649 = vld [vmem:[%s288 + $0xba] sm:$0xff]
      %v3650 = vld [vmem:[%s288 + $0xc2] sm:$0xff]
      %v3651 = vld [vmem:[%s288 + $0xca] sm:$0xff]
      %v3652 = vld [vmem:[%s288 + $0xd2] sm:$0xff]
      %v3653 = vld [vmem:[%s288 + $0xda] sm:$0xff]
      %v3654 = vld [vmem:[%s288 + $0xe2] sm:$0xff]
      %v3655 = vld [vmem:[%s288 + $0xea] sm:$0x3f]
      %v3656 = vld [vmem:[%s293 + $0x12] sm:$0xff]
      %v3657 = vld [vmem:[%s293 + $0x1a] sm:$0xff]
      %v3658 = vld [vmem:[%s293 + $0x22] sm:$0xff]
      %v3659 = vld [vmem:[%s293 + $0x2a] sm:$0xff]
      %v3660 = vld [vmem:[%s293 + $0x32] sm:$0xff]
      %v3661 = vld [vmem:[%s293 + $0x3a] sm:$0xff]
      %v3662 = vld [vmem:[%s293 + $0x42] sm:$0xff]
      %v3663 = vld [vmem:[%s293 + $0x4a] sm:$0xff]
      %v3664 = vld [vmem:[%s293 + $0x52] sm:$0xff]
      %v3665 = vld [vmem:[%s293 + $0x5a] sm:$0xff]
      %v3666 = vld [vmem:[%s293 + $0x62] sm:$0xff]
      %v3667 = vld [vmem:[%s293 + $0x6a] sm:$0xff]
      %v3668 = vld [vmem:[%s293 + $0x72] sm:$0xff]
      %v3669 = vld [vmem:[%s293 + $0x7a] sm:$0xff]
      %v3670 = vld [vmem:[%s293 + $0x82] sm:$0xff]
      %v3671 = vld [vmem:[%s293 + $0x8a] sm:$0xff]
      %v3672 = vld [vmem:[%s293 + $0x92] sm:$0xff]
      %v3673 = vld [vmem:[%s293 + $0x9a] sm:$0xff]
      %v3674 = vld [vmem:[%s293 + $0xa2] sm:$0xff]
      %v3675 = vld [vmem:[%s293 + $0xaa] sm:$0xff]
      %v3676 = vld [vmem:[%s293 + $0xb2] sm:$0xff]
      %v3677 = vld [vmem:[%s293 + $0xba] sm:$0xff]
      %v3678 = vld [vmem:[%s293 + $0xc2] sm:$0xff]
      %v3679 = vld [vmem:[%s293 + $0xca] sm:$0xff]
      %v3680 = vld [vmem:[%s293 + $0xd2] sm:$0xff]
      %v3681 = vld [vmem:[%s293 + $0xda] sm:$0xff]
      %v3682 = vld [vmem:[%s293 + $0xe2] sm:$0xff]
      %v3683 = vld [vmem:[%s293 + $0xea] sm:$0x3f]
      %v3685 = vsel %vm384, %v3656, 0
      %v3688 = vsel %vm384, %v3657, 0
      %v3691 = vsel %vm384, %v3658, 0
      %v3694 = vsel %vm384, %v3659, 0
      %v3697 = vsel %vm384, %v3660, 0
      %v3700 = vsel %vm384, %v3661, 0
      %v3703 = vsel %vm384, %v3662, 0
      %v3706 = vsel %vm384, %v3663, 0
      %v3709 = vsel %vm384, %v3664, 0
      %v3712 = vsel %vm384, %v3665, 0
      %v3715 = vsel %vm384, %v3666, 0
      %v3718 = vsel %vm384, %v3667, 0
      %v3721 = vsel %vm384, %v3668, 0
      %v3724 = vsel %vm384, %v3669, 0
      %v3727 = vsel %vm384, %v3670, 0
      %v3730 = vsel %vm384, %v3671, 0
      %v3733 = vsel %vm384, %v3672, 0
      %v3736 = vsel %vm384, %v3673, 0
      %v3739 = vsel %vm384, %v3674, 0
      %v3742 = vsel %vm384, %v3675, 0
      %v3745 = vsel %vm384, %v3676, 0
      %v3748 = vsel %vm384, %v3677, 0
      %v3751 = vsel %vm384, %v3678, 0
      %v3754 = vsel %vm384, %v3679, 0
      %v3757 = vsel %vm384, %v3680, 0
      %v3760 = vsel %vm384, %v3681, 0
      %v3763 = vsel %vm384, %v3682, 0
      %v3766 = vsel %vm384, %v3683, 0
      %v3769 = vsel %vm469, %v313, 0
      %3771 = vmatprep.subr.mxu0 0.0
      %3772 = vmatpush1.msra.mxu0 0.0
      %3773 = vmatprep.subr.mxu0 0.0
      %3774 = vmatpush1.msra.mxu0 0.0
      %3775 = vmatprep.subr.mxu0 0.0
      %3776 = vmatpush1.msra.mxu0 0.0
      %3777 = vmatprep.subr.mxu0 0.0
      %3778 = vmatpush1.msra.mxu0 0.0
      %3779 = vmatprep.subr.mxu0 0.0
      %3780 = vmatpush1.msra.mxu0 0.0
      %3781 = vmatprep.subr.mxu0 0.0
      %3782 = vmatpush1.msra.mxu0 0.0
      %3783 = vmatprep.subr.mxu0 0.0
      %3784 = vmatpush1.msra.mxu0 0.0
      %3785 = vmatprep.subr.mxu0 0.0
      %3786 = vmatpush1.msra.mxu0 0.0
      %3787 = vmatprep.subr.mxu0 0.0
      %3788 = vmatpush1.msra.mxu0 0.0
      %3789 = vmatprep.subr.mxu0 0.0
      %3790 = vmatpush1.msra.mxu0 0.0
      %3791 = vmatprep.subr.mxu0 0.0
      %3792 = vmatpush1.msra.mxu0 0.0
      %3793 = vmatprep.subr.mxu0 0.0
      %3794 = vmatpush1.msra.mxu0 0.0
      %3795 = vmatprep.subr.mxu0 0.0
      %3796 = vmatpush1.msra.mxu0 0.0
      %3797 = vmatprep.subr.mxu0 0.0
      %3798 = vmatpush1.msra.mxu0 0.0
      %3799 = vmatprep.subr.mxu0 0.0
      %3800 = vmatpush1.msra.mxu0 0.0
      %3801 = vmatprep.subr.mxu0 0.0
      %3802 = vmatpush1.msra.mxu0 %v3769
      %3803 = vmatprep.subr.mxu0 0.0
      %3804 = vmatpush2.msra.mxu0 0.0
      %3805 = vmatprep.subr.mxu0 0.0
      %3806 = vmatpush2.msra.mxu0 0.0
      %3807 = vmatprep.subr.mxu0 0.0
      %3808 = vmatpush2.msra.mxu0 0.0
      %3809 = vmatprep.subr.mxu0 0.0
      %3810 = vmatpush2.msra.mxu0 0.0
      %3811 = vmatprep.subr.mxu0 0.0
      %3812 = vmatpush2.msra.mxu0 0.0
      %3813 = vmatprep.subr.mxu0 0.0
      %3814 = vmatpush2.msra.mxu0 0.0
      %3815 = vmatprep.subr.mxu0 0.0
      %3816 = vmatpush2.msra.mxu0 0.0
      %3817 = vmatprep.subr.mxu0 0.0
      %3818 = vmatpush2.msra.mxu0 0.0
      %3819 = vmatprep.subr.mxu0 0.0
      %3820 = vmatpush2.msra.mxu0 0.0
      %3821 = vmatprep.subr.mxu0 0.0
      %3822 = vmatpush2.msra.mxu0 0.0
      %3823 = vmatprep.subr.mxu0 0.0
      %3824 = vmatpush2.msra.mxu0 0.0
      %3825 = vmatprep.subr.mxu0 0.0
      %3826 = vmatpush2.msra.mxu0 0.0
      %3827 = vmatprep.subr.mxu0 0.0
      %3828 = vmatpush2.msra.mxu0 0.0
      %3829 = vmatprep.subr.mxu0 0.0
      %3830 = vmatpush2.msra.mxu0 0.0
      %3831 = vmatprep.subr.mxu0 0.0
      %3832 = vmatpush2.msra.mxu0 0.0
      %3833 = vmatprep.subr.mxu0 0.0
      %3834 = vmatpush2.msra.mxu0 0.0
      %3835 = vmatprep.mubr.f32.mxu0 0.0
      %3836 = vmatmul.mubr.f32.gmra.mxu0 %v3685
      %v3837 = vpop.f32.mrf.mxu0
      %v3838 = vadd.f32 0.0, %v3837
      %v3839 = vpop.f32.mrf.mxu0
      %3840 = vmatprep.mubr.f32.mxu0 0.0
      %3841 = vmatmul.mubr.f32.gmra.mxu0 %v3688
      %v3842 = vpop.f32.mrf.mxu0
      %v3843 = vadd.f32 0.0, %v3842
      %v3844 = vpop.f32.mrf.mxu0
      %3845 = vmatprep.mubr.f32.mxu0 0.0
      %3846 = vmatmul.mubr.f32.gmra.mxu0 %v3691
      %v3847 = vpop.f32.mrf.mxu0
      %v3848 = vadd.f32 0.0, %v3847
      %v3849 = vpop.f32.mrf.mxu0
      %3850 = vmatprep.mubr.f32.mxu0 0.0
      %3851 = vmatmul.mubr.f32.gmra.mxu0 %v3694
      %v3852 = vpop.f32.mrf.mxu0
      %v3853 = vadd.f32 0.0, %v3852
      %v3854 = vpop.f32.mrf.mxu0
      %3855 = vmatprep.mubr.f32.mxu0 0.0
      %3856 = vmatmul.mubr.f32.gmra.mxu0 %v3697
      %v3857 = vpop.f32.mrf.mxu0
      %v3858 = vadd.f32 0.0, %v3857
      %v3859 = vpop.f32.mrf.mxu0
      %3860 = vmatprep.mubr.f32.mxu0 0.0
      %3861 = vmatmul.mubr.f32.gmra.mxu0 %v3700
      %v3862 = vpop.f32.mrf.mxu0
      %v3863 = vadd.f32 0.0, %v3862
      %v3864 = vpop.f32.mrf.mxu0
      %3865 = vmatprep.mubr.f32.mxu0 0.0
      %3866 = vmatmul.mubr.f32.gmra.mxu0 %v3703
      %v3867 = vpop.f32.mrf.mxu0
      %v3868 = vadd.f32 0.0, %v3867
      %v3869 = vpop.f32.mrf.mxu0
      %3870 = vmatprep.mubr.f32.mxu0 0.0
      %3871 = vmatmul.mubr.f32.gmra.mxu0 %v3706
      %v3872 = vpop.f32.mrf.mxu0
      %v3873 = vadd.f32 0.0, %v3872
      %v3874 = vpop.f32.mrf.mxu0
      %3875 = vmatprep.mubr.f32.mxu0 0.0
      %3876 = vmatmul.mubr.f32.gmra.mxu0 %v3709
      %v3877 = vpop.f32.mrf.mxu0
      %v3878 = vadd.f32 0.0, %v3877
      %v3879 = vpop.f32.mrf.mxu0
      %3880 = vmatprep.mubr.f32.mxu0 0.0
      %3881 = vmatmul.mubr.f32.gmra.mxu0 %v3712
      %v3882 = vpop.f32.mrf.mxu0
      %v3883 = vadd.f32 0.0, %v3882
      %v3884 = vpop.f32.mrf.mxu0
      %3885 = vmatprep.mubr.f32.mxu0 0.0
      %3886 = vmatmul.mubr.f32.gmra.mxu0 %v3715
      %v3887 = vpop.f32.mrf.mxu0
      %v3888 = vadd.f32 0.0, %v3887
      %v3889 = vpop.f32.mrf.mxu0
      %3890 = vmatprep.mubr.f32.mxu0 0.0
      %3891 = vmatmul.mubr.f32.gmra.mxu0 %v3718
      %v3892 = vpop.f32.mrf.mxu0
      %v3893 = vadd.f32 0.0, %v3892
      %v3894 = vpop.f32.mrf.mxu0
      %3895 = vmatprep.mubr.f32.mxu0 0.0
      %3896 = vmatmul.mubr.f32.gmra.mxu0 %v3721
      %v3897 = vpop.f32.mrf.mxu0
      %v3898 = vadd.f32 0.0, %v3897
      %v3899 = vpop.f32.mrf.mxu0
      %3900 = vmatprep.mubr.f32.mxu0 0.0
      %3901 = vmatmul.mubr.f32.gmra.mxu0 %v3724
      %v3902 = vpop.f32.mrf.mxu0
      %v3903 = vadd.f32 0.0, %v3902
      %v3904 = vpop.f32.mrf.mxu0
      %3905 = vmatprep.mubr.f32.mxu0 0.0
      %3906 = vmatmul.mubr.f32.gmra.mxu0 %v3727
      %v3907 = vpop.f32.mrf.mxu0
      %v3908 = vadd.f32 0.0, %v3907
      %v3909 = vpop.f32.mrf.mxu0
      %3910 = vmatprep.mubr.f32.mxu0 0.0
      %3911 = vmatmul.mubr.f32.gmra.mxu0 %v3730
      %v3912 = vpop.f32.mrf.mxu0
      %v3913 = vadd.f32 0.0, %v3912
      %v3914 = vpop.f32.mrf.mxu0
      %3915 = vmatprep.mubr.f32.mxu0 0.0
      %3916 = vmatmul.mubr.f32.gmra.mxu0 %v3733
      %v3917 = vpop.f32.mrf.mxu0
      %v3918 = vadd.f32 0.0, %v3917
      %v3919 = vpop.f32.mrf.mxu0
      %3920 = vmatprep.mubr.f32.mxu0 0.0
      %3921 = vmatmul.mubr.f32.gmra.mxu0 %v3736
      %v3922 = vpop.f32.mrf.mxu0
      %v3923 = vadd.f32 0.0, %v3922
      %v3924 = vpop.f32.mrf.mxu0
      %3925 = vmatprep.mubr.f32.mxu0 0.0
      %3926 = vmatmul.mubr.f32.gmra.mxu0 %v3739
      %v3927 = vpop.f32.mrf.mxu0
      %v3928 = vadd.f32 0.0, %v3927
      %v3929 = vpop.f32.mrf.mxu0
      %3930 = vmatprep.mubr.f32.mxu0 0.0
      %3931 = vmatmul.mubr.f32.gmra.mxu0 %v3742
      %v3932 = vpop.f32.mrf.mxu0
      %v3933 = vadd.f32 0.0, %v3932
      %v3934 = vpop.f32.mrf.mxu0
      %3935 = vmatprep.mubr.f32.mxu0 0.0
      %3936 = vmatmul.mubr.f32.gmra.mxu0 %v3745
      %v3937 = vpop.f32.mrf.mxu0
      %v3938 = vadd.f32 0.0, %v3937
      %v3939 = vpop.f32.mrf.mxu0
      %3940 = vmatprep.mubr.f32.mxu0 0.0
      %3941 = vmatmul.mubr.f32.gmra.mxu0 %v3748
      %v3942 = vpop.f32.mrf.mxu0
      %v3943 = vadd.f32 0.0, %v3942
      %v3944 = vpop.f32.mrf.mxu0
      %3945 = vmatprep.mubr.f32.mxu0 0.0
      %3946 = vmatmul.mubr.f32.gmra.mxu0 %v3751
      %v3947 = vpop.f32.mrf.mxu0
      %v3948 = vadd.f32 0.0, %v3947
      %v3949 = vpop.f32.mrf.mxu0
      %3950 = vmatprep.mubr.f32.mxu0 0.0
      %3951 = vmatmul.mubr.f32.gmra.mxu0 %v3754
      %v3952 = vpop.f32.mrf.mxu0
      %v3953 = vadd.f32 0.0, %v3952
      %v3954 = vpop.f32.mrf.mxu0
      %3955 = vmatprep.mubr.f32.mxu0 0.0
      %3956 = vmatmul.mubr.f32.gmra.mxu0 %v3757
      %v3957 = vpop.f32.mrf.mxu0
      %v3958 = vadd.f32 0.0, %v3957
      %v3959 = vpop.f32.mrf.mxu0
      %3960 = vmatprep.mubr.f32.mxu0 0.0
      %3961 = vmatmul.mubr.f32.gmra.mxu0 %v3760
      %v3962 = vpop.f32.mrf.mxu0
      %v3963 = vadd.f32 0.0, %v3962
      %v3964 = vpop.f32.mrf.mxu0
      %3965 = vmatprep.mubr.f32.mxu0 0.0
      %3966 = vmatmul.mubr.f32.gmra.mxu0 %v3763
      %v3967 = vpop.f32.mrf.mxu0
      %v3968 = vadd.f32 0.0, %v3967
      %v3969 = vpop.f32.mrf.mxu0
      %3970 = vmatprep.mubr.f32.mxu0 0.0
      %3971 = vmatmul.mubr.f32.gmra.mxu0 %v3766
      %v3972 = vpop.f32.mrf.mxu0
      %v3973 = vadd.f32 0.0, %v3972
      %v3974 = vpop.f32.mrf.mxu0
      %3975 = vdwg.mxu0
      %v3977 = vsel %vm678, %v3628, 0
      %v3980 = vsel %vm678, %v3629, 0
      %v3983 = vsel %vm678, %v3630, 0
      %v3986 = vsel %vm678, %v3631, 0
      %v3989 = vsel %vm678, %v3632, 0
      %v3992 = vsel %vm678, %v3633, 0
      %v3995 = vsel %vm678, %v3634, 0
      %v3998 = vsel %vm678, %v3635, 0
      %v4001 = vsel %vm678, %v3636, 0
      %v4004 = vsel %vm678, %v3637, 0
      %v4007 = vsel %vm678, %v3638, 0
      %v4010 = vsel %vm678, %v3639, 0
      %v4013 = vsel %vm678, %v3640, 0
      %v4016 = vsel %vm678, %v3641, 0
      %v4019 = vsel %vm678, %v3642, 0
      %v4022 = vsel %vm678, %v3643, 0
      %v4025 = vsel %vm678, %v3644, 0
      %v4028 = vsel %vm678, %v3645, 0
      %v4031 = vsel %vm678, %v3646, 0
      %v4034 = vsel %vm678, %v3647, 0
      %v4037 = vsel %vm678, %v3648, 0
      %v4040 = vsel %vm678, %v3649, 0
      %v4043 = vsel %vm678, %v3650, 0
      %v4046 = vsel %vm678, %v3651, 0
      %v4049 = vsel %vm678, %v3652, 0
      %v4052 = vsel %vm678, %v3653, 0
      %v4055 = vsel %vm678, %v3654, 0
      %v4058 = vsel %vm678, %v3655, 0
      %4060 = vmatprep.subr.mxu0 0.0
      %4061 = vmatpush1.msra.mxu0 0.0
      %4062 = vmatprep.subr.mxu0 0.0
      %4063 = vmatpush1.msra.mxu0 0.0
      %4064 = vmatprep.subr.mxu0 0.0
      %4065 = vmatpush1.msra.mxu0 0.0
      %4066 = vmatprep.subr.mxu0 0.0
      %4067 = vmatpush1.msra.mxu0 0.0
      %4068 = vmatprep.subr.mxu0 0.0
      %4069 = vmatpush1.msra.mxu0 0.0
      %4070 = vmatprep.subr.mxu0 0.0
      %4071 = vmatpush1.msra.mxu0 0.0
      %4072 = vmatprep.subr.mxu0 0.0
      %4073 = vmatpush1.msra.mxu0 0.0
      %4074 = vmatprep.subr.mxu0 0.0
      %4075 = vmatpush1.msra.mxu0 0.0
      %4076 = vmatprep.subr.mxu0 0.0
      %4077 = vmatpush1.msra.mxu0 0.0
      %4078 = vmatprep.subr.mxu0 0.0
      %4079 = vmatpush1.msra.mxu0 0.0
      %4080 = vmatprep.subr.mxu0 0.0
      %4081 = vmatpush1.msra.mxu0 0.0
      %4082 = vmatprep.subr.mxu0 0.0
      %4083 = vmatpush1.msra.mxu0 0.0
      %4084 = vmatprep.subr.mxu0 0.0
      %4085 = vmatpush1.msra.mxu0 0.0
      %4086 = vmatprep.subr.mxu0 0.0
      %4087 = vmatpush1.msra.mxu0 0.0
      %4088 = vmatprep.subr.mxu0 0.0
      %4089 = vmatpush1.msra.mxu0 0.0
      %4090 = vmatprep.subr.mxu0 0.0
      %4091 = vmatpush1.msra.mxu0 %v304
      %4092 = vmatprep.subr.mxu0 0.0
      %4093 = vmatpush2.msra.mxu0 0.0
      %4094 = vmatprep.subr.mxu0 0.0
      %4095 = vmatpush2.msra.mxu0 0.0
      %4096 = vmatprep.subr.mxu0 0.0
      %4097 = vmatpush2.msra.mxu0 0.0
      %4098 = vmatprep.subr.mxu0 0.0
      %4099 = vmatpush2.msra.mxu0 0.0
      %4100 = vmatprep.subr.mxu0 0.0
      %4101 = vmatpush2.msra.mxu0 0.0
      %4102 = vmatprep.subr.mxu0 0.0
      %4103 = vmatpush2.msra.mxu0 0.0
      %4104 = vmatprep.subr.mxu0 0.0
      %4105 = vmatpush2.msra.mxu0 0.0
      %4106 = vmatprep.subr.mxu0 0.0
      %4107 = vmatpush2.msra.mxu0 0.0
      %4108 = vmatprep.subr.mxu0 0.0
      %4109 = vmatpush2.msra.mxu0 0.0
      %4110 = vmatprep.subr.mxu0 0.0
      %4111 = vmatpush2.msra.mxu0 0.0
      %4112 = vmatprep.subr.mxu0 0.0
      %4113 = vmatpush2.msra.mxu0 0.0
      %4114 = vmatprep.subr.mxu0 0.0
      %4115 = vmatpush2.msra.mxu0 0.0
      %4116 = vmatprep.subr.mxu0 0.0
      %4117 = vmatpush2.msra.mxu0 0.0
      %4118 = vmatprep.subr.mxu0 0.0
      %4119 = vmatpush2.msra.mxu0 0.0
      %4120 = vmatprep.subr.mxu0 0.0
      %4121 = vmatpush2.msra.mxu0 0.0
      %4122 = vmatprep.subr.mxu0 0.0
      %4123 = vmatpush2.msra.mxu0 0.0
      %4124 = vmatprep.mubr.f32.mxu0 0.0
      %4125 = vmatmul.mubr.f32.gmra.mxu0 %v3977
      %v4126 = vpop.f32.mrf.mxu0
      %v4127 = vadd.f32 %v3838, %v4126
      %v4128 = vpop.f32.mrf.mxu0
      %4129 = vmatprep.mubr.f32.mxu0 0.0
      %4130 = vmatmul.mubr.f32.gmra.mxu0 %v3980
      %v4131 = vpop.f32.mrf.mxu0
      %v4132 = vadd.f32 %v3843, %v4131
      %v4133 = vpop.f32.mrf.mxu0
      %4134 = vmatprep.mubr.f32.mxu0 0.0
      %4135 = vmatmul.mubr.f32.gmra.mxu0 %v3983
      %v4136 = vpop.f32.mrf.mxu0
      %v4137 = vadd.f32 %v3848, %v4136
      %v4138 = vpop.f32.mrf.mxu0
      %4139 = vmatprep.mubr.f32.mxu0 0.0
      %4140 = vmatmul.mubr.f32.gmra.mxu0 %v3986
      %v4141 = vpop.f32.mrf.mxu0
      %v4142 = vadd.f32 %v3853, %v4141
      %v4143 = vpop.f32.mrf.mxu0
      %4144 = vmatprep.mubr.f32.mxu0 0.0
      %4145 = vmatmul.mubr.f32.gmra.mxu0 %v3989
      %v4146 = vpop.f32.mrf.mxu0
      %v4147 = vadd.f32 %v3858, %v4146
      %v4148 = vpop.f32.mrf.mxu0
      %4149 = vmatprep.mubr.f32.mxu0 0.0
      %4150 = vmatmul.mubr.f32.gmra.mxu0 %v3992
      %v4151 = vpop.f32.mrf.mxu0
      %v4152 = vadd.f32 %v3863, %v4151
      %v4153 = vpop.f32.mrf.mxu0
      %4154 = vmatprep.mubr.f32.mxu0 0.0
      %4155 = vmatmul.mubr.f32.gmra.mxu0 %v3995
      %v4156 = vpop.f32.mrf.mxu0
      %v4157 = vadd.f32 %v3868, %v4156
      %v4158 = vpop.f32.mrf.mxu0
      %4159 = vmatprep.mubr.f32.mxu0 0.0
      %4160 = vmatmul.mubr.f32.gmra.mxu0 %v3998
      %v4161 = vpop.f32.mrf.mxu0
      %v4162 = vadd.f32 %v3873, %v4161
      %v4163 = vpop.f32.mrf.mxu0
      %4164 = vmatprep.mubr.f32.mxu0 0.0
      %4165 = vmatmul.mubr.f32.gmra.mxu0 %v4001
      %v4166 = vpop.f32.mrf.mxu0
      %v4167 = vadd.f32 %v3878, %v4166
      %v4168 = vpop.f32.mrf.mxu0
      %4169 = vmatprep.mubr.f32.mxu0 0.0
      %4170 = vmatmul.mubr.f32.gmra.mxu0 %v4004
      %v4171 = vpop.f32.mrf.mxu0
      %v4172 = vadd.f32 %v3883, %v4171
      %v4173 = vpop.f32.mrf.mxu0
      %4174 = vmatprep.mubr.f32.mxu0 0.0
      %4175 = vmatmul.mubr.f32.gmra.mxu0 %v4007
      %v4176 = vpop.f32.mrf.mxu0
      %v4177 = vadd.f32 %v3888, %v4176
      %v4178 = vpop.f32.mrf.mxu0
      %4179 = vmatprep.mubr.f32.mxu0 0.0
      %4180 = vmatmul.mubr.f32.gmra.mxu0 %v4010
      %v4181 = vpop.f32.mrf.mxu0
      %v4182 = vadd.f32 %v3893, %v4181
      %v4183 = vpop.f32.mrf.mxu0
      %4184 = vmatprep.mubr.f32.mxu0 0.0
      %4185 = vmatmul.mubr.f32.gmra.mxu0 %v4013
      %v4186 = vpop.f32.mrf.mxu0
      %v4187 = vadd.f32 %v3898, %v4186
      %v4188 = vpop.f32.mrf.mxu0
      %4189 = vmatprep.mubr.f32.mxu0 0.0
      %4190 = vmatmul.mubr.f32.gmra.mxu0 %v4016
      %v4191 = vpop.f32.mrf.mxu0
      %v4192 = vadd.f32 %v3903, %v4191
      %v4193 = vpop.f32.mrf.mxu0
      %4194 = vmatprep.mubr.f32.mxu0 0.0
      %4195 = vmatmul.mubr.f32.gmra.mxu0 %v4019
      %v4196 = vpop.f32.mrf.mxu0
      %v4197 = vadd.f32 %v3908, %v4196
      %v4198 = vpop.f32.mrf.mxu0
      %4199 = vmatprep.mubr.f32.mxu0 0.0
      %4200 = vmatmul.mubr.f32.gmra.mxu0 %v4022
      %v4201 = vpop.f32.mrf.mxu0
      %v4202 = vadd.f32 %v3913, %v4201
      %v4203 = vpop.f32.mrf.mxu0
      %4204 = vmatprep.mubr.f32.mxu0 0.0
      %4205 = vmatmul.mubr.f32.gmra.mxu0 %v4025
      %v4206 = vpop.f32.mrf.mxu0
      %v4207 = vadd.f32 %v3918, %v4206
      %v4208 = vpop.f32.mrf.mxu0
      %4209 = vmatprep.mubr.f32.mxu0 0.0
      %4210 = vmatmul.mubr.f32.gmra.mxu0 %v4028
      %v4211 = vpop.f32.mrf.mxu0
      %v4212 = vadd.f32 %v3923, %v4211
      %v4213 = vpop.f32.mrf.mxu0
      %4214 = vmatprep.mubr.f32.mxu0 0.0
      %4215 = vmatmul.mubr.f32.gmra.mxu0 %v4031
      %v4216 = vpop.f32.mrf.mxu0
      %v4217 = vadd.f32 %v3928, %v4216
      %v4218 = vpop.f32.mrf.mxu0
      %4219 = vmatprep.mubr.f32.mxu0 0.0
      %4220 = vmatmul.mubr.f32.gmra.mxu0 %v4034
      %v4221 = vpop.f32.mrf.mxu0
      %v4222 = vadd.f32 %v3933, %v4221
      %v4223 = vpop.f32.mrf.mxu0
      %4224 = vmatprep.mubr.f32.mxu0 0.0
      %4225 = vmatmul.mubr.f32.gmra.mxu0 %v4037
      %v4226 = vpop.f32.mrf.mxu0
      %v4227 = vadd.f32 %v3938, %v4226
      %v4228 = vpop.f32.mrf.mxu0
      %4229 = vmatprep.mubr.f32.mxu0 0.0
      %4230 = vmatmul.mubr.f32.gmra.mxu0 %v4040
      %v4231 = vpop.f32.mrf.mxu0
      %v4232 = vadd.f32 %v3943, %v4231
      %v4233 = vpop.f32.mrf.mxu0
      %4234 = vmatprep.mubr.f32.mxu0 0.0
      %4235 = vmatmul.mubr.f32.gmra.mxu0 %v4043
      %v4236 = vpop.f32.mrf.mxu0
      %v4237 = vadd.f32 %v3948, %v4236
      %v4238 = vpop.f32.mrf.mxu0
      %4239 = vmatprep.mubr.f32.mxu0 0.0
      %4240 = vmatmul.mubr.f32.gmra.mxu0 %v4046
      %v4241 = vpop.f32.mrf.mxu0
      %v4242 = vadd.f32 %v3953, %v4241
      %v4243 = vpop.f32.mrf.mxu0
      %4244 = vmatprep.mubr.f32.mxu0 0.0
      %4245 = vmatmul.mubr.f32.gmra.mxu0 %v4049
      %v4246 = vpop.f32.mrf.mxu0
      %v4247 = vadd.f32 %v3958, %v4246
      %v4248 = vpop.f32.mrf.mxu0
      %4249 = vmatprep.mubr.f32.mxu0 0.0
      %4250 = vmatmul.mubr.f32.gmra.mxu0 %v4052
      %v4251 = vpop.f32.mrf.mxu0
      %v4252 = vadd.f32 %v3963, %v4251
      %v4253 = vpop.f32.mrf.mxu0
      %4254 = vmatprep.mubr.f32.mxu0 0.0
      %4255 = vmatmul.mubr.f32.gmra.mxu0 %v4055
      %v4256 = vpop.f32.mrf.mxu0
      %v4257 = vadd.f32 %v3968, %v4256
      %v4258 = vpop.f32.mrf.mxu0
      %4259 = vmatprep.mubr.f32.mxu0 0.0
      %4260 = vmatmul.mubr.f32.gmra.mxu0 %v4058
      %v4261 = vpop.f32.mrf.mxu0
      %v4262 = vadd.f32 %v3973, %v4261
      %v4263 = vpop.f32.mrf.mxu0
      %4264 = vdwg.mxu0
      %v4265 = vadd.f32 %v3600, %v4127
      %v4266 = vadd.f32 %v3601, %v4132
      %v4267 = vadd.f32 %v3602, %v4137
      %v4268 = vadd.f32 %v3603, %v4142
      %v4269 = vadd.f32 %v3604, %v4147
      %v4270 = vadd.f32 %v3605, %v4152
      %v4271 = vadd.f32 %v3606, %v4157
      %v4272 = vadd.f32 %v3607, %v4162
      %v4273 = vadd.f32 %v3608, %v4167
      %v4274 = vadd.f32 %v3609, %v4172
      %v4275 = vadd.f32 %v3610, %v4177
      %v4276 = vadd.f32 %v3611, %v4182
      %v4277 = vadd.f32 %v3612, %v4187
      %v4278 = vadd.f32 %v3613, %v4192
      %v4279 = vadd.f32 %v3614, %v4197
      %v4280 = vadd.f32 %v3615, %v4202
      %v4281 = vadd.f32 %v3616, %v4207
      %v4282 = vadd.f32 %v3617, %v4212
      %v4283 = vadd.f32 %v3618, %v4217
      %v4284 = vadd.f32 %v3619, %v4222
      %v4285 = vadd.f32 %v3620, %v4227
      %v4286 = vadd.f32 %v3621, %v4232
      %v4287 = vadd.f32 %v3622, %v4237
      %v4288 = vadd.f32 %v3623, %v4242
      %v4289 = vadd.f32 %v3624, %v4247
      %v4290 = vadd.f32 %v3625, %v4252
      %v4291 = vadd.f32 %v3626, %v4257
      %v4292 = vadd.f32 %v3627, %v4262
      %v4293 = vld [vmem:[%s288 + $0x20] sm:$0xff]
      %v4294 = vld [vmem:[%s288 + $0x28] sm:$0xff]
      %v4295 = vld [vmem:[%s288 + $0x30] sm:$0xff]
      %v4296 = vld [vmem:[%s288 + $0x38] sm:$0xff]
      %v4297 = vld [vmem:[%s288 + $0x40] sm:$0xff]
      %v4298 = vld [vmem:[%s288 + $0x48] sm:$0xff]
      %v4299 = vld [vmem:[%s288 + $0x50] sm:$0xff]
      %v4300 = vld [vmem:[%s288 + $0x58] sm:$0xff]
      %v4301 = vld [vmem:[%s288 + $0x60] sm:$0xff]
      %v4302 = vld [vmem:[%s288 + $0x68] sm:$0xff]
      %v4303 = vld [vmem:[%s288 + $0x70] sm:$0xff]
      %v4304 = vld [vmem:[%s288 + $0x78] sm:$0xff]
      %v4305 = vld [vmem:[%s288 + $0x80] sm:$0xff]
      %v4306 = vld [vmem:[%s288 + $0x88] sm:$0xff]
      %v4307 = vld [vmem:[%s288 + $0x90] sm:$0xff]
      %v4308 = vld [vmem:[%s288 + $0x98] sm:$0xff]
      %v4309 = vld [vmem:[%s288 + $0xa0] sm:$0xff]
      %v4310 = vld [vmem:[%s288 + $0xa8] sm:$0xff]
      %v4311 = vld [vmem:[%s288 + $0xb0] sm:$0xff]
      %v4312 = vld [vmem:[%s288 + $0xb8] sm:$0xff]
      %v4313 = vld [vmem:[%s288 + $0xc0] sm:$0xff]
      %v4314 = vld [vmem:[%s288 + $0xc8] sm:$0xff]
      %v4315 = vld [vmem:[%s288 + $0xd0] sm:$0xff]
      %v4316 = vld [vmem:[%s288 + $0xd8] sm:$0xff]
      %v4317 = vld [vmem:[%s288 + $0xe0] sm:$0xff]
      %v4318 = vld [vmem:[%s288 + $0xe8] sm:$0xff]
      %v4319 = vld [vmem:[%s288 + $0xf0] sm:$0xff]
      %v4320 = vld [vmem:[%s288 + $0xf8] sm:$0x3f]
      %v4321 = vld [vmem:[%s293 + $0x20] sm:$0xff]
      %v4322 = vld [vmem:[%s293 + $0x28] sm:$0xff]
      %v4323 = vld [vmem:[%s293 + $0x30] sm:$0xff]
      %v4324 = vld [vmem:[%s293 + $0x38] sm:$0xff]
      %v4325 = vld [vmem:[%s293 + $0x40] sm:$0xff]
      %v4326 = vld [vmem:[%s293 + $0x48] sm:$0xff]
      %v4327 = vld [vmem:[%s293 + $0x50] sm:$0xff]
      %v4328 = vld [vmem:[%s293 + $0x58] sm:$0xff]
      %v4329 = vld [vmem:[%s293 + $0x60] sm:$0xff]
      %v4330 = vld [vmem:[%s293 + $0x68] sm:$0xff]
      %v4331 = vld [vmem:[%s293 + $0x70] sm:$0xff]
      %v4332 = vld [vmem:[%s293 + $0x78] sm:$0xff]
      %v4333 = vld [vmem:[%s293 + $0x80] sm:$0xff]
      %v4334 = vld [vmem:[%s293 + $0x88] sm:$0xff]
      %v4335 = vld [vmem:[%s293 + $0x90] sm:$0xff]
      %v4336 = vld [vmem:[%s293 + $0x98] sm:$0xff]
      %v4337 = vld [vmem:[%s293 + $0xa0] sm:$0xff]
      %v4338 = vld [vmem:[%s293 + $0xa8] sm:$0xff]
      %v4339 = vld [vmem:[%s293 + $0xb0] sm:$0xff]
      %v4340 = vld [vmem:[%s293 + $0xb8] sm:$0xff]
      %v4341 = vld [vmem:[%s293 + $0xc0] sm:$0xff]
      %v4342 = vld [vmem:[%s293 + $0xc8] sm:$0xff]
      %v4343 = vld [vmem:[%s293 + $0xd0] sm:$0xff]
      %v4344 = vld [vmem:[%s293 + $0xd8] sm:$0xff]
      %v4345 = vld [vmem:[%s293 + $0xe0] sm:$0xff]
      %v4346 = vld [vmem:[%s293 + $0xe8] sm:$0xff]
      %v4347 = vld [vmem:[%s293 + $0xf0] sm:$0xff]
      %v4348 = vld [vmem:[%s293 + $0xf8] sm:$0x3f]
      %v4350 = vsel %vm384, %v4321, 0
      %v4353 = vsel %vm384, %v4322, 0
      %v4356 = vsel %vm384, %v4323, 0
      %v4359 = vsel %vm384, %v4324, 0
      %v4362 = vsel %vm384, %v4325, 0
      %v4365 = vsel %vm384, %v4326, 0
      %v4368 = vsel %vm384, %v4327, 0
      %v4371 = vsel %vm384, %v4328, 0
      %v4374 = vsel %vm384, %v4329, 0
      %v4377 = vsel %vm384, %v4330, 0
      %v4380 = vsel %vm384, %v4331, 0
      %v4383 = vsel %vm384, %v4332, 0
      %v4386 = vsel %vm384, %v4333, 0
      %v4389 = vsel %vm384, %v4334, 0
      %v4392 = vsel %vm384, %v4335, 0
      %v4395 = vsel %vm384, %v4336, 0
      %v4398 = vsel %vm384, %v4337, 0
      %v4401 = vsel %vm384, %v4338, 0
      %v4404 = vsel %vm384, %v4339, 0
      %v4407 = vsel %vm384, %v4340, 0
      %v4410 = vsel %vm384, %v4341, 0
      %v4413 = vsel %vm384, %v4342, 0
      %v4416 = vsel %vm384, %v4343, 0
      %v4419 = vsel %vm384, %v4344, 0
      %v4422 = vsel %vm384, %v4345, 0
      %v4425 = vsel %vm384, %v4346, 0
      %v4428 = vsel %vm384, %v4347, 0
      %v4431 = vsel %vm384, %v4348, 0
      %v4434 = vsel %vm469, %v314, 0
      %4436 = vmatprep.subr.mxu0 0.0
      %4437 = vmatpush1.msra.mxu0 0.0
      %4438 = vmatprep.subr.mxu0 0.0
      %4439 = vmatpush1.msra.mxu0 0.0
      %4440 = vmatprep.subr.mxu0 0.0
      %4441 = vmatpush1.msra.mxu0 0.0
      %4442 = vmatprep.subr.mxu0 0.0
      %4443 = vmatpush1.msra.mxu0 0.0
      %4444 = vmatprep.subr.mxu0 0.0
      %4445 = vmatpush1.msra.mxu0 0.0
      %4446 = vmatprep.subr.mxu0 0.0
      %4447 = vmatpush1.msra.mxu0 0.0
      %4448 = vmatprep.subr.mxu0 0.0
      %4449 = vmatpush1.msra.mxu0 0.0
      %4450 = vmatprep.subr.mxu0 0.0
      %4451 = vmatpush1.msra.mxu0 0.0
      %4452 = vmatprep.subr.mxu0 0.0
      %4453 = vmatpush1.msra.mxu0 0.0
      %4454 = vmatprep.subr.mxu0 0.0
      %4455 = vmatpush1.msra.mxu0 0.0
      %4456 = vmatprep.subr.mxu0 0.0
      %4457 = vmatpush1.msra.mxu0 0.0
      %4458 = vmatprep.subr.mxu0 0.0
      %4459 = vmatpush1.msra.mxu0 0.0
      %4460 = vmatprep.subr.mxu0 0.0
      %4461 = vmatpush1.msra.mxu0 0.0
      %4462 = vmatprep.subr.mxu0 0.0
      %4463 = vmatpush1.msra.mxu0 0.0
      %4464 = vmatprep.subr.mxu0 0.0
      %4465 = vmatpush1.msra.mxu0 0.0
      %4466 = vmatprep.subr.mxu0 0.0
      %4467 = vmatpush1.msra.mxu0 %v4434
      %4468 = vmatprep.subr.mxu0 0.0
      %4469 = vmatpush2.msra.mxu0 0.0
      %4470 = vmatprep.subr.mxu0 0.0
      %4471 = vmatpush2.msra.mxu0 0.0
      %4472 = vmatprep.subr.mxu0 0.0
      %4473 = vmatpush2.msra.mxu0 0.0
      %4474 = vmatprep.subr.mxu0 0.0
      %4475 = vmatpush2.msra.mxu0 0.0
      %4476 = vmatprep.subr.mxu0 0.0
      %4477 = vmatpush2.msra.mxu0 0.0
      %4478 = vmatprep.subr.mxu0 0.0
      %4479 = vmatpush2.msra.mxu0 0.0
      %4480 = vmatprep.subr.mxu0 0.0
      %4481 = vmatpush2.msra.mxu0 0.0
      %4482 = vmatprep.subr.mxu0 0.0
      %4483 = vmatpush2.msra.mxu0 0.0
      %4484 = vmatprep.subr.mxu0 0.0
      %4485 = vmatpush2.msra.mxu0 0.0
      %4486 = vmatprep.subr.mxu0 0.0
      %4487 = vmatpush2.msra.mxu0 0.0
      %4488 = vmatprep.subr.mxu0 0.0
      %4489 = vmatpush2.msra.mxu0 0.0
      %4490 = vmatprep.subr.mxu0 0.0
      %4491 = vmatpush2.msra.mxu0 0.0
      %4492 = vmatprep.subr.mxu0 0.0
      %4493 = vmatpush2.msra.mxu0 0.0
      %4494 = vmatprep.subr.mxu0 0.0
      %4495 = vmatpush2.msra.mxu0 0.0
      %4496 = vmatprep.subr.mxu0 0.0
      %4497 = vmatpush2.msra.mxu0 0.0
      %4498 = vmatprep.subr.mxu0 0.0
      %4499 = vmatpush2.msra.mxu0 0.0
      %4500 = vmatprep.mubr.f32.mxu0 0.0
      %4501 = vmatmul.mubr.f32.gmra.mxu0 %v4350
      %v4502 = vpop.f32.mrf.mxu0
      %v4503 = vadd.f32 0.0, %v4502
      %v4504 = vpop.f32.mrf.mxu0
      %4505 = vmatprep.mubr.f32.mxu0 0.0
      %4506 = vmatmul.mubr.f32.gmra.mxu0 %v4353
      %v4507 = vpop.f32.mrf.mxu0
      %v4508 = vadd.f32 0.0, %v4507
      %v4509 = vpop.f32.mrf.mxu0
      %4510 = vmatprep.mubr.f32.mxu0 0.0
      %4511 = vmatmul.mubr.f32.gmra.mxu0 %v4356
      %v4512 = vpop.f32.mrf.mxu0
      %v4513 = vadd.f32 0.0, %v4512
      %v4514 = vpop.f32.mrf.mxu0
      %4515 = vmatprep.mubr.f32.mxu0 0.0
      %4516 = vmatmul.mubr.f32.gmra.mxu0 %v4359
      %v4517 = vpop.f32.mrf.mxu0
      %v4518 = vadd.f32 0.0, %v4517
      %v4519 = vpop.f32.mrf.mxu0
      %4520 = vmatprep.mubr.f32.mxu0 0.0
      %4521 = vmatmul.mubr.f32.gmra.mxu0 %v4362
      %v4522 = vpop.f32.mrf.mxu0
      %v4523 = vadd.f32 0.0, %v4522
      %v4524 = vpop.f32.mrf.mxu0
      %4525 = vmatprep.mubr.f32.mxu0 0.0
      %4526 = vmatmul.mubr.f32.gmra.mxu0 %v4365
      %v4527 = vpop.f32.mrf.mxu0
      %v4528 = vadd.f32 0.0, %v4527
      %v4529 = vpop.f32.mrf.mxu0
      %4530 = vmatprep.mubr.f32.mxu0 0.0
      %4531 = vmatmul.mubr.f32.gmra.mxu0 %v4368
      %v4532 = vpop.f32.mrf.mxu0
      %v4533 = vadd.f32 0.0, %v4532
      %v4534 = vpop.f32.mrf.mxu0
      %4535 = vmatprep.mubr.f32.mxu0 0.0
      %4536 = vmatmul.mubr.f32.gmra.mxu0 %v4371
      %v4537 = vpop.f32.mrf.mxu0
      %v4538 = vadd.f32 0.0, %v4537
      %v4539 = vpop.f32.mrf.mxu0
      %4540 = vmatprep.mubr.f32.mxu0 0.0
      %4541 = vmatmul.mubr.f32.gmra.mxu0 %v4374
      %v4542 = vpop.f32.mrf.mxu0
      %v4543 = vadd.f32 0.0, %v4542
      %v4544 = vpop.f32.mrf.mxu0
      %4545 = vmatprep.mubr.f32.mxu0 0.0
      %4546 = vmatmul.mubr.f32.gmra.mxu0 %v4377
      %v4547 = vpop.f32.mrf.mxu0
      %v4548 = vadd.f32 0.0, %v4547
      %v4549 = vpop.f32.mrf.mxu0
      %4550 = vmatprep.mubr.f32.mxu0 0.0
      %4551 = vmatmul.mubr.f32.gmra.mxu0 %v4380
      %v4552 = vpop.f32.mrf.mxu0
      %v4553 = vadd.f32 0.0, %v4552
      %v4554 = vpop.f32.mrf.mxu0
      %4555 = vmatprep.mubr.f32.mxu0 0.0
      %4556 = vmatmul.mubr.f32.gmra.mxu0 %v4383
      %v4557 = vpop.f32.mrf.mxu0
      %v4558 = vadd.f32 0.0, %v4557
      %v4559 = vpop.f32.mrf.mxu0
      %4560 = vmatprep.mubr.f32.mxu0 0.0
      %4561 = vmatmul.mubr.f32.gmra.mxu0 %v4386
      %v4562 = vpop.f32.mrf.mxu0
      %v4563 = vadd.f32 0.0, %v4562
      %v4564 = vpop.f32.mrf.mxu0
      %4565 = vmatprep.mubr.f32.mxu0 0.0
      %4566 = vmatmul.mubr.f32.gmra.mxu0 %v4389
      %v4567 = vpop.f32.mrf.mxu0
      %v4568 = vadd.f32 0.0, %v4567
      %v4569 = vpop.f32.mrf.mxu0
      %4570 = vmatprep.mubr.f32.mxu0 0.0
      %4571 = vmatmul.mubr.f32.gmra.mxu0 %v4392
      %v4572 = vpop.f32.mrf.mxu0
      %v4573 = vadd.f32 0.0, %v4572
      %v4574 = vpop.f32.mrf.mxu0
      %4575 = vmatprep.mubr.f32.mxu0 0.0
      %4576 = vmatmul.mubr.f32.gmra.mxu0 %v4395
      %v4577 = vpop.f32.mrf.mxu0
      %v4578 = vadd.f32 0.0, %v4577
      %v4579 = vpop.f32.mrf.mxu0
      %4580 = vmatprep.mubr.f32.mxu0 0.0
      %4581 = vmatmul.mubr.f32.gmra.mxu0 %v4398
      %v4582 = vpop.f32.mrf.mxu0
      %v4583 = vadd.f32 0.0, %v4582
      %v4584 = vpop.f32.mrf.mxu0
      %4585 = vmatprep.mubr.f32.mxu0 0.0
      %4586 = vmatmul.mubr.f32.gmra.mxu0 %v4401
      %v4587 = vpop.f32.mrf.mxu0
      %v4588 = vadd.f32 0.0, %v4587
      %v4589 = vpop.f32.mrf.mxu0
      %4590 = vmatprep.mubr.f32.mxu0 0.0
      %4591 = vmatmul.mubr.f32.gmra.mxu0 %v4404
      %v4592 = vpop.f32.mrf.mxu0
      %v4593 = vadd.f32 0.0, %v4592
      %v4594 = vpop.f32.mrf.mxu0
      %4595 = vmatprep.mubr.f32.mxu0 0.0
      %4596 = vmatmul.mubr.f32.gmra.mxu0 %v4407
      %v4597 = vpop.f32.mrf.mxu0
      %v4598 = vadd.f32 0.0, %v4597
      %v4599 = vpop.f32.mrf.mxu0
      %4600 = vmatprep.mubr.f32.mxu0 0.0
      %4601 = vmatmul.mubr.f32.gmra.mxu0 %v4410
      %v4602 = vpop.f32.mrf.mxu0
      %v4603 = vadd.f32 0.0, %v4602
      %v4604 = vpop.f32.mrf.mxu0
      %4605 = vmatprep.mubr.f32.mxu0 0.0
      %4606 = vmatmul.mubr.f32.gmra.mxu0 %v4413
      %v4607 = vpop.f32.mrf.mxu0
      %v4608 = vadd.f32 0.0, %v4607
      %v4609 = vpop.f32.mrf.mxu0
      %4610 = vmatprep.mubr.f32.mxu0 0.0
      %4611 = vmatmul.mubr.f32.gmra.mxu0 %v4416
      %v4612 = vpop.f32.mrf.mxu0
      %v4613 = vadd.f32 0.0, %v4612
      %v4614 = vpop.f32.mrf.mxu0
      %4615 = vmatprep.mubr.f32.mxu0 0.0
      %4616 = vmatmul.mubr.f32.gmra.mxu0 %v4419
      %v4617 = vpop.f32.mrf.mxu0
      %v4618 = vadd.f32 0.0, %v4617
      %v4619 = vpop.f32.mrf.mxu0
      %4620 = vmatprep.mubr.f32.mxu0 0.0
      %4621 = vmatmul.mubr.f32.gmra.mxu0 %v4422
      %v4622 = vpop.f32.mrf.mxu0
      %v4623 = vadd.f32 0.0, %v4622
      %v4624 = vpop.f32.mrf.mxu0
      %4625 = vmatprep.mubr.f32.mxu0 0.0
      %4626 = vmatmul.mubr.f32.gmra.mxu0 %v4425
      %v4627 = vpop.f32.mrf.mxu0
      %v4628 = vadd.f32 0.0, %v4627
      %v4629 = vpop.f32.mrf.mxu0
      %4630 = vmatprep.mubr.f32.mxu0 0.0
      %4631 = vmatmul.mubr.f32.gmra.mxu0 %v4428
      %v4632 = vpop.f32.mrf.mxu0
      %v4633 = vadd.f32 0.0, %v4632
      %v4634 = vpop.f32.mrf.mxu0
      %4635 = vmatprep.mubr.f32.mxu0 0.0
      %4636 = vmatmul.mubr.f32.gmra.mxu0 %v4431
      %v4637 = vpop.f32.mrf.mxu0
      %v4638 = vadd.f32 0.0, %v4637
      %v4639 = vpop.f32.mrf.mxu0
      %4640 = vdwg.mxu0
      %v4642 = vsel %vm678, %v4293, 0
      %v4645 = vsel %vm678, %v4294, 0
      %v4648 = vsel %vm678, %v4295, 0
      %v4651 = vsel %vm678, %v4296, 0
      %v4654 = vsel %vm678, %v4297, 0
      %v4657 = vsel %vm678, %v4298, 0
      %v4660 = vsel %vm678, %v4299, 0
      %v4663 = vsel %vm678, %v4300, 0
      %v4666 = vsel %vm678, %v4301, 0
      %v4669 = vsel %vm678, %v4302, 0
      %v4672 = vsel %vm678, %v4303, 0
      %v4675 = vsel %vm678, %v4304, 0
      %v4678 = vsel %vm678, %v4305, 0
      %v4681 = vsel %vm678, %v4306, 0
      %v4684 = vsel %vm678, %v4307, 0
      %v4687 = vsel %vm678, %v4308, 0
      %v4690 = vsel %vm678, %v4309, 0
      %v4693 = vsel %vm678, %v4310, 0
      %v4696 = vsel %vm678, %v4311, 0
      %v4699 = vsel %vm678, %v4312, 0
      %v4702 = vsel %vm678, %v4313, 0
      %v4705 = vsel %vm678, %v4314, 0
      %v4708 = vsel %vm678, %v4315, 0
      %v4711 = vsel %vm678, %v4316, 0
      %v4714 = vsel %vm678, %v4317, 0
      %v4717 = vsel %vm678, %v4318, 0
      %v4720 = vsel %vm678, %v4319, 0
      %v4723 = vsel %vm678, %v4320, 0
      %4725 = vmatprep.subr.mxu0 0.0
      %4726 = vmatpush1.msra.mxu0 0.0
      %4727 = vmatprep.subr.mxu0 0.0
      %4728 = vmatpush1.msra.mxu0 0.0
      %4729 = vmatprep.subr.mxu0 0.0
      %4730 = vmatpush1.msra.mxu0 0.0
      %4731 = vmatprep.subr.mxu0 0.0
      %4732 = vmatpush1.msra.mxu0 0.0
      %4733 = vmatprep.subr.mxu0 0.0
      %4734 = vmatpush1.msra.mxu0 0.0
      %4735 = vmatprep.subr.mxu0 0.0
      %4736 = vmatpush1.msra.mxu0 0.0
      %4737 = vmatprep.subr.mxu0 0.0
      %4738 = vmatpush1.msra.mxu0 0.0
      %4739 = vmatprep.subr.mxu0 0.0
      %4740 = vmatpush1.msra.mxu0 0.0
      %4741 = vmatprep.subr.mxu0 0.0
      %4742 = vmatpush1.msra.mxu0 0.0
      %4743 = vmatprep.subr.mxu0 0.0
      %4744 = vmatpush1.msra.mxu0 0.0
      %4745 = vmatprep.subr.mxu0 0.0
      %4746 = vmatpush1.msra.mxu0 0.0
      %4747 = vmatprep.subr.mxu0 0.0
      %4748 = vmatpush1.msra.mxu0 0.0
      %4749 = vmatprep.subr.mxu0 0.0
      %4750 = vmatpush1.msra.mxu0 0.0
      %4751 = vmatprep.subr.mxu0 0.0
      %4752 = vmatpush1.msra.mxu0 0.0
      %4753 = vmatprep.subr.mxu0 0.0
      %4754 = vmatpush1.msra.mxu0 0.0
      %4755 = vmatprep.subr.mxu0 0.0
      %4756 = vmatpush1.msra.mxu0 %v305
      %4757 = vmatprep.subr.mxu0 0.0
      %4758 = vmatpush2.msra.mxu0 0.0
      %4759 = vmatprep.subr.mxu0 0.0
      %4760 = vmatpush2.msra.mxu0 0.0
      %4761 = vmatprep.subr.mxu0 0.0
      %4762 = vmatpush2.msra.mxu0 0.0
      %4763 = vmatprep.subr.mxu0 0.0
      %4764 = vmatpush2.msra.mxu0 0.0
      %4765 = vmatprep.subr.mxu0 0.0
      %4766 = vmatpush2.msra.mxu0 0.0
      %4767 = vmatprep.subr.mxu0 0.0
      %4768 = vmatpush2.msra.mxu0 0.0
      %4769 = vmatprep.subr.mxu0 0.0
      %4770 = vmatpush2.msra.mxu0 0.0
      %4771 = vmatprep.subr.mxu0 0.0
      %4772 = vmatpush2.msra.mxu0 0.0
      %4773 = vmatprep.subr.mxu0 0.0
      %4774 = vmatpush2.msra.mxu0 0.0
      %4775 = vmatprep.subr.mxu0 0.0
      %4776 = vmatpush2.msra.mxu0 0.0
      %4777 = vmatprep.subr.mxu0 0.0
      %4778 = vmatpush2.msra.mxu0 0.0
      %4779 = vmatprep.subr.mxu0 0.0
      %4780 = vmatpush2.msra.mxu0 0.0
      %4781 = vmatprep.subr.mxu0 0.0
      %4782 = vmatpush2.msra.mxu0 0.0
      %4783 = vmatprep.subr.mxu0 0.0
      %4784 = vmatpush2.msra.mxu0 0.0
      %4785 = vmatprep.subr.mxu0 0.0
      %4786 = vmatpush2.msra.mxu0 0.0
      %4787 = vmatprep.subr.mxu0 0.0
      %4788 = vmatpush2.msra.mxu0 0.0
      %4789 = vmatprep.mubr.f32.mxu0 0.0
      %4790 = vmatmul.mubr.f32.gmra.mxu0 %v4642
      %v4791 = vpop.f32.mrf.mxu0
      %v4792 = vadd.f32 %v4503, %v4791
      %v4793 = vpop.f32.mrf.mxu0
      %4794 = vmatprep.mubr.f32.mxu0 0.0
      %4795 = vmatmul.mubr.f32.gmra.mxu0 %v4645
      %v4796 = vpop.f32.mrf.mxu0
      %v4797 = vadd.f32 %v4508, %v4796
      %v4798 = vpop.f32.mrf.mxu0
      %4799 = vmatprep.mubr.f32.mxu0 0.0
      %4800 = vmatmul.mubr.f32.gmra.mxu0 %v4648
      %v4801 = vpop.f32.mrf.mxu0
      %v4802 = vadd.f32 %v4513, %v4801
      %v4803 = vpop.f32.mrf.mxu0
      %4804 = vmatprep.mubr.f32.mxu0 0.0
      %4805 = vmatmul.mubr.f32.gmra.mxu0 %v4651
      %v4806 = vpop.f32.mrf.mxu0
      %v4807 = vadd.f32 %v4518, %v4806
      %v4808 = vpop.f32.mrf.mxu0
      %4809 = vmatprep.mubr.f32.mxu0 0.0
      %4810 = vmatmul.mubr.f32.gmra.mxu0 %v4654
      %v4811 = vpop.f32.mrf.mxu0
      %v4812 = vadd.f32 %v4523, %v4811
      %v4813 = vpop.f32.mrf.mxu0
      %4814 = vmatprep.mubr.f32.mxu0 0.0
      %4815 = vmatmul.mubr.f32.gmra.mxu0 %v4657
      %v4816 = vpop.f32.mrf.mxu0
      %v4817 = vadd.f32 %v4528, %v4816
      %v4818 = vpop.f32.mrf.mxu0
      %4819 = vmatprep.mubr.f32.mxu0 0.0
      %4820 = vmatmul.mubr.f32.gmra.mxu0 %v4660
      %v4821 = vpop.f32.mrf.mxu0
      %v4822 = vadd.f32 %v4533, %v4821
      %v4823 = vpop.f32.mrf.mxu0
      %4824 = vmatprep.mubr.f32.mxu0 0.0
      %4825 = vmatmul.mubr.f32.gmra.mxu0 %v4663
      %v4826 = vpop.f32.mrf.mxu0
      %v4827 = vadd.f32 %v4538, %v4826
      %v4828 = vpop.f32.mrf.mxu0
      %4829 = vmatprep.mubr.f32.mxu0 0.0
      %4830 = vmatmul.mubr.f32.gmra.mxu0 %v4666
      %v4831 = vpop.f32.mrf.mxu0
      %v4832 = vadd.f32 %v4543, %v4831
      %v4833 = vpop.f32.mrf.mxu0
      %4834 = vmatprep.mubr.f32.mxu0 0.0
      %4835 = vmatmul.mubr.f32.gmra.mxu0 %v4669
      %v4836 = vpop.f32.mrf.mxu0
      %v4837 = vadd.f32 %v4548, %v4836
      %v4838 = vpop.f32.mrf.mxu0
      %4839 = vmatprep.mubr.f32.mxu0 0.0
      %4840 = vmatmul.mubr.f32.gmra.mxu0 %v4672
      %v4841 = vpop.f32.mrf.mxu0
      %v4842 = vadd.f32 %v4553, %v4841
      %v4843 = vpop.f32.mrf.mxu0
      %4844 = vmatprep.mubr.f32.mxu0 0.0
      %4845 = vmatmul.mubr.f32.gmra.mxu0 %v4675
      %v4846 = vpop.f32.mrf.mxu0
      %v4847 = vadd.f32 %v4558, %v4846
      %v4848 = vpop.f32.mrf.mxu0
      %4849 = vmatprep.mubr.f32.mxu0 0.0
      %4850 = vmatmul.mubr.f32.gmra.mxu0 %v4678
      %v4851 = vpop.f32.mrf.mxu0
      %v4852 = vadd.f32 %v4563, %v4851
      %v4853 = vpop.f32.mrf.mxu0
      %4854 = vmatprep.mubr.f32.mxu0 0.0
      %4855 = vmatmul.mubr.f32.gmra.mxu0 %v4681
      %v4856 = vpop.f32.mrf.mxu0
      %v4857 = vadd.f32 %v4568, %v4856
      %v4858 = vpop.f32.mrf.mxu0
      %4859 = vmatprep.mubr.f32.mxu0 0.0
      %4860 = vmatmul.mubr.f32.gmra.mxu0 %v4684
      %v4861 = vpop.f32.mrf.mxu0
      %v4862 = vadd.f32 %v4573, %v4861
      %v4863 = vpop.f32.mrf.mxu0
      %4864 = vmatprep.mubr.f32.mxu0 0.0
      %4865 = vmatmul.mubr.f32.gmra.mxu0 %v4687
      %v4866 = vpop.f32.mrf.mxu0
      %v4867 = vadd.f32 %v4578, %v4866
      %v4868 = vpop.f32.mrf.mxu0
      %4869 = vmatprep.mubr.f32.mxu0 0.0
      %4870 = vmatmul.mubr.f32.gmra.mxu0 %v4690
      %v4871 = vpop.f32.mrf.mxu0
      %v4872 = vadd.f32 %v4583, %v4871
      %v4873 = vpop.f32.mrf.mxu0
      %4874 = vmatprep.mubr.f32.mxu0 0.0
      %4875 = vmatmul.mubr.f32.gmra.mxu0 %v4693
      %v4876 = vpop.f32.mrf.mxu0
      %v4877 = vadd.f32 %v4588, %v4876
      %v4878 = vpop.f32.mrf.mxu0
      %4879 = vmatprep.mubr.f32.mxu0 0.0
      %4880 = vmatmul.mubr.f32.gmra.mxu0 %v4696
      %v4881 = vpop.f32.mrf.mxu0
      %v4882 = vadd.f32 %v4593, %v4881
      %v4883 = vpop.f32.mrf.mxu0
      %4884 = vmatprep.mubr.f32.mxu0 0.0
      %4885 = vmatmul.mubr.f32.gmra.mxu0 %v4699
      %v4886 = vpop.f32.mrf.mxu0
      %v4887 = vadd.f32 %v4598, %v4886
      %v4888 = vpop.f32.mrf.mxu0
      %4889 = vmatprep.mubr.f32.mxu0 0.0
      %4890 = vmatmul.mubr.f32.gmra.mxu0 %v4702
      %v4891 = vpop.f32.mrf.mxu0
      %v4892 = vadd.f32 %v4603, %v4891
      %v4893 = vpop.f32.mrf.mxu0
      %4894 = vmatprep.mubr.f32.mxu0 0.0
      %4895 = vmatmul.mubr.f32.gmra.mxu0 %v4705
      %v4896 = vpop.f32.mrf.mxu0
      %v4897 = vadd.f32 %v4608, %v4896
      %v4898 = vpop.f32.mrf.mxu0
      %4899 = vmatprep.mubr.f32.mxu0 0.0
      %4900 = vmatmul.mubr.f32.gmra.mxu0 %v4708
      %v4901 = vpop.f32.mrf.mxu0
      %v4902 = vadd.f32 %v4613, %v4901
      %v4903 = vpop.f32.mrf.mxu0
      %4904 = vmatprep.mubr.f32.mxu0 0.0
      %4905 = vmatmul.mubr.f32.gmra.mxu0 %v4711
      %v4906 = vpop.f32.mrf.mxu0
      %v4907 = vadd.f32 %v4618, %v4906
      %v4908 = vpop.f32.mrf.mxu0
      %4909 = vmatprep.mubr.f32.mxu0 0.0
      %4910 = vmatmul.mubr.f32.gmra.mxu0 %v4714
      %v4911 = vpop.f32.mrf.mxu0
      %v4912 = vadd.f32 %v4623, %v4911
      %v4913 = vpop.f32.mrf.mxu0
      %4914 = vmatprep.mubr.f32.mxu0 0.0
      %4915 = vmatmul.mubr.f32.gmra.mxu0 %v4717
      %v4916 = vpop.f32.mrf.mxu0
      %v4917 = vadd.f32 %v4628, %v4916
      %v4918 = vpop.f32.mrf.mxu0
      %4919 = vmatprep.mubr.f32.mxu0 0.0
      %4920 = vmatmul.mubr.f32.gmra.mxu0 %v4720
      %v4921 = vpop.f32.mrf.mxu0
      %v4922 = vadd.f32 %v4633, %v4921
      %v4923 = vpop.f32.mrf.mxu0
      %4924 = vmatprep.mubr.f32.mxu0 0.0
      %4925 = vmatmul.mubr.f32.gmra.mxu0 %v4723
      %v4926 = vpop.f32.mrf.mxu0
      %v4927 = vadd.f32 %v4638, %v4926
      %v4928 = vpop.f32.mrf.mxu0
      %4929 = vdwg.mxu0
      %v4930 = vadd.f32 %v4265, %v4792
      %v4931 = vadd.f32 %v4266, %v4797
      %v4932 = vadd.f32 %v4267, %v4802
      %v4933 = vadd.f32 %v4268, %v4807
      %v4934 = vadd.f32 %v4269, %v4812
      %v4935 = vadd.f32 %v4270, %v4817
      %v4936 = vadd.f32 %v4271, %v4822
      %v4937 = vadd.f32 %v4272, %v4827
      %v4938 = vadd.f32 %v4273, %v4832
      %v4939 = vadd.f32 %v4274, %v4837
      %v4940 = vadd.f32 %v4275, %v4842
      %v4941 = vadd.f32 %v4276, %v4847
      %v4942 = vadd.f32 %v4277, %v4852
      %v4943 = vadd.f32 %v4278, %v4857
      %v4944 = vadd.f32 %v4279, %v4862
      %v4945 = vadd.f32 %v4280, %v4867
      %v4946 = vadd.f32 %v4281, %v4872
      %v4947 = vadd.f32 %v4282, %v4877
      %v4948 = vadd.f32 %v4283, %v4882
      %v4949 = vadd.f32 %v4284, %v4887
      %v4950 = vadd.f32 %v4285, %v4892
      %v4951 = vadd.f32 %v4286, %v4897
      %v4952 = vadd.f32 %v4287, %v4902
      %v4953 = vadd.f32 %v4288, %v4907
      %v4954 = vadd.f32 %v4289, %v4912
      %v4955 = vadd.f32 %v4290, %v4917
      %v4956 = vadd.f32 %v4291, %v4922
      %v4957 = vadd.f32 %v4292, %v4927
      %v4958 = vld [vmem:[%s288 + $0x21] sm:$0xff]
      %v4959 = vld [vmem:[%s288 + $0x29] sm:$0xff]
      %v4960 = vld [vmem:[%s288 + $0x31] sm:$0xff]
      %v4961 = vld [vmem:[%s288 + $0x39] sm:$0xff]
      %v4962 = vld [vmem:[%s288 + $0x41] sm:$0xff]
      %v4963 = vld [vmem:[%s288 + $0x49] sm:$0xff]
      %v4964 = vld [vmem:[%s288 + $0x51] sm:$0xff]
      %v4965 = vld [vmem:[%s288 + $0x59] sm:$0xff]
      %v4966 = vld [vmem:[%s288 + $0x61] sm:$0xff]
      %v4967 = vld [vmem:[%s288 + $0x69] sm:$0xff]
      %v4968 = vld [vmem:[%s288 + $0x71] sm:$0xff]
      %v4969 = vld [vmem:[%s288 + $0x79] sm:$0xff]
      %v4970 = vld [vmem:[%s288 + $0x81] sm:$0xff]
      %v4971 = vld [vmem:[%s288 + $0x89] sm:$0xff]
      %v4972 = vld [vmem:[%s288 + $0x91] sm:$0xff]
      %v4973 = vld [vmem:[%s288 + $0x99] sm:$0xff]
      %v4974 = vld [vmem:[%s288 + $0xa1] sm:$0xff]
      %v4975 = vld [vmem:[%s288 + $0xa9] sm:$0xff]
      %v4976 = vld [vmem:[%s288 + $0xb1] sm:$0xff]
      %v4977 = vld [vmem:[%s288 + $0xb9] sm:$0xff]
      %v4978 = vld [vmem:[%s288 + $0xc1] sm:$0xff]
      %v4979 = vld [vmem:[%s288 + $0xc9] sm:$0xff]
      %v4980 = vld [vmem:[%s288 + $0xd1] sm:$0xff]
      %v4981 = vld [vmem:[%s288 + $0xd9] sm:$0xff]
      %v4982 = vld [vmem:[%s288 + $0xe1] sm:$0xff]
      %v4983 = vld [vmem:[%s288 + $0xe9] sm:$0xff]
      %v4984 = vld [vmem:[%s288 + $0xf1] sm:$0xff]
      %v4985 = vld [vmem:[%s288 + $0xf9] sm:$0x3f]
      %v4986 = vld [vmem:[%s293 + $0x21] sm:$0xff]
      %v4987 = vld [vmem:[%s293 + $0x29] sm:$0xff]
      %v4988 = vld [vmem:[%s293 + $0x31] sm:$0xff]
      %v4989 = vld [vmem:[%s293 + $0x39] sm:$0xff]
      %v4990 = vld [vmem:[%s293 + $0x41] sm:$0xff]
      %v4991 = vld [vmem:[%s293 + $0x49] sm:$0xff]
      %v4992 = vld [vmem:[%s293 + $0x51] sm:$0xff]
      %v4993 = vld [vmem:[%s293 + $0x59] sm:$0xff]
      %v4994 = vld [vmem:[%s293 + $0x61] sm:$0xff]
      %v4995 = vld [vmem:[%s293 + $0x69] sm:$0xff]
      %v4996 = vld [vmem:[%s293 + $0x71] sm:$0xff]
      %v4997 = vld [vmem:[%s293 + $0x79] sm:$0xff]
      %v4998 = vld [vmem:[%s293 + $0x81] sm:$0xff]
      %v4999 = vld [vmem:[%s293 + $0x89] sm:$0xff]
      %v5000 = vld [vmem:[%s293 + $0x91] sm:$0xff]
      %v5001 = vld [vmem:[%s293 + $0x99] sm:$0xff]
      %v5002 = vld [vmem:[%s293 + $0xa1] sm:$0xff]
      %v5003 = vld [vmem:[%s293 + $0xa9] sm:$0xff]
      %v5004 = vld [vmem:[%s293 + $0xb1] sm:$0xff]
      %v5005 = vld [vmem:[%s293 + $0xb9] sm:$0xff]
      %v5006 = vld [vmem:[%s293 + $0xc1] sm:$0xff]
      %v5007 = vld [vmem:[%s293 + $0xc9] sm:$0xff]
      %v5008 = vld [vmem:[%s293 + $0xd1] sm:$0xff]
      %v5009 = vld [vmem:[%s293 + $0xd9] sm:$0xff]
      %v5010 = vld [vmem:[%s293 + $0xe1] sm:$0xff]
      %v5011 = vld [vmem:[%s293 + $0xe9] sm:$0xff]
      %v5012 = vld [vmem:[%s293 + $0xf1] sm:$0xff]
      %v5013 = vld [vmem:[%s293 + $0xf9] sm:$0x3f]
      %v5015 = vsel %vm384, %v4986, 0
      %v5018 = vsel %vm384, %v4987, 0
      %v5021 = vsel %vm384, %v4988, 0
      %v5024 = vsel %vm384, %v4989, 0
      %v5027 = vsel %vm384, %v4990, 0
      %v5030 = vsel %vm384, %v4991, 0
      %v5033 = vsel %vm384, %v4992, 0
      %v5036 = vsel %vm384, %v4993, 0
      %v5039 = vsel %vm384, %v4994, 0
      %v5042 = vsel %vm384, %v4995, 0
      %v5045 = vsel %vm384, %v4996, 0
      %v5048 = vsel %vm384, %v4997, 0
      %v5051 = vsel %vm384, %v4998, 0
      %v5054 = vsel %vm384, %v4999, 0
      %v5057 = vsel %vm384, %v5000, 0
      %v5060 = vsel %vm384, %v5001, 0
      %v5063 = vsel %vm384, %v5002, 0
      %v5066 = vsel %vm384, %v5003, 0
      %v5069 = vsel %vm384, %v5004, 0
      %v5072 = vsel %vm384, %v5005, 0
      %v5075 = vsel %vm384, %v5006, 0
      %v5078 = vsel %vm384, %v5007, 0
      %v5081 = vsel %vm384, %v5008, 0
      %v5084 = vsel %vm384, %v5009, 0
      %v5087 = vsel %vm384, %v5010, 0
      %v5090 = vsel %vm384, %v5011, 0
      %v5093 = vsel %vm384, %v5012, 0
      %v5096 = vsel %vm384, %v5013, 0
      %v5099 = vsel %vm469, %v315, 0
      %5101 = vmatprep.subr.mxu0 0.0
      %5102 = vmatpush1.msra.mxu0 0.0
      %5103 = vmatprep.subr.mxu0 0.0
      %5104 = vmatpush1.msra.mxu0 0.0
      %5105 = vmatprep.subr.mxu0 0.0
      %5106 = vmatpush1.msra.mxu0 0.0
      %5107 = vmatprep.subr.mxu0 0.0
      %5108 = vmatpush1.msra.mxu0 0.0
      %5109 = vmatprep.subr.mxu0 0.0
      %5110 = vmatpush1.msra.mxu0 0.0
      %5111 = vmatprep.subr.mxu0 0.0
      %5112 = vmatpush1.msra.mxu0 0.0
      %5113 = vmatprep.subr.mxu0 0.0
      %5114 = vmatpush1.msra.mxu0 0.0
      %5115 = vmatprep.subr.mxu0 0.0
      %5116 = vmatpush1.msra.mxu0 0.0
      %5117 = vmatprep.subr.mxu0 0.0
      %5118 = vmatpush1.msra.mxu0 0.0
      %5119 = vmatprep.subr.mxu0 0.0
      %5120 = vmatpush1.msra.mxu0 0.0
      %5121 = vmatprep.subr.mxu0 0.0
      %5122 = vmatpush1.msra.mxu0 0.0
      %5123 = vmatprep.subr.mxu0 0.0
      %5124 = vmatpush1.msra.mxu0 0.0
      %5125 = vmatprep.subr.mxu0 0.0
      %5126 = vmatpush1.msra.mxu0 0.0
      %5127 = vmatprep.subr.mxu0 0.0
      %5128 = vmatpush1.msra.mxu0 0.0
      %5129 = vmatprep.subr.mxu0 0.0
      %5130 = vmatpush1.msra.mxu0 0.0
      %5131 = vmatprep.subr.mxu0 0.0
      %5132 = vmatpush1.msra.mxu0 %v5099
      %5133 = vmatprep.subr.mxu0 0.0
      %5134 = vmatpush2.msra.mxu0 0.0
      %5135 = vmatprep.subr.mxu0 0.0
      %5136 = vmatpush2.msra.mxu0 0.0
      %5137 = vmatprep.subr.mxu0 0.0
      %5138 = vmatpush2.msra.mxu0 0.0
      %5139 = vmatprep.subr.mxu0 0.0
      %5140 = vmatpush2.msra.mxu0 0.0
      %5141 = vmatprep.subr.mxu0 0.0
      %5142 = vmatpush2.msra.mxu0 0.0
      %5143 = vmatprep.subr.mxu0 0.0
      %5144 = vmatpush2.msra.mxu0 0.0
      %5145 = vmatprep.subr.mxu0 0.0
      %5146 = vmatpush2.msra.mxu0 0.0
      %5147 = vmatprep.subr.mxu0 0.0
      %5148 = vmatpush2.msra.mxu0 0.0
      %5149 = vmatprep.subr.mxu0 0.0
      %5150 = vmatpush2.msra.mxu0 0.0
      %5151 = vmatprep.subr.mxu0 0.0
      %5152 = vmatpush2.msra.mxu0 0.0
      %5153 = vmatprep.subr.mxu0 0.0
      %5154 = vmatpush2.msra.mxu0 0.0
      %5155 = vmatprep.subr.mxu0 0.0
      %5156 = vmatpush2.msra.mxu0 0.0
      %5157 = vmatprep.subr.mxu0 0.0
      %5158 = vmatpush2.msra.mxu0 0.0
      %5159 = vmatprep.subr.mxu0 0.0
      %5160 = vmatpush2.msra.mxu0 0.0
      %5161 = vmatprep.subr.mxu0 0.0
      %5162 = vmatpush2.msra.mxu0 0.0
      %5163 = vmatprep.subr.mxu0 0.0
      %5164 = vmatpush2.msra.mxu0 0.0
      %5165 = vmatprep.mubr.f32.mxu0 0.0
      %5166 = vmatmul.mubr.f32.gmra.mxu0 %v5015
      %v5167 = vpop.f32.mrf.mxu0
      %v5168 = vadd.f32 0.0, %v5167
      %v5169 = vpop.f32.mrf.mxu0
      %5170 = vmatprep.mubr.f32.mxu0 0.0
      %5171 = vmatmul.mubr.f32.gmra.mxu0 %v5018
      %v5172 = vpop.f32.mrf.mxu0
      %v5173 = vadd.f32 0.0, %v5172
      %v5174 = vpop.f32.mrf.mxu0
      %5175 = vmatprep.mubr.f32.mxu0 0.0
      %5176 = vmatmul.mubr.f32.gmra.mxu0 %v5021
      %v5177 = vpop.f32.mrf.mxu0
      %v5178 = vadd.f32 0.0, %v5177
      %v5179 = vpop.f32.mrf.mxu0
      %5180 = vmatprep.mubr.f32.mxu0 0.0
      %5181 = vmatmul.mubr.f32.gmra.mxu0 %v5024
      %v5182 = vpop.f32.mrf.mxu0
      %v5183 = vadd.f32 0.0, %v5182
      %v5184 = vpop.f32.mrf.mxu0
      %5185 = vmatprep.mubr.f32.mxu0 0.0
      %5186 = vmatmul.mubr.f32.gmra.mxu0 %v5027
      %v5187 = vpop.f32.mrf.mxu0
      %v5188 = vadd.f32 0.0, %v5187
      %v5189 = vpop.f32.mrf.mxu0
      %5190 = vmatprep.mubr.f32.mxu0 0.0
      %5191 = vmatmul.mubr.f32.gmra.mxu0 %v5030
      %v5192 = vpop.f32.mrf.mxu0
      %v5193 = vadd.f32 0.0, %v5192
      %v5194 = vpop.f32.mrf.mxu0
      %5195 = vmatprep.mubr.f32.mxu0 0.0
      %5196 = vmatmul.mubr.f32.gmra.mxu0 %v5033
      %v5197 = vpop.f32.mrf.mxu0
      %v5198 = vadd.f32 0.0, %v5197
      %v5199 = vpop.f32.mrf.mxu0
      %5200 = vmatprep.mubr.f32.mxu0 0.0
      %5201 = vmatmul.mubr.f32.gmra.mxu0 %v5036
      %v5202 = vpop.f32.mrf.mxu0
      %v5203 = vadd.f32 0.0, %v5202
      %v5204 = vpop.f32.mrf.mxu0
      %5205 = vmatprep.mubr.f32.mxu0 0.0
      %5206 = vmatmul.mubr.f32.gmra.mxu0 %v5039
      %v5207 = vpop.f32.mrf.mxu0
      %v5208 = vadd.f32 0.0, %v5207
      %v5209 = vpop.f32.mrf.mxu0
      %5210 = vmatprep.mubr.f32.mxu0 0.0
      %5211 = vmatmul.mubr.f32.gmra.mxu0 %v5042
      %v5212 = vpop.f32.mrf.mxu0
      %v5213 = vadd.f32 0.0, %v5212
      %v5214 = vpop.f32.mrf.mxu0
      %5215 = vmatprep.mubr.f32.mxu0 0.0
      %5216 = vmatmul.mubr.f32.gmra.mxu0 %v5045
      %v5217 = vpop.f32.mrf.mxu0
      %v5218 = vadd.f32 0.0, %v5217
      %v5219 = vpop.f32.mrf.mxu0
      %5220 = vmatprep.mubr.f32.mxu0 0.0
      %5221 = vmatmul.mubr.f32.gmra.mxu0 %v5048
      %v5222 = vpop.f32.mrf.mxu0
      %v5223 = vadd.f32 0.0, %v5222
      %v5224 = vpop.f32.mrf.mxu0
      %5225 = vmatprep.mubr.f32.mxu0 0.0
      %5226 = vmatmul.mubr.f32.gmra.mxu0 %v5051
      %v5227 = vpop.f32.mrf.mxu0
      %v5228 = vadd.f32 0.0, %v5227
      %v5229 = vpop.f32.mrf.mxu0
      %5230 = vmatprep.mubr.f32.mxu0 0.0
      %5231 = vmatmul.mubr.f32.gmra.mxu0 %v5054
      %v5232 = vpop.f32.mrf.mxu0
      %v5233 = vadd.f32 0.0, %v5232
      %v5234 = vpop.f32.mrf.mxu0
      %5235 = vmatprep.mubr.f32.mxu0 0.0
      %5236 = vmatmul.mubr.f32.gmra.mxu0 %v5057
      %v5237 = vpop.f32.mrf.mxu0
      %v5238 = vadd.f32 0.0, %v5237
      %v5239 = vpop.f32.mrf.mxu0
      %5240 = vmatprep.mubr.f32.mxu0 0.0
      %5241 = vmatmul.mubr.f32.gmra.mxu0 %v5060
      %v5242 = vpop.f32.mrf.mxu0
      %v5243 = vadd.f32 0.0, %v5242
      %v5244 = vpop.f32.mrf.mxu0
      %5245 = vmatprep.mubr.f32.mxu0 0.0
      %5246 = vmatmul.mubr.f32.gmra.mxu0 %v5063
      %v5247 = vpop.f32.mrf.mxu0
      %v5248 = vadd.f32 0.0, %v5247
      %v5249 = vpop.f32.mrf.mxu0
      %5250 = vmatprep.mubr.f32.mxu0 0.0
      %5251 = vmatmul.mubr.f32.gmra.mxu0 %v5066
      %v5252 = vpop.f32.mrf.mxu0
      %v5253 = vadd.f32 0.0, %v5252
      %v5254 = vpop.f32.mrf.mxu0
      %5255 = vmatprep.mubr.f32.mxu0 0.0
      %5256 = vmatmul.mubr.f32.gmra.mxu0 %v5069
      %v5257 = vpop.f32.mrf.mxu0
      %v5258 = vadd.f32 0.0, %v5257
      %v5259 = vpop.f32.mrf.mxu0
      %5260 = vmatprep.mubr.f32.mxu0 0.0
      %5261 = vmatmul.mubr.f32.gmra.mxu0 %v5072
      %v5262 = vpop.f32.mrf.mxu0
      %v5263 = vadd.f32 0.0, %v5262
      %v5264 = vpop.f32.mrf.mxu0
      %5265 = vmatprep.mubr.f32.mxu0 0.0
      %5266 = vmatmul.mubr.f32.gmra.mxu0 %v5075
      %v5267 = vpop.f32.mrf.mxu0
      %v5268 = vadd.f32 0.0, %v5267
      %v5269 = vpop.f32.mrf.mxu0
      %5270 = vmatprep.mubr.f32.mxu0 0.0
      %5271 = vmatmul.mubr.f32.gmra.mxu0 %v5078
      %v5272 = vpop.f32.mrf.mxu0
      %v5273 = vadd.f32 0.0, %v5272
      %v5274 = vpop.f32.mrf.mxu0
      %5275 = vmatprep.mubr.f32.mxu0 0.0
      %5276 = vmatmul.mubr.f32.gmra.mxu0 %v5081
      %v5277 = vpop.f32.mrf.mxu0
      %v5278 = vadd.f32 0.0, %v5277
      %v5279 = vpop.f32.mrf.mxu0
      %5280 = vmatprep.mubr.f32.mxu0 0.0
      %5281 = vmatmul.mubr.f32.gmra.mxu0 %v5084
      %v5282 = vpop.f32.mrf.mxu0
      %v5283 = vadd.f32 0.0, %v5282
      %v5284 = vpop.f32.mrf.mxu0
      %5285 = vmatprep.mubr.f32.mxu0 0.0
      %5286 = vmatmul.mubr.f32.gmra.mxu0 %v5087
      %v5287 = vpop.f32.mrf.mxu0
      %v5288 = vadd.f32 0.0, %v5287
      %v5289 = vpop.f32.mrf.mxu0
      %5290 = vmatprep.mubr.f32.mxu0 0.0
      %5291 = vmatmul.mubr.f32.gmra.mxu0 %v5090
      %v5292 = vpop.f32.mrf.mxu0
      %v5293 = vadd.f32 0.0, %v5292
      %v5294 = vpop.f32.mrf.mxu0
      %5295 = vmatprep.mubr.f32.mxu0 0.0
      %5296 = vmatmul.mubr.f32.gmra.mxu0 %v5093
      %v5297 = vpop.f32.mrf.mxu0
      %v5298 = vadd.f32 0.0, %v5297
      %v5299 = vpop.f32.mrf.mxu0
      %5300 = vmatprep.mubr.f32.mxu0 0.0
      %5301 = vmatmul.mubr.f32.gmra.mxu0 %v5096
      %v5302 = vpop.f32.mrf.mxu0
      %v5303 = vadd.f32 0.0, %v5302
      %v5304 = vpop.f32.mrf.mxu0
      %5305 = vdwg.mxu0
      %v5307 = vsel %vm678, %v4958, 0
      %v5310 = vsel %vm678, %v4959, 0
      %v5313 = vsel %vm678, %v4960, 0
      %v5316 = vsel %vm678, %v4961, 0
      %v5319 = vsel %vm678, %v4962, 0
      %v5322 = vsel %vm678, %v4963, 0
      %v5325 = vsel %vm678, %v4964, 0
      %v5328 = vsel %vm678, %v4965, 0
      %v5331 = vsel %vm678, %v4966, 0
      %v5334 = vsel %vm678, %v4967, 0
      %v5337 = vsel %vm678, %v4968, 0
      %v5340 = vsel %vm678, %v4969, 0
      %v5343 = vsel %vm678, %v4970, 0
      %v5346 = vsel %vm678, %v4971, 0
      %v5349 = vsel %vm678, %v4972, 0
      %v5352 = vsel %vm678, %v4973, 0
      %v5355 = vsel %vm678, %v4974, 0
      %v5358 = vsel %vm678, %v4975, 0
      %v5361 = vsel %vm678, %v4976, 0
      %v5364 = vsel %vm678, %v4977, 0
      %v5367 = vsel %vm678, %v4978, 0
      %v5370 = vsel %vm678, %v4979, 0
      %v5373 = vsel %vm678, %v4980, 0
      %v5376 = vsel %vm678, %v4981, 0
      %v5379 = vsel %vm678, %v4982, 0
      %v5382 = vsel %vm678, %v4983, 0
      %v5385 = vsel %vm678, %v4984, 0
      %v5388 = vsel %vm678, %v4985, 0
      %5390 = vmatprep.subr.mxu0 0.0
      %5391 = vmatpush1.msra.mxu0 0.0
      %5392 = vmatprep.subr.mxu0 0.0
      %5393 = vmatpush1.msra.mxu0 0.0
      %5394 = vmatprep.subr.mxu0 0.0
      %5395 = vmatpush1.msra.mxu0 0.0
      %5396 = vmatprep.subr.mxu0 0.0
      %5397 = vmatpush1.msra.mxu0 0.0
      %5398 = vmatprep.subr.mxu0 0.0
      %5399 = vmatpush1.msra.mxu0 0.0
      %5400 = vmatprep.subr.mxu0 0.0
      %5401 = vmatpush1.msra.mxu0 0.0
      %5402 = vmatprep.subr.mxu0 0.0
      %5403 = vmatpush1.msra.mxu0 0.0
      %5404 = vmatprep.subr.mxu0 0.0
      %5405 = vmatpush1.msra.mxu0 0.0
      %5406 = vmatprep.subr.mxu0 0.0
      %5407 = vmatpush1.msra.mxu0 0.0
      %5408 = vmatprep.subr.mxu0 0.0
      %5409 = vmatpush1.msra.mxu0 0.0
      %5410 = vmatprep.subr.mxu0 0.0
      %5411 = vmatpush1.msra.mxu0 0.0
      %5412 = vmatprep.subr.mxu0 0.0
      %5413 = vmatpush1.msra.mxu0 0.0
      %5414 = vmatprep.subr.mxu0 0.0
      %5415 = vmatpush1.msra.mxu0 0.0
      %5416 = vmatprep.subr.mxu0 0.0
      %5417 = vmatpush1.msra.mxu0 0.0
      %5418 = vmatprep.subr.mxu0 0.0
      %5419 = vmatpush1.msra.mxu0 0.0
      %5420 = vmatprep.subr.mxu0 0.0
      %5421 = vmatpush1.msra.mxu0 %v306
      %5422 = vmatprep.subr.mxu0 0.0
      %5423 = vmatpush2.msra.mxu0 0.0
      %5424 = vmatprep.subr.mxu0 0.0
      %5425 = vmatpush2.msra.mxu0 0.0
      %5426 = vmatprep.subr.mxu0 0.0
      %5427 = vmatpush2.msra.mxu0 0.0
      %5428 = vmatprep.subr.mxu0 0.0
      %5429 = vmatpush2.msra.mxu0 0.0
      %5430 = vmatprep.subr.mxu0 0.0
      %5431 = vmatpush2.msra.mxu0 0.0
      %5432 = vmatprep.subr.mxu0 0.0
      %5433 = vmatpush2.msra.mxu0 0.0
      %5434 = vmatprep.subr.mxu0 0.0
      %5435 = vmatpush2.msra.mxu0 0.0
      %5436 = vmatprep.subr.mxu0 0.0
      %5437 = vmatpush2.msra.mxu0 0.0
      %5438 = vmatprep.subr.mxu0 0.0
      %5439 = vmatpush2.msra.mxu0 0.0
      %5440 = vmatprep.subr.mxu0 0.0
      %5441 = vmatpush2.msra.mxu0 0.0
      %5442 = vmatprep.subr.mxu0 0.0
      %5443 = vmatpush2.msra.mxu0 0.0
      %5444 = vmatprep.subr.mxu0 0.0
      %5445 = vmatpush2.msra.mxu0 0.0
      %5446 = vmatprep.subr.mxu0 0.0
      %5447 = vmatpush2.msra.mxu0 0.0
      %5448 = vmatprep.subr.mxu0 0.0
      %5449 = vmatpush2.msra.mxu0 0.0
      %5450 = vmatprep.subr.mxu0 0.0
      %5451 = vmatpush2.msra.mxu0 0.0
      %5452 = vmatprep.subr.mxu0 0.0
      %5453 = vmatpush2.msra.mxu0 0.0
      %5454 = vmatprep.mubr.f32.mxu0 0.0
      %5455 = vmatmul.mubr.f32.gmra.mxu0 %v5307
      %v5456 = vpop.f32.mrf.mxu0
      %v5457 = vadd.f32 %v5168, %v5456
      %v5458 = vpop.f32.mrf.mxu0
      %5459 = vmatprep.mubr.f32.mxu0 0.0
      %5460 = vmatmul.mubr.f32.gmra.mxu0 %v5310
      %v5461 = vpop.f32.mrf.mxu0
      %v5462 = vadd.f32 %v5173, %v5461
      %v5463 = vpop.f32.mrf.mxu0
      %5464 = vmatprep.mubr.f32.mxu0 0.0
      %5465 = vmatmul.mubr.f32.gmra.mxu0 %v5313
      %v5466 = vpop.f32.mrf.mxu0
      %v5467 = vadd.f32 %v5178, %v5466
      %v5468 = vpop.f32.mrf.mxu0
      %5469 = vmatprep.mubr.f32.mxu0 0.0
      %5470 = vmatmul.mubr.f32.gmra.mxu0 %v5316
      %v5471 = vpop.f32.mrf.mxu0
      %v5472 = vadd.f32 %v5183, %v5471
      %v5473 = vpop.f32.mrf.mxu0
      %5474 = vmatprep.mubr.f32.mxu0 0.0
      %5475 = vmatmul.mubr.f32.gmra.mxu0 %v5319
      %v5476 = vpop.f32.mrf.mxu0
      %v5477 = vadd.f32 %v5188, %v5476
      %v5478 = vpop.f32.mrf.mxu0
      %5479 = vmatprep.mubr.f32.mxu0 0.0
      %5480 = vmatmul.mubr.f32.gmra.mxu0 %v5322
      %v5481 = vpop.f32.mrf.mxu0
      %v5482 = vadd.f32 %v5193, %v5481
      %v5483 = vpop.f32.mrf.mxu0
      %5484 = vmatprep.mubr.f32.mxu0 0.0
      %5485 = vmatmul.mubr.f32.gmra.mxu0 %v5325
      %v5486 = vpop.f32.mrf.mxu0
      %v5487 = vadd.f32 %v5198, %v5486
      %v5488 = vpop.f32.mrf.mxu0
      %5489 = vmatprep.mubr.f32.mxu0 0.0
      %5490 = vmatmul.mubr.f32.gmra.mxu0 %v5328
      %v5491 = vpop.f32.mrf.mxu0
      %v5492 = vadd.f32 %v5203, %v5491
      %v5493 = vpop.f32.mrf.mxu0
      %5494 = vmatprep.mubr.f32.mxu0 0.0
      %5495 = vmatmul.mubr.f32.gmra.mxu0 %v5331
      %v5496 = vpop.f32.mrf.mxu0
      %v5497 = vadd.f32 %v5208, %v5496
      %v5498 = vpop.f32.mrf.mxu0
      %5499 = vmatprep.mubr.f32.mxu0 0.0
      %5500 = vmatmul.mubr.f32.gmra.mxu0 %v5334
      %v5501 = vpop.f32.mrf.mxu0
      %v5502 = vadd.f32 %v5213, %v5501
      %v5503 = vpop.f32.mrf.mxu0
      %5504 = vmatprep.mubr.f32.mxu0 0.0
      %5505 = vmatmul.mubr.f32.gmra.mxu0 %v5337
      %v5506 = vpop.f32.mrf.mxu0
      %v5507 = vadd.f32 %v5218, %v5506
      %v5508 = vpop.f32.mrf.mxu0
      %5509 = vmatprep.mubr.f32.mxu0 0.0
      %5510 = vmatmul.mubr.f32.gmra.mxu0 %v5340
      %v5511 = vpop.f32.mrf.mxu0
      %v5512 = vadd.f32 %v5223, %v5511
      %v5513 = vpop.f32.mrf.mxu0
      %5514 = vmatprep.mubr.f32.mxu0 0.0
      %5515 = vmatmul.mubr.f32.gmra.mxu0 %v5343
      %v5516 = vpop.f32.mrf.mxu0
      %v5517 = vadd.f32 %v5228, %v5516
      %v5518 = vpop.f32.mrf.mxu0
      %5519 = vmatprep.mubr.f32.mxu0 0.0
      %5520 = vmatmul.mubr.f32.gmra.mxu0 %v5346
      %v5521 = vpop.f32.mrf.mxu0
      %v5522 = vadd.f32 %v5233, %v5521
      %v5523 = vpop.f32.mrf.mxu0
      %5524 = vmatprep.mubr.f32.mxu0 0.0
      %5525 = vmatmul.mubr.f32.gmra.mxu0 %v5349
      %v5526 = vpop.f32.mrf.mxu0
      %v5527 = vadd.f32 %v5238, %v5526
      %v5528 = vpop.f32.mrf.mxu0
      %5529 = vmatprep.mubr.f32.mxu0 0.0
      %5530 = vmatmul.mubr.f32.gmra.mxu0 %v5352
      %v5531 = vpop.f32.mrf.mxu0
      %v5532 = vadd.f32 %v5243, %v5531
      %v5533 = vpop.f32.mrf.mxu0
      %5534 = vmatprep.mubr.f32.mxu0 0.0
      %5535 = vmatmul.mubr.f32.gmra.mxu0 %v5355
      %v5536 = vpop.f32.mrf.mxu0
      %v5537 = vadd.f32 %v5248, %v5536
      %v5538 = vpop.f32.mrf.mxu0
      %5539 = vmatprep.mubr.f32.mxu0 0.0
      %5540 = vmatmul.mubr.f32.gmra.mxu0 %v5358
      %v5541 = vpop.f32.mrf.mxu0
      %v5542 = vadd.f32 %v5253, %v5541
      %v5543 = vpop.f32.mrf.mxu0
      %5544 = vmatprep.mubr.f32.mxu0 0.0
      %5545 = vmatmul.mubr.f32.gmra.mxu0 %v5361
      %v5546 = vpop.f32.mrf.mxu0
      %v5547 = vadd.f32 %v5258, %v5546
      %v5548 = vpop.f32.mrf.mxu0
      %5549 = vmatprep.mubr.f32.mxu0 0.0
      %5550 = vmatmul.mubr.f32.gmra.mxu0 %v5364
      %v5551 = vpop.f32.mrf.mxu0
      %v5552 = vadd.f32 %v5263, %v5551
      %v5553 = vpop.f32.mrf.mxu0
      %5554 = vmatprep.mubr.f32.mxu0 0.0
      %5555 = vmatmul.mubr.f32.gmra.mxu0 %v5367
      %v5556 = vpop.f32.mrf.mxu0
      %v5557 = vadd.f32 %v5268, %v5556
      %v5558 = vpop.f32.mrf.mxu0
      %5559 = vmatprep.mubr.f32.mxu0 0.0
      %5560 = vmatmul.mubr.f32.gmra.mxu0 %v5370
      %v5561 = vpop.f32.mrf.mxu0
      %v5562 = vadd.f32 %v5273, %v5561
      %v5563 = vpop.f32.mrf.mxu0
      %5564 = vmatprep.mubr.f32.mxu0 0.0
      %5565 = vmatmul.mubr.f32.gmra.mxu0 %v5373
      %v5566 = vpop.f32.mrf.mxu0
      %v5567 = vadd.f32 %v5278, %v5566
      %v5568 = vpop.f32.mrf.mxu0
      %5569 = vmatprep.mubr.f32.mxu0 0.0
      %5570 = vmatmul.mubr.f32.gmra.mxu0 %v5376
      %v5571 = vpop.f32.mrf.mxu0
      %v5572 = vadd.f32 %v5283, %v5571
      %v5573 = vpop.f32.mrf.mxu0
      %5574 = vmatprep.mubr.f32.mxu0 0.0
      %5575 = vmatmul.mubr.f32.gmra.mxu0 %v5379
      %v5576 = vpop.f32.mrf.mxu0
      %v5577 = vadd.f32 %v5288, %v5576
      %v5578 = vpop.f32.mrf.mxu0
      %5579 = vmatprep.mubr.f32.mxu0 0.0
      %5580 = vmatmul.mubr.f32.gmra.mxu0 %v5382
      %v5581 = vpop.f32.mrf.mxu0
      %v5582 = vadd.f32 %v5293, %v5581
      %v5583 = vpop.f32.mrf.mxu0
      %5584 = vmatprep.mubr.f32.mxu0 0.0
      %5585 = vmatmul.mubr.f32.gmra.mxu0 %v5385
      %v5586 = vpop.f32.mrf.mxu0
      %v5587 = vadd.f32 %v5298, %v5586
      %v5588 = vpop.f32.mrf.mxu0
      %5589 = vmatprep.mubr.f32.mxu0 0.0
      %5590 = vmatmul.mubr.f32.gmra.mxu0 %v5388
      %v5591 = vpop.f32.mrf.mxu0
      %v5592 = vadd.f32 %v5303, %v5591
      %v5593 = vpop.f32.mrf.mxu0
      %5594 = vdwg.mxu0
      %v5595 = vadd.f32 %v4930, %v5457
      %v5596 = vadd.f32 %v4931, %v5462
      %v5597 = vadd.f32 %v4932, %v5467
      %v5598 = vadd.f32 %v4933, %v5472
      %v5599 = vadd.f32 %v4934, %v5477
      %v5600 = vadd.f32 %v4935, %v5482
      %v5601 = vadd.f32 %v4936, %v5487
      %v5602 = vadd.f32 %v4937, %v5492
      %v5603 = vadd.f32 %v4938, %v5497
      %v5604 = vadd.f32 %v4939, %v5502
      %v5605 = vadd.f32 %v4940, %v5507
      %v5606 = vadd.f32 %v4941, %v5512
      %v5607 = vadd.f32 %v4942, %v5517
      %v5608 = vadd.f32 %v4943, %v5522
      %v5609 = vadd.f32 %v4944, %v5527
      %v5610 = vadd.f32 %v4945, %v5532
      %v5611 = vadd.f32 %v4946, %v5537
      %v5612 = vadd.f32 %v4947, %v5542
      %v5613 = vadd.f32 %v4948, %v5547
      %v5614 = vadd.f32 %v4949, %v5552
      %v5615 = vadd.f32 %v4950, %v5557
      %v5616 = vadd.f32 %v4951, %v5562
      %v5617 = vadd.f32 %v4952, %v5567
      %v5618 = vadd.f32 %v4953, %v5572
      %v5619 = vadd.f32 %v4954, %v5577
      %v5620 = vadd.f32 %v4955, %v5582
      %v5621 = vadd.f32 %v4956, %v5587
      %v5622 = vadd.f32 %v4957, %v5592
      %v5623 = vld [vmem:[%s288 + $0x22] sm:$0xff]
      %v5624 = vld [vmem:[%s288 + $0x2a] sm:$0xff]
      %v5625 = vld [vmem:[%s288 + $0x32] sm:$0xff]
      %v5626 = vld [vmem:[%s288 + $0x3a] sm:$0xff]
      %v5627 = vld [vmem:[%s288 + $0x42] sm:$0xff]
      %v5628 = vld [vmem:[%s288 + $0x4a] sm:$0xff]
      %v5629 = vld [vmem:[%s288 + $0x52] sm:$0xff]
      %v5630 = vld [vmem:[%s288 + $0x5a] sm:$0xff]
      %v5631 = vld [vmem:[%s288 + $0x62] sm:$0xff]
      %v5632 = vld [vmem:[%s288 + $0x6a] sm:$0xff]
      %v5633 = vld [vmem:[%s288 + $0x72] sm:$0xff]
      %v5634 = vld [vmem:[%s288 + $0x7a] sm:$0xff]
      %v5635 = vld [vmem:[%s288 + $0x82] sm:$0xff]
      %v5636 = vld [vmem:[%s288 + $0x8a] sm:$0xff]
      %v5637 = vld [vmem:[%s288 + $0x92] sm:$0xff]
      %v5638 = vld [vmem:[%s288 + $0x9a] sm:$0xff]
      %v5639 = vld [vmem:[%s288 + $0xa2] sm:$0xff]
      %v5640 = vld [vmem:[%s288 + $0xaa] sm:$0xff]
      %v5641 = vld [vmem:[%s288 + $0xb2] sm:$0xff]
      %v5642 = vld [vmem:[%s288 + $0xba] sm:$0xff]
      %v5643 = vld [vmem:[%s288 + $0xc2] sm:$0xff]
      %v5644 = vld [vmem:[%s288 + $0xca] sm:$0xff]
      %v5645 = vld [vmem:[%s288 + $0xd2] sm:$0xff]
      %v5646 = vld [vmem:[%s288 + $0xda] sm:$0xff]
      %v5647 = vld [vmem:[%s288 + $0xe2] sm:$0xff]
      %v5648 = vld [vmem:[%s288 + $0xea] sm:$0xff]
      %v5649 = vld [vmem:[%s288 + $0xf2] sm:$0xff]
      %v5650 = vld [vmem:[%s288 + $0xfa] sm:$0x3f]
      %v5651 = vld [vmem:[%s293 + $0x22] sm:$0xff]
      %v5652 = vld [vmem:[%s293 + $0x2a] sm:$0xff]
      %v5653 = vld [vmem:[%s293 + $0x32] sm:$0xff]
      %v5654 = vld [vmem:[%s293 + $0x3a] sm:$0xff]
      %v5655 = vld [vmem:[%s293 + $0x42] sm:$0xff]
      %v5656 = vld [vmem:[%s293 + $0x4a] sm:$0xff]
      %v5657 = vld [vmem:[%s293 + $0x52] sm:$0xff]
      %v5658 = vld [vmem:[%s293 + $0x5a] sm:$0xff]
      %v5659 = vld [vmem:[%s293 + $0x62] sm:$0xff]
      %v5660 = vld [vmem:[%s293 + $0x6a] sm:$0xff]
      %v5661 = vld [vmem:[%s293 + $0x72] sm:$0xff]
      %v5662 = vld [vmem:[%s293 + $0x7a] sm:$0xff]
      %v5663 = vld [vmem:[%s293 + $0x82] sm:$0xff]
      %v5664 = vld [vmem:[%s293 + $0x8a] sm:$0xff]
      %v5665 = vld [vmem:[%s293 + $0x92] sm:$0xff]
      %v5666 = vld [vmem:[%s293 + $0x9a] sm:$0xff]
      %v5667 = vld [vmem:[%s293 + $0xa2] sm:$0xff]
      %v5668 = vld [vmem:[%s293 + $0xaa] sm:$0xff]
      %v5669 = vld [vmem:[%s293 + $0xb2] sm:$0xff]
      %v5670 = vld [vmem:[%s293 + $0xba] sm:$0xff]
      %v5671 = vld [vmem:[%s293 + $0xc2] sm:$0xff]
      %v5672 = vld [vmem:[%s293 + $0xca] sm:$0xff]
      %v5673 = vld [vmem:[%s293 + $0xd2] sm:$0xff]
      %v5674 = vld [vmem:[%s293 + $0xda] sm:$0xff]
      %v5675 = vld [vmem:[%s293 + $0xe2] sm:$0xff]
      %v5676 = vld [vmem:[%s293 + $0xea] sm:$0xff]
      %v5677 = vld [vmem:[%s293 + $0xf2] sm:$0xff]
      %v5678 = vld [vmem:[%s293 + $0xfa] sm:$0x3f]
      %v5680 = vsel %vm384, %v5651, 0
      %v5683 = vsel %vm384, %v5652, 0
      %v5686 = vsel %vm384, %v5653, 0
      %v5689 = vsel %vm384, %v5654, 0
      %v5692 = vsel %vm384, %v5655, 0
      %v5695 = vsel %vm384, %v5656, 0
      %v5698 = vsel %vm384, %v5657, 0
      %v5701 = vsel %vm384, %v5658, 0
      %v5704 = vsel %vm384, %v5659, 0
      %v5707 = vsel %vm384, %v5660, 0
      %v5710 = vsel %vm384, %v5661, 0
      %v5713 = vsel %vm384, %v5662, 0
      %v5716 = vsel %vm384, %v5663, 0
      %v5719 = vsel %vm384, %v5664, 0
      %v5722 = vsel %vm384, %v5665, 0
      %v5725 = vsel %vm384, %v5666, 0
      %v5728 = vsel %vm384, %v5667, 0
      %v5731 = vsel %vm384, %v5668, 0
      %v5734 = vsel %vm384, %v5669, 0
      %v5737 = vsel %vm384, %v5670, 0
      %v5740 = vsel %vm384, %v5671, 0
      %v5743 = vsel %vm384, %v5672, 0
      %v5746 = vsel %vm384, %v5673, 0
      %v5749 = vsel %vm384, %v5674, 0
      %v5752 = vsel %vm384, %v5675, 0
      %v5755 = vsel %vm384, %v5676, 0
      %v5758 = vsel %vm384, %v5677, 0
      %v5761 = vsel %vm384, %v5678, 0
      %v5764 = vsel %vm469, %v316, 0
      %5766 = vmatprep.subr.mxu0 0.0
      %5767 = vmatpush1.msra.mxu0 0.0
      %5768 = vmatprep.subr.mxu0 0.0
      %5769 = vmatpush1.msra.mxu0 0.0
      %5770 = vmatprep.subr.mxu0 0.0
      %5771 = vmatpush1.msra.mxu0 0.0
      %5772 = vmatprep.subr.mxu0 0.0
      %5773 = vmatpush1.msra.mxu0 0.0
      %5774 = vmatprep.subr.mxu0 0.0
      %5775 = vmatpush1.msra.mxu0 0.0
      %5776 = vmatprep.subr.mxu0 0.0
      %5777 = vmatpush1.msra.mxu0 0.0
      %5778 = vmatprep.subr.mxu0 0.0
      %5779 = vmatpush1.msra.mxu0 0.0
      %5780 = vmatprep.subr.mxu0 0.0
      %5781 = vmatpush1.msra.mxu0 0.0
      %5782 = vmatprep.subr.mxu0 0.0
      %5783 = vmatpush1.msra.mxu0 0.0
      %5784 = vmatprep.subr.mxu0 0.0
      %5785 = vmatpush1.msra.mxu0 0.0
      %5786 = vmatprep.subr.mxu0 0.0
      %5787 = vmatpush1.msra.mxu0 0.0
      %5788 = vmatprep.subr.mxu0 0.0
      %5789 = vmatpush1.msra.mxu0 0.0
      %5790 = vmatprep.subr.mxu0 0.0
      %5791 = vmatpush1.msra.mxu0 0.0
      %5792 = vmatprep.subr.mxu0 0.0
      %5793 = vmatpush1.msra.mxu0 0.0
      %5794 = vmatprep.subr.mxu0 0.0
      %5795 = vmatpush1.msra.mxu0 0.0
      %5796 = vmatprep.subr.mxu0 0.0
      %5797 = vmatpush1.msra.mxu0 %v5764
      %5798 = vmatprep.subr.mxu0 0.0
      %5799 = vmatpush2.msra.mxu0 0.0
      %5800 = vmatprep.subr.mxu0 0.0
      %5801 = vmatpush2.msra.mxu0 0.0
      %5802 = vmatprep.subr.mxu0 0.0
      %5803 = vmatpush2.msra.mxu0 0.0
      %5804 = vmatprep.subr.mxu0 0.0
      %5805 = vmatpush2.msra.mxu0 0.0
      %5806 = vmatprep.subr.mxu0 0.0
      %5807 = vmatpush2.msra.mxu0 0.0
      %5808 = vmatprep.subr.mxu0 0.0
      %5809 = vmatpush2.msra.mxu0 0.0
      %5810 = vmatprep.subr.mxu0 0.0
      %5811 = vmatpush2.msra.mxu0 0.0
      %5812 = vmatprep.subr.mxu0 0.0
      %5813 = vmatpush2.msra.mxu0 0.0
      %5814 = vmatprep.subr.mxu0 0.0
      %5815 = vmatpush2.msra.mxu0 0.0
      %5816 = vmatprep.subr.mxu0 0.0
      %5817 = vmatpush2.msra.mxu0 0.0
      %5818 = vmatprep.subr.mxu0 0.0
      %5819 = vmatpush2.msra.mxu0 0.0
      %5820 = vmatprep.subr.mxu0 0.0
      %5821 = vmatpush2.msra.mxu0 0.0
      %5822 = vmatprep.subr.mxu0 0.0
      %5823 = vmatpush2.msra.mxu0 0.0
      %5824 = vmatprep.subr.mxu0 0.0
      %5825 = vmatpush2.msra.mxu0 0.0
      %5826 = vmatprep.subr.mxu0 0.0
      %5827 = vmatpush2.msra.mxu0 0.0
      %5828 = vmatprep.subr.mxu0 0.0
      %5829 = vmatpush2.msra.mxu0 0.0
      %5830 = vmatprep.mubr.f32.mxu0 0.0
      %5831 = vmatmul.mubr.f32.gmra.mxu0 %v5680
      %v5832 = vpop.f32.mrf.mxu0
      %v5833 = vadd.f32 0.0, %v5832
      %v5834 = vpop.f32.mrf.mxu0
      %5835 = vmatprep.mubr.f32.mxu0 0.0
      %5836 = vmatmul.mubr.f32.gmra.mxu0 %v5683
      %v5837 = vpop.f32.mrf.mxu0
      %v5838 = vadd.f32 0.0, %v5837
      %v5839 = vpop.f32.mrf.mxu0
      %5840 = vmatprep.mubr.f32.mxu0 0.0
      %5841 = vmatmul.mubr.f32.gmra.mxu0 %v5686
      %v5842 = vpop.f32.mrf.mxu0
      %v5843 = vadd.f32 0.0, %v5842
      %v5844 = vpop.f32.mrf.mxu0
      %5845 = vmatprep.mubr.f32.mxu0 0.0
      %5846 = vmatmul.mubr.f32.gmra.mxu0 %v5689
      %v5847 = vpop.f32.mrf.mxu0
      %v5848 = vadd.f32 0.0, %v5847
      %v5849 = vpop.f32.mrf.mxu0
      %5850 = vmatprep.mubr.f32.mxu0 0.0
      %5851 = vmatmul.mubr.f32.gmra.mxu0 %v5692
      %v5852 = vpop.f32.mrf.mxu0
      %v5853 = vadd.f32 0.0, %v5852
      %v5854 = vpop.f32.mrf.mxu0
      %5855 = vmatprep.mubr.f32.mxu0 0.0
      %5856 = vmatmul.mubr.f32.gmra.mxu0 %v5695
      %v5857 = vpop.f32.mrf.mxu0
      %v5858 = vadd.f32 0.0, %v5857
      %v5859 = vpop.f32.mrf.mxu0
      %5860 = vmatprep.mubr.f32.mxu0 0.0
      %5861 = vmatmul.mubr.f32.gmra.mxu0 %v5698
      %v5862 = vpop.f32.mrf.mxu0
      %v5863 = vadd.f32 0.0, %v5862
      %v5864 = vpop.f32.mrf.mxu0
      %5865 = vmatprep.mubr.f32.mxu0 0.0
      %5866 = vmatmul.mubr.f32.gmra.mxu0 %v5701
      %v5867 = vpop.f32.mrf.mxu0
      %v5868 = vadd.f32 0.0, %v5867
      %v5869 = vpop.f32.mrf.mxu0
      %5870 = vmatprep.mubr.f32.mxu0 0.0
      %5871 = vmatmul.mubr.f32.gmra.mxu0 %v5704
      %v5872 = vpop.f32.mrf.mxu0
      %v5873 = vadd.f32 0.0, %v5872
      %v5874 = vpop.f32.mrf.mxu0
      %5875 = vmatprep.mubr.f32.mxu0 0.0
      %5876 = vmatmul.mubr.f32.gmra.mxu0 %v5707
      %v5877 = vpop.f32.mrf.mxu0
      %v5878 = vadd.f32 0.0, %v5877
      %v5879 = vpop.f32.mrf.mxu0
      %5880 = vmatprep.mubr.f32.mxu0 0.0
      %5881 = vmatmul.mubr.f32.gmra.mxu0 %v5710
      %v5882 = vpop.f32.mrf.mxu0
      %v5883 = vadd.f32 0.0, %v5882
      %v5884 = vpop.f32.mrf.mxu0
      %5885 = vmatprep.mubr.f32.mxu0 0.0
      %5886 = vmatmul.mubr.f32.gmra.mxu0 %v5713
      %v5887 = vpop.f32.mrf.mxu0
      %v5888 = vadd.f32 0.0, %v5887
      %v5889 = vpop.f32.mrf.mxu0
      %5890 = vmatprep.mubr.f32.mxu0 0.0
      %5891 = vmatmul.mubr.f32.gmra.mxu0 %v5716
      %v5892 = vpop.f32.mrf.mxu0
      %v5893 = vadd.f32 0.0, %v5892
      %v5894 = vpop.f32.mrf.mxu0
      %5895 = vmatprep.mubr.f32.mxu0 0.0
      %5896 = vmatmul.mubr.f32.gmra.mxu0 %v5719
      %v5897 = vpop.f32.mrf.mxu0
      %v5898 = vadd.f32 0.0, %v5897
      %v5899 = vpop.f32.mrf.mxu0
      %5900 = vmatprep.mubr.f32.mxu0 0.0
      %5901 = vmatmul.mubr.f32.gmra.mxu0 %v5722
      %v5902 = vpop.f32.mrf.mxu0
      %v5903 = vadd.f32 0.0, %v5902
      %v5904 = vpop.f32.mrf.mxu0
      %5905 = vmatprep.mubr.f32.mxu0 0.0
      %5906 = vmatmul.mubr.f32.gmra.mxu0 %v5725
      %v5907 = vpop.f32.mrf.mxu0
      %v5908 = vadd.f32 0.0, %v5907
      %v5909 = vpop.f32.mrf.mxu0
      %5910 = vmatprep.mubr.f32.mxu0 0.0
      %5911 = vmatmul.mubr.f32.gmra.mxu0 %v5728
      %v5912 = vpop.f32.mrf.mxu0
      %v5913 = vadd.f32 0.0, %v5912
      %v5914 = vpop.f32.mrf.mxu0
      %5915 = vmatprep.mubr.f32.mxu0 0.0
      %5916 = vmatmul.mubr.f32.gmra.mxu0 %v5731
      %v5917 = vpop.f32.mrf.mxu0
      %v5918 = vadd.f32 0.0, %v5917
      %v5919 = vpop.f32.mrf.mxu0
      %5920 = vmatprep.mubr.f32.mxu0 0.0
      %5921 = vmatmul.mubr.f32.gmra.mxu0 %v5734
      %v5922 = vpop.f32.mrf.mxu0
      %v5923 = vadd.f32 0.0, %v5922
      %v5924 = vpop.f32.mrf.mxu0
      %5925 = vmatprep.mubr.f32.mxu0 0.0
      %5926 = vmatmul.mubr.f32.gmra.mxu0 %v5737
      %v5927 = vpop.f32.mrf.mxu0
      %v5928 = vadd.f32 0.0, %v5927
      %v5929 = vpop.f32.mrf.mxu0
      %5930 = vmatprep.mubr.f32.mxu0 0.0
      %5931 = vmatmul.mubr.f32.gmra.mxu0 %v5740
      %v5932 = vpop.f32.mrf.mxu0
      %v5933 = vadd.f32 0.0, %v5932
      %v5934 = vpop.f32.mrf.mxu0
      %5935 = vmatprep.mubr.f32.mxu0 0.0
      %5936 = vmatmul.mubr.f32.gmra.mxu0 %v5743
      %v5937 = vpop.f32.mrf.mxu0
      %v5938 = vadd.f32 0.0, %v5937
      %v5939 = vpop.f32.mrf.mxu0
      %5940 = vmatprep.mubr.f32.mxu0 0.0
      %5941 = vmatmul.mubr.f32.gmra.mxu0 %v5746
      %v5942 = vpop.f32.mrf.mxu0
      %v5943 = vadd.f32 0.0, %v5942
      %v5944 = vpop.f32.mrf.mxu0
      %5945 = vmatprep.mubr.f32.mxu0 0.0
      %5946 = vmatmul.mubr.f32.gmra.mxu0 %v5749
      %v5947 = vpop.f32.mrf.mxu0
      %v5948 = vadd.f32 0.0, %v5947
      %v5949 = vpop.f32.mrf.mxu0
      %5950 = vmatprep.mubr.f32.mxu0 0.0
      %5951 = vmatmul.mubr.f32.gmra.mxu0 %v5752
      %v5952 = vpop.f32.mrf.mxu0
      %v5953 = vadd.f32 0.0, %v5952
      %v5954 = vpop.f32.mrf.mxu0
      %5955 = vmatprep.mubr.f32.mxu0 0.0
      %5956 = vmatmul.mubr.f32.gmra.mxu0 %v5755
      %v5957 = vpop.f32.mrf.mxu0
      %v5958 = vadd.f32 0.0, %v5957
      %v5959 = vpop.f32.mrf.mxu0
      %5960 = vmatprep.mubr.f32.mxu0 0.0
      %5961 = vmatmul.mubr.f32.gmra.mxu0 %v5758
      %v5962 = vpop.f32.mrf.mxu0
      %v5963 = vadd.f32 0.0, %v5962
      %v5964 = vpop.f32.mrf.mxu0
      %5965 = vmatprep.mubr.f32.mxu0 0.0
      %5966 = vmatmul.mubr.f32.gmra.mxu0 %v5761
      %v5967 = vpop.f32.mrf.mxu0
      %v5968 = vadd.f32 0.0, %v5967
      %v5969 = vpop.f32.mrf.mxu0
      %5970 = vdwg.mxu0
      %v5972 = vsel %vm678, %v5623, 0
      %v5975 = vsel %vm678, %v5624, 0
      %v5978 = vsel %vm678, %v5625, 0
      %v5981 = vsel %vm678, %v5626, 0
      %v5984 = vsel %vm678, %v5627, 0
      %v5987 = vsel %vm678, %v5628, 0
      %v5990 = vsel %vm678, %v5629, 0
      %v5993 = vsel %vm678, %v5630, 0
      %v5996 = vsel %vm678, %v5631, 0
      %v5999 = vsel %vm678, %v5632, 0
      %v6002 = vsel %vm678, %v5633, 0
      %v6005 = vsel %vm678, %v5634, 0
      %v6008 = vsel %vm678, %v5635, 0
      %v6011 = vsel %vm678, %v5636, 0
      %v6014 = vsel %vm678, %v5637, 0
      %v6017 = vsel %vm678, %v5638, 0
      %v6020 = vsel %vm678, %v5639, 0
      %v6023 = vsel %vm678, %v5640, 0
      %v6026 = vsel %vm678, %v5641, 0
      %v6029 = vsel %vm678, %v5642, 0
      %v6032 = vsel %vm678, %v5643, 0
      %v6035 = vsel %vm678, %v5644, 0
      %v6038 = vsel %vm678, %v5645, 0
      %v6041 = vsel %vm678, %v5646, 0
      %v6044 = vsel %vm678, %v5647, 0
      %v6047 = vsel %vm678, %v5648, 0
      %v6050 = vsel %vm678, %v5649, 0
      %v6053 = vsel %vm678, %v5650, 0
      %6055 = vmatprep.subr.mxu0 0.0
      %6056 = vmatpush1.msra.mxu0 0.0
      %6057 = vmatprep.subr.mxu0 0.0
      %6058 = vmatpush1.msra.mxu0 0.0
      %6059 = vmatprep.subr.mxu0 0.0
      %6060 = vmatpush1.msra.mxu0 0.0
      %6061 = vmatprep.subr.mxu0 0.0
      %6062 = vmatpush1.msra.mxu0 0.0
      %6063 = vmatprep.subr.mxu0 0.0
      %6064 = vmatpush1.msra.mxu0 0.0
      %6065 = vmatprep.subr.mxu0 0.0
      %6066 = vmatpush1.msra.mxu0 0.0
      %6067 = vmatprep.subr.mxu0 0.0
      %6068 = vmatpush1.msra.mxu0 0.0
      %6069 = vmatprep.subr.mxu0 0.0
      %6070 = vmatpush1.msra.mxu0 0.0
      %6071 = vmatprep.subr.mxu0 0.0
      %6072 = vmatpush1.msra.mxu0 0.0
      %6073 = vmatprep.subr.mxu0 0.0
      %6074 = vmatpush1.msra.mxu0 0.0
      %6075 = vmatprep.subr.mxu0 0.0
      %6076 = vmatpush1.msra.mxu0 0.0
      %6077 = vmatprep.subr.mxu0 0.0
      %6078 = vmatpush1.msra.mxu0 0.0
      %6079 = vmatprep.subr.mxu0 0.0
      %6080 = vmatpush1.msra.mxu0 0.0
      %6081 = vmatprep.subr.mxu0 0.0
      %6082 = vmatpush1.msra.mxu0 0.0
      %6083 = vmatprep.subr.mxu0 0.0
      %6084 = vmatpush1.msra.mxu0 0.0
      %6085 = vmatprep.subr.mxu0 0.0
      %6086 = vmatpush1.msra.mxu0 %v307
      %6087 = vmatprep.subr.mxu0 0.0
      %6088 = vmatpush2.msra.mxu0 0.0
      %6089 = vmatprep.subr.mxu0 0.0
      %6090 = vmatpush2.msra.mxu0 0.0
      %6091 = vmatprep.subr.mxu0 0.0
      %6092 = vmatpush2.msra.mxu0 0.0
      %6093 = vmatprep.subr.mxu0 0.0
      %6094 = vmatpush2.msra.mxu0 0.0
      %6095 = vmatprep.subr.mxu0 0.0
      %6096 = vmatpush2.msra.mxu0 0.0
      %6097 = vmatprep.subr.mxu0 0.0
      %6098 = vmatpush2.msra.mxu0 0.0
      %6099 = vmatprep.subr.mxu0 0.0
      %6100 = vmatpush2.msra.mxu0 0.0
      %6101 = vmatprep.subr.mxu0 0.0
      %6102 = vmatpush2.msra.mxu0 0.0
      %6103 = vmatprep.subr.mxu0 0.0
      %6104 = vmatpush2.msra.mxu0 0.0
      %6105 = vmatprep.subr.mxu0 0.0
      %6106 = vmatpush2.msra.mxu0 0.0
      %6107 = vmatprep.subr.mxu0 0.0
      %6108 = vmatpush2.msra.mxu0 0.0
      %6109 = vmatprep.subr.mxu0 0.0
      %6110 = vmatpush2.msra.mxu0 0.0
      %6111 = vmatprep.subr.mxu0 0.0
      %6112 = vmatpush2.msra.mxu0 0.0
      %6113 = vmatprep.subr.mxu0 0.0
      %6114 = vmatpush2.msra.mxu0 0.0
      %6115 = vmatprep.subr.mxu0 0.0
      %6116 = vmatpush2.msra.mxu0 0.0
      %6117 = vmatprep.subr.mxu0 0.0
      %6118 = vmatpush2.msra.mxu0 0.0
      %6119 = vmatprep.mubr.f32.mxu0 0.0
      %6120 = vmatmul.mubr.f32.gmra.mxu0 %v5972
      %v6121 = vpop.f32.mrf.mxu0
      %v6122 = vadd.f32 %v5833, %v6121
      %v6123 = vpop.f32.mrf.mxu0
      %6124 = vmatprep.mubr.f32.mxu0 0.0
      %6125 = vmatmul.mubr.f32.gmra.mxu0 %v5975
      %v6126 = vpop.f32.mrf.mxu0
      %v6127 = vadd.f32 %v5838, %v6126
      %v6128 = vpop.f32.mrf.mxu0
      %6129 = vmatprep.mubr.f32.mxu0 0.0
      %6130 = vmatmul.mubr.f32.gmra.mxu0 %v5978
      %v6131 = vpop.f32.mrf.mxu0
      %v6132 = vadd.f32 %v5843, %v6131
      %v6133 = vpop.f32.mrf.mxu0
      %6134 = vmatprep.mubr.f32.mxu0 0.0
      %6135 = vmatmul.mubr.f32.gmra.mxu0 %v5981
      %v6136 = vpop.f32.mrf.mxu0
      %v6137 = vadd.f32 %v5848, %v6136
      %v6138 = vpop.f32.mrf.mxu0
      %6139 = vmatprep.mubr.f32.mxu0 0.0
      %6140 = vmatmul.mubr.f32.gmra.mxu0 %v5984
      %v6141 = vpop.f32.mrf.mxu0
      %v6142 = vadd.f32 %v5853, %v6141
      %v6143 = vpop.f32.mrf.mxu0
      %6144 = vmatprep.mubr.f32.mxu0 0.0
      %6145 = vmatmul.mubr.f32.gmra.mxu0 %v5987
      %v6146 = vpop.f32.mrf.mxu0
      %v6147 = vadd.f32 %v5858, %v6146
      %v6148 = vpop.f32.mrf.mxu0
      %6149 = vmatprep.mubr.f32.mxu0 0.0
      %6150 = vmatmul.mubr.f32.gmra.mxu0 %v5990
      %v6151 = vpop.f32.mrf.mxu0
      %v6152 = vadd.f32 %v5863, %v6151
      %v6153 = vpop.f32.mrf.mxu0
      %6154 = vmatprep.mubr.f32.mxu0 0.0
      %6155 = vmatmul.mubr.f32.gmra.mxu0 %v5993
      %v6156 = vpop.f32.mrf.mxu0
      %v6157 = vadd.f32 %v5868, %v6156
      %v6158 = vpop.f32.mrf.mxu0
      %6159 = vmatprep.mubr.f32.mxu0 0.0
      %6160 = vmatmul.mubr.f32.gmra.mxu0 %v5996
      %v6161 = vpop.f32.mrf.mxu0
      %v6162 = vadd.f32 %v5873, %v6161
      %v6163 = vpop.f32.mrf.mxu0
      %6164 = vmatprep.mubr.f32.mxu0 0.0
      %6165 = vmatmul.mubr.f32.gmra.mxu0 %v5999
      %v6166 = vpop.f32.mrf.mxu0
      %v6167 = vadd.f32 %v5878, %v6166
      %v6168 = vpop.f32.mrf.mxu0
      %6169 = vmatprep.mubr.f32.mxu0 0.0
      %6170 = vmatmul.mubr.f32.gmra.mxu0 %v6002
      %v6171 = vpop.f32.mrf.mxu0
      %v6172 = vadd.f32 %v5883, %v6171
      %v6173 = vpop.f32.mrf.mxu0
      %6174 = vmatprep.mubr.f32.mxu0 0.0
      %6175 = vmatmul.mubr.f32.gmra.mxu0 %v6005
      %v6176 = vpop.f32.mrf.mxu0
      %v6177 = vadd.f32 %v5888, %v6176
      %v6178 = vpop.f32.mrf.mxu0
      %6179 = vmatprep.mubr.f32.mxu0 0.0
      %6180 = vmatmul.mubr.f32.gmra.mxu0 %v6008
      %v6181 = vpop.f32.mrf.mxu0
      %v6182 = vadd.f32 %v5893, %v6181
      %v6183 = vpop.f32.mrf.mxu0
      %6184 = vmatprep.mubr.f32.mxu0 0.0
      %6185 = vmatmul.mubr.f32.gmra.mxu0 %v6011
      %v6186 = vpop.f32.mrf.mxu0
      %v6187 = vadd.f32 %v5898, %v6186
      %v6188 = vpop.f32.mrf.mxu0
      %6189 = vmatprep.mubr.f32.mxu0 0.0
      %6190 = vmatmul.mubr.f32.gmra.mxu0 %v6014
      %v6191 = vpop.f32.mrf.mxu0
      %v6192 = vadd.f32 %v5903, %v6191
      %v6193 = vpop.f32.mrf.mxu0
      %6194 = vmatprep.mubr.f32.mxu0 0.0
      %6195 = vmatmul.mubr.f32.gmra.mxu0 %v6017
      %v6196 = vpop.f32.mrf.mxu0
      %v6197 = vadd.f32 %v5908, %v6196
      %v6198 = vpop.f32.mrf.mxu0
      %6199 = vmatprep.mubr.f32.mxu0 0.0
      %6200 = vmatmul.mubr.f32.gmra.mxu0 %v6020
      %v6201 = vpop.f32.mrf.mxu0
      %v6202 = vadd.f32 %v5913, %v6201
      %v6203 = vpop.f32.mrf.mxu0
      %6204 = vmatprep.mubr.f32.mxu0 0.0
      %6205 = vmatmul.mubr.f32.gmra.mxu0 %v6023
      %v6206 = vpop.f32.mrf.mxu0
      %v6207 = vadd.f32 %v5918, %v6206
      %v6208 = vpop.f32.mrf.mxu0
      %6209 = vmatprep.mubr.f32.mxu0 0.0
      %6210 = vmatmul.mubr.f32.gmra.mxu0 %v6026
      %v6211 = vpop.f32.mrf.mxu0
      %v6212 = vadd.f32 %v5923, %v6211
      %v6213 = vpop.f32.mrf.mxu0
      %6214 = vmatprep.mubr.f32.mxu0 0.0
      %6215 = vmatmul.mubr.f32.gmra.mxu0 %v6029
      %v6216 = vpop.f32.mrf.mxu0
      %v6217 = vadd.f32 %v5928, %v6216
      %v6218 = vpop.f32.mrf.mxu0
      %6219 = vmatprep.mubr.f32.mxu0 0.0
      %6220 = vmatmul.mubr.f32.gmra.mxu0 %v6032
      %v6221 = vpop.f32.mrf.mxu0
      %v6222 = vadd.f32 %v5933, %v6221
      %v6223 = vpop.f32.mrf.mxu0
      %6224 = vmatprep.mubr.f32.mxu0 0.0
      %6225 = vmatmul.mubr.f32.gmra.mxu0 %v6035
      %v6226 = vpop.f32.mrf.mxu0
      %v6227 = vadd.f32 %v5938, %v6226
      %v6228 = vpop.f32.mrf.mxu0
      %6229 = vmatprep.mubr.f32.mxu0 0.0
      %6230 = vmatmul.mubr.f32.gmra.mxu0 %v6038
      %v6231 = vpop.f32.mrf.mxu0
      %v6232 = vadd.f32 %v5943, %v6231
      %v6233 = vpop.f32.mrf.mxu0
      %6234 = vmatprep.mubr.f32.mxu0 0.0
      %6235 = vmatmul.mubr.f32.gmra.mxu0 %v6041
      %v6236 = vpop.f32.mrf.mxu0
      %v6237 = vadd.f32 %v5948, %v6236
      %v6238 = vpop.f32.mrf.mxu0
      %6239 = vmatprep.mubr.f32.mxu0 0.0
      %6240 = vmatmul.mubr.f32.gmra.mxu0 %v6044
      %v6241 = vpop.f32.mrf.mxu0
      %v6242 = vadd.f32 %v5953, %v6241
      %v6243 = vpop.f32.mrf.mxu0
      %6244 = vmatprep.mubr.f32.mxu0 0.0
      %6245 = vmatmul.mubr.f32.gmra.mxu0 %v6047
      %v6246 = vpop.f32.mrf.mxu0
      %v6247 = vadd.f32 %v5958, %v6246
      %v6248 = vpop.f32.mrf.mxu0
      %6249 = vmatprep.mubr.f32.mxu0 0.0
      %6250 = vmatmul.mubr.f32.gmra.mxu0 %v6050
      %v6251 = vpop.f32.mrf.mxu0
      %v6252 = vadd.f32 %v5963, %v6251
      %v6253 = vpop.f32.mrf.mxu0
      %6254 = vmatprep.mubr.f32.mxu0 0.0
      %6255 = vmatmul.mubr.f32.gmra.mxu0 %v6053
      %v6256 = vpop.f32.mrf.mxu0
      %v6257 = vadd.f32 %v5968, %v6256
      %v6258 = vpop.f32.mrf.mxu0
      %6259 = vdwg.mxu0
      %v6260 = vadd.f32 %v5595, %v6122
      %v6261 = vadd.f32 %v5596, %v6127
      %v6262 = vadd.f32 %v5597, %v6132
      %v6263 = vadd.f32 %v5598, %v6137
      %v6264 = vadd.f32 %v5599, %v6142
      %v6265 = vadd.f32 %v5600, %v6147
      %v6266 = vadd.f32 %v5601, %v6152
      %v6267 = vadd.f32 %v5602, %v6157
      %v6268 = vadd.f32 %v5603, %v6162
      %v6269 = vadd.f32 %v5604, %v6167
      %v6270 = vadd.f32 %v5605, %v6172
      %v6271 = vadd.f32 %v5606, %v6177
      %v6272 = vadd.f32 %v5607, %v6182
      %v6273 = vadd.f32 %v5608, %v6187
      %v6274 = vadd.f32 %v5609, %v6192
      %v6275 = vadd.f32 %v5610, %v6197
      %v6276 = vadd.f32 %v5611, %v6202
      %v6277 = vadd.f32 %v5612, %v6207
      %v6278 = vadd.f32 %v5613, %v6212
      %v6279 = vadd.f32 %v5614, %v6217
      %v6280 = vadd.f32 %v5615, %v6222
      %v6281 = vadd.f32 %v5616, %v6227
      %v6282 = vadd.f32 %v5617, %v6232
      %v6283 = vadd.f32 %v5618, %v6237
      %v6284 = vadd.f32 %v5619, %v6242
      %v6285 = vadd.f32 %v5620, %v6247
      %v6286 = vadd.f32 %v5621, %v6252
      %v6287 = vadd.f32 %v5622, %v6257
      %v6289 = vlaneseq
      %v6290 = vshrl.u32 %v6289, 7
      %v6291 = vsub.s32 0, %v6290
      %v6292 = vrot.slane %v326, %v6291
      %v6294 = vadd.f32 %v6260, %v6292
      %v6295 = vadd.f32 %v6261, %v6292
      %v6296 = vadd.f32 %v6262, %v6292
      %v6297 = vadd.f32 %v6263, %v6292
      %v6298 = vadd.f32 %v6264, %v6292
      %v6299 = vadd.f32 %v6265, %v6292
      %v6300 = vadd.f32 %v6266, %v6292
      %v6301 = vadd.f32 %v6267, %v6292
      %v6302 = vadd.f32 %v6268, %v6292
      %v6303 = vadd.f32 %v6269, %v6292
      %v6304 = vadd.f32 %v6270, %v6292
      %v6305 = vadd.f32 %v6271, %v6292
      %v6306 = vadd.f32 %v6272, %v6292
      %v6307 = vadd.f32 %v6273, %v6292
      %v6308 = vadd.f32 %v6274, %v6292
      %v6309 = vadd.f32 %v6275, %v6292
      %v6310 = vadd.f32 %v6276, %v6292
      %v6311 = vadd.f32 %v6277, %v6292
      %v6312 = vadd.f32 %v6278, %v6292
      %v6313 = vadd.f32 %v6279, %v6292
      %v6314 = vadd.f32 %v6280, %v6292
      %v6315 = vadd.f32 %v6281, %v6292
      %v6316 = vadd.f32 %v6282, %v6292
      %v6317 = vadd.f32 %v6283, %v6292
      %v6318 = vadd.f32 %v6284, %v6292
      %v6319 = vadd.f32 %v6285, %v6292
      %v6320 = vadd.f32 %v6286, %v6292
      %v6321 = vadd.f32 %v6287, %v6292
      %v6322 = vmax.f32 %v6294, 0.0
      %v6323 = vmax.f32 %v6295, 0.0
      %v6324 = vmax.f32 %v6296, 0.0
      %v6325 = vmax.f32 %v6297, 0.0
      %v6326 = vmax.f32 %v6298, 0.0
      %v6327 = vmax.f32 %v6299, 0.0
      %v6328 = vmax.f32 %v6300, 0.0
      %v6329 = vmax.f32 %v6301, 0.0
      %v6330 = vmax.f32 %v6302, 0.0
      %v6331 = vmax.f32 %v6303, 0.0
      %v6332 = vmax.f32 %v6304, 0.0
      %v6333 = vmax.f32 %v6305, 0.0
      %v6334 = vmax.f32 %v6306, 0.0
      %v6335 = vmax.f32 %v6307, 0.0
      %v6336 = vmax.f32 %v6308, 0.0
      %v6337 = vmax.f32 %v6309, 0.0
      %v6338 = vmax.f32 %v6310, 0.0
      %v6339 = vmax.f32 %v6311, 0.0
      %v6340 = vmax.f32 %v6312, 0.0
      %v6341 = vmax.f32 %v6313, 0.0
      %v6342 = vmax.f32 %v6314, 0.0
      %v6343 = vmax.f32 %v6315, 0.0
      %v6344 = vmax.f32 %v6316, 0.0
      %v6345 = vmax.f32 %v6317, 0.0
      %v6346 = vmax.f32 %v6318, 0.0
      %v6347 = vmax.f32 %v6319, 0.0
      %v6348 = vmax.f32 %v6320, 0.0
      %v6349 = vmax.f32 %v6321, 0.0
      %6350 = vst.msk [vmem:[#allocation2] sm:$0xff] %vm678, %v6322
      %6351 = vst.msk [vmem:[#allocation2 + $0x8] sm:$0xff] %vm678, %v6323
      %6352 = vst.msk [vmem:[#allocation2 + $0x10] sm:$0xff] %vm678, %v6324
      %6353 = vst.msk [vmem:[#allocation2 + $0x18] sm:$0xff] %vm678, %v6325
      %6354 = vst.msk [vmem:[#allocation2 + $0x20] sm:$0xff] %vm678, %v6326
      %6355 = vst.msk [vmem:[#allocation2 + $0x28] sm:$0xff] %vm678, %v6327
      %6356 = vst.msk [vmem:[#allocation2 + $0x30] sm:$0xff] %vm678, %v6328
      %6357 = vst.msk [vmem:[#allocation2 + $0x38] sm:$0xff] %vm678, %v6329
      %6358 = vst.msk [vmem:[#allocation2 + $0x40] sm:$0xff] %vm678, %v6330
      %6359 = vst.msk [vmem:[#allocation2 + $0x48] sm:$0xff] %vm678, %v6331
      %6360 = vst.msk [vmem:[#allocation2 + $0x50] sm:$0xff] %vm678, %v6332
      %6361 = vst.msk [vmem:[#allocation2 + $0x58] sm:$0xff] %vm678, %v6333
      %6362 = vst.msk [vmem:[#allocation2 + $0x60] sm:$0xff] %vm678, %v6334
      %6363 = vst.msk [vmem:[#allocation2 + $0x68] sm:$0xff] %vm678, %v6335
      %6364 = vst.msk [vmem:[#allocation2 + $0x70] sm:$0xff] %vm678, %v6336
      %6365 = vst.msk [vmem:[#allocation2 + $0x78] sm:$0xff] %vm678, %v6337
      %6366 = vst.msk [vmem:[#allocation2 + $0x80] sm:$0xff] %vm678, %v6338
      %6367 = vst.msk [vmem:[#allocation2 + $0x88] sm:$0xff] %vm678, %v6339
      %6368 = vst.msk [vmem:[#allocation2 + $0x90] sm:$0xff] %vm678, %v6340
      %6369 = vst.msk [vmem:[#allocation2 + $0x98] sm:$0xff] %vm678, %v6341
      %6370 = vst.msk [vmem:[#allocation2 + $0xa0] sm:$0xff] %vm678, %v6342
      %6371 = vst.msk [vmem:[#allocation2 + $0xa8] sm:$0xff] %vm678, %v6343
      %6372 = vst.msk [vmem:[#allocation2 + $0xb0] sm:$0xff] %vm678, %v6344
      %6373 = vst.msk [vmem:[#allocation2 + $0xb8] sm:$0xff] %vm678, %v6345
      %6374 = vst.msk [vmem:[#allocation2 + $0xc0] sm:$0xff] %vm678, %v6346
      %6375 = vst.msk [vmem:[#allocation2 + $0xc8] sm:$0xff] %vm678, %v6347
      %6376 = vst.msk [vmem:[#allocation2 + $0xd0] sm:$0xff] %vm678, %v6348
      %vm6377 = vcmask 62464
      %6378 = vst.msk [vmem:[#allocation2 + $0xd8] sm:$0x3f] %vm6377, %v6349
      %v6379 = vld [vmem:[#allocation2] sm:$0xff]
      %v6380 = vld [vmem:[#allocation2 + $0x8] sm:$0xff]
      %v6381 = vld [vmem:[#allocation2 + $0x10] sm:$0xff]
      %v6382 = vld [vmem:[#allocation2 + $0x18] sm:$0xff]
      %v6383 = vld [vmem:[#allocation2 + $0x20] sm:$0xff]
      %v6384 = vld [vmem:[#allocation2 + $0x28] sm:$0xff]
      %v6385 = vld [vmem:[#allocation2 + $0x30] sm:$0xff]
      %v6386 = vld [vmem:[#allocation2 + $0x38] sm:$0xff]
      %v6387 = vld [vmem:[#allocation2 + $0x40] sm:$0xff]
      %v6388 = vld [vmem:[#allocation2 + $0x48] sm:$0xff]
      %v6389 = vld [vmem:[#allocation2 + $0x50] sm:$0xff]
      %v6390 = vld [vmem:[#allocation2 + $0x58] sm:$0xff]
      %v6391 = vld [vmem:[#allocation2 + $0x60] sm:$0xff]
      %v6392 = vld [vmem:[#allocation2 + $0x68] sm:$0xff]
      %v6393 = vld [vmem:[#allocation2 + $0x70] sm:$0xff]
      %v6394 = vld [vmem:[#allocation2 + $0x78] sm:$0xff]
      %v6395 = vld [vmem:[#allocation2 + $0x80] sm:$0xff]
      %v6396 = vld [vmem:[#allocation2 + $0x88] sm:$0xff]
      %v6397 = vld [vmem:[#allocation2 + $0x90] sm:$0xff]
      %v6398 = vld [vmem:[#allocation2 + $0x98] sm:$0xff]
      %v6399 = vld [vmem:[#allocation2 + $0xa0] sm:$0xff]
      %v6400 = vld [vmem:[#allocation2 + $0xa8] sm:$0xff]
      %v6401 = vld [vmem:[#allocation2 + $0xb0] sm:$0xff]
      %v6402 = vld [vmem:[#allocation2 + $0xb8] sm:$0xf]
      %v6403 = vld [vmem:[#allocation2 + $0x1] sm:$0xff]
      %v6404 = vld [vmem:[#allocation2 + $0x9] sm:$0xff]
      %v6405 = vld [vmem:[#allocation2 + $0x11] sm:$0xff]
      %v6406 = vld [vmem:[#allocation2 + $0x19] sm:$0xff]
      %v6407 = vld [vmem:[#allocation2 + $0x21] sm:$0xff]
      %v6408 = vld [vmem:[#allocation2 + $0x29] sm:$0xff]
      %v6409 = vld [vmem:[#allocation2 + $0x31] sm:$0xff]
      %v6410 = vld [vmem:[#allocation2 + $0x39] sm:$0xff]
      %v6411 = vld [vmem:[#allocation2 + $0x41] sm:$0xff]
      %v6412 = vld [vmem:[#allocation2 + $0x49] sm:$0xff]
      %v6413 = vld [vmem:[#allocation2 + $0x51] sm:$0xff]
      %v6414 = vld [vmem:[#allocation2 + $0x59] sm:$0xff]
      %v6415 = vld [vmem:[#allocation2 + $0x61] sm:$0xff]
      %v6416 = vld [vmem:[#allocation2 + $0x69] sm:$0xff]
      %v6417 = vld [vmem:[#allocation2 + $0x71] sm:$0xff]
      %v6418 = vld [vmem:[#allocation2 + $0x79] sm:$0xff]
      %v6419 = vld [vmem:[#allocation2 + $0x81] sm:$0xff]
      %v6420 = vld [vmem:[#allocation2 + $0x89] sm:$0xff]
      %v6421 = vld [vmem:[#allocation2 + $0x91] sm:$0xff]
      %v6422 = vld [vmem:[#allocation2 + $0x99] sm:$0xff]
      %v6423 = vld [vmem:[#allocation2 + $0xa1] sm:$0xff]
      %v6424 = vld [vmem:[#allocation2 + $0xa9] sm:$0xff]
      %v6425 = vld [vmem:[#allocation2 + $0xb1] sm:$0xff]
      %v6426 = vld [vmem:[#allocation2 + $0xb9] sm:$0xf]
      %v6428 = vsel %vm678, %v6403, 0
      %v6431 = vsel %vm678, %v6404, 0
      %v6434 = vsel %vm678, %v6405, 0
      %v6437 = vsel %vm678, %v6406, 0
      %v6440 = vsel %vm678, %v6407, 0
      %v6443 = vsel %vm678, %v6408, 0
      %v6446 = vsel %vm678, %v6409, 0
      %v6449 = vsel %vm678, %v6410, 0
      %v6452 = vsel %vm678, %v6411, 0
      %v6455 = vsel %vm678, %v6412, 0
      %v6458 = vsel %vm678, %v6413, 0
      %v6461 = vsel %vm678, %v6414, 0
      %v6464 = vsel %vm678, %v6415, 0
      %v6467 = vsel %vm678, %v6416, 0
      %v6470 = vsel %vm678, %v6417, 0
      %v6473 = vsel %vm678, %v6418, 0
      %v6476 = vsel %vm678, %v6419, 0
      %v6479 = vsel %vm678, %v6420, 0
      %v6482 = vsel %vm678, %v6421, 0
      %v6485 = vsel %vm678, %v6422, 0
      %v6488 = vsel %vm678, %v6423, 0
      %v6491 = vsel %vm678, %v6424, 0
      %v6494 = vsel %vm678, %v6425, 0
      %v6497 = vsel %vm678, %v6426, 0
      %6499 = vmatprep.subr.mxu0 0.0
      %6500 = vmatpush1.msra.mxu0 0.0
      %6501 = vmatprep.subr.mxu0 0.0
      %6502 = vmatpush1.msra.mxu0 0.0
      %6503 = vmatprep.subr.mxu0 0.0
      %6504 = vmatpush1.msra.mxu0 0.0
      %6505 = vmatprep.subr.mxu0 0.0
      %6506 = vmatpush1.msra.mxu0 0.0
      %6507 = vmatprep.subr.mxu0 0.0
      %6508 = vmatpush1.msra.mxu0 0.0
      %6509 = vmatprep.subr.mxu0 0.0
      %6510 = vmatpush1.msra.mxu0 0.0
      %6511 = vmatprep.subr.mxu0 0.0
      %6512 = vmatpush1.msra.mxu0 0.0
      %6513 = vmatprep.subr.mxu0 0.0
      %6514 = vmatpush1.msra.mxu0 0.0
      %6515 = vmatprep.subr.mxu0 0.0
      %6516 = vmatpush1.msra.mxu0 0.0
      %6517 = vmatprep.subr.mxu0 0.0
      %6518 = vmatpush1.msra.mxu0 0.0
      %6519 = vmatprep.subr.mxu0 0.0
      %6520 = vmatpush1.msra.mxu0 0.0
      %6521 = vmatprep.subr.mxu0 0.0
      %6522 = vmatpush1.msra.mxu0 0.0
      %6523 = vmatprep.subr.mxu0 0.0
      %6524 = vmatpush1.msra.mxu0 0.0
      %6525 = vmatprep.subr.mxu0 0.0
      %6526 = vmatpush1.msra.mxu0 0.0
      %6527 = vmatprep.subr.mxu0 0.0
      %6528 = vmatpush1.msra.mxu0 0.0
      %6529 = vmatprep.subr.mxu0 0.0
      %6530 = vmatpush1.msra.mxu0 %v318
      %6531 = vmatprep.subr.mxu0 0.0
      %6532 = vmatpush2.msra.mxu0 0.0
      %6533 = vmatprep.subr.mxu0 0.0
      %6534 = vmatpush2.msra.mxu0 0.0
      %6535 = vmatprep.subr.mxu0 0.0
      %6536 = vmatpush2.msra.mxu0 0.0
      %6537 = vmatprep.subr.mxu0 0.0
      %6538 = vmatpush2.msra.mxu0 0.0
      %6539 = vmatprep.subr.mxu0 0.0
      %6540 = vmatpush2.msra.mxu0 0.0
      %6541 = vmatprep.subr.mxu0 0.0
      %6542 = vmatpush2.msra.mxu0 0.0
      %6543 = vmatprep.subr.mxu0 0.0
      %6544 = vmatpush2.msra.mxu0 0.0
      %6545 = vmatprep.subr.mxu0 0.0
      %6546 = vmatpush2.msra.mxu0 0.0
      %6547 = vmatprep.subr.mxu0 0.0
      %6548 = vmatpush2.msra.mxu0 0.0
      %6549 = vmatprep.subr.mxu0 0.0
      %6550 = vmatpush2.msra.mxu0 0.0
      %6551 = vmatprep.subr.mxu0 0.0
      %6552 = vmatpush2.msra.mxu0 0.0
      %6553 = vmatprep.subr.mxu0 0.0
      %6554 = vmatpush2.msra.mxu0 0.0
      %6555 = vmatprep.subr.mxu0 0.0
      %6556 = vmatpush2.msra.mxu0 0.0
      %6557 = vmatprep.subr.mxu0 0.0
      %6558 = vmatpush2.msra.mxu0 0.0
      %6559 = vmatprep.subr.mxu0 0.0
      %6560 = vmatpush2.msra.mxu0 0.0
      %6561 = vmatprep.subr.mxu0 0.0
      %6562 = vmatpush2.msra.mxu0 0.0
      %6563 = vmatprep.mubr.f32.mxu0 0.0
      %6564 = vmatmul.mubr.f32.gmra.mxu0 %v6428
      %v6565 = vpop.f32.mrf.mxu0
      %v6566 = vadd.f32 0.0, %v6565
      %v6567 = vpop.f32.mrf.mxu0
      %6568 = vmatprep.mubr.f32.mxu0 0.0
      %6569 = vmatmul.mubr.f32.gmra.mxu0 %v6431
      %v6570 = vpop.f32.mrf.mxu0
      %v6571 = vadd.f32 0.0, %v6570
      %v6572 = vpop.f32.mrf.mxu0
      %6573 = vmatprep.mubr.f32.mxu0 0.0
      %6574 = vmatmul.mubr.f32.gmra.mxu0 %v6434
      %v6575 = vpop.f32.mrf.mxu0
      %v6576 = vadd.f32 0.0, %v6575
      %v6577 = vpop.f32.mrf.mxu0
      %6578 = vmatprep.mubr.f32.mxu0 0.0
      %6579 = vmatmul.mubr.f32.gmra.mxu0 %v6437
      %v6580 = vpop.f32.mrf.mxu0
      %v6581 = vadd.f32 0.0, %v6580
      %v6582 = vpop.f32.mrf.mxu0
      %6583 = vmatprep.mubr.f32.mxu0 0.0
      %6584 = vmatmul.mubr.f32.gmra.mxu0 %v6440
      %v6585 = vpop.f32.mrf.mxu0
      %v6586 = vadd.f32 0.0, %v6585
      %v6587 = vpop.f32.mrf.mxu0
      %6588 = vmatprep.mubr.f32.mxu0 0.0
      %6589 = vmatmul.mubr.f32.gmra.mxu0 %v6443
      %v6590 = vpop.f32.mrf.mxu0
      %v6591 = vadd.f32 0.0, %v6590
      %v6592 = vpop.f32.mrf.mxu0
      %6593 = vmatprep.mubr.f32.mxu0 0.0
      %6594 = vmatmul.mubr.f32.gmra.mxu0 %v6446
      %v6595 = vpop.f32.mrf.mxu0
      %v6596 = vadd.f32 0.0, %v6595
      %v6597 = vpop.f32.mrf.mxu0
      %6598 = vmatprep.mubr.f32.mxu0 0.0
      %6599 = vmatmul.mubr.f32.gmra.mxu0 %v6449
      %v6600 = vpop.f32.mrf.mxu0
      %v6601 = vadd.f32 0.0, %v6600
      %v6602 = vpop.f32.mrf.mxu0
      %6603 = vmatprep.mubr.f32.mxu0 0.0
      %6604 = vmatmul.mubr.f32.gmra.mxu0 %v6452
      %v6605 = vpop.f32.mrf.mxu0
      %v6606 = vadd.f32 0.0, %v6605
      %v6607 = vpop.f32.mrf.mxu0
      %6608 = vmatprep.mubr.f32.mxu0 0.0
      %6609 = vmatmul.mubr.f32.gmra.mxu0 %v6455
      %v6610 = vpop.f32.mrf.mxu0
      %v6611 = vadd.f32 0.0, %v6610
      %v6612 = vpop.f32.mrf.mxu0
      %6613 = vmatprep.mubr.f32.mxu0 0.0
      %6614 = vmatmul.mubr.f32.gmra.mxu0 %v6458
      %v6615 = vpop.f32.mrf.mxu0
      %v6616 = vadd.f32 0.0, %v6615
      %v6617 = vpop.f32.mrf.mxu0
      %6618 = vmatprep.mubr.f32.mxu0 0.0
      %6619 = vmatmul.mubr.f32.gmra.mxu0 %v6461
      %v6620 = vpop.f32.mrf.mxu0
      %v6621 = vadd.f32 0.0, %v6620
      %v6622 = vpop.f32.mrf.mxu0
      %6623 = vmatprep.mubr.f32.mxu0 0.0
      %6624 = vmatmul.mubr.f32.gmra.mxu0 %v6464
      %v6625 = vpop.f32.mrf.mxu0
      %v6626 = vadd.f32 0.0, %v6625
      %v6627 = vpop.f32.mrf.mxu0
      %6628 = vmatprep.mubr.f32.mxu0 0.0
      %6629 = vmatmul.mubr.f32.gmra.mxu0 %v6467
      %v6630 = vpop.f32.mrf.mxu0
      %v6631 = vadd.f32 0.0, %v6630
      %v6632 = vpop.f32.mrf.mxu0
      %6633 = vmatprep.mubr.f32.mxu0 0.0
      %6634 = vmatmul.mubr.f32.gmra.mxu0 %v6470
      %v6635 = vpop.f32.mrf.mxu0
      %v6636 = vadd.f32 0.0, %v6635
      %v6637 = vpop.f32.mrf.mxu0
      %6638 = vmatprep.mubr.f32.mxu0 0.0
      %6639 = vmatmul.mubr.f32.gmra.mxu0 %v6473
      %v6640 = vpop.f32.mrf.mxu0
      %v6641 = vadd.f32 0.0, %v6640
      %v6642 = vpop.f32.mrf.mxu0
      %6643 = vmatprep.mubr.f32.mxu0 0.0
      %6644 = vmatmul.mubr.f32.gmra.mxu0 %v6476
      %v6645 = vpop.f32.mrf.mxu0
      %v6646 = vadd.f32 0.0, %v6645
      %v6647 = vpop.f32.mrf.mxu0
      %6648 = vmatprep.mubr.f32.mxu0 0.0
      %6649 = vmatmul.mubr.f32.gmra.mxu0 %v6479
      %v6650 = vpop.f32.mrf.mxu0
      %v6651 = vadd.f32 0.0, %v6650
      %v6652 = vpop.f32.mrf.mxu0
      %6653 = vmatprep.mubr.f32.mxu0 0.0
      %6654 = vmatmul.mubr.f32.gmra.mxu0 %v6482
      %v6655 = vpop.f32.mrf.mxu0
      %v6656 = vadd.f32 0.0, %v6655
      %v6657 = vpop.f32.mrf.mxu0
      %6658 = vmatprep.mubr.f32.mxu0 0.0
      %6659 = vmatmul.mubr.f32.gmra.mxu0 %v6485
      %v6660 = vpop.f32.mrf.mxu0
      %v6661 = vadd.f32 0.0, %v6660
      %v6662 = vpop.f32.mrf.mxu0
      %6663 = vmatprep.mubr.f32.mxu0 0.0
      %6664 = vmatmul.mubr.f32.gmra.mxu0 %v6488
      %v6665 = vpop.f32.mrf.mxu0
      %v6666 = vadd.f32 0.0, %v6665
      %v6667 = vpop.f32.mrf.mxu0
      %6668 = vmatprep.mubr.f32.mxu0 0.0
      %6669 = vmatmul.mubr.f32.gmra.mxu0 %v6491
      %v6670 = vpop.f32.mrf.mxu0
      %v6671 = vadd.f32 0.0, %v6670
      %v6672 = vpop.f32.mrf.mxu0
      %6673 = vmatprep.mubr.f32.mxu0 0.0
      %6674 = vmatmul.mubr.f32.gmra.mxu0 %v6494
      %v6675 = vpop.f32.mrf.mxu0
      %v6676 = vadd.f32 0.0, %v6675
      %v6677 = vpop.f32.mrf.mxu0
      %6678 = vmatprep.mubr.f32.mxu0 0.0
      %6679 = vmatmul.mubr.f32.gmra.mxu0 %v6497
      %v6680 = vpop.f32.mrf.mxu0
      %v6681 = vadd.f32 0.0, %v6680
      %v6682 = vpop.f32.mrf.mxu0
      %6683 = vdwg.mxu0
      %v6685 = vsel %vm678, %v6379, 0
      %v6688 = vsel %vm678, %v6380, 0
      %v6691 = vsel %vm678, %v6381, 0
      %v6694 = vsel %vm678, %v6382, 0
      %v6697 = vsel %vm678, %v6383, 0
      %v6700 = vsel %vm678, %v6384, 0
      %v6703 = vsel %vm678, %v6385, 0
      %v6706 = vsel %vm678, %v6386, 0
      %v6709 = vsel %vm678, %v6387, 0
      %v6712 = vsel %vm678, %v6388, 0
      %v6715 = vsel %vm678, %v6389, 0
      %v6718 = vsel %vm678, %v6390, 0
      %v6721 = vsel %vm678, %v6391, 0
      %v6724 = vsel %vm678, %v6392, 0
      %v6727 = vsel %vm678, %v6393, 0
      %v6730 = vsel %vm678, %v6394, 0
      %v6733 = vsel %vm678, %v6395, 0
      %v6736 = vsel %vm678, %v6396, 0
      %v6739 = vsel %vm678, %v6397, 0
      %v6742 = vsel %vm678, %v6398, 0
      %v6745 = vsel %vm678, %v6399, 0
      %v6748 = vsel %vm678, %v6400, 0
      %v6751 = vsel %vm678, %v6401, 0
      %v6754 = vsel %vm678, %v6402, 0
      %6756 = vmatprep.subr.mxu0 0.0
      %6757 = vmatpush1.msra.mxu0 0.0
      %6758 = vmatprep.subr.mxu0 0.0
      %6759 = vmatpush1.msra.mxu0 0.0
      %6760 = vmatprep.subr.mxu0 0.0
      %6761 = vmatpush1.msra.mxu0 0.0
      %6762 = vmatprep.subr.mxu0 0.0
      %6763 = vmatpush1.msra.mxu0 0.0
      %6764 = vmatprep.subr.mxu0 0.0
      %6765 = vmatpush1.msra.mxu0 0.0
      %6766 = vmatprep.subr.mxu0 0.0
      %6767 = vmatpush1.msra.mxu0 0.0
      %6768 = vmatprep.subr.mxu0 0.0
      %6769 = vmatpush1.msra.mxu0 0.0
      %6770 = vmatprep.subr.mxu0 0.0
      %6771 = vmatpush1.msra.mxu0 0.0
      %6772 = vmatprep.subr.mxu0 0.0
      %6773 = vmatpush1.msra.mxu0 0.0
      %6774 = vmatprep.subr.mxu0 0.0
      %6775 = vmatpush1.msra.mxu0 0.0
      %6776 = vmatprep.subr.mxu0 0.0
      %6777 = vmatpush1.msra.mxu0 0.0
      %6778 = vmatprep.subr.mxu0 0.0
      %6779 = vmatpush1.msra.mxu0 0.0
      %6780 = vmatprep.subr.mxu0 0.0
      %6781 = vmatpush1.msra.mxu0 0.0
      %6782 = vmatprep.subr.mxu0 0.0
      %6783 = vmatpush1.msra.mxu0 0.0
      %6784 = vmatprep.subr.mxu0 0.0
      %6785 = vmatpush1.msra.mxu0 0.0
      %6786 = vmatprep.subr.mxu0 0.0
      %6787 = vmatpush1.msra.mxu0 %v317
      %6788 = vmatprep.subr.mxu0 0.0
      %6789 = vmatpush2.msra.mxu0 0.0
      %6790 = vmatprep.subr.mxu0 0.0
      %6791 = vmatpush2.msra.mxu0 0.0
      %6792 = vmatprep.subr.mxu0 0.0
      %6793 = vmatpush2.msra.mxu0 0.0
      %6794 = vmatprep.subr.mxu0 0.0
      %6795 = vmatpush2.msra.mxu0 0.0
      %6796 = vmatprep.subr.mxu0 0.0
      %6797 = vmatpush2.msra.mxu0 0.0
      %6798 = vmatprep.subr.mxu0 0.0
      %6799 = vmatpush2.msra.mxu0 0.0
      %6800 = vmatprep.subr.mxu0 0.0
      %6801 = vmatpush2.msra.mxu0 0.0
      %6802 = vmatprep.subr.mxu0 0.0
      %6803 = vmatpush2.msra.mxu0 0.0
      %6804 = vmatprep.subr.mxu0 0.0
      %6805 = vmatpush2.msra.mxu0 0.0
      %6806 = vmatprep.subr.mxu0 0.0
      %6807 = vmatpush2.msra.mxu0 0.0
      %6808 = vmatprep.subr.mxu0 0.0
      %6809 = vmatpush2.msra.mxu0 0.0
      %6810 = vmatprep.subr.mxu0 0.0
      %6811 = vmatpush2.msra.mxu0 0.0
      %6812 = vmatprep.subr.mxu0 0.0
      %6813 = vmatpush2.msra.mxu0 0.0
      %6814 = vmatprep.subr.mxu0 0.0
      %6815 = vmatpush2.msra.mxu0 0.0
      %6816 = vmatprep.subr.mxu0 0.0
      %6817 = vmatpush2.msra.mxu0 0.0
      %6818 = vmatprep.subr.mxu0 0.0
      %6819 = vmatpush2.msra.mxu0 0.0
      %6820 = vmatprep.mubr.f32.mxu0 0.0
      %6821 = vmatmul.mubr.f32.gmra.mxu0 %v6685
      %v6822 = vpop.f32.mrf.mxu0
      %v6823 = vadd.f32 %v6566, %v6822
      %v6824 = vpop.f32.mrf.mxu0
      %6825 = vmatprep.mubr.f32.mxu0 0.0
      %6826 = vmatmul.mubr.f32.gmra.mxu0 %v6688
      %v6827 = vpop.f32.mrf.mxu0
      %v6828 = vadd.f32 %v6571, %v6827
      %v6829 = vpop.f32.mrf.mxu0
      %6830 = vmatprep.mubr.f32.mxu0 0.0
      %6831 = vmatmul.mubr.f32.gmra.mxu0 %v6691
      %v6832 = vpop.f32.mrf.mxu0
      %v6833 = vadd.f32 %v6576, %v6832
      %v6834 = vpop.f32.mrf.mxu0
      %6835 = vmatprep.mubr.f32.mxu0 0.0
      %6836 = vmatmul.mubr.f32.gmra.mxu0 %v6694
      %v6837 = vpop.f32.mrf.mxu0
      %v6838 = vadd.f32 %v6581, %v6837
      %v6839 = vpop.f32.mrf.mxu0
      %6840 = vmatprep.mubr.f32.mxu0 0.0
      %6841 = vmatmul.mubr.f32.gmra.mxu0 %v6697
      %v6842 = vpop.f32.mrf.mxu0
      %v6843 = vadd.f32 %v6586, %v6842
      %v6844 = vpop.f32.mrf.mxu0
      %6845 = vmatprep.mubr.f32.mxu0 0.0
      %6846 = vmatmul.mubr.f32.gmra.mxu0 %v6700
      %v6847 = vpop.f32.mrf.mxu0
      %v6848 = vadd.f32 %v6591, %v6847
      %v6849 = vpop.f32.mrf.mxu0
      %6850 = vmatprep.mubr.f32.mxu0 0.0
      %6851 = vmatmul.mubr.f32.gmra.mxu0 %v6703
      %v6852 = vpop.f32.mrf.mxu0
      %v6853 = vadd.f32 %v6596, %v6852
      %v6854 = vpop.f32.mrf.mxu0
      %6855 = vmatprep.mubr.f32.mxu0 0.0
      %6856 = vmatmul.mubr.f32.gmra.mxu0 %v6706
      %v6857 = vpop.f32.mrf.mxu0
      %v6858 = vadd.f32 %v6601, %v6857
      %v6859 = vpop.f32.mrf.mxu0
      %6860 = vmatprep.mubr.f32.mxu0 0.0
      %6861 = vmatmul.mubr.f32.gmra.mxu0 %v6709
      %v6862 = vpop.f32.mrf.mxu0
      %v6863 = vadd.f32 %v6606, %v6862
      %v6864 = vpop.f32.mrf.mxu0
      %6865 = vmatprep.mubr.f32.mxu0 0.0
      %6866 = vmatmul.mubr.f32.gmra.mxu0 %v6712
      %v6867 = vpop.f32.mrf.mxu0
      %v6868 = vadd.f32 %v6611, %v6867
      %v6869 = vpop.f32.mrf.mxu0
      %6870 = vmatprep.mubr.f32.mxu0 0.0
      %6871 = vmatmul.mubr.f32.gmra.mxu0 %v6715
      %v6872 = vpop.f32.mrf.mxu0
      %v6873 = vadd.f32 %v6616, %v6872
      %v6874 = vpop.f32.mrf.mxu0
      %6875 = vmatprep.mubr.f32.mxu0 0.0
      %6876 = vmatmul.mubr.f32.gmra.mxu0 %v6718
      %v6877 = vpop.f32.mrf.mxu0
      %v6878 = vadd.f32 %v6621, %v6877
      %v6879 = vpop.f32.mrf.mxu0
      %6880 = vmatprep.mubr.f32.mxu0 0.0
      %6881 = vmatmul.mubr.f32.gmra.mxu0 %v6721
      %v6882 = vpop.f32.mrf.mxu0
      %v6883 = vadd.f32 %v6626, %v6882
      %v6884 = vpop.f32.mrf.mxu0
      %6885 = vmatprep.mubr.f32.mxu0 0.0
      %6886 = vmatmul.mubr.f32.gmra.mxu0 %v6724
      %v6887 = vpop.f32.mrf.mxu0
      %v6888 = vadd.f32 %v6631, %v6887
      %v6889 = vpop.f32.mrf.mxu0
      %6890 = vmatprep.mubr.f32.mxu0 0.0
      %6891 = vmatmul.mubr.f32.gmra.mxu0 %v6727
      %v6892 = vpop.f32.mrf.mxu0
      %v6893 = vadd.f32 %v6636, %v6892
      %v6894 = vpop.f32.mrf.mxu0
      %6895 = vmatprep.mubr.f32.mxu0 0.0
      %6896 = vmatmul.mubr.f32.gmra.mxu0 %v6730
      %v6897 = vpop.f32.mrf.mxu0
      %v6898 = vadd.f32 %v6641, %v6897
      %v6899 = vpop.f32.mrf.mxu0
      %6900 = vmatprep.mubr.f32.mxu0 0.0
      %6901 = vmatmul.mubr.f32.gmra.mxu0 %v6733
      %v6902 = vpop.f32.mrf.mxu0
      %v6903 = vadd.f32 %v6646, %v6902
      %v6904 = vpop.f32.mrf.mxu0
      %6905 = vmatprep.mubr.f32.mxu0 0.0
      %6906 = vmatmul.mubr.f32.gmra.mxu0 %v6736
      %v6907 = vpop.f32.mrf.mxu0
      %v6908 = vadd.f32 %v6651, %v6907
      %v6909 = vpop.f32.mrf.mxu0
      %6910 = vmatprep.mubr.f32.mxu0 0.0
      %6911 = vmatmul.mubr.f32.gmra.mxu0 %v6739
      %v6912 = vpop.f32.mrf.mxu0
      %v6913 = vadd.f32 %v6656, %v6912
      %v6914 = vpop.f32.mrf.mxu0
      %6915 = vmatprep.mubr.f32.mxu0 0.0
      %6916 = vmatmul.mubr.f32.gmra.mxu0 %v6742
      %v6917 = vpop.f32.mrf.mxu0
      %v6918 = vadd.f32 %v6661, %v6917
      %v6919 = vpop.f32.mrf.mxu0
      %6920 = vmatprep.mubr.f32.mxu0 0.0
      %6921 = vmatmul.mubr.f32.gmra.mxu0 %v6745
      %v6922 = vpop.f32.mrf.mxu0
      %v6923 = vadd.f32 %v6666, %v6922
      %v6924 = vpop.f32.mrf.mxu0
      %6925 = vmatprep.mubr.f32.mxu0 0.0
      %6926 = vmatmul.mubr.f32.gmra.mxu0 %v6748
      %v6927 = vpop.f32.mrf.mxu0
      %v6928 = vadd.f32 %v6671, %v6927
      %v6929 = vpop.f32.mrf.mxu0
      %6930 = vmatprep.mubr.f32.mxu0 0.0
      %6931 = vmatmul.mubr.f32.gmra.mxu0 %v6751
      %v6932 = vpop.f32.mrf.mxu0
      %v6933 = vadd.f32 %v6676, %v6932
      %v6934 = vpop.f32.mrf.mxu0
      %6935 = vmatprep.mubr.f32.mxu0 0.0
      %6936 = vmatmul.mubr.f32.gmra.mxu0 %v6754
      %v6937 = vpop.f32.mrf.mxu0
      %v6938 = vadd.f32 %v6681, %v6937
      %v6939 = vpop.f32.mrf.mxu0
      %6940 = vdwg.mxu0
      %v6941 = vld [vmem:[#allocation2 + $0x2] sm:$0xff]
      %v6942 = vld [vmem:[#allocation2 + $0xa] sm:$0xff]
      %v6943 = vld [vmem:[#allocation2 + $0x12] sm:$0xff]
      %v6944 = vld [vmem:[#allocation2 + $0x1a] sm:$0xff]
      %v6945 = vld [vmem:[#allocation2 + $0x22] sm:$0xff]
      %v6946 = vld [vmem:[#allocation2 + $0x2a] sm:$0xff]
      %v6947 = vld [vmem:[#allocation2 + $0x32] sm:$0xff]
      %v6948 = vld [vmem:[#allocation2 + $0x3a] sm:$0xff]
      %v6949 = vld [vmem:[#allocation2 + $0x42] sm:$0xff]
      %v6950 = vld [vmem:[#allocation2 + $0x4a] sm:$0xff]
      %v6951 = vld [vmem:[#allocation2 + $0x52] sm:$0xff]
      %v6952 = vld [vmem:[#allocation2 + $0x5a] sm:$0xff]
      %v6953 = vld [vmem:[#allocation2 + $0x62] sm:$0xff]
      %v6954 = vld [vmem:[#allocation2 + $0x6a] sm:$0xff]
      %v6955 = vld [vmem:[#allocation2 + $0x72] sm:$0xff]
      %v6956 = vld [vmem:[#allocation2 + $0x7a] sm:$0xff]
      %v6957 = vld [vmem:[#allocation2 + $0x82] sm:$0xff]
      %v6958 = vld [vmem:[#allocation2 + $0x8a] sm:$0xff]
      %v6959 = vld [vmem:[#allocation2 + $0x92] sm:$0xff]
      %v6960 = vld [vmem:[#allocation2 + $0x9a] sm:$0xff]
      %v6961 = vld [vmem:[#allocation2 + $0xa2] sm:$0xff]
      %v6962 = vld [vmem:[#allocation2 + $0xaa] sm:$0xff]
      %v6963 = vld [vmem:[#allocation2 + $0xb2] sm:$0xff]
      %v6964 = vld [vmem:[#allocation2 + $0xba] sm:$0xf]
      %v6966 = vsel %vm678, %v6941, 0
      %v6969 = vsel %vm678, %v6942, 0
      %v6972 = vsel %vm678, %v6943, 0
      %v6975 = vsel %vm678, %v6944, 0
      %v6978 = vsel %vm678, %v6945, 0
      %v6981 = vsel %vm678, %v6946, 0
      %v6984 = vsel %vm678, %v6947, 0
      %v6987 = vsel %vm678, %v6948, 0
      %v6990 = vsel %vm678, %v6949, 0
      %v6993 = vsel %vm678, %v6950, 0
      %v6996 = vsel %vm678, %v6951, 0
      %v6999 = vsel %vm678, %v6952, 0
      %v7002 = vsel %vm678, %v6953, 0
      %v7005 = vsel %vm678, %v6954, 0
      %v7008 = vsel %vm678, %v6955, 0
      %v7011 = vsel %vm678, %v6956, 0
      %v7014 = vsel %vm678, %v6957, 0
      %v7017 = vsel %vm678, %v6958, 0
      %v7020 = vsel %vm678, %v6959, 0
      %v7023 = vsel %vm678, %v6960, 0
      %v7026 = vsel %vm678, %v6961, 0
      %v7029 = vsel %vm678, %v6962, 0
      %v7032 = vsel %vm678, %v6963, 0
      %v7035 = vsel %vm678, %v6964, 0
      %7037 = vmatprep.subr.mxu0 0.0
      %7038 = vmatpush1.msra.mxu0 0.0
      %7039 = vmatprep.subr.mxu0 0.0
      %7040 = vmatpush1.msra.mxu0 0.0
      %7041 = vmatprep.subr.mxu0 0.0
      %7042 = vmatpush1.msra.mxu0 0.0
      %7043 = vmatprep.subr.mxu0 0.0
      %7044 = vmatpush1.msra.mxu0 0.0
      %7045 = vmatprep.subr.mxu0 0.0
      %7046 = vmatpush1.msra.mxu0 0.0
      %7047 = vmatprep.subr.mxu0 0.0
      %7048 = vmatpush1.msra.mxu0 0.0
      %7049 = vmatprep.subr.mxu0 0.0
      %7050 = vmatpush1.msra.mxu0 0.0
      %7051 = vmatprep.subr.mxu0 0.0
      %7052 = vmatpush1.msra.mxu0 0.0
      %7053 = vmatprep.subr.mxu0 0.0
      %7054 = vmatpush1.msra.mxu0 0.0
      %7055 = vmatprep.subr.mxu0 0.0
      %7056 = vmatpush1.msra.mxu0 0.0
      %7057 = vmatprep.subr.mxu0 0.0
      %7058 = vmatpush1.msra.mxu0 0.0
      %7059 = vmatprep.subr.mxu0 0.0
      %7060 = vmatpush1.msra.mxu0 0.0
      %7061 = vmatprep.subr.mxu0 0.0
      %7062 = vmatpush1.msra.mxu0 0.0
      %7063 = vmatprep.subr.mxu0 0.0
      %7064 = vmatpush1.msra.mxu0 0.0
      %7065 = vmatprep.subr.mxu0 0.0
      %7066 = vmatpush1.msra.mxu0 0.0
      %7067 = vmatprep.subr.mxu0 0.0
      %7068 = vmatpush1.msra.mxu0 %v319
      %7069 = vmatprep.subr.mxu0 0.0
      %7070 = vmatpush2.msra.mxu0 0.0
      %7071 = vmatprep.subr.mxu0 0.0
      %7072 = vmatpush2.msra.mxu0 0.0
      %7073 = vmatprep.subr.mxu0 0.0
      %7074 = vmatpush2.msra.mxu0 0.0
      %7075 = vmatprep.subr.mxu0 0.0
      %7076 = vmatpush2.msra.mxu0 0.0
      %7077 = vmatprep.subr.mxu0 0.0
      %7078 = vmatpush2.msra.mxu0 0.0
      %7079 = vmatprep.subr.mxu0 0.0
      %7080 = vmatpush2.msra.mxu0 0.0
      %7081 = vmatprep.subr.mxu0 0.0
      %7082 = vmatpush2.msra.mxu0 0.0
      %7083 = vmatprep.subr.mxu0 0.0
      %7084 = vmatpush2.msra.mxu0 0.0
      %7085 = vmatprep.subr.mxu0 0.0
      %7086 = vmatpush2.msra.mxu0 0.0
      %7087 = vmatprep.subr.mxu0 0.0
      %7088 = vmatpush2.msra.mxu0 0.0
      %7089 = vmatprep.subr.mxu0 0.0
      %7090 = vmatpush2.msra.mxu0 0.0
      %7091 = vmatprep.subr.mxu0 0.0
      %7092 = vmatpush2.msra.mxu0 0.0
      %7093 = vmatprep.subr.mxu0 0.0
      %7094 = vmatpush2.msra.mxu0 0.0
      %7095 = vmatprep.subr.mxu0 0.0
      %7096 = vmatpush2.msra.mxu0 0.0
      %7097 = vmatprep.subr.mxu0 0.0
      %7098 = vmatpush2.msra.mxu0 0.0
      %7099 = vmatprep.subr.mxu0 0.0
      %7100 = vmatpush2.msra.mxu0 0.0
      %7101 = vmatprep.mubr.f32.mxu0 0.0
      %7102 = vmatmul.mubr.f32.gmra.mxu0 %v6966
      %v7103 = vpop.f32.mrf.mxu0
      %v7104 = vadd.f32 0.0, %v7103
      %v7105 = vpop.f32.mrf.mxu0
      %7106 = vmatprep.mubr.f32.mxu0 0.0
      %7107 = vmatmul.mubr.f32.gmra.mxu0 %v6969
      %v7108 = vpop.f32.mrf.mxu0
      %v7109 = vadd.f32 0.0, %v7108
      %v7110 = vpop.f32.mrf.mxu0
      %7111 = vmatprep.mubr.f32.mxu0 0.0
      %7112 = vmatmul.mubr.f32.gmra.mxu0 %v6972
      %v7113 = vpop.f32.mrf.mxu0
      %v7114 = vadd.f32 0.0, %v7113
      %v7115 = vpop.f32.mrf.mxu0
      %7116 = vmatprep.mubr.f32.mxu0 0.0
      %7117 = vmatmul.mubr.f32.gmra.mxu0 %v6975
      %v7118 = vpop.f32.mrf.mxu0
      %v7119 = vadd.f32 0.0, %v7118
      %v7120 = vpop.f32.mrf.mxu0
      %7121 = vmatprep.mubr.f32.mxu0 0.0
      %7122 = vmatmul.mubr.f32.gmra.mxu0 %v6978
      %v7123 = vpop.f32.mrf.mxu0
      %v7124 = vadd.f32 0.0, %v7123
      %v7125 = vpop.f32.mrf.mxu0
      %7126 = vmatprep.mubr.f32.mxu0 0.0
      %7127 = vmatmul.mubr.f32.gmra.mxu0 %v6981
      %v7128 = vpop.f32.mrf.mxu0
      %v7129 = vadd.f32 0.0, %v7128
      %v7130 = vpop.f32.mrf.mxu0
      %7131 = vmatprep.mubr.f32.mxu0 0.0
      %7132 = vmatmul.mubr.f32.gmra.mxu0 %v6984
      %v7133 = vpop.f32.mrf.mxu0
      %v7134 = vadd.f32 0.0, %v7133
      %v7135 = vpop.f32.mrf.mxu0
      %7136 = vmatprep.mubr.f32.mxu0 0.0
      %7137 = vmatmul.mubr.f32.gmra.mxu0 %v6987
      %v7138 = vpop.f32.mrf.mxu0
      %v7139 = vadd.f32 0.0, %v7138
      %v7140 = vpop.f32.mrf.mxu0
      %7141 = vmatprep.mubr.f32.mxu0 0.0
      %7142 = vmatmul.mubr.f32.gmra.mxu0 %v6990
      %v7143 = vpop.f32.mrf.mxu0
      %v7144 = vadd.f32 0.0, %v7143
      %v7145 = vpop.f32.mrf.mxu0
      %7146 = vmatprep.mubr.f32.mxu0 0.0
      %7147 = vmatmul.mubr.f32.gmra.mxu0 %v6993
      %v7148 = vpop.f32.mrf.mxu0
      %v7149 = vadd.f32 0.0, %v7148
      %v7150 = vpop.f32.mrf.mxu0
      %7151 = vmatprep.mubr.f32.mxu0 0.0
      %7152 = vmatmul.mubr.f32.gmra.mxu0 %v6996
      %v7153 = vpop.f32.mrf.mxu0
      %v7154 = vadd.f32 0.0, %v7153
      %v7155 = vpop.f32.mrf.mxu0
      %7156 = vmatprep.mubr.f32.mxu0 0.0
      %7157 = vmatmul.mubr.f32.gmra.mxu0 %v6999
      %v7158 = vpop.f32.mrf.mxu0
      %v7159 = vadd.f32 0.0, %v7158
      %v7160 = vpop.f32.mrf.mxu0
      %7161 = vmatprep.mubr.f32.mxu0 0.0
      %7162 = vmatmul.mubr.f32.gmra.mxu0 %v7002
      %v7163 = vpop.f32.mrf.mxu0
      %v7164 = vadd.f32 0.0, %v7163
      %v7165 = vpop.f32.mrf.mxu0
      %7166 = vmatprep.mubr.f32.mxu0 0.0
      %7167 = vmatmul.mubr.f32.gmra.mxu0 %v7005
      %v7168 = vpop.f32.mrf.mxu0
      %v7169 = vadd.f32 0.0, %v7168
      %v7170 = vpop.f32.mrf.mxu0
      %7171 = vmatprep.mubr.f32.mxu0 0.0
      %7172 = vmatmul.mubr.f32.gmra.mxu0 %v7008
      %v7173 = vpop.f32.mrf.mxu0
      %v7174 = vadd.f32 0.0, %v7173
      %v7175 = vpop.f32.mrf.mxu0
      %7176 = vmatprep.mubr.f32.mxu0 0.0
      %7177 = vmatmul.mubr.f32.gmra.mxu0 %v7011
      %v7178 = vpop.f32.mrf.mxu0
      %v7179 = vadd.f32 0.0, %v7178
      %v7180 = vpop.f32.mrf.mxu0
      %7181 = vmatprep.mubr.f32.mxu0 0.0
      %7182 = vmatmul.mubr.f32.gmra.mxu0 %v7014
      %v7183 = vpop.f32.mrf.mxu0
      %v7184 = vadd.f32 0.0, %v7183
      %v7185 = vpop.f32.mrf.mxu0
      %7186 = vmatprep.mubr.f32.mxu0 0.0
      %7187 = vmatmul.mubr.f32.gmra.mxu0 %v7017
      %v7188 = vpop.f32.mrf.mxu0
      %v7189 = vadd.f32 0.0, %v7188
      %v7190 = vpop.f32.mrf.mxu0
      %7191 = vmatprep.mubr.f32.mxu0 0.0
      %7192 = vmatmul.mubr.f32.gmra.mxu0 %v7020
      %v7193 = vpop.f32.mrf.mxu0
      %v7194 = vadd.f32 0.0, %v7193
      %v7195 = vpop.f32.mrf.mxu0
      %7196 = vmatprep.mubr.f32.mxu0 0.0
      %7197 = vmatmul.mubr.f32.gmra.mxu0 %v7023
      %v7198 = vpop.f32.mrf.mxu0
      %v7199 = vadd.f32 0.0, %v7198
      %v7200 = vpop.f32.mrf.mxu0
      %7201 = vmatprep.mubr.f32.mxu0 0.0
      %7202 = vmatmul.mubr.f32.gmra.mxu0 %v7026
      %v7203 = vpop.f32.mrf.mxu0
      %v7204 = vadd.f32 0.0, %v7203
      %v7205 = vpop.f32.mrf.mxu0
      %7206 = vmatprep.mubr.f32.mxu0 0.0
      %7207 = vmatmul.mubr.f32.gmra.mxu0 %v7029
      %v7208 = vpop.f32.mrf.mxu0
      %v7209 = vadd.f32 0.0, %v7208
      %v7210 = vpop.f32.mrf.mxu0
      %7211 = vmatprep.mubr.f32.mxu0 0.0
      %7212 = vmatmul.mubr.f32.gmra.mxu0 %v7032
      %v7213 = vpop.f32.mrf.mxu0
      %v7214 = vadd.f32 0.0, %v7213
      %v7215 = vpop.f32.mrf.mxu0
      %7216 = vmatprep.mubr.f32.mxu0 0.0
      %7217 = vmatmul.mubr.f32.gmra.mxu0 %v7035
      %v7218 = vpop.f32.mrf.mxu0
      %v7219 = vadd.f32 0.0, %v7218
      %v7220 = vpop.f32.mrf.mxu0
      %7221 = vdwg.mxu0
      %v7222 = vadd.f32 %v6823, %v7104
      %v7223 = vadd.f32 %v6828, %v7109
      %v7224 = vadd.f32 %v6833, %v7114
      %v7225 = vadd.f32 %v6838, %v7119
      %v7226 = vadd.f32 %v6843, %v7124
      %v7227 = vadd.f32 %v6848, %v7129
      %v7228 = vadd.f32 %v6853, %v7134
      %v7229 = vadd.f32 %v6858, %v7139
      %v7230 = vadd.f32 %v6863, %v7144
      %v7231 = vadd.f32 %v6868, %v7149
      %v7232 = vadd.f32 %v6873, %v7154
      %v7233 = vadd.f32 %v6878, %v7159
      %v7234 = vadd.f32 %v6883, %v7164
      %v7235 = vadd.f32 %v6888, %v7169
      %v7236 = vadd.f32 %v6893, %v7174
      %v7237 = vadd.f32 %v6898, %v7179
      %v7238 = vadd.f32 %v6903, %v7184
      %v7239 = vadd.f32 %v6908, %v7189
      %v7240 = vadd.f32 %v6913, %v7194
      %v7241 = vadd.f32 %v6918, %v7199
      %v7242 = vadd.f32 %v6923, %v7204
      %v7243 = vadd.f32 %v6928, %v7209
      %v7244 = vadd.f32 %v6933, %v7214
      %v7245 = vadd.f32 %v6938, %v7219
      %v7246 = vld [vmem:[#allocation2 + $0x10] sm:$0xff]
      %v7247 = vld [vmem:[#allocation2 + $0x18] sm:$0xff]
      %v7248 = vld [vmem:[#allocation2 + $0x20] sm:$0xff]
      %v7249 = vld [vmem:[#allocation2 + $0x28] sm:$0xff]
      %v7250 = vld [vmem:[#allocation2 + $0x30] sm:$0xff]
      %v7251 = vld [vmem:[#allocation2 + $0x38] sm:$0xff]
      %v7252 = vld [vmem:[#allocation2 + $0x40] sm:$0xff]
      %v7253 = vld [vmem:[#allocation2 + $0x48] sm:$0xff]
      %v7254 = vld [vmem:[#allocation2 + $0x50] sm:$0xff]
      %v7255 = vld [vmem:[#allocation2 + $0x58] sm:$0xff]
      %v7256 = vld [vmem:[#allocation2 + $0x60] sm:$0xff]
      %v7257 = vld [vmem:[#allocation2 + $0x68] sm:$0xff]
      %v7258 = vld [vmem:[#allocation2 + $0x70] sm:$0xff]
      %v7259 = vld [vmem:[#allocation2 + $0x78] sm:$0xff]
      %v7260 = vld [vmem:[#allocation2 + $0x80] sm:$0xff]
      %v7261 = vld [vmem:[#allocation2 + $0x88] sm:$0xff]
      %v7262 = vld [vmem:[#allocation2 + $0x90] sm:$0xff]
      %v7263 = vld [vmem:[#allocation2 + $0x98] sm:$0xff]
      %v7264 = vld [vmem:[#allocation2 + $0xa0] sm:$0xff]
      %v7265 = vld [vmem:[#allocation2 + $0xa8] sm:$0xff]
      %v7266 = vld [vmem:[#allocation2 + $0xb0] sm:$0xff]
      %v7267 = vld [vmem:[#allocation2 + $0xb8] sm:$0xff]
      %v7268 = vld [vmem:[#allocation2 + $0xc0] sm:$0xff]
      %v7269 = vld [vmem:[#allocation2 + $0xc8] sm:$0xf]
      %v7271 = vsel %vm678, %v7246, 0
      %v7274 = vsel %vm678, %v7247, 0
      %v7277 = vsel %vm678, %v7248, 0
      %v7280 = vsel %vm678, %v7249, 0
      %v7283 = vsel %vm678, %v7250, 0
      %v7286 = vsel %vm678, %v7251, 0
      %v7289 = vsel %vm678, %v7252, 0
      %v7292 = vsel %vm678, %v7253, 0
      %v7295 = vsel %vm678, %v7254, 0
      %v7298 = vsel %vm678, %v7255, 0
      %v7301 = vsel %vm678, %v7256, 0
      %v7304 = vsel %vm678, %v7257, 0
      %v7307 = vsel %vm678, %v7258, 0
      %v7310 = vsel %vm678, %v7259, 0
      %v7313 = vsel %vm678, %v7260, 0
      %v7316 = vsel %vm678, %v7261, 0
      %v7319 = vsel %vm678, %v7262, 0
      %v7322 = vsel %vm678, %v7263, 0
      %v7325 = vsel %vm678, %v7264, 0
      %v7328 = vsel %vm678, %v7265, 0
      %v7331 = vsel %vm678, %v7266, 0
      %v7334 = vsel %vm678, %v7267, 0
      %v7337 = vsel %vm678, %v7268, 0
      %v7340 = vsel %vm678, %v7269, 0
      %7342 = vmatprep.subr.mxu0 0.0
      %7343 = vmatpush1.msra.mxu0 0.0
      %7344 = vmatprep.subr.mxu0 0.0
      %7345 = vmatpush1.msra.mxu0 0.0
      %7346 = vmatprep.subr.mxu0 0.0
      %7347 = vmatpush1.msra.mxu0 0.0
      %7348 = vmatprep.subr.mxu0 0.0
      %7349 = vmatpush1.msra.mxu0 0.0
      %7350 = vmatprep.subr.mxu0 0.0
      %7351 = vmatpush1.msra.mxu0 0.0
      %7352 = vmatprep.subr.mxu0 0.0
      %7353 = vmatpush1.msra.mxu0 0.0
      %7354 = vmatprep.subr.mxu0 0.0
      %7355 = vmatpush1.msra.mxu0 0.0
      %7356 = vmatprep.subr.mxu0 0.0
      %7357 = vmatpush1.msra.mxu0 0.0
      %7358 = vmatprep.subr.mxu0 0.0
      %7359 = vmatpush1.msra.mxu0 0.0
      %7360 = vmatprep.subr.mxu0 0.0
      %7361 = vmatpush1.msra.mxu0 0.0
      %7362 = vmatprep.subr.mxu0 0.0
      %7363 = vmatpush1.msra.mxu0 0.0
      %7364 = vmatprep.subr.mxu0 0.0
      %7365 = vmatpush1.msra.mxu0 0.0
      %7366 = vmatprep.subr.mxu0 0.0
      %7367 = vmatpush1.msra.mxu0 0.0
      %7368 = vmatprep.subr.mxu0 0.0
      %7369 = vmatpush1.msra.mxu0 0.0
      %7370 = vmatprep.subr.mxu0 0.0
      %7371 = vmatpush1.msra.mxu0 0.0
      %7372 = vmatprep.subr.mxu0 0.0
      %7373 = vmatpush1.msra.mxu0 %v320
      %7374 = vmatprep.subr.mxu0 0.0
      %7375 = vmatpush2.msra.mxu0 0.0
      %7376 = vmatprep.subr.mxu0 0.0
      %7377 = vmatpush2.msra.mxu0 0.0
      %7378 = vmatprep.subr.mxu0 0.0
      %7379 = vmatpush2.msra.mxu0 0.0
      %7380 = vmatprep.subr.mxu0 0.0
      %7381 = vmatpush2.msra.mxu0 0.0
      %7382 = vmatprep.subr.mxu0 0.0
      %7383 = vmatpush2.msra.mxu0 0.0
      %7384 = vmatprep.subr.mxu0 0.0
      %7385 = vmatpush2.msra.mxu0 0.0
      %7386 = vmatprep.subr.mxu0 0.0
      %7387 = vmatpush2.msra.mxu0 0.0
      %7388 = vmatprep.subr.mxu0 0.0
      %7389 = vmatpush2.msra.mxu0 0.0
      %7390 = vmatprep.subr.mxu0 0.0
      %7391 = vmatpush2.msra.mxu0 0.0
      %7392 = vmatprep.subr.mxu0 0.0
      %7393 = vmatpush2.msra.mxu0 0.0
      %7394 = vmatprep.subr.mxu0 0.0
      %7395 = vmatpush2.msra.mxu0 0.0
      %7396 = vmatprep.subr.mxu0 0.0
      %7397 = vmatpush2.msra.mxu0 0.0
      %7398 = vmatprep.subr.mxu0 0.0
      %7399 = vmatpush2.msra.mxu0 0.0
      %7400 = vmatprep.subr.mxu0 0.0
      %7401 = vmatpush2.msra.mxu0 0.0
      %7402 = vmatprep.subr.mxu0 0.0
      %7403 = vmatpush2.msra.mxu0 0.0
      %7404 = vmatprep.subr.mxu0 0.0
      %7405 = vmatpush2.msra.mxu0 0.0
      %7406 = vmatprep.mubr.f32.mxu0 0.0
      %7407 = vmatmul.mubr.f32.gmra.mxu0 %v7271
      %v7408 = vpop.f32.mrf.mxu0
      %v7409 = vadd.f32 0.0, %v7408
      %v7410 = vpop.f32.mrf.mxu0
      %7411 = vmatprep.mubr.f32.mxu0 0.0
      %7412 = vmatmul.mubr.f32.gmra.mxu0 %v7274
      %v7413 = vpop.f32.mrf.mxu0
      %v7414 = vadd.f32 0.0, %v7413
      %v7415 = vpop.f32.mrf.mxu0
      %7416 = vmatprep.mubr.f32.mxu0 0.0
      %7417 = vmatmul.mubr.f32.gmra.mxu0 %v7277
      %v7418 = vpop.f32.mrf.mxu0
      %v7419 = vadd.f32 0.0, %v7418
      %v7420 = vpop.f32.mrf.mxu0
      %7421 = vmatprep.mubr.f32.mxu0 0.0
      %7422 = vmatmul.mubr.f32.gmra.mxu0 %v7280
      %v7423 = vpop.f32.mrf.mxu0
      %v7424 = vadd.f32 0.0, %v7423
      %v7425 = vpop.f32.mrf.mxu0
      %7426 = vmatprep.mubr.f32.mxu0 0.0
      %7427 = vmatmul.mubr.f32.gmra.mxu0 %v7283
      %v7428 = vpop.f32.mrf.mxu0
      %v7429 = vadd.f32 0.0, %v7428
      %v7430 = vpop.f32.mrf.mxu0
      %7431 = vmatprep.mubr.f32.mxu0 0.0
      %7432 = vmatmul.mubr.f32.gmra.mxu0 %v7286
      %v7433 = vpop.f32.mrf.mxu0
      %v7434 = vadd.f32 0.0, %v7433
      %v7435 = vpop.f32.mrf.mxu0
      %7436 = vmatprep.mubr.f32.mxu0 0.0
      %7437 = vmatmul.mubr.f32.gmra.mxu0 %v7289
      %v7438 = vpop.f32.mrf.mxu0
      %v7439 = vadd.f32 0.0, %v7438
      %v7440 = vpop.f32.mrf.mxu0
      %7441 = vmatprep.mubr.f32.mxu0 0.0
      %7442 = vmatmul.mubr.f32.gmra.mxu0 %v7292
      %v7443 = vpop.f32.mrf.mxu0
      %v7444 = vadd.f32 0.0, %v7443
      %v7445 = vpop.f32.mrf.mxu0
      %7446 = vmatprep.mubr.f32.mxu0 0.0
      %7447 = vmatmul.mubr.f32.gmra.mxu0 %v7295
      %v7448 = vpop.f32.mrf.mxu0
      %v7449 = vadd.f32 0.0, %v7448
      %v7450 = vpop.f32.mrf.mxu0
      %7451 = vmatprep.mubr.f32.mxu0 0.0
      %7452 = vmatmul.mubr.f32.gmra.mxu0 %v7298
      %v7453 = vpop.f32.mrf.mxu0
      %v7454 = vadd.f32 0.0, %v7453
      %v7455 = vpop.f32.mrf.mxu0
      %7456 = vmatprep.mubr.f32.mxu0 0.0
      %7457 = vmatmul.mubr.f32.gmra.mxu0 %v7301
      %v7458 = vpop.f32.mrf.mxu0
      %v7459 = vadd.f32 0.0, %v7458
      %v7460 = vpop.f32.mrf.mxu0
      %7461 = vmatprep.mubr.f32.mxu0 0.0
      %7462 = vmatmul.mubr.f32.gmra.mxu0 %v7304
      %v7463 = vpop.f32.mrf.mxu0
      %v7464 = vadd.f32 0.0, %v7463
      %v7465 = vpop.f32.mrf.mxu0
      %7466 = vmatprep.mubr.f32.mxu0 0.0
      %7467 = vmatmul.mubr.f32.gmra.mxu0 %v7307
      %v7468 = vpop.f32.mrf.mxu0
      %v7469 = vadd.f32 0.0, %v7468
      %v7470 = vpop.f32.mrf.mxu0
      %7471 = vmatprep.mubr.f32.mxu0 0.0
      %7472 = vmatmul.mubr.f32.gmra.mxu0 %v7310
      %v7473 = vpop.f32.mrf.mxu0
      %v7474 = vadd.f32 0.0, %v7473
      %v7475 = vpop.f32.mrf.mxu0
      %7476 = vmatprep.mubr.f32.mxu0 0.0
      %7477 = vmatmul.mubr.f32.gmra.mxu0 %v7313
      %v7478 = vpop.f32.mrf.mxu0
      %v7479 = vadd.f32 0.0, %v7478
      %v7480 = vpop.f32.mrf.mxu0
      %7481 = vmatprep.mubr.f32.mxu0 0.0
      %7482 = vmatmul.mubr.f32.gmra.mxu0 %v7316
      %v7483 = vpop.f32.mrf.mxu0
      %v7484 = vadd.f32 0.0, %v7483
      %v7485 = vpop.f32.mrf.mxu0
      %7486 = vmatprep.mubr.f32.mxu0 0.0
      %7487 = vmatmul.mubr.f32.gmra.mxu0 %v7319
      %v7488 = vpop.f32.mrf.mxu0
      %v7489 = vadd.f32 0.0, %v7488
      %v7490 = vpop.f32.mrf.mxu0
      %7491 = vmatprep.mubr.f32.mxu0 0.0
      %7492 = vmatmul.mubr.f32.gmra.mxu0 %v7322
      %v7493 = vpop.f32.mrf.mxu0
      %v7494 = vadd.f32 0.0, %v7493
      %v7495 = vpop.f32.mrf.mxu0
      %7496 = vmatprep.mubr.f32.mxu0 0.0
      %7497 = vmatmul.mubr.f32.gmra.mxu0 %v7325
      %v7498 = vpop.f32.mrf.mxu0
      %v7499 = vadd.f32 0.0, %v7498
      %v7500 = vpop.f32.mrf.mxu0
      %7501 = vmatprep.mubr.f32.mxu0 0.0
      %7502 = vmatmul.mubr.f32.gmra.mxu0 %v7328
      %v7503 = vpop.f32.mrf.mxu0
      %v7504 = vadd.f32 0.0, %v7503
      %v7505 = vpop.f32.mrf.mxu0
      %7506 = vmatprep.mubr.f32.mxu0 0.0
      %7507 = vmatmul.mubr.f32.gmra.mxu0 %v7331
      %v7508 = vpop.f32.mrf.mxu0
      %v7509 = vadd.f32 0.0, %v7508
      %v7510 = vpop.f32.mrf.mxu0
      %7511 = vmatprep.mubr.f32.mxu0 0.0
      %7512 = vmatmul.mubr.f32.gmra.mxu0 %v7334
      %v7513 = vpop.f32.mrf.mxu0
      %v7514 = vadd.f32 0.0, %v7513
      %v7515 = vpop.f32.mrf.mxu0
      %7516 = vmatprep.mubr.f32.mxu0 0.0
      %7517 = vmatmul.mubr.f32.gmra.mxu0 %v7337
      %v7518 = vpop.f32.mrf.mxu0
      %v7519 = vadd.f32 0.0, %v7518
      %v7520 = vpop.f32.mrf.mxu0
      %7521 = vmatprep.mubr.f32.mxu0 0.0
      %7522 = vmatmul.mubr.f32.gmra.mxu0 %v7340
      %v7523 = vpop.f32.mrf.mxu0
      %v7524 = vadd.f32 0.0, %v7523
      %v7525 = vpop.f32.mrf.mxu0
      %7526 = vdwg.mxu0
      %v7527 = vadd.f32 %v7222, %v7409
      %v7528 = vadd.f32 %v7223, %v7414
      %v7529 = vadd.f32 %v7224, %v7419
      %v7530 = vadd.f32 %v7225, %v7424
      %v7531 = vadd.f32 %v7226, %v7429
      %v7532 = vadd.f32 %v7227, %v7434
      %v7533 = vadd.f32 %v7228, %v7439
      %v7534 = vadd.f32 %v7229, %v7444
      %v7535 = vadd.f32 %v7230, %v7449
      %v7536 = vadd.f32 %v7231, %v7454
      %v7537 = vadd.f32 %v7232, %v7459
      %v7538 = vadd.f32 %v7233, %v7464
      %v7539 = vadd.f32 %v7234, %v7469
      %v7540 = vadd.f32 %v7235, %v7474
      %v7541 = vadd.f32 %v7236, %v7479
      %v7542 = vadd.f32 %v7237, %v7484
      %v7543 = vadd.f32 %v7238, %v7489
      %v7544 = vadd.f32 %v7239, %v7494
      %v7545 = vadd.f32 %v7240, %v7499
      %v7546 = vadd.f32 %v7241, %v7504
      %v7547 = vadd.f32 %v7242, %v7509
      %v7548 = vadd.f32 %v7243, %v7514
      %v7549 = vadd.f32 %v7244, %v7519
      %v7550 = vadd.f32 %v7245, %v7524
      %v7551 = vld [vmem:[#allocation2 + $0x11] sm:$0xff]
      %v7552 = vld [vmem:[#allocation2 + $0x19] sm:$0xff]
      %v7553 = vld [vmem:[#allocation2 + $0x21] sm:$0xff]
      %v7554 = vld [vmem:[#allocation2 + $0x29] sm:$0xff]
      %v7555 = vld [vmem:[#allocation2 + $0x31] sm:$0xff]
      %v7556 = vld [vmem:[#allocation2 + $0x39] sm:$0xff]
      %v7557 = vld [vmem:[#allocation2 + $0x41] sm:$0xff]
      %v7558 = vld [vmem:[#allocation2 + $0x49] sm:$0xff]
      %v7559 = vld [vmem:[#allocation2 + $0x51] sm:$0xff]
      %v7560 = vld [vmem:[#allocation2 + $0x59] sm:$0xff]
      %v7561 = vld [vmem:[#allocation2 + $0x61] sm:$0xff]
      %v7562 = vld [vmem:[#allocation2 + $0x69] sm:$0xff]
      %v7563 = vld [vmem:[#allocation2 + $0x71] sm:$0xff]
      %v7564 = vld [vmem:[#allocation2 + $0x79] sm:$0xff]
      %v7565 = vld [vmem:[#allocation2 + $0x81] sm:$0xff]
      %v7566 = vld [vmem:[#allocation2 + $0x89] sm:$0xff]
      %v7567 = vld [vmem:[#allocation2 + $0x91] sm:$0xff]
      %v7568 = vld [vmem:[#allocation2 + $0x99] sm:$0xff]
      %v7569 = vld [vmem:[#allocation2 + $0xa1] sm:$0xff]
      %v7570 = vld [vmem:[#allocation2 + $0xa9] sm:$0xff]
      %v7571 = vld [vmem:[#allocation2 + $0xb1] sm:$0xff]
      %v7572 = vld [vmem:[#allocation2 + $0xb9] sm:$0xff]
      %v7573 = vld [vmem:[#allocation2 + $0xc1] sm:$0xff]
      %v7574 = vld [vmem:[#allocation2 + $0xc9] sm:$0xf]
      %v7576 = vsel %vm678, %v7551, 0
      %v7579 = vsel %vm678, %v7552, 0
      %v7582 = vsel %vm678, %v7553, 0
      %v7585 = vsel %vm678, %v7554, 0
      %v7588 = vsel %vm678, %v7555, 0
      %v7591 = vsel %vm678, %v7556, 0
      %v7594 = vsel %vm678, %v7557, 0
      %v7597 = vsel %vm678, %v7558, 0
      %v7600 = vsel %vm678, %v7559, 0
      %v7603 = vsel %vm678, %v7560, 0
      %v7606 = vsel %vm678, %v7561, 0
      %v7609 = vsel %vm678, %v7562, 0
      %v7612 = vsel %vm678, %v7563, 0
      %v7615 = vsel %vm678, %v7564, 0
      %v7618 = vsel %vm678, %v7565, 0
      %v7621 = vsel %vm678, %v7566, 0
      %v7624 = vsel %vm678, %v7567, 0
      %v7627 = vsel %vm678, %v7568, 0
      %v7630 = vsel %vm678, %v7569, 0
      %v7633 = vsel %vm678, %v7570, 0
      %v7636 = vsel %vm678, %v7571, 0
      %v7639 = vsel %vm678, %v7572, 0
      %v7642 = vsel %vm678, %v7573, 0
      %v7645 = vsel %vm678, %v7574, 0
      %7647 = vmatprep.subr.mxu0 0.0
      %7648 = vmatpush1.msra.mxu0 0.0
      %7649 = vmatprep.subr.mxu0 0.0
      %7650 = vmatpush1.msra.mxu0 0.0
      %7651 = vmatprep.subr.mxu0 0.0
      %7652 = vmatpush1.msra.mxu0 0.0
      %7653 = vmatprep.subr.mxu0 0.0
      %7654 = vmatpush1.msra.mxu0 0.0
      %7655 = vmatprep.subr.mxu0 0.0
      %7656 = vmatpush1.msra.mxu0 0.0
      %7657 = vmatprep.subr.mxu0 0.0
      %7658 = vmatpush1.msra.mxu0 0.0
      %7659 = vmatprep.subr.mxu0 0.0
      %7660 = vmatpush1.msra.mxu0 0.0
      %7661 = vmatprep.subr.mxu0 0.0
      %7662 = vmatpush1.msra.mxu0 0.0
      %7663 = vmatprep.subr.mxu0 0.0
      %7664 = vmatpush1.msra.mxu0 0.0
      %7665 = vmatprep.subr.mxu0 0.0
      %7666 = vmatpush1.msra.mxu0 0.0
      %7667 = vmatprep.subr.mxu0 0.0
      %7668 = vmatpush1.msra.mxu0 0.0
      %7669 = vmatprep.subr.mxu0 0.0
      %7670 = vmatpush1.msra.mxu0 0.0
      %7671 = vmatprep.subr.mxu0 0.0
      %7672 = vmatpush1.msra.mxu0 0.0
      %7673 = vmatprep.subr.mxu0 0.0
      %7674 = vmatpush1.msra.mxu0 0.0
      %7675 = vmatprep.subr.mxu0 0.0
      %7676 = vmatpush1.msra.mxu0 0.0
      %7677 = vmatprep.subr.mxu0 0.0
      %7678 = vmatpush1.msra.mxu0 %v321
      %7679 = vmatprep.subr.mxu0 0.0
      %7680 = vmatpush2.msra.mxu0 0.0
      %7681 = vmatprep.subr.mxu0 0.0
      %7682 = vmatpush2.msra.mxu0 0.0
      %7683 = vmatprep.subr.mxu0 0.0
      %7684 = vmatpush2.msra.mxu0 0.0
      %7685 = vmatprep.subr.mxu0 0.0
      %7686 = vmatpush2.msra.mxu0 0.0
      %7687 = vmatprep.subr.mxu0 0.0
      %7688 = vmatpush2.msra.mxu0 0.0
      %7689 = vmatprep.subr.mxu0 0.0
      %7690 = vmatpush2.msra.mxu0 0.0
      %7691 = vmatprep.subr.mxu0 0.0
      %7692 = vmatpush2.msra.mxu0 0.0
      %7693 = vmatprep.subr.mxu0 0.0
      %7694 = vmatpush2.msra.mxu0 0.0
      %7695 = vmatprep.subr.mxu0 0.0
      %7696 = vmatpush2.msra.mxu0 0.0
      %7697 = vmatprep.subr.mxu0 0.0
      %7698 = vmatpush2.msra.mxu0 0.0
      %7699 = vmatprep.subr.mxu0 0.0
      %7700 = vmatpush2.msra.mxu0 0.0
      %7701 = vmatprep.subr.mxu0 0.0
      %7702 = vmatpush2.msra.mxu0 0.0
      %7703 = vmatprep.subr.mxu0 0.0
      %7704 = vmatpush2.msra.mxu0 0.0
      %7705 = vmatprep.subr.mxu0 0.0
      %7706 = vmatpush2.msra.mxu0 0.0
      %7707 = vmatprep.subr.mxu0 0.0
      %7708 = vmatpush2.msra.mxu0 0.0
      %7709 = vmatprep.subr.mxu0 0.0
      %7710 = vmatpush2.msra.mxu0 0.0
      %7711 = vmatprep.mubr.f32.mxu0 0.0
      %7712 = vmatmul.mubr.f32.gmra.mxu0 %v7576
      %v7713 = vpop.f32.mrf.mxu0
      %v7714 = vadd.f32 0.0, %v7713
      %v7715 = vpop.f32.mrf.mxu0
      %7716 = vmatprep.mubr.f32.mxu0 0.0
      %7717 = vmatmul.mubr.f32.gmra.mxu0 %v7579
      %v7718 = vpop.f32.mrf.mxu0
      %v7719 = vadd.f32 0.0, %v7718
      %v7720 = vpop.f32.mrf.mxu0
      %7721 = vmatprep.mubr.f32.mxu0 0.0
      %7722 = vmatmul.mubr.f32.gmra.mxu0 %v7582
      %v7723 = vpop.f32.mrf.mxu0
      %v7724 = vadd.f32 0.0, %v7723
      %v7725 = vpop.f32.mrf.mxu0
      %7726 = vmatprep.mubr.f32.mxu0 0.0
      %7727 = vmatmul.mubr.f32.gmra.mxu0 %v7585
      %v7728 = vpop.f32.mrf.mxu0
      %v7729 = vadd.f32 0.0, %v7728
      %v7730 = vpop.f32.mrf.mxu0
      %7731 = vmatprep.mubr.f32.mxu0 0.0
      %7732 = vmatmul.mubr.f32.gmra.mxu0 %v7588
      %v7733 = vpop.f32.mrf.mxu0
      %v7734 = vadd.f32 0.0, %v7733
      %v7735 = vpop.f32.mrf.mxu0
      %7736 = vmatprep.mubr.f32.mxu0 0.0
      %7737 = vmatmul.mubr.f32.gmra.mxu0 %v7591
      %v7738 = vpop.f32.mrf.mxu0
      %v7739 = vadd.f32 0.0, %v7738
      %v7740 = vpop.f32.mrf.mxu0
      %7741 = vmatprep.mubr.f32.mxu0 0.0
      %7742 = vmatmul.mubr.f32.gmra.mxu0 %v7594
      %v7743 = vpop.f32.mrf.mxu0
      %v7744 = vadd.f32 0.0, %v7743
      %v7745 = vpop.f32.mrf.mxu0
      %7746 = vmatprep.mubr.f32.mxu0 0.0
      %7747 = vmatmul.mubr.f32.gmra.mxu0 %v7597
      %v7748 = vpop.f32.mrf.mxu0
      %v7749 = vadd.f32 0.0, %v7748
      %v7750 = vpop.f32.mrf.mxu0
      %7751 = vmatprep.mubr.f32.mxu0 0.0
      %7752 = vmatmul.mubr.f32.gmra.mxu0 %v7600
      %v7753 = vpop.f32.mrf.mxu0
      %v7754 = vadd.f32 0.0, %v7753
      %v7755 = vpop.f32.mrf.mxu0
      %7756 = vmatprep.mubr.f32.mxu0 0.0
      %7757 = vmatmul.mubr.f32.gmra.mxu0 %v7603
      %v7758 = vpop.f32.mrf.mxu0
      %v7759 = vadd.f32 0.0, %v7758
      %v7760 = vpop.f32.mrf.mxu0
      %7761 = vmatprep.mubr.f32.mxu0 0.0
      %7762 = vmatmul.mubr.f32.gmra.mxu0 %v7606
      %v7763 = vpop.f32.mrf.mxu0
      %v7764 = vadd.f32 0.0, %v7763
      %v7765 = vpop.f32.mrf.mxu0
      %7766 = vmatprep.mubr.f32.mxu0 0.0
      %7767 = vmatmul.mubr.f32.gmra.mxu0 %v7609
      %v7768 = vpop.f32.mrf.mxu0
      %v7769 = vadd.f32 0.0, %v7768
      %v7770 = vpop.f32.mrf.mxu0
      %7771 = vmatprep.mubr.f32.mxu0 0.0
      %7772 = vmatmul.mubr.f32.gmra.mxu0 %v7612
      %v7773 = vpop.f32.mrf.mxu0
      %v7774 = vadd.f32 0.0, %v7773
      %v7775 = vpop.f32.mrf.mxu0
      %7776 = vmatprep.mubr.f32.mxu0 0.0
      %7777 = vmatmul.mubr.f32.gmra.mxu0 %v7615
      %v7778 = vpop.f32.mrf.mxu0
      %v7779 = vadd.f32 0.0, %v7778
      %v7780 = vpop.f32.mrf.mxu0
      %7781 = vmatprep.mubr.f32.mxu0 0.0
      %7782 = vmatmul.mubr.f32.gmra.mxu0 %v7618
      %v7783 = vpop.f32.mrf.mxu0
      %v7784 = vadd.f32 0.0, %v7783
      %v7785 = vpop.f32.mrf.mxu0
      %7786 = vmatprep.mubr.f32.mxu0 0.0
      %7787 = vmatmul.mubr.f32.gmra.mxu0 %v7621
      %v7788 = vpop.f32.mrf.mxu0
      %v7789 = vadd.f32 0.0, %v7788
      %v7790 = vpop.f32.mrf.mxu0
      %7791 = vmatprep.mubr.f32.mxu0 0.0
      %7792 = vmatmul.mubr.f32.gmra.mxu0 %v7624
      %v7793 = vpop.f32.mrf.mxu0
      %v7794 = vadd.f32 0.0, %v7793
      %v7795 = vpop.f32.mrf.mxu0
      %7796 = vmatprep.mubr.f32.mxu0 0.0
      %7797 = vmatmul.mubr.f32.gmra.mxu0 %v7627
      %v7798 = vpop.f32.mrf.mxu0
      %v7799 = vadd.f32 0.0, %v7798
      %v7800 = vpop.f32.mrf.mxu0
      %7801 = vmatprep.mubr.f32.mxu0 0.0
      %7802 = vmatmul.mubr.f32.gmra.mxu0 %v7630
      %v7803 = vpop.f32.mrf.mxu0
      %v7804 = vadd.f32 0.0, %v7803
      %v7805 = vpop.f32.mrf.mxu0
      %7806 = vmatprep.mubr.f32.mxu0 0.0
      %7807 = vmatmul.mubr.f32.gmra.mxu0 %v7633
      %v7808 = vpop.f32.mrf.mxu0
      %v7809 = vadd.f32 0.0, %v7808
      %v7810 = vpop.f32.mrf.mxu0
      %7811 = vmatprep.mubr.f32.mxu0 0.0
      %7812 = vmatmul.mubr.f32.gmra.mxu0 %v7636
      %v7813 = vpop.f32.mrf.mxu0
      %v7814 = vadd.f32 0.0, %v7813
      %v7815 = vpop.f32.mrf.mxu0
      %7816 = vmatprep.mubr.f32.mxu0 0.0
      %7817 = vmatmul.mubr.f32.gmra.mxu0 %v7639
      %v7818 = vpop.f32.mrf.mxu0
      %v7819 = vadd.f32 0.0, %v7818
      %v7820 = vpop.f32.mrf.mxu0
      %7821 = vmatprep.mubr.f32.mxu0 0.0
      %7822 = vmatmul.mubr.f32.gmra.mxu0 %v7642
      %v7823 = vpop.f32.mrf.mxu0
      %v7824 = vadd.f32 0.0, %v7823
      %v7825 = vpop.f32.mrf.mxu0
      %7826 = vmatprep.mubr.f32.mxu0 0.0
      %7827 = vmatmul.mubr.f32.gmra.mxu0 %v7645
      %v7828 = vpop.f32.mrf.mxu0
      %v7829 = vadd.f32 0.0, %v7828
      %v7830 = vpop.f32.mrf.mxu0
      %7831 = vdwg.mxu0
      %v7832 = vadd.f32 %v7527, %v7714
      %v7833 = vadd.f32 %v7528, %v7719
      %v7834 = vadd.f32 %v7529, %v7724
      %v7835 = vadd.f32 %v7530, %v7729
      %v7836 = vadd.f32 %v7531, %v7734
      %v7837 = vadd.f32 %v7532, %v7739
      %v7838 = vadd.f32 %v7533, %v7744
      %v7839 = vadd.f32 %v7534, %v7749
      %v7840 = vadd.f32 %v7535, %v7754
      %v7841 = vadd.f32 %v7536, %v7759
      %v7842 = vadd.f32 %v7537, %v7764
      %v7843 = vadd.f32 %v7538, %v7769
      %v7844 = vadd.f32 %v7539, %v7774
      %v7845 = vadd.f32 %v7540, %v7779
      %v7846 = vadd.f32 %v7541, %v7784
      %v7847 = vadd.f32 %v7542, %v7789
      %v7848 = vadd.f32 %v7543, %v7794
      %v7849 = vadd.f32 %v7544, %v7799
      %v7850 = vadd.f32 %v7545, %v7804
      %v7851 = vadd.f32 %v7546, %v7809
      %v7852 = vadd.f32 %v7547, %v7814
      %v7853 = vadd.f32 %v7548, %v7819
      %v7854 = vadd.f32 %v7549, %v7824
      %v7855 = vadd.f32 %v7550, %v7829
      %v7856 = vld [vmem:[#allocation2 + $0x12] sm:$0xff]
      %v7857 = vld [vmem:[#allocation2 + $0x1a] sm:$0xff]
      %v7858 = vld [vmem:[#allocation2 + $0x22] sm:$0xff]
      %v7859 = vld [vmem:[#allocation2 + $0x2a] sm:$0xff]
      %v7860 = vld [vmem:[#allocation2 + $0x32] sm:$0xff]
      %v7861 = vld [vmem:[#allocation2 + $0x3a] sm:$0xff]
      %v7862 = vld [vmem:[#allocation2 + $0x42] sm:$0xff]
      %v7863 = vld [vmem:[#allocation2 + $0x4a] sm:$0xff]
      %v7864 = vld [vmem:[#allocation2 + $0x52] sm:$0xff]
      %v7865 = vld [vmem:[#allocation2 + $0x5a] sm:$0xff]
      %v7866 = vld [vmem:[#allocation2 + $0x62] sm:$0xff]
      %v7867 = vld [vmem:[#allocation2 + $0x6a] sm:$0xff]
      %v7868 = vld [vmem:[#allocation2 + $0x72] sm:$0xff]
      %v7869 = vld [vmem:[#allocation2 + $0x7a] sm:$0xff]
      %v7870 = vld [vmem:[#allocation2 + $0x82] sm:$0xff]
      %v7871 = vld [vmem:[#allocation2 + $0x8a] sm:$0xff]
      %v7872 = vld [vmem:[#allocation2 + $0x92] sm:$0xff]
      %v7873 = vld [vmem:[#allocation2 + $0x9a] sm:$0xff]
      %v7874 = vld [vmem:[#allocation2 + $0xa2] sm:$0xff]
      %v7875 = vld [vmem:[#allocation2 + $0xaa] sm:$0xff]
      %v7876 = vld [vmem:[#allocation2 + $0xb2] sm:$0xff]
      %v7877 = vld [vmem:[#allocation2 + $0xba] sm:$0xff]
      %v7878 = vld [vmem:[#allocation2 + $0xc2] sm:$0xff]
      %v7879 = vld [vmem:[#allocation2 + $0xca] sm:$0xf]
      %v7881 = vsel %vm678, %v7856, 0
      %v7884 = vsel %vm678, %v7857, 0
      %v7887 = vsel %vm678, %v7858, 0
      %v7890 = vsel %vm678, %v7859, 0
      %v7893 = vsel %vm678, %v7860, 0
      %v7896 = vsel %vm678, %v7861, 0
      %v7899 = vsel %vm678, %v7862, 0
      %v7902 = vsel %vm678, %v7863, 0
      %v7905 = vsel %vm678, %v7864, 0
      %v7908 = vsel %vm678, %v7865, 0
      %v7911 = vsel %vm678, %v7866, 0
      %v7914 = vsel %vm678, %v7867, 0
      %v7917 = vsel %vm678, %v7868, 0
      %v7920 = vsel %vm678, %v7869, 0
      %v7923 = vsel %vm678, %v7870, 0
      %v7926 = vsel %vm678, %v7871, 0
      %v7929 = vsel %vm678, %v7872, 0
      %v7932 = vsel %vm678, %v7873, 0
      %v7935 = vsel %vm678, %v7874, 0
      %v7938 = vsel %vm678, %v7875, 0
      %v7941 = vsel %vm678, %v7876, 0
      %v7944 = vsel %vm678, %v7877, 0
      %v7947 = vsel %vm678, %v7878, 0
      %v7950 = vsel %vm678, %v7879, 0
      %7952 = vmatprep.subr.mxu0 0.0
      %7953 = vmatpush1.msra.mxu0 0.0
      %7954 = vmatprep.subr.mxu0 0.0
      %7955 = vmatpush1.msra.mxu0 0.0
      %7956 = vmatprep.subr.mxu0 0.0
      %7957 = vmatpush1.msra.mxu0 0.0
      %7958 = vmatprep.subr.mxu0 0.0
      %7959 = vmatpush1.msra.mxu0 0.0
      %7960 = vmatprep.subr.mxu0 0.0
      %7961 = vmatpush1.msra.mxu0 0.0
      %7962 = vmatprep.subr.mxu0 0.0
      %7963 = vmatpush1.msra.mxu0 0.0
      %7964 = vmatprep.subr.mxu0 0.0
      %7965 = vmatpush1.msra.mxu0 0.0
      %7966 = vmatprep.subr.mxu0 0.0
      %7967 = vmatpush1.msra.mxu0 0.0
      %7968 = vmatprep.subr.mxu0 0.0
      %7969 = vmatpush1.msra.mxu0 0.0
      %7970 = vmatprep.subr.mxu0 0.0
      %7971 = vmatpush1.msra.mxu0 0.0
      %7972 = vmatprep.subr.mxu0 0.0
      %7973 = vmatpush1.msra.mxu0 0.0
      %7974 = vmatprep.subr.mxu0 0.0
      %7975 = vmatpush1.msra.mxu0 0.0
      %7976 = vmatprep.subr.mxu0 0.0
      %7977 = vmatpush1.msra.mxu0 0.0
      %7978 = vmatprep.subr.mxu0 0.0
      %7979 = vmatpush1.msra.mxu0 0.0
      %7980 = vmatprep.subr.mxu0 0.0
      %7981 = vmatpush1.msra.mxu0 0.0
      %7982 = vmatprep.subr.mxu0 0.0
      %7983 = vmatpush1.msra.mxu0 %v322
      %7984 = vmatprep.subr.mxu0 0.0
      %7985 = vmatpush2.msra.mxu0 0.0
      %7986 = vmatprep.subr.mxu0 0.0
      %7987 = vmatpush2.msra.mxu0 0.0
      %7988 = vmatprep.subr.mxu0 0.0
      %7989 = vmatpush2.msra.mxu0 0.0
      %7990 = vmatprep.subr.mxu0 0.0
      %7991 = vmatpush2.msra.mxu0 0.0
      %7992 = vmatprep.subr.mxu0 0.0
      %7993 = vmatpush2.msra.mxu0 0.0
      %7994 = vmatprep.subr.mxu0 0.0
      %7995 = vmatpush2.msra.mxu0 0.0
      %7996 = vmatprep.subr.mxu0 0.0
      %7997 = vmatpush2.msra.mxu0 0.0
      %7998 = vmatprep.subr.mxu0 0.0
      %7999 = vmatpush2.msra.mxu0 0.0
      %8000 = vmatprep.subr.mxu0 0.0
      %8001 = vmatpush2.msra.mxu0 0.0
      %8002 = vmatprep.subr.mxu0 0.0
      %8003 = vmatpush2.msra.mxu0 0.0
      %8004 = vmatprep.subr.mxu0 0.0
      %8005 = vmatpush2.msra.mxu0 0.0
      %8006 = vmatprep.subr.mxu0 0.0
      %8007 = vmatpush2.msra.mxu0 0.0
      %8008 = vmatprep.subr.mxu0 0.0
      %8009 = vmatpush2.msra.mxu0 0.0
      %8010 = vmatprep.subr.mxu0 0.0
      %8011 = vmatpush2.msra.mxu0 0.0
      %8012 = vmatprep.subr.mxu0 0.0
      %8013 = vmatpush2.msra.mxu0 0.0
      %8014 = vmatprep.subr.mxu0 0.0
      %8015 = vmatpush2.msra.mxu0 0.0
      %8016 = vmatprep.mubr.f32.mxu0 0.0
      %8017 = vmatmul.mubr.f32.gmra.mxu0 %v7881
      %v8018 = vpop.f32.mrf.mxu0
      %v8019 = vadd.f32 0.0, %v8018
      %v8020 = vpop.f32.mrf.mxu0
      %8021 = vmatprep.mubr.f32.mxu0 0.0
      %8022 = vmatmul.mubr.f32.gmra.mxu0 %v7884
      %v8023 = vpop.f32.mrf.mxu0
      %v8024 = vadd.f32 0.0, %v8023
      %v8025 = vpop.f32.mrf.mxu0
      %8026 = vmatprep.mubr.f32.mxu0 0.0
      %8027 = vmatmul.mubr.f32.gmra.mxu0 %v7887
      %v8028 = vpop.f32.mrf.mxu0
      %v8029 = vadd.f32 0.0, %v8028
      %v8030 = vpop.f32.mrf.mxu0
      %8031 = vmatprep.mubr.f32.mxu0 0.0
      %8032 = vmatmul.mubr.f32.gmra.mxu0 %v7890
      %v8033 = vpop.f32.mrf.mxu0
      %v8034 = vadd.f32 0.0, %v8033
      %v8035 = vpop.f32.mrf.mxu0
      %8036 = vmatprep.mubr.f32.mxu0 0.0
      %8037 = vmatmul.mubr.f32.gmra.mxu0 %v7893
      %v8038 = vpop.f32.mrf.mxu0
      %v8039 = vadd.f32 0.0, %v8038
      %v8040 = vpop.f32.mrf.mxu0
      %8041 = vmatprep.mubr.f32.mxu0 0.0
      %8042 = vmatmul.mubr.f32.gmra.mxu0 %v7896
      %v8043 = vpop.f32.mrf.mxu0
      %v8044 = vadd.f32 0.0, %v8043
      %v8045 = vpop.f32.mrf.mxu0
      %8046 = vmatprep.mubr.f32.mxu0 0.0
      %8047 = vmatmul.mubr.f32.gmra.mxu0 %v7899
      %v8048 = vpop.f32.mrf.mxu0
      %v8049 = vadd.f32 0.0, %v8048
      %v8050 = vpop.f32.mrf.mxu0
      %8051 = vmatprep.mubr.f32.mxu0 0.0
      %8052 = vmatmul.mubr.f32.gmra.mxu0 %v7902
      %v8053 = vpop.f32.mrf.mxu0
      %v8054 = vadd.f32 0.0, %v8053
      %v8055 = vpop.f32.mrf.mxu0
      %8056 = vmatprep.mubr.f32.mxu0 0.0
      %8057 = vmatmul.mubr.f32.gmra.mxu0 %v7905
      %v8058 = vpop.f32.mrf.mxu0
      %v8059 = vadd.f32 0.0, %v8058
      %v8060 = vpop.f32.mrf.mxu0
      %8061 = vmatprep.mubr.f32.mxu0 0.0
      %8062 = vmatmul.mubr.f32.gmra.mxu0 %v7908
      %v8063 = vpop.f32.mrf.mxu0
      %v8064 = vadd.f32 0.0, %v8063
      %v8065 = vpop.f32.mrf.mxu0
      %8066 = vmatprep.mubr.f32.mxu0 0.0
      %8067 = vmatmul.mubr.f32.gmra.mxu0 %v7911
      %v8068 = vpop.f32.mrf.mxu0
      %v8069 = vadd.f32 0.0, %v8068
      %v8070 = vpop.f32.mrf.mxu0
      %8071 = vmatprep.mubr.f32.mxu0 0.0
      %8072 = vmatmul.mubr.f32.gmra.mxu0 %v7914
      %v8073 = vpop.f32.mrf.mxu0
      %v8074 = vadd.f32 0.0, %v8073
      %v8075 = vpop.f32.mrf.mxu0
      %8076 = vmatprep.mubr.f32.mxu0 0.0
      %8077 = vmatmul.mubr.f32.gmra.mxu0 %v7917
      %v8078 = vpop.f32.mrf.mxu0
      %v8079 = vadd.f32 0.0, %v8078
      %v8080 = vpop.f32.mrf.mxu0
      %8081 = vmatprep.mubr.f32.mxu0 0.0
      %8082 = vmatmul.mubr.f32.gmra.mxu0 %v7920
      %v8083 = vpop.f32.mrf.mxu0
      %v8084 = vadd.f32 0.0, %v8083
      %v8085 = vpop.f32.mrf.mxu0
      %8086 = vmatprep.mubr.f32.mxu0 0.0
      %8087 = vmatmul.mubr.f32.gmra.mxu0 %v7923
      %v8088 = vpop.f32.mrf.mxu0
      %v8089 = vadd.f32 0.0, %v8088
      %v8090 = vpop.f32.mrf.mxu0
      %8091 = vmatprep.mubr.f32.mxu0 0.0
      %8092 = vmatmul.mubr.f32.gmra.mxu0 %v7926
      %v8093 = vpop.f32.mrf.mxu0
      %v8094 = vadd.f32 0.0, %v8093
      %v8095 = vpop.f32.mrf.mxu0
      %8096 = vmatprep.mubr.f32.mxu0 0.0
      %8097 = vmatmul.mubr.f32.gmra.mxu0 %v7929
      %v8098 = vpop.f32.mrf.mxu0
      %v8099 = vadd.f32 0.0, %v8098
      %v8100 = vpop.f32.mrf.mxu0
      %8101 = vmatprep.mubr.f32.mxu0 0.0
      %8102 = vmatmul.mubr.f32.gmra.mxu0 %v7932
      %v8103 = vpop.f32.mrf.mxu0
      %v8104 = vadd.f32 0.0, %v8103
      %v8105 = vpop.f32.mrf.mxu0
      %8106 = vmatprep.mubr.f32.mxu0 0.0
      %8107 = vmatmul.mubr.f32.gmra.mxu0 %v7935
      %v8108 = vpop.f32.mrf.mxu0
      %v8109 = vadd.f32 0.0, %v8108
      %v8110 = vpop.f32.mrf.mxu0
      %8111 = vmatprep.mubr.f32.mxu0 0.0
      %8112 = vmatmul.mubr.f32.gmra.mxu0 %v7938
      %v8113 = vpop.f32.mrf.mxu0
      %v8114 = vadd.f32 0.0, %v8113
      %v8115 = vpop.f32.mrf.mxu0
      %8116 = vmatprep.mubr.f32.mxu0 0.0
      %8117 = vmatmul.mubr.f32.gmra.mxu0 %v7941
      %v8118 = vpop.f32.mrf.mxu0
      %v8119 = vadd.f32 0.0, %v8118
      %v8120 = vpop.f32.mrf.mxu0
      %8121 = vmatprep.mubr.f32.mxu0 0.0
      %8122 = vmatmul.mubr.f32.gmra.mxu0 %v7944
      %v8123 = vpop.f32.mrf.mxu0
      %v8124 = vadd.f32 0.0, %v8123
      %v8125 = vpop.f32.mrf.mxu0
      %8126 = vmatprep.mubr.f32.mxu0 0.0
      %8127 = vmatmul.mubr.f32.gmra.mxu0 %v7947
      %v8128 = vpop.f32.mrf.mxu0
      %v8129 = vadd.f32 0.0, %v8128
      %v8130 = vpop.f32.mrf.mxu0
      %8131 = vmatprep.mubr.f32.mxu0 0.0
      %8132 = vmatmul.mubr.f32.gmra.mxu0 %v7950
      %v8133 = vpop.f32.mrf.mxu0
      %v8134 = vadd.f32 0.0, %v8133
      %v8135 = vpop.f32.mrf.mxu0
      %8136 = vdwg.mxu0
      %v8137 = vadd.f32 %v7832, %v8019
      %v8138 = vadd.f32 %v7833, %v8024
      %v8139 = vadd.f32 %v7834, %v8029
      %v8140 = vadd.f32 %v7835, %v8034
      %v8141 = vadd.f32 %v7836, %v8039
      %v8142 = vadd.f32 %v7837, %v8044
      %v8143 = vadd.f32 %v7838, %v8049
      %v8144 = vadd.f32 %v7839, %v8054
      %v8145 = vadd.f32 %v7840, %v8059
      %v8146 = vadd.f32 %v7841, %v8064
      %v8147 = vadd.f32 %v7842, %v8069
      %v8148 = vadd.f32 %v7843, %v8074
      %v8149 = vadd.f32 %v7844, %v8079
      %v8150 = vadd.f32 %v7845, %v8084
      %v8151 = vadd.f32 %v7846, %v8089
      %v8152 = vadd.f32 %v7847, %v8094
      %v8153 = vadd.f32 %v7848, %v8099
      %v8154 = vadd.f32 %v7849, %v8104
      %v8155 = vadd.f32 %v7850, %v8109
      %v8156 = vadd.f32 %v7851, %v8114
      %v8157 = vadd.f32 %v7852, %v8119
      %v8158 = vadd.f32 %v7853, %v8124
      %v8159 = vadd.f32 %v7854, %v8129
      %v8160 = vadd.f32 %v7855, %v8134
      %v8161 = vld [vmem:[#allocation2 + $0x20] sm:$0xff]
      %v8162 = vld [vmem:[#allocation2 + $0x28] sm:$0xff]
      %v8163 = vld [vmem:[#allocation2 + $0x30] sm:$0xff]
      %v8164 = vld [vmem:[#allocation2 + $0x38] sm:$0xff]
      %v8165 = vld [vmem:[#allocation2 + $0x40] sm:$0xff]
      %v8166 = vld [vmem:[#allocation2 + $0x48] sm:$0xff]
      %v8167 = vld [vmem:[#allocation2 + $0x50] sm:$0xff]
      %v8168 = vld [vmem:[#allocation2 + $0x58] sm:$0xff]
      %v8169 = vld [vmem:[#allocation2 + $0x60] sm:$0xff]
      %v8170 = vld [vmem:[#allocation2 + $0x68] sm:$0xff]
      %v8171 = vld [vmem:[#allocation2 + $0x70] sm:$0xff]
      %v8172 = vld [vmem:[#allocation2 + $0x78] sm:$0xff]
      %v8173 = vld [vmem:[#allocation2 + $0x80] sm:$0xff]
      %v8174 = vld [vmem:[#allocation2 + $0x88] sm:$0xff]
      %v8175 = vld [vmem:[#allocation2 + $0x90] sm:$0xff]
      %v8176 = vld [vmem:[#allocation2 + $0x98] sm:$0xff]
      %v8177 = vld [vmem:[#allocation2 + $0xa0] sm:$0xff]
      %v8178 = vld [vmem:[#allocation2 + $0xa8] sm:$0xff]
      %v8179 = vld [vmem:[#allocation2 + $0xb0] sm:$0xff]
      %v8180 = vld [vmem:[#allocation2 + $0xb8] sm:$0xff]
      %v8181 = vld [vmem:[#allocation2 + $0xc0] sm:$0xff]
      %v8182 = vld [vmem:[#allocation2 + $0xc8] sm:$0xff]
      %v8183 = vld [vmem:[#allocation2 + $0xd0] sm:$0xff]
      %v8184 = vld [vmem:[#allocation2 + $0xd8] sm:$0xf]
      %v8186 = vsel %vm678, %v8161, 0
      %v8189 = vsel %vm678, %v8162, 0
      %v8192 = vsel %vm678, %v8163, 0
      %v8195 = vsel %vm678, %v8164, 0
      %v8198 = vsel %vm678, %v8165, 0
      %v8201 = vsel %vm678, %v8166, 0
      %v8204 = vsel %vm678, %v8167, 0
      %v8207 = vsel %vm678, %v8168, 0
      %v8210 = vsel %vm678, %v8169, 0
      %v8213 = vsel %vm678, %v8170, 0
      %v8216 = vsel %vm678, %v8171, 0
      %v8219 = vsel %vm678, %v8172, 0
      %v8222 = vsel %vm678, %v8173, 0
      %v8225 = vsel %vm678, %v8174, 0
      %v8228 = vsel %vm678, %v8175, 0
      %v8231 = vsel %vm678, %v8176, 0
      %v8234 = vsel %vm678, %v8177, 0
      %v8237 = vsel %vm678, %v8178, 0
      %v8240 = vsel %vm678, %v8179, 0
      %v8243 = vsel %vm678, %v8180, 0
      %v8246 = vsel %vm678, %v8181, 0
      %v8249 = vsel %vm678, %v8182, 0
      %v8252 = vsel %vm678, %v8183, 0
      %v8255 = vsel %vm678, %v8184, 0
      %8257 = vmatprep.subr.mxu0 0.0
      %8258 = vmatpush1.msra.mxu0 0.0
      %8259 = vmatprep.subr.mxu0 0.0
      %8260 = vmatpush1.msra.mxu0 0.0
      %8261 = vmatprep.subr.mxu0 0.0
      %8262 = vmatpush1.msra.mxu0 0.0
      %8263 = vmatprep.subr.mxu0 0.0
      %8264 = vmatpush1.msra.mxu0 0.0
      %8265 = vmatprep.subr.mxu0 0.0
      %8266 = vmatpush1.msra.mxu0 0.0
      %8267 = vmatprep.subr.mxu0 0.0
      %8268 = vmatpush1.msra.mxu0 0.0
      %8269 = vmatprep.subr.mxu0 0.0
      %8270 = vmatpush1.msra.mxu0 0.0
      %8271 = vmatprep.subr.mxu0 0.0
      %8272 = vmatpush1.msra.mxu0 0.0
      %8273 = vmatprep.subr.mxu0 0.0
      %8274 = vmatpush1.msra.mxu0 0.0
      %8275 = vmatprep.subr.mxu0 0.0
      %8276 = vmatpush1.msra.mxu0 0.0
      %8277 = vmatprep.subr.mxu0 0.0
      %8278 = vmatpush1.msra.mxu0 0.0
      %8279 = vmatprep.subr.mxu0 0.0
      %8280 = vmatpush1.msra.mxu0 0.0
      %8281 = vmatprep.subr.mxu0 0.0
      %8282 = vmatpush1.msra.mxu0 0.0
      %8283 = vmatprep.subr.mxu0 0.0
      %8284 = vmatpush1.msra.mxu0 0.0
      %8285 = vmatprep.subr.mxu0 0.0
      %8286 = vmatpush1.msra.mxu0 0.0
      %8287 = vmatprep.subr.mxu0 0.0
      %8288 = vmatpush1.msra.mxu0 %v323
      %8289 = vmatprep.subr.mxu0 0.0
      %8290 = vmatpush2.msra.mxu0 0.0
      %8291 = vmatprep.subr.mxu0 0.0
      %8292 = vmatpush2.msra.mxu0 0.0
      %8293 = vmatprep.subr.mxu0 0.0
      %8294 = vmatpush2.msra.mxu0 0.0
      %8295 = vmatprep.subr.mxu0 0.0
      %8296 = vmatpush2.msra.mxu0 0.0
      %8297 = vmatprep.subr.mxu0 0.0
      %8298 = vmatpush2.msra.mxu0 0.0
      %8299 = vmatprep.subr.mxu0 0.0
      %8300 = vmatpush2.msra.mxu0 0.0
      %8301 = vmatprep.subr.mxu0 0.0
      %8302 = vmatpush2.msra.mxu0 0.0
      %8303 = vmatprep.subr.mxu0 0.0
      %8304 = vmatpush2.msra.mxu0 0.0
      %8305 = vmatprep.subr.mxu0 0.0
      %8306 = vmatpush2.msra.mxu0 0.0
      %8307 = vmatprep.subr.mxu0 0.0
      %8308 = vmatpush2.msra.mxu0 0.0
      %8309 = vmatprep.subr.mxu0 0.0
      %8310 = vmatpush2.msra.mxu0 0.0
      %8311 = vmatprep.subr.mxu0 0.0
      %8312 = vmatpush2.msra.mxu0 0.0
      %8313 = vmatprep.subr.mxu0 0.0
      %8314 = vmatpush2.msra.mxu0 0.0
      %8315 = vmatprep.subr.mxu0 0.0
      %8316 = vmatpush2.msra.mxu0 0.0
      %8317 = vmatprep.subr.mxu0 0.0
      %8318 = vmatpush2.msra.mxu0 0.0
      %8319 = vmatprep.subr.mxu0 0.0
      %8320 = vmatpush2.msra.mxu0 0.0
      %8321 = vmatprep.mubr.f32.mxu0 0.0
      %8322 = vmatmul.mubr.f32.gmra.mxu0 %v8186
      %v8323 = vpop.f32.mrf.mxu0
      %v8324 = vadd.f32 0.0, %v8323
      %v8325 = vpop.f32.mrf.mxu0
      %8326 = vmatprep.mubr.f32.mxu0 0.0
      %8327 = vmatmul.mubr.f32.gmra.mxu0 %v8189
      %v8328 = vpop.f32.mrf.mxu0
      %v8329 = vadd.f32 0.0, %v8328
      %v8330 = vpop.f32.mrf.mxu0
      %8331 = vmatprep.mubr.f32.mxu0 0.0
      %8332 = vmatmul.mubr.f32.gmra.mxu0 %v8192
      %v8333 = vpop.f32.mrf.mxu0
      %v8334 = vadd.f32 0.0, %v8333
      %v8335 = vpop.f32.mrf.mxu0
      %8336 = vmatprep.mubr.f32.mxu0 0.0
      %8337 = vmatmul.mubr.f32.gmra.mxu0 %v8195
      %v8338 = vpop.f32.mrf.mxu0
      %v8339 = vadd.f32 0.0, %v8338
      %v8340 = vpop.f32.mrf.mxu0
      %8341 = vmatprep.mubr.f32.mxu0 0.0
      %8342 = vmatmul.mubr.f32.gmra.mxu0 %v8198
      %v8343 = vpop.f32.mrf.mxu0
      %v8344 = vadd.f32 0.0, %v8343
      %v8345 = vpop.f32.mrf.mxu0
      %8346 = vmatprep.mubr.f32.mxu0 0.0
      %8347 = vmatmul.mubr.f32.gmra.mxu0 %v8201
      %v8348 = vpop.f32.mrf.mxu0
      %v8349 = vadd.f32 0.0, %v8348
      %v8350 = vpop.f32.mrf.mxu0
      %8351 = vmatprep.mubr.f32.mxu0 0.0
      %8352 = vmatmul.mubr.f32.gmra.mxu0 %v8204
      %v8353 = vpop.f32.mrf.mxu0
      %v8354 = vadd.f32 0.0, %v8353
      %v8355 = vpop.f32.mrf.mxu0
      %8356 = vmatprep.mubr.f32.mxu0 0.0
      %8357 = vmatmul.mubr.f32.gmra.mxu0 %v8207
      %v8358 = vpop.f32.mrf.mxu0
      %v8359 = vadd.f32 0.0, %v8358
      %v8360 = vpop.f32.mrf.mxu0
      %8361 = vmatprep.mubr.f32.mxu0 0.0
      %8362 = vmatmul.mubr.f32.gmra.mxu0 %v8210
      %v8363 = vpop.f32.mrf.mxu0
      %v8364 = vadd.f32 0.0, %v8363
      %v8365 = vpop.f32.mrf.mxu0
      %8366 = vmatprep.mubr.f32.mxu0 0.0
      %8367 = vmatmul.mubr.f32.gmra.mxu0 %v8213
      %v8368 = vpop.f32.mrf.mxu0
      %v8369 = vadd.f32 0.0, %v8368
      %v8370 = vpop.f32.mrf.mxu0
      %8371 = vmatprep.mubr.f32.mxu0 0.0
      %8372 = vmatmul.mubr.f32.gmra.mxu0 %v8216
      %v8373 = vpop.f32.mrf.mxu0
      %v8374 = vadd.f32 0.0, %v8373
      %v8375 = vpop.f32.mrf.mxu0
      %8376 = vmatprep.mubr.f32.mxu0 0.0
      %8377 = vmatmul.mubr.f32.gmra.mxu0 %v8219
      %v8378 = vpop.f32.mrf.mxu0
      %v8379 = vadd.f32 0.0, %v8378
      %v8380 = vpop.f32.mrf.mxu0
      %8381 = vmatprep.mubr.f32.mxu0 0.0
      %8382 = vmatmul.mubr.f32.gmra.mxu0 %v8222
      %v8383 = vpop.f32.mrf.mxu0
      %v8384 = vadd.f32 0.0, %v8383
      %v8385 = vpop.f32.mrf.mxu0
      %8386 = vmatprep.mubr.f32.mxu0 0.0
      %8387 = vmatmul.mubr.f32.gmra.mxu0 %v8225
      %v8388 = vpop.f32.mrf.mxu0
      %v8389 = vadd.f32 0.0, %v8388
      %v8390 = vpop.f32.mrf.mxu0
      %8391 = vmatprep.mubr.f32.mxu0 0.0
      %8392 = vmatmul.mubr.f32.gmra.mxu0 %v8228
      %v8393 = vpop.f32.mrf.mxu0
      %v8394 = vadd.f32 0.0, %v8393
      %v8395 = vpop.f32.mrf.mxu0
      %8396 = vmatprep.mubr.f32.mxu0 0.0
      %8397 = vmatmul.mubr.f32.gmra.mxu0 %v8231
      %v8398 = vpop.f32.mrf.mxu0
      %v8399 = vadd.f32 0.0, %v8398
      %v8400 = vpop.f32.mrf.mxu0
      %8401 = vmatprep.mubr.f32.mxu0 0.0
      %8402 = vmatmul.mubr.f32.gmra.mxu0 %v8234
      %v8403 = vpop.f32.mrf.mxu0
      %v8404 = vadd.f32 0.0, %v8403
      %v8405 = vpop.f32.mrf.mxu0
      %8406 = vmatprep.mubr.f32.mxu0 0.0
      %8407 = vmatmul.mubr.f32.gmra.mxu0 %v8237
      %v8408 = vpop.f32.mrf.mxu0
      %v8409 = vadd.f32 0.0, %v8408
      %v8410 = vpop.f32.mrf.mxu0
      %8411 = vmatprep.mubr.f32.mxu0 0.0
      %8412 = vmatmul.mubr.f32.gmra.mxu0 %v8240
      %v8413 = vpop.f32.mrf.mxu0
      %v8414 = vadd.f32 0.0, %v8413
      %v8415 = vpop.f32.mrf.mxu0
      %8416 = vmatprep.mubr.f32.mxu0 0.0
      %8417 = vmatmul.mubr.f32.gmra.mxu0 %v8243
      %v8418 = vpop.f32.mrf.mxu0
      %v8419 = vadd.f32 0.0, %v8418
      %v8420 = vpop.f32.mrf.mxu0
      %8421 = vmatprep.mubr.f32.mxu0 0.0
      %8422 = vmatmul.mubr.f32.gmra.mxu0 %v8246
      %v8423 = vpop.f32.mrf.mxu0
      %v8424 = vadd.f32 0.0, %v8423
      %v8425 = vpop.f32.mrf.mxu0
      %8426 = vmatprep.mubr.f32.mxu0 0.0
      %8427 = vmatmul.mubr.f32.gmra.mxu0 %v8249
      %v8428 = vpop.f32.mrf.mxu0
      %v8429 = vadd.f32 0.0, %v8428
      %v8430 = vpop.f32.mrf.mxu0
      %8431 = vmatprep.mubr.f32.mxu0 0.0
      %8432 = vmatmul.mubr.f32.gmra.mxu0 %v8252
      %v8433 = vpop.f32.mrf.mxu0
      %v8434 = vadd.f32 0.0, %v8433
      %v8435 = vpop.f32.mrf.mxu0
      %8436 = vmatprep.mubr.f32.mxu0 0.0
      %8437 = vmatmul.mubr.f32.gmra.mxu0 %v8255
      %v8438 = vpop.f32.mrf.mxu0
      %v8439 = vadd.f32 0.0, %v8438
      %v8440 = vpop.f32.mrf.mxu0
      %8441 = vdwg.mxu0
      %v8442 = vadd.f32 %v8137, %v8324
      %v8443 = vadd.f32 %v8138, %v8329
      %v8444 = vadd.f32 %v8139, %v8334
      %v8445 = vadd.f32 %v8140, %v8339
      %v8446 = vadd.f32 %v8141, %v8344
      %v8447 = vadd.f32 %v8142, %v8349
      %v8448 = vadd.f32 %v8143, %v8354
      %v8449 = vadd.f32 %v8144, %v8359
      %v8450 = vadd.f32 %v8145, %v8364
      %v8451 = vadd.f32 %v8146, %v8369
      %v8452 = vadd.f32 %v8147, %v8374
      %v8453 = vadd.f32 %v8148, %v8379
      %v8454 = vadd.f32 %v8149, %v8384
      %v8455 = vadd.f32 %v8150, %v8389
      %v8456 = vadd.f32 %v8151, %v8394
      %v8457 = vadd.f32 %v8152, %v8399
      %v8458 = vadd.f32 %v8153, %v8404
      %v8459 = vadd.f32 %v8154, %v8409
      %v8460 = vadd.f32 %v8155, %v8414
      %v8461 = vadd.f32 %v8156, %v8419
      %v8462 = vadd.f32 %v8157, %v8424
      %v8463 = vadd.f32 %v8158, %v8429
      %v8464 = vadd.f32 %v8159, %v8434
      %v8465 = vadd.f32 %v8160, %v8439
      %v8466 = vld [vmem:[#allocation2 + $0x21] sm:$0xff]
      %v8467 = vld [vmem:[#allocation2 + $0x29] sm:$0xff]
      %v8468 = vld [vmem:[#allocation2 + $0x31] sm:$0xff]
      %v8469 = vld [vmem:[#allocation2 + $0x39] sm:$0xff]
      %v8470 = vld [vmem:[#allocation2 + $0x41] sm:$0xff]
      %v8471 = vld [vmem:[#allocation2 + $0x49] sm:$0xff]
      %v8472 = vld [vmem:[#allocation2 + $0x51] sm:$0xff]
      %v8473 = vld [vmem:[#allocation2 + $0x59] sm:$0xff]
      %v8474 = vld [vmem:[#allocation2 + $0x61] sm:$0xff]
      %v8475 = vld [vmem:[#allocation2 + $0x69] sm:$0xff]
      %v8476 = vld [vmem:[#allocation2 + $0x71] sm:$0xff]
      %v8477 = vld [vmem:[#allocation2 + $0x79] sm:$0xff]
      %v8478 = vld [vmem:[#allocation2 + $0x81] sm:$0xff]
      %v8479 = vld [vmem:[#allocation2 + $0x89] sm:$0xff]
      %v8480 = vld [vmem:[#allocation2 + $0x91] sm:$0xff]
      %v8481 = vld [vmem:[#allocation2 + $0x99] sm:$0xff]
      %v8482 = vld [vmem:[#allocation2 + $0xa1] sm:$0xff]
      %v8483 = vld [vmem:[#allocation2 + $0xa9] sm:$0xff]
      %v8484 = vld [vmem:[#allocation2 + $0xb1] sm:$0xff]
      %v8485 = vld [vmem:[#allocation2 + $0xb9] sm:$0xff]
      %v8486 = vld [vmem:[#allocation2 + $0xc1] sm:$0xff]
      %v8487 = vld [vmem:[#allocation2 + $0xc9] sm:$0xff]
      %v8488 = vld [vmem:[#allocation2 + $0xd1] sm:$0xff]
      %v8489 = vld [vmem:[#allocation2 + $0xd9] sm:$0xf]
      %v8491 = vsel %vm678, %v8466, 0
      %v8494 = vsel %vm678, %v8467, 0
      %v8497 = vsel %vm678, %v8468, 0
      %v8500 = vsel %vm678, %v8469, 0
      %v8503 = vsel %vm678, %v8470, 0
      %v8506 = vsel %vm678, %v8471, 0
      %v8509 = vsel %vm678, %v8472, 0
      %v8512 = vsel %vm678, %v8473, 0
      %v8515 = vsel %vm678, %v8474, 0
      %v8518 = vsel %vm678, %v8475, 0
      %v8521 = vsel %vm678, %v8476, 0
      %v8524 = vsel %vm678, %v8477, 0
      %v8527 = vsel %vm678, %v8478, 0
      %v8530 = vsel %vm678, %v8479, 0
      %v8533 = vsel %vm678, %v8480, 0
      %v8536 = vsel %vm678, %v8481, 0
      %v8539 = vsel %vm678, %v8482, 0
      %v8542 = vsel %vm678, %v8483, 0
      %v8545 = vsel %vm678, %v8484, 0
      %v8548 = vsel %vm678, %v8485, 0
      %v8551 = vsel %vm678, %v8486, 0
      %v8554 = vsel %vm678, %v8487, 0
      %v8557 = vsel %vm678, %v8488, 0
      %v8560 = vsel %vm678, %v8489, 0
      %8562 = vmatprep.subr.mxu0 0.0
      %8563 = vmatpush1.msra.mxu0 0.0
      %8564 = vmatprep.subr.mxu0 0.0
      %8565 = vmatpush1.msra.mxu0 0.0
      %8566 = vmatprep.subr.mxu0 0.0
      %8567 = vmatpush1.msra.mxu0 0.0
      %8568 = vmatprep.subr.mxu0 0.0
      %8569 = vmatpush1.msra.mxu0 0.0
      %8570 = vmatprep.subr.mxu0 0.0
      %8571 = vmatpush1.msra.mxu0 0.0
      %8572 = vmatprep.subr.mxu0 0.0
      %8573 = vmatpush1.msra.mxu0 0.0
      %8574 = vmatprep.subr.mxu0 0.0
      %8575 = vmatpush1.msra.mxu0 0.0
      %8576 = vmatprep.subr.mxu0 0.0
      %8577 = vmatpush1.msra.mxu0 0.0
      %8578 = vmatprep.subr.mxu0 0.0
      %8579 = vmatpush1.msra.mxu0 0.0
      %8580 = vmatprep.subr.mxu0 0.0
      %8581 = vmatpush1.msra.mxu0 0.0
      %8582 = vmatprep.subr.mxu0 0.0
      %8583 = vmatpush1.msra.mxu0 0.0
      %8584 = vmatprep.subr.mxu0 0.0
      %8585 = vmatpush1.msra.mxu0 0.0
      %8586 = vmatprep.subr.mxu0 0.0
      %8587 = vmatpush1.msra.mxu0 0.0
      %8588 = vmatprep.subr.mxu0 0.0
      %8589 = vmatpush1.msra.mxu0 0.0
      %8590 = vmatprep.subr.mxu0 0.0
      %8591 = vmatpush1.msra.mxu0 0.0
      %8592 = vmatprep.subr.mxu0 0.0
      %8593 = vmatpush1.msra.mxu0 %v324
      %8594 = vmatprep.subr.mxu0 0.0
      %8595 = vmatpush2.msra.mxu0 0.0
      %8596 = vmatprep.subr.mxu0 0.0
      %8597 = vmatpush2.msra.mxu0 0.0
      %8598 = vmatprep.subr.mxu0 0.0
      %8599 = vmatpush2.msra.mxu0 0.0
      %8600 = vmatprep.subr.mxu0 0.0
      %8601 = vmatpush2.msra.mxu0 0.0
      %8602 = vmatprep.subr.mxu0 0.0
      %8603 = vmatpush2.msra.mxu0 0.0
      %8604 = vmatprep.subr.mxu0 0.0
      %8605 = vmatpush2.msra.mxu0 0.0
      %8606 = vmatprep.subr.mxu0 0.0
      %8607 = vmatpush2.msra.mxu0 0.0
      %8608 = vmatprep.subr.mxu0 0.0
      %8609 = vmatpush2.msra.mxu0 0.0
      %8610 = vmatprep.subr.mxu0 0.0
      %8611 = vmatpush2.msra.mxu0 0.0
      %8612 = vmatprep.subr.mxu0 0.0
      %8613 = vmatpush2.msra.mxu0 0.0
      %8614 = vmatprep.subr.mxu0 0.0
      %8615 = vmatpush2.msra.mxu0 0.0
      %8616 = vmatprep.subr.mxu0 0.0
      %8617 = vmatpush2.msra.mxu0 0.0
      %8618 = vmatprep.subr.mxu0 0.0
      %8619 = vmatpush2.msra.mxu0 0.0
      %8620 = vmatprep.subr.mxu0 0.0
      %8621 = vmatpush2.msra.mxu0 0.0
      %8622 = vmatprep.subr.mxu0 0.0
      %8623 = vmatpush2.msra.mxu0 0.0
      %8624 = vmatprep.subr.mxu0 0.0
      %8625 = vmatpush2.msra.mxu0 0.0
      %8626 = vmatprep.mubr.f32.mxu0 0.0
      %8627 = vmatmul.mubr.f32.gmra.mxu0 %v8491
      %v8628 = vpop.f32.mrf.mxu0
      %v8629 = vadd.f32 0.0, %v8628
      %v8630 = vpop.f32.mrf.mxu0
      %8631 = vmatprep.mubr.f32.mxu0 0.0
      %8632 = vmatmul.mubr.f32.gmra.mxu0 %v8494
      %v8633 = vpop.f32.mrf.mxu0
      %v8634 = vadd.f32 0.0, %v8633
      %v8635 = vpop.f32.mrf.mxu0
      %8636 = vmatprep.mubr.f32.mxu0 0.0
      %8637 = vmatmul.mubr.f32.gmra.mxu0 %v8497
      %v8638 = vpop.f32.mrf.mxu0
      %v8639 = vadd.f32 0.0, %v8638
      %v8640 = vpop.f32.mrf.mxu0
      %8641 = vmatprep.mubr.f32.mxu0 0.0
      %8642 = vmatmul.mubr.f32.gmra.mxu0 %v8500
      %v8643 = vpop.f32.mrf.mxu0
      %v8644 = vadd.f32 0.0, %v8643
      %v8645 = vpop.f32.mrf.mxu0
      %8646 = vmatprep.mubr.f32.mxu0 0.0
      %8647 = vmatmul.mubr.f32.gmra.mxu0 %v8503
      %v8648 = vpop.f32.mrf.mxu0
      %v8649 = vadd.f32 0.0, %v8648
      %v8650 = vpop.f32.mrf.mxu0
      %8651 = vmatprep.mubr.f32.mxu0 0.0
      %8652 = vmatmul.mubr.f32.gmra.mxu0 %v8506
      %v8653 = vpop.f32.mrf.mxu0
      %v8654 = vadd.f32 0.0, %v8653
      %v8655 = vpop.f32.mrf.mxu0
      %8656 = vmatprep.mubr.f32.mxu0 0.0
      %8657 = vmatmul.mubr.f32.gmra.mxu0 %v8509
      %v8658 = vpop.f32.mrf.mxu0
      %v8659 = vadd.f32 0.0, %v8658
      %v8660 = vpop.f32.mrf.mxu0
      %8661 = vmatprep.mubr.f32.mxu0 0.0
      %8662 = vmatmul.mubr.f32.gmra.mxu0 %v8512
      %v8663 = vpop.f32.mrf.mxu0
      %v8664 = vadd.f32 0.0, %v8663
      %v8665 = vpop.f32.mrf.mxu0
      %8666 = vmatprep.mubr.f32.mxu0 0.0
      %8667 = vmatmul.mubr.f32.gmra.mxu0 %v8515
      %v8668 = vpop.f32.mrf.mxu0
      %v8669 = vadd.f32 0.0, %v8668
      %v8670 = vpop.f32.mrf.mxu0
      %8671 = vmatprep.mubr.f32.mxu0 0.0
      %8672 = vmatmul.mubr.f32.gmra.mxu0 %v8518
      %v8673 = vpop.f32.mrf.mxu0
      %v8674 = vadd.f32 0.0, %v8673
      %v8675 = vpop.f32.mrf.mxu0
      %8676 = vmatprep.mubr.f32.mxu0 0.0
      %8677 = vmatmul.mubr.f32.gmra.mxu0 %v8521
      %v8678 = vpop.f32.mrf.mxu0
      %v8679 = vadd.f32 0.0, %v8678
      %v8680 = vpop.f32.mrf.mxu0
      %8681 = vmatprep.mubr.f32.mxu0 0.0
      %8682 = vmatmul.mubr.f32.gmra.mxu0 %v8524
      %v8683 = vpop.f32.mrf.mxu0
      %v8684 = vadd.f32 0.0, %v8683
      %v8685 = vpop.f32.mrf.mxu0
      %8686 = vmatprep.mubr.f32.mxu0 0.0
      %8687 = vmatmul.mubr.f32.gmra.mxu0 %v8527
      %v8688 = vpop.f32.mrf.mxu0
      %v8689 = vadd.f32 0.0, %v8688
      %v8690 = vpop.f32.mrf.mxu0
      %8691 = vmatprep.mubr.f32.mxu0 0.0
      %8692 = vmatmul.mubr.f32.gmra.mxu0 %v8530
      %v8693 = vpop.f32.mrf.mxu0
      %v8694 = vadd.f32 0.0, %v8693
      %v8695 = vpop.f32.mrf.mxu0
      %8696 = vmatprep.mubr.f32.mxu0 0.0
      %8697 = vmatmul.mubr.f32.gmra.mxu0 %v8533
      %v8698 = vpop.f32.mrf.mxu0
      %v8699 = vadd.f32 0.0, %v8698
      %v8700 = vpop.f32.mrf.mxu0
      %8701 = vmatprep.mubr.f32.mxu0 0.0
      %8702 = vmatmul.mubr.f32.gmra.mxu0 %v8536
      %v8703 = vpop.f32.mrf.mxu0
      %v8704 = vadd.f32 0.0, %v8703
      %v8705 = vpop.f32.mrf.mxu0
      %8706 = vmatprep.mubr.f32.mxu0 0.0
      %8707 = vmatmul.mubr.f32.gmra.mxu0 %v8539
      %v8708 = vpop.f32.mrf.mxu0
      %v8709 = vadd.f32 0.0, %v8708
      %v8710 = vpop.f32.mrf.mxu0
      %8711 = vmatprep.mubr.f32.mxu0 0.0
      %8712 = vmatmul.mubr.f32.gmra.mxu0 %v8542
      %v8713 = vpop.f32.mrf.mxu0
      %v8714 = vadd.f32 0.0, %v8713
      %v8715 = vpop.f32.mrf.mxu0
      %8716 = vmatprep.mubr.f32.mxu0 0.0
      %8717 = vmatmul.mubr.f32.gmra.mxu0 %v8545
      %v8718 = vpop.f32.mrf.mxu0
      %v8719 = vadd.f32 0.0, %v8718
      %v8720 = vpop.f32.mrf.mxu0
      %8721 = vmatprep.mubr.f32.mxu0 0.0
      %8722 = vmatmul.mubr.f32.gmra.mxu0 %v8548
      %v8723 = vpop.f32.mrf.mxu0
      %v8724 = vadd.f32 0.0, %v8723
      %v8725 = vpop.f32.mrf.mxu0
      %8726 = vmatprep.mubr.f32.mxu0 0.0
      %8727 = vmatmul.mubr.f32.gmra.mxu0 %v8551
      %v8728 = vpop.f32.mrf.mxu0
      %v8729 = vadd.f32 0.0, %v8728
      %v8730 = vpop.f32.mrf.mxu0
      %8731 = vmatprep.mubr.f32.mxu0 0.0
      %8732 = vmatmul.mubr.f32.gmra.mxu0 %v8554
      %v8733 = vpop.f32.mrf.mxu0
      %v8734 = vadd.f32 0.0, %v8733
      %v8735 = vpop.f32.mrf.mxu0
      %8736 = vmatprep.mubr.f32.mxu0 0.0
      %8737 = vmatmul.mubr.f32.gmra.mxu0 %v8557
      %v8738 = vpop.f32.mrf.mxu0
      %v8739 = vadd.f32 0.0, %v8738
      %v8740 = vpop.f32.mrf.mxu0
      %8741 = vmatprep.mubr.f32.mxu0 0.0
      %8742 = vmatmul.mubr.f32.gmra.mxu0 %v8560
      %v8743 = vpop.f32.mrf.mxu0
      %v8744 = vadd.f32 0.0, %v8743
      %v8745 = vpop.f32.mrf.mxu0
      %8746 = vdwg.mxu0
      %v8747 = vadd.f32 %v8442, %v8629
      %v8748 = vadd.f32 %v8443, %v8634
      %v8749 = vadd.f32 %v8444, %v8639
      %v8750 = vadd.f32 %v8445, %v8644
      %v8751 = vadd.f32 %v8446, %v8649
      %v8752 = vadd.f32 %v8447, %v8654
      %v8753 = vadd.f32 %v8448, %v8659
      %v8754 = vadd.f32 %v8449, %v8664
      %v8755 = vadd.f32 %v8450, %v8669
      %v8756 = vadd.f32 %v8451, %v8674
      %v8757 = vadd.f32 %v8452, %v8679
      %v8758 = vadd.f32 %v8453, %v8684
      %v8759 = vadd.f32 %v8454, %v8689
      %v8760 = vadd.f32 %v8455, %v8694
      %v8761 = vadd.f32 %v8456, %v8699
      %v8762 = vadd.f32 %v8457, %v8704
      %v8763 = vadd.f32 %v8458, %v8709
      %v8764 = vadd.f32 %v8459, %v8714
      %v8765 = vadd.f32 %v8460, %v8719
      %v8766 = vadd.f32 %v8461, %v8724
      %v8767 = vadd.f32 %v8462, %v8729
      %v8768 = vadd.f32 %v8463, %v8734
      %v8769 = vadd.f32 %v8464, %v8739
      %v8770 = vadd.f32 %v8465, %v8744
      %v8771 = vld [vmem:[#allocation2 + $0x22] sm:$0xff]
      %v8772 = vld [vmem:[#allocation2 + $0x2a] sm:$0xff]
      %v8773 = vld [vmem:[#allocation2 + $0x32] sm:$0xff]
      %v8774 = vld [vmem:[#allocation2 + $0x3a] sm:$0xff]
      %v8775 = vld [vmem:[#allocation2 + $0x42] sm:$0xff]
      %v8776 = vld [vmem:[#allocation2 + $0x4a] sm:$0xff]
      %v8777 = vld [vmem:[#allocation2 + $0x52] sm:$0xff]
      %v8778 = vld [vmem:[#allocation2 + $0x5a] sm:$0xff]
      %v8779 = vld [vmem:[#allocation2 + $0x62] sm:$0xff]
      %v8780 = vld [vmem:[#allocation2 + $0x6a] sm:$0xff]
      %v8781 = vld [vmem:[#allocation2 + $0x72] sm:$0xff]
      %v8782 = vld [vmem:[#allocation2 + $0x7a] sm:$0xff]
      %v8783 = vld [vmem:[#allocation2 + $0x82] sm:$0xff]
      %v8784 = vld [vmem:[#allocation2 + $0x8a] sm:$0xff]
      %v8785 = vld [vmem:[#allocation2 + $0x92] sm:$0xff]
      %v8786 = vld [vmem:[#allocation2 + $0x9a] sm:$0xff]
      %v8787 = vld [vmem:[#allocation2 + $0xa2] sm:$0xff]
      %v8788 = vld [vmem:[#allocation2 + $0xaa] sm:$0xff]
      %v8789 = vld [vmem:[#allocation2 + $0xb2] sm:$0xff]
      %v8790 = vld [vmem:[#allocation2 + $0xba] sm:$0xff]
      %v8791 = vld [vmem:[#allocation2 + $0xc2] sm:$0xff]
      %v8792 = vld [vmem:[#allocation2 + $0xca] sm:$0xff]
      %v8793 = vld [vmem:[#allocation2 + $0xd2] sm:$0xff]
      %v8794 = vld [vmem:[#allocation2 + $0xda] sm:$0xf]
      %v8796 = vsel %vm678, %v8771, 0
      %v8799 = vsel %vm678, %v8772, 0
      %v8802 = vsel %vm678, %v8773, 0
      %v8805 = vsel %vm678, %v8774, 0
      %v8808 = vsel %vm678, %v8775, 0
      %v8811 = vsel %vm678, %v8776, 0
      %v8814 = vsel %vm678, %v8777, 0
      %v8817 = vsel %vm678, %v8778, 0
      %v8820 = vsel %vm678, %v8779, 0
      %v8823 = vsel %vm678, %v8780, 0
      %v8826 = vsel %vm678, %v8781, 0
      %v8829 = vsel %vm678, %v8782, 0
      %v8832 = vsel %vm678, %v8783, 0
      %v8835 = vsel %vm678, %v8784, 0
      %v8838 = vsel %vm678, %v8785, 0
      %v8841 = vsel %vm678, %v8786, 0
      %v8844 = vsel %vm678, %v8787, 0
      %v8847 = vsel %vm678, %v8788, 0
      %v8850 = vsel %vm678, %v8789, 0
      %v8853 = vsel %vm678, %v8790, 0
      %v8856 = vsel %vm678, %v8791, 0
      %v8859 = vsel %vm678, %v8792, 0
      %v8862 = vsel %vm678, %v8793, 0
      %v8865 = vsel %vm678, %v8794, 0
      %8867 = vmatprep.subr.mxu0 0.0
      %8868 = vmatpush1.msra.mxu0 0.0
      %8869 = vmatprep.subr.mxu0 0.0
      %8870 = vmatpush1.msra.mxu0 0.0
      %8871 = vmatprep.subr.mxu0 0.0
      %8872 = vmatpush1.msra.mxu0 0.0
      %8873 = vmatprep.subr.mxu0 0.0
      %8874 = vmatpush1.msra.mxu0 0.0
      %8875 = vmatprep.subr.mxu0 0.0
      %8876 = vmatpush1.msra.mxu0 0.0
      %8877 = vmatprep.subr.mxu0 0.0
      %8878 = vmatpush1.msra.mxu0 0.0
      %8879 = vmatprep.subr.mxu0 0.0
      %8880 = vmatpush1.msra.mxu0 0.0
      %8881 = vmatprep.subr.mxu0 0.0
      %8882 = vmatpush1.msra.mxu0 0.0
      %8883 = vmatprep.subr.mxu0 0.0
      %8884 = vmatpush1.msra.mxu0 0.0
      %8885 = vmatprep.subr.mxu0 0.0
      %8886 = vmatpush1.msra.mxu0 0.0
      %8887 = vmatprep.subr.mxu0 0.0
      %8888 = vmatpush1.msra.mxu0 0.0
      %8889 = vmatprep.subr.mxu0 0.0
      %8890 = vmatpush1.msra.mxu0 0.0
      %8891 = vmatprep.subr.mxu0 0.0
      %8892 = vmatpush1.msra.mxu0 0.0
      %8893 = vmatprep.subr.mxu0 0.0
      %8894 = vmatpush1.msra.mxu0 0.0
      %8895 = vmatprep.subr.mxu0 0.0
      %8896 = vmatpush1.msra.mxu0 0.0
      %8897 = vmatprep.subr.mxu0 0.0
      %8898 = vmatpush1.msra.mxu0 %v325
      %8899 = vmatprep.subr.mxu0 0.0
      %8900 = vmatpush2.msra.mxu0 0.0
      %8901 = vmatprep.subr.mxu0 0.0
      %8902 = vmatpush2.msra.mxu0 0.0
      %8903 = vmatprep.subr.mxu0 0.0
      %8904 = vmatpush2.msra.mxu0 0.0
      %8905 = vmatprep.subr.mxu0 0.0
      %8906 = vmatpush2.msra.mxu0 0.0
      %8907 = vmatprep.subr.mxu0 0.0
      %8908 = vmatpush2.msra.mxu0 0.0
      %8909 = vmatprep.subr.mxu0 0.0
      %8910 = vmatpush2.msra.mxu0 0.0
      %8911 = vmatprep.subr.mxu0 0.0
      %8912 = vmatpush2.msra.mxu0 0.0
      %8913 = vmatprep.subr.mxu0 0.0
      %8914 = vmatpush2.msra.mxu0 0.0
      %8915 = vmatprep.subr.mxu0 0.0
      %8916 = vmatpush2.msra.mxu0 0.0
      %8917 = vmatprep.subr.mxu0 0.0
      %8918 = vmatpush2.msra.mxu0 0.0
      %8919 = vmatprep.subr.mxu0 0.0
      %8920 = vmatpush2.msra.mxu0 0.0
      %8921 = vmatprep.subr.mxu0 0.0
      %8922 = vmatpush2.msra.mxu0 0.0
      %8923 = vmatprep.subr.mxu0 0.0
      %8924 = vmatpush2.msra.mxu0 0.0
      %8925 = vmatprep.subr.mxu0 0.0
      %8926 = vmatpush2.msra.mxu0 0.0
      %8927 = vmatprep.subr.mxu0 0.0
      %8928 = vmatpush2.msra.mxu0 0.0
      %8929 = vmatprep.subr.mxu0 0.0
      %8930 = vmatpush2.msra.mxu0 0.0
      %8931 = vmatprep.mubr.f32.mxu0 0.0
      %8932 = vmatmul.mubr.f32.gmra.mxu0 %v8796
      %v8933 = vpop.f32.mrf.mxu0
      %v8934 = vadd.f32 0.0, %v8933
      %v8935 = vpop.f32.mrf.mxu0
      %8936 = vmatprep.mubr.f32.mxu0 0.0
      %8937 = vmatmul.mubr.f32.gmra.mxu0 %v8799
      %v8938 = vpop.f32.mrf.mxu0
      %v8939 = vadd.f32 0.0, %v8938
      %v8940 = vpop.f32.mrf.mxu0
      %8941 = vmatprep.mubr.f32.mxu0 0.0
      %8942 = vmatmul.mubr.f32.gmra.mxu0 %v8802
      %v8943 = vpop.f32.mrf.mxu0
      %v8944 = vadd.f32 0.0, %v8943
      %v8945 = vpop.f32.mrf.mxu0
      %8946 = vmatprep.mubr.f32.mxu0 0.0
      %8947 = vmatmul.mubr.f32.gmra.mxu0 %v8805
      %v8948 = vpop.f32.mrf.mxu0
      %v8949 = vadd.f32 0.0, %v8948
      %v8950 = vpop.f32.mrf.mxu0
      %8951 = vmatprep.mubr.f32.mxu0 0.0
      %8952 = vmatmul.mubr.f32.gmra.mxu0 %v8808
      %v8953 = vpop.f32.mrf.mxu0
      %v8954 = vadd.f32 0.0, %v8953
      %v8955 = vpop.f32.mrf.mxu0
      %8956 = vmatprep.mubr.f32.mxu0 0.0
      %8957 = vmatmul.mubr.f32.gmra.mxu0 %v8811
      %v8958 = vpop.f32.mrf.mxu0
      %v8959 = vadd.f32 0.0, %v8958
      %v8960 = vpop.f32.mrf.mxu0
      %8961 = vmatprep.mubr.f32.mxu0 0.0
      %8962 = vmatmul.mubr.f32.gmra.mxu0 %v8814
      %v8963 = vpop.f32.mrf.mxu0
      %v8964 = vadd.f32 0.0, %v8963
      %v8965 = vpop.f32.mrf.mxu0
      %8966 = vmatprep.mubr.f32.mxu0 0.0
      %8967 = vmatmul.mubr.f32.gmra.mxu0 %v8817
      %v8968 = vpop.f32.mrf.mxu0
      %v8969 = vadd.f32 0.0, %v8968
      %v8970 = vpop.f32.mrf.mxu0
      %8971 = vmatprep.mubr.f32.mxu0 0.0
      %8972 = vmatmul.mubr.f32.gmra.mxu0 %v8820
      %v8973 = vpop.f32.mrf.mxu0
      %v8974 = vadd.f32 0.0, %v8973
      %v8975 = vpop.f32.mrf.mxu0
      %8976 = vmatprep.mubr.f32.mxu0 0.0
      %8977 = vmatmul.mubr.f32.gmra.mxu0 %v8823
      %v8978 = vpop.f32.mrf.mxu0
      %v8979 = vadd.f32 0.0, %v8978
      %v8980 = vpop.f32.mrf.mxu0
      %8981 = vmatprep.mubr.f32.mxu0 0.0
      %8982 = vmatmul.mubr.f32.gmra.mxu0 %v8826
      %v8983 = vpop.f32.mrf.mxu0
      %v8984 = vadd.f32 0.0, %v8983
      %v8985 = vpop.f32.mrf.mxu0
      %8986 = vmatprep.mubr.f32.mxu0 0.0
      %8987 = vmatmul.mubr.f32.gmra.mxu0 %v8829
      %v8988 = vpop.f32.mrf.mxu0
      %v8989 = vadd.f32 0.0, %v8988
      %v8990 = vpop.f32.mrf.mxu0
      %8991 = vmatprep.mubr.f32.mxu0 0.0
      %8992 = vmatmul.mubr.f32.gmra.mxu0 %v8832
      %v8993 = vpop.f32.mrf.mxu0
      %v8994 = vadd.f32 0.0, %v8993
      %v8995 = vpop.f32.mrf.mxu0
      %8996 = vmatprep.mubr.f32.mxu0 0.0
      %8997 = vmatmul.mubr.f32.gmra.mxu0 %v8835
      %v8998 = vpop.f32.mrf.mxu0
      %v8999 = vadd.f32 0.0, %v8998
      %v9000 = vpop.f32.mrf.mxu0
      %9001 = vmatprep.mubr.f32.mxu0 0.0
      %9002 = vmatmul.mubr.f32.gmra.mxu0 %v8838
      %v9003 = vpop.f32.mrf.mxu0
      %v9004 = vadd.f32 0.0, %v9003
      %v9005 = vpop.f32.mrf.mxu0
      %9006 = vmatprep.mubr.f32.mxu0 0.0
      %9007 = vmatmul.mubr.f32.gmra.mxu0 %v8841
      %v9008 = vpop.f32.mrf.mxu0
      %v9009 = vadd.f32 0.0, %v9008
      %v9010 = vpop.f32.mrf.mxu0
      %9011 = vmatprep.mubr.f32.mxu0 0.0
      %9012 = vmatmul.mubr.f32.gmra.mxu0 %v8844
      %v9013 = vpop.f32.mrf.mxu0
      %v9014 = vadd.f32 0.0, %v9013
      %v9015 = vpop.f32.mrf.mxu0
      %9016 = vmatprep.mubr.f32.mxu0 0.0
      %9017 = vmatmul.mubr.f32.gmra.mxu0 %v8847
      %v9018 = vpop.f32.mrf.mxu0
      %v9019 = vadd.f32 0.0, %v9018
      %v9020 = vpop.f32.mrf.mxu0
      %9021 = vmatprep.mubr.f32.mxu0 0.0
      %9022 = vmatmul.mubr.f32.gmra.mxu0 %v8850
      %v9023 = vpop.f32.mrf.mxu0
      %v9024 = vadd.f32 0.0, %v9023
      %v9025 = vpop.f32.mrf.mxu0
      %9026 = vmatprep.mubr.f32.mxu0 0.0
      %9027 = vmatmul.mubr.f32.gmra.mxu0 %v8853
      %v9028 = vpop.f32.mrf.mxu0
      %v9029 = vadd.f32 0.0, %v9028
      %v9030 = vpop.f32.mrf.mxu0
      %9031 = vmatprep.mubr.f32.mxu0 0.0
      %9032 = vmatmul.mubr.f32.gmra.mxu0 %v8856
      %v9033 = vpop.f32.mrf.mxu0
      %v9034 = vadd.f32 0.0, %v9033
      %v9035 = vpop.f32.mrf.mxu0
      %9036 = vmatprep.mubr.f32.mxu0 0.0
      %9037 = vmatmul.mubr.f32.gmra.mxu0 %v8859
      %v9038 = vpop.f32.mrf.mxu0
      %v9039 = vadd.f32 0.0, %v9038
      %v9040 = vpop.f32.mrf.mxu0
      %9041 = vmatprep.mubr.f32.mxu0 0.0
      %9042 = vmatmul.mubr.f32.gmra.mxu0 %v8862
      %v9043 = vpop.f32.mrf.mxu0
      %v9044 = vadd.f32 0.0, %v9043
      %v9045 = vpop.f32.mrf.mxu0
      %9046 = vmatprep.mubr.f32.mxu0 0.0
      %9047 = vmatmul.mubr.f32.gmra.mxu0 %v8865
      %v9048 = vpop.f32.mrf.mxu0
      %v9049 = vadd.f32 0.0, %v9048
      %v9050 = vpop.f32.mrf.mxu0
      %9051 = vdwg.mxu0
      %v9052 = vadd.f32 %v8747, %v8934
      %v9053 = vadd.f32 %v8748, %v8939
      %v9054 = vadd.f32 %v8749, %v8944
      %v9055 = vadd.f32 %v8750, %v8949
      %v9056 = vadd.f32 %v8751, %v8954
      %v9057 = vadd.f32 %v8752, %v8959
      %v9058 = vadd.f32 %v8753, %v8964
      %v9059 = vadd.f32 %v8754, %v8969
      %v9060 = vadd.f32 %v8755, %v8974
      %v9061 = vadd.f32 %v8756, %v8979
      %v9062 = vadd.f32 %v8757, %v8984
      %v9063 = vadd.f32 %v8758, %v8989
      %v9064 = vadd.f32 %v8759, %v8994
      %v9065 = vadd.f32 %v8760, %v8999
      %v9066 = vadd.f32 %v8761, %v9004
      %v9067 = vadd.f32 %v8762, %v9009
      %v9068 = vadd.f32 %v8763, %v9014
      %v9069 = vadd.f32 %v8764, %v9019
      %v9070 = vadd.f32 %v8765, %v9024
      %v9071 = vadd.f32 %v8766, %v9029
      %v9072 = vadd.f32 %v8767, %v9034
      %v9073 = vadd.f32 %v8768, %v9039
      %v9074 = vadd.f32 %v8769, %v9044
      %v9075 = vadd.f32 %v8770, %v9049
      %v9077 = vlaneseq
      %v9078 = vshrl.u32 %v9077, 7
      %v9079 = vsub.s32 0, %v9078
      %v9080 = vrot.slane %v327, %v9079
      %v9082 = vadd.f32 %v9052, %v9080
      %v9083 = vadd.f32 %v9053, %v9080
      %v9084 = vadd.f32 %v9054, %v9080
      %v9085 = vadd.f32 %v9055, %v9080
      %v9086 = vadd.f32 %v9056, %v9080
      %v9087 = vadd.f32 %v9057, %v9080
      %v9088 = vadd.f32 %v9058, %v9080
      %v9089 = vadd.f32 %v9059, %v9080
      %v9090 = vadd.f32 %v9060, %v9080
      %v9091 = vadd.f32 %v9061, %v9080
      %v9092 = vadd.f32 %v9062, %v9080
      %v9093 = vadd.f32 %v9063, %v9080
      %v9094 = vadd.f32 %v9064, %v9080
      %v9095 = vadd.f32 %v9065, %v9080
      %v9096 = vadd.f32 %v9066, %v9080
      %v9097 = vadd.f32 %v9067, %v9080
      %v9098 = vadd.f32 %v9068, %v9080
      %v9099 = vadd.f32 %v9069, %v9080
      %v9100 = vadd.f32 %v9070, %v9080
      %v9101 = vadd.f32 %v9071, %v9080
      %v9102 = vadd.f32 %v9072, %v9080
      %v9103 = vadd.f32 %v9073, %v9080
      %v9104 = vadd.f32 %v9074, %v9080
      %v9105 = vadd.f32 %v9075, %v9080
      %v9106 = vmax.f32 %v9082, 0.0
      %v9107 = vmax.f32 %v9083, 0.0
      %v9108 = vmax.f32 %v9084, 0.0
      %v9109 = vmax.f32 %v9085, 0.0
      %v9110 = vmax.f32 %v9086, 0.0
      %v9111 = vmax.f32 %v9087, 0.0
      %v9112 = vmax.f32 %v9088, 0.0
      %v9113 = vmax.f32 %v9089, 0.0
      %v9114 = vmax.f32 %v9090, 0.0
      %v9115 = vmax.f32 %v9091, 0.0
      %v9116 = vmax.f32 %v9092, 0.0
      %v9117 = vmax.f32 %v9093, 0.0
      %v9118 = vmax.f32 %v9094, 0.0
      %v9119 = vmax.f32 %v9095, 0.0
      %v9120 = vmax.f32 %v9096, 0.0
      %v9121 = vmax.f32 %v9097, 0.0
      %v9122 = vmax.f32 %v9098, 0.0
      %v9123 = vmax.f32 %v9099, 0.0
      %v9124 = vmax.f32 %v9100, 0.0
      %v9125 = vmax.f32 %v9101, 0.0
      %v9126 = vmax.f32 %v9102, 0.0
      %v9127 = vmax.f32 %v9103, 0.0
      %v9128 = vmax.f32 %v9104, 0.0
      %v9129 = vmax.f32 %v9105, 0.0
      %v9130 = vlaneseq
      %v9131 = vshrl.u32 %v9130, 7
      %v9132 = vadd.s32 %v9131, 8
      %v9133 = vadd.s32 %v9131, 16
      %v9134 = vadd.s32 %v9131, 24
      %v9135 = vadd.s32 %v9131, 32
      %v9136 = vadd.s32 %v9131, 40
      %v9137 = vadd.s32 %v9131, 48
      %v9138 = vadd.s32 %v9131, 56
      %v9139 = vadd.s32 %v9131, 64
      %v9140 = vadd.s32 %v9131, 72
      %v9141 = vadd.s32 %v9131, 80
      %v9142 = vadd.s32 %v9131, 88
      %v9143 = vadd.s32 %v9131, 96
      %v9144 = vadd.s32 %v9131, 104
      %v9145 = vadd.s32 %v9131, 112
      %v9146 = vadd.s32 %v9131, 120
      %v9147 = vadd.s32 %v9131, 128
      %v9148 = vadd.s32 %v9131, 136
      %v9149 = vadd.s32 %v9131, 144
      %v9150 = vadd.s32 %v9131, 152
      %v9151 = vadd.s32 %v9131, 160
      %v9152 = vadd.s32 %v9131, 168
      %v9153 = vadd.s32 %v9131, 176
      %v9154 = vadd.s32 %v9131, 184
      %vm9155 = vcmp.lt.s32.totalorder %v9131, 0
      %v9156 = vsub.s32 0, %v9131
      %v9157 = vsel %vm9155, %v9156, %v9131
      %v9158 = vshrl.u32 %v9157, 4
      %v9159 = vand.u32 %v9157, 15
      %v9160 = vsub.s32 0, %v9159
      %v9161 = vsel %vm9155, %v9160, %v9159
      %vm9162 = vcmp.lt.s32.totalorder %v9132, 0
      %v9163 = vsub.s32 0, %v9132
      %v9164 = vsel %vm9162, %v9163, %v9132
      %v9165 = vshrl.u32 %v9164, 4
      %v9166 = vand.u32 %v9164, 15
      %v9167 = vsub.s32 0, %v9166
      %v9168 = vsel %vm9162, %v9167, %v9166
      %vm9169 = vcmp.lt.s32.totalorder %v9133, 0
      %v9170 = vsub.s32 0, %v9133
      %v9171 = vsel %vm9169, %v9170, %v9133
      %v9172 = vshrl.u32 %v9171, 4
      %v9173 = vand.u32 %v9171, 15
      %v9174 = vsub.s32 0, %v9173
      %v9175 = vsel %vm9169, %v9174, %v9173
      %vm9176 = vcmp.lt.s32.totalorder %v9134, 0
      %v9177 = vsub.s32 0, %v9134
      %v9178 = vsel %vm9176, %v9177, %v9134
      %v9179 = vshrl.u32 %v9178, 4
      %v9180 = vand.u32 %v9178, 15
      %v9181 = vsub.s32 0, %v9180
      %v9182 = vsel %vm9176, %v9181, %v9180
      %vm9183 = vcmp.lt.s32.totalorder %v9135, 0
      %v9184 = vsub.s32 0, %v9135
      %v9185 = vsel %vm9183, %v9184, %v9135
      %v9186 = vshrl.u32 %v9185, 4
      %v9187 = vand.u32 %v9185, 15
      %v9188 = vsub.s32 0, %v9187
      %v9189 = vsel %vm9183, %v9188, %v9187
      %vm9190 = vcmp.lt.s32.totalorder %v9136, 0
      %v9191 = vsub.s32 0, %v9136
      %v9192 = vsel %vm9190, %v9191, %v9136
      %v9193 = vshrl.u32 %v9192, 4
      %v9194 = vand.u32 %v9192, 15
      %v9195 = vsub.s32 0, %v9194
      %v9196 = vsel %vm9190, %v9195, %v9194
      %vm9197 = vcmp.lt.s32.totalorder %v9137, 0
      %v9198 = vsub.s32 0, %v9137
      %v9199 = vsel %vm9197, %v9198, %v9137
      %v9200 = vshrl.u32 %v9199, 4
      %v9201 = vand.u32 %v9199, 15
      %v9202 = vsub.s32 0, %v9201
      %v9203 = vsel %vm9197, %v9202, %v9201
      %vm9204 = vcmp.lt.s32.totalorder %v9138, 0
      %v9205 = vsub.s32 0, %v9138
      %v9206 = vsel %vm9204, %v9205, %v9138
      %v9207 = vshrl.u32 %v9206, 4
      %v9208 = vand.u32 %v9206, 15
      %v9209 = vsub.s32 0, %v9208
      %v9210 = vsel %vm9204, %v9209, %v9208
      %vm9211 = vcmp.lt.s32.totalorder %v9139, 0
      %v9212 = vsub.s32 0, %v9139
      %v9213 = vsel %vm9211, %v9212, %v9139
      %v9214 = vshrl.u32 %v9213, 4
      %v9215 = vand.u32 %v9213, 15
      %v9216 = vsub.s32 0, %v9215
      %v9217 = vsel %vm9211, %v9216, %v9215
      %vm9218 = vcmp.lt.s32.totalorder %v9140, 0
      %v9219 = vsub.s32 0, %v9140
      %v9220 = vsel %vm9218, %v9219, %v9140
      %v9221 = vshrl.u32 %v9220, 4
      %v9222 = vand.u32 %v9220, 15
      %v9223 = vsub.s32 0, %v9222
      %v9224 = vsel %vm9218, %v9223, %v9222
      %vm9225 = vcmp.lt.s32.totalorder %v9141, 0
      %v9226 = vsub.s32 0, %v9141
      %v9227 = vsel %vm9225, %v9226, %v9141
      %v9228 = vshrl.u32 %v9227, 4
      %v9229 = vand.u32 %v9227, 15
      %v9230 = vsub.s32 0, %v9229
      %v9231 = vsel %vm9225, %v9230, %v9229
      %vm9232 = vcmp.lt.s32.totalorder %v9142, 0
      %v9233 = vsub.s32 0, %v9142
      %v9234 = vsel %vm9232, %v9233, %v9142
      %v9235 = vshrl.u32 %v9234, 4
      %v9236 = vand.u32 %v9234, 15
      %v9237 = vsub.s32 0, %v9236
      %v9238 = vsel %vm9232, %v9237, %v9236
      %vm9239 = vcmp.lt.s32.totalorder %v9143, 0
      %v9240 = vsub.s32 0, %v9143
      %v9241 = vsel %vm9239, %v9240, %v9143
      %v9242 = vshrl.u32 %v9241, 4
      %v9243 = vand.u32 %v9241, 15
      %v9244 = vsub.s32 0, %v9243
      %v9245 = vsel %vm9239, %v9244, %v9243
      %vm9246 = vcmp.lt.s32.totalorder %v9144, 0
      %v9247 = vsub.s32 0, %v9144
      %v9248 = vsel %vm9246, %v9247, %v9144
      %v9249 = vshrl.u32 %v9248, 4
      %v9250 = vand.u32 %v9248, 15
      %v9251 = vsub.s32 0, %v9250
      %v9252 = vsel %vm9246, %v9251, %v9250
      %vm9253 = vcmp.lt.s32.totalorder %v9145, 0
      %v9254 = vsub.s32 0, %v9145
      %v9255 = vsel %vm9253, %v9254, %v9145
      %v9256 = vshrl.u32 %v9255, 4
      %v9257 = vand.u32 %v9255, 15
      %v9258 = vsub.s32 0, %v9257
      %v9259 = vsel %vm9253, %v9258, %v9257
      %vm9260 = vcmp.lt.s32.totalorder %v9146, 0
      %v9261 = vsub.s32 0, %v9146
      %v9262 = vsel %vm9260, %v9261, %v9146
      %v9263 = vshrl.u32 %v9262, 4
      %v9264 = vand.u32 %v9262, 15
      %v9265 = vsub.s32 0, %v9264
      %v9266 = vsel %vm9260, %v9265, %v9264
      %vm9267 = vcmp.lt.s32.totalorder %v9147, 0
      %v9268 = vsub.s32 0, %v9147
      %v9269 = vsel %vm9267, %v9268, %v9147
      %v9270 = vshrl.u32 %v9269, 4
      %v9271 = vand.u32 %v9269, 15
      %v9272 = vsub.s32 0, %v9271
      %v9273 = vsel %vm9267, %v9272, %v9271
      %vm9274 = vcmp.lt.s32.totalorder %v9148, 0
      %v9275 = vsub.s32 0, %v9148
      %v9276 = vsel %vm9274, %v9275, %v9148
      %v9277 = vshrl.u32 %v9276, 4
      %v9278 = vand.u32 %v9276, 15
      %v9279 = vsub.s32 0, %v9278
      %v9280 = vsel %vm9274, %v9279, %v9278
      %vm9281 = vcmp.lt.s32.totalorder %v9149, 0
      %v9282 = vsub.s32 0, %v9149
      %v9283 = vsel %vm9281, %v9282, %v9149
      %v9284 = vshrl.u32 %v9283, 4
      %v9285 = vand.u32 %v9283, 15
      %v9286 = vsub.s32 0, %v9285
      %v9287 = vsel %vm9281, %v9286, %v9285
      %vm9288 = vcmp.lt.s32.totalorder %v9150, 0
      %v9289 = vsub.s32 0, %v9150
      %v9290 = vsel %vm9288, %v9289, %v9150
      %v9291 = vshrl.u32 %v9290, 4
      %v9292 = vand.u32 %v9290, 15
      %v9293 = vsub.s32 0, %v9292
      %v9294 = vsel %vm9288, %v9293, %v9292
      %vm9295 = vcmp.lt.s32.totalorder %v9151, 0
      %v9296 = vsub.s32 0, %v9151
      %v9297 = vsel %vm9295, %v9296, %v9151
      %v9298 = vshrl.u32 %v9297, 4
      %v9299 = vand.u32 %v9297, 15
      %v9300 = vsub.s32 0, %v9299
      %v9301 = vsel %vm9295, %v9300, %v9299
      %vm9302 = vcmp.lt.s32.totalorder %v9152, 0
      %v9303 = vsub.s32 0, %v9152
      %v9304 = vsel %vm9302, %v9303, %v9152
      %v9305 = vshrl.u32 %v9304, 4
      %v9306 = vand.u32 %v9304, 15
      %v9307 = vsub.s32 0, %v9306
      %v9308 = vsel %vm9302, %v9307, %v9306
      %vm9309 = vcmp.lt.s32.totalorder %v9153, 0
      %v9310 = vsub.s32 0, %v9153
      %v9311 = vsel %vm9309, %v9310, %v9153
      %v9312 = vshrl.u32 %v9311, 4
      %v9313 = vand.u32 %v9311, 15
      %v9314 = vsub.s32 0, %v9313
      %v9315 = vsel %vm9309, %v9314, %v9313
      %vm9316 = vcmp.lt.s32.totalorder %v9154, 0
      %v9317 = vsub.s32 0, %v9154
      %v9318 = vsel %vm9316, %v9317, %v9154
      %v9319 = vshrl.u32 %v9318, 4
      %v9320 = vand.u32 %v9318, 15
      %v9321 = vsub.s32 0, %v9320
      %v9322 = vsel %vm9316, %v9321, %v9320
      %vm9323 = vcmp.ne.s32.totalorder %v9161, 0
      %vm9324 = vcmp.ne.s32.totalorder %v9168, 0
      %vm9325 = vcmp.ne.s32.totalorder %v9175, 0
      %vm9326 = vcmp.ne.s32.totalorder %v9182, 0
      %vm9327 = vcmp.ne.s32.totalorder %v9189, 0
      %vm9328 = vcmp.ne.s32.totalorder %v9196, 0
      %vm9329 = vcmp.ne.s32.totalorder %v9203, 0
      %vm9330 = vcmp.ne.s32.totalorder %v9210, 0
      %vm9331 = vcmp.ne.s32.totalorder %v9217, 0
      %vm9332 = vcmp.ne.s32.totalorder %v9224, 0
      %vm9333 = vcmp.ne.s32.totalorder %v9231, 0
      %vm9334 = vcmp.ne.s32.totalorder %v9238, 0
      %vm9335 = vcmp.ne.s32.totalorder %v9245, 0
      %vm9336 = vcmp.ne.s32.totalorder %v9252, 0
      %vm9337 = vcmp.ne.s32.totalorder %v9259, 0
      %vm9338 = vcmp.ne.s32.totalorder %v9266, 0
      %vm9339 = vcmp.ne.s32.totalorder %v9273, 0
      %vm9340 = vcmp.ne.s32.totalorder %v9280, 0
      %vm9341 = vcmp.ne.s32.totalorder %v9287, 0
      %vm9342 = vcmp.ne.s32.totalorder %v9294, 0
      %vm9343 = vcmp.ne.s32.totalorder %v9301, 0
      %vm9344 = vcmp.ne.s32.totalorder %v9308, 0
      %vm9345 = vcmp.ne.s32.totalorder %v9315, 0
      %vm9346 = vcmp.ne.s32.totalorder %v9322, 0
      %vm9347 = vcmp.lt.s32.totalorder %v9161, 0
      %vm9348 = vcmp.lt.s32.totalorder %v9168, 0
      %vm9349 = vcmp.lt.s32.totalorder %v9175, 0
      %vm9350 = vcmp.lt.s32.totalorder %v9182, 0
      %vm9351 = vcmp.lt.s32.totalorder %v9189, 0
      %vm9352 = vcmp.lt.s32.totalorder %v9196, 0
      %vm9353 = vcmp.lt.s32.totalorder %v9203, 0
      %vm9354 = vcmp.lt.s32.totalorder %v9210, 0
      %vm9355 = vcmp.lt.s32.totalorder %v9217, 0
      %vm9356 = vcmp.lt.s32.totalorder %v9224, 0
      %vm9357 = vcmp.lt.s32.totalorder %v9231, 0
      %vm9358 = vcmp.lt.s32.totalorder %v9238, 0
      %vm9359 = vcmp.lt.s32.totalorder %v9245, 0
      %vm9360 = vcmp.lt.s32.totalorder %v9252, 0
      %vm9361 = vcmp.lt.s32.totalorder %v9259, 0
      %vm9362 = vcmp.lt.s32.totalorder %v9266, 0
      %vm9363 = vcmp.lt.s32.totalorder %v9273, 0
      %vm9364 = vcmp.lt.s32.totalorder %v9280, 0
      %vm9365 = vcmp.lt.s32.totalorder %v9287, 0
      %vm9366 = vcmp.lt.s32.totalorder %v9294, 0
      %vm9367 = vcmp.lt.s32.totalorder %v9301, 0
      %vm9368 = vcmp.lt.s32.totalorder %v9308, 0
      %vm9369 = vcmp.lt.s32.totalorder %v9315, 0
      %vm9370 = vcmp.lt.s32.totalorder %v9322, 0
      %vm9371 = vmand %vm9347, %vm9323
      %vm9372 = vmand %vm9348, %vm9324
      %vm9373 = vmand %vm9349, %vm9325
      %vm9374 = vmand %vm9350, %vm9326
      %vm9375 = vmand %vm9351, %vm9327
      %vm9376 = vmand %vm9352, %vm9328
      %vm9377 = vmand %vm9353, %vm9329
      %vm9378 = vmand %vm9354, %vm9330
      %vm9379 = vmand %vm9355, %vm9331
      %vm9380 = vmand %vm9356, %vm9332
      %vm9381 = vmand %vm9357, %vm9333
      %vm9382 = vmand %vm9358, %vm9334
      %vm9383 = vmand %vm9359, %vm9335
      %vm9384 = vmand %vm9360, %vm9336
      %vm9385 = vmand %vm9361, %vm9337
      %vm9386 = vmand %vm9362, %vm9338
      %vm9387 = vmand %vm9363, %vm9339
      %vm9388 = vmand %vm9364, %vm9340
      %vm9389 = vmand %vm9365, %vm9341
      %vm9390 = vmand %vm9366, %vm9342
      %vm9391 = vmand %vm9367, %vm9343
      %vm9392 = vmand %vm9368, %vm9344
      %vm9393 = vmand %vm9369, %vm9345
      %vm9394 = vmand %vm9370, %vm9346
      %v9395 = vadd.s32 %v9161, 16
      %v9396 = vadd.s32 %v9168, 16
      %v9397 = vadd.s32 %v9175, 16
      %v9398 = vadd.s32 %v9182, 16
      %v9399 = vadd.s32 %v9189, 16
      %v9400 = vadd.s32 %v9196, 16
      %v9401 = vadd.s32 %v9203, 16
      %v9402 = vadd.s32 %v9210, 16
      %v9403 = vadd.s32 %v9217, 16
      %v9404 = vadd.s32 %v9224, 16
      %v9405 = vadd.s32 %v9231, 16
      %v9406 = vadd.s32 %v9238, 16
      %v9407 = vadd.s32 %v9245, 16
      %v9408 = vadd.s32 %v9252, 16
      %v9409 = vadd.s32 %v9259, 16
      %v9410 = vadd.s32 %v9266, 16
      %v9411 = vadd.s32 %v9273, 16
      %v9412 = vadd.s32 %v9280, 16
      %v9413 = vadd.s32 %v9287, 16
      %v9414 = vadd.s32 %v9294, 16
      %v9415 = vadd.s32 %v9301, 16
      %v9416 = vadd.s32 %v9308, 16
      %v9417 = vadd.s32 %v9315, 16
      %v9418 = vadd.s32 %v9322, 16
      %v9419 = vsel %vm9371, %v9395, %v9161
      %v9420 = vsel %vm9372, %v9396, %v9168
      %v9421 = vsel %vm9373, %v9397, %v9175
      %v9422 = vsel %vm9374, %v9398, %v9182
      %v9423 = vsel %vm9375, %v9399, %v9189
      %v9424 = vsel %vm9376, %v9400, %v9196
      %v9425 = vsel %vm9377, %v9401, %v9203
      %v9426 = vsel %vm9378, %v9402, %v9210
      %v9427 = vsel %vm9379, %v9403, %v9217
      %v9428 = vsel %vm9380, %v9404, %v9224
      %v9429 = vsel %vm9381, %v9405, %v9231
      %v9430 = vsel %vm9382, %v9406, %v9238
      %v9431 = vsel %vm9383, %v9407, %v9245
      %v9432 = vsel %vm9384, %v9408, %v9252
      %v9433 = vsel %vm9385, %v9409, %v9259
      %v9434 = vsel %vm9386, %v9410, %v9266
      %v9435 = vsel %vm9387, %v9411, %v9273
      %v9436 = vsel %vm9388, %v9412, %v9280
      %v9437 = vsel %vm9389, %v9413, %v9287
      %v9438 = vsel %vm9390, %v9414, %v9294
      %v9439 = vsel %vm9391, %v9415, %v9301
      %v9440 = vsel %vm9392, %v9416, %v9308
      %v9441 = vsel %vm9393, %v9417, %v9315
      %v9442 = vsel %vm9394, %v9418, %v9322
      %vm9443 = vcmp.lt.s32.totalorder %v9419, 12
      %vm9444 = vcmp.lt.s32.totalorder %v9420, 12
      %vm9445 = vcmp.lt.s32.totalorder %v9421, 12
      %vm9446 = vcmp.lt.s32.totalorder %v9422, 12
      %vm9447 = vcmp.lt.s32.totalorder %v9423, 12
      %vm9448 = vcmp.lt.s32.totalorder %v9424, 12
      %vm9449 = vcmp.lt.s32.totalorder %v9425, 12
      %vm9450 = vcmp.lt.s32.totalorder %v9426, 12
      %vm9451 = vcmp.lt.s32.totalorder %v9427, 12
      %vm9452 = vcmp.lt.s32.totalorder %v9428, 12
      %vm9453 = vcmp.lt.s32.totalorder %v9429, 12
      %vm9454 = vcmp.lt.s32.totalorder %v9430, 12
      %vm9455 = vcmp.lt.s32.totalorder %v9431, 12
      %vm9456 = vcmp.lt.s32.totalorder %v9432, 12
      %vm9457 = vcmp.lt.s32.totalorder %v9433, 12
      %vm9458 = vcmp.lt.s32.totalorder %v9434, 12
      %vm9459 = vcmp.lt.s32.totalorder %v9435, 12
      %vm9460 = vcmp.lt.s32.totalorder %v9436, 12
      %vm9461 = vcmp.lt.s32.totalorder %v9437, 12
      %vm9462 = vcmp.lt.s32.totalorder %v9438, 12
      %vm9463 = vcmp.lt.s32.totalorder %v9439, 12
      %vm9464 = vcmp.lt.s32.totalorder %v9440, 12
      %vm9465 = vcmp.lt.s32.totalorder %v9441, 12
      %vm9466 = vcmp.lt.s32.totalorder %v9442, 12
      %v9467 = vsel %vm9443, 1, 0
      %v9468 = vsel %vm9444, 1, 0
      %v9469 = vsel %vm9445, 1, 0
      %v9470 = vsel %vm9446, 1, 0
      %v9471 = vsel %vm9447, 1, 0
      %v9472 = vsel %vm9448, 1, 0
      %v9473 = vsel %vm9449, 1, 0
      %v9474 = vsel %vm9450, 1, 0
      %v9475 = vsel %vm9451, 1, 0
      %v9476 = vsel %vm9452, 1, 0
      %v9477 = vsel %vm9453, 1, 0
      %v9478 = vsel %vm9454, 1, 0
      %v9479 = vsel %vm9455, 1, 0
      %v9480 = vsel %vm9456, 1, 0
      %v9481 = vsel %vm9457, 1, 0
      %v9482 = vsel %vm9458, 1, 0
      %v9483 = vsel %vm9459, 1, 0
      %v9484 = vsel %vm9460, 1, 0
      %v9485 = vsel %vm9461, 1, 0
      %v9486 = vsel %vm9462, 1, 0
      %v9487 = vsel %vm9463, 1, 0
      %v9488 = vsel %vm9464, 1, 0
      %v9489 = vsel %vm9465, 1, 0
      %v9490 = vsel %vm9466, 1, 0
      %vm9491 = vcmp.eq.s32.totalorder %v9467, 1
      %vm9492 = vcmp.eq.s32.totalorder %v9468, 1
      %vm9493 = vcmp.eq.s32.totalorder %v9469, 1
      %vm9494 = vcmp.eq.s32.totalorder %v9470, 1
      %vm9495 = vcmp.eq.s32.totalorder %v9471, 1
      %vm9496 = vcmp.eq.s32.totalorder %v9472, 1
      %vm9497 = vcmp.eq.s32.totalorder %v9473, 1
      %vm9498 = vcmp.eq.s32.totalorder %v9474, 1
      %vm9499 = vcmp.eq.s32.totalorder %v9475, 1
      %vm9500 = vcmp.eq.s32.totalorder %v9476, 1
      %vm9501 = vcmp.eq.s32.totalorder %v9477, 1
      %vm9502 = vcmp.eq.s32.totalorder %v9478, 1
      %vm9503 = vcmp.eq.s32.totalorder %v9479, 1
      %vm9504 = vcmp.eq.s32.totalorder %v9480, 1
      %vm9505 = vcmp.eq.s32.totalorder %v9481, 1
      %vm9506 = vcmp.eq.s32.totalorder %v9482, 1
      %vm9507 = vcmp.eq.s32.totalorder %v9483, 1
      %vm9508 = vcmp.eq.s32.totalorder %v9484, 1
      %vm9509 = vcmp.eq.s32.totalorder %v9485, 1
      %vm9510 = vcmp.eq.s32.totalorder %v9486, 1
      %vm9511 = vcmp.eq.s32.totalorder %v9487, 1
      %vm9512 = vcmp.eq.s32.totalorder %v9488, 1
      %vm9513 = vcmp.eq.s32.totalorder %v9489, 1
      %vm9514 = vcmp.eq.s32.totalorder %v9490, 1
      %v9515 = vsel %vm9491, %v9106, 0.0
      %v9516 = vsel %vm9492, %v9107, 0.0
      %v9517 = vsel %vm9493, %v9108, 0.0
      %v9518 = vsel %vm9494, %v9109, 0.0
      %v9519 = vsel %vm9495, %v9110, 0.0
      %v9520 = vsel %vm9496, %v9111, 0.0
      %v9521 = vsel %vm9497, %v9112, 0.0
      %v9522 = vsel %vm9498, %v9113, 0.0
      %v9523 = vsel %vm9499, %v9114, 0.0
      %v9524 = vsel %vm9500, %v9115, 0.0
      %v9525 = vsel %vm9501, %v9116, 0.0
      %v9526 = vsel %vm9502, %v9117, 0.0
      %v9527 = vsel %vm9503, %v9118, 0.0
      %v9528 = vsel %vm9504, %v9119, 0.0
      %v9529 = vsel %vm9505, %v9120, 0.0
      %v9530 = vsel %vm9506, %v9121, 0.0
      %v9531 = vsel %vm9507, %v9122, 0.0
      %v9532 = vsel %vm9508, %v9123, 0.0
      %v9533 = vsel %vm9509, %v9124, 0.0
      %v9534 = vsel %vm9510, %v9125, 0.0
      %v9535 = vsel %vm9511, %v9126, 0.0
      %v9536 = vsel %vm9512, %v9127, 0.0
      %v9537 = vsel %vm9513, %v9128, 0.0
      %v9538 = vsel %vm9514, %v9129, 0.0
      %9539 = vst.msk [vmem:[%s298] sm:$0xff] %vm678, 0.0
      %9540 = vst.msk [vmem:[%s298 + $0x8] sm:$0xff] %vm678, 0.0
      %9541 = vst.msk [vmem:[%s298 + $0x10] sm:$0xff] %vm678, 0.0
      %9542 = vst.msk [vmem:[%s298 + $0x18] sm:$0xff] %vm678, 0.0
      %vm9543 = vcmask 58368
      %9544 = vst.msk [vmem:[%s298 + $0x20] sm:$0x3] %vm9543, 0.0
      %9545 = vst.msk [vmem:[%s298 + $0x22] sm:$0xff] %vm678, %v9515
      %9546 = vst.msk [vmem:[%s298 + $0x2a] sm:$0xff] %vm678, %v9516
      %9547 = vst.msk [vmem:[%s298 + $0x32] sm:$0xff] %vm678, %v9517
      %9548 = vst.msk [vmem:[%s298 + $0x3a] sm:$0xff] %vm678, %v9518
      %9549 = vst.msk [vmem:[%s298 + $0x42] sm:$0xff] %vm678, %v9519
      %9550 = vst.msk [vmem:[%s298 + $0x4a] sm:$0xff] %vm678, %v9520
      %9551 = vst.msk [vmem:[%s298 + $0x52] sm:$0xff] %vm678, %v9521
      %9552 = vst.msk [vmem:[%s298 + $0x5a] sm:$0xff] %vm678, %v9522
      %9553 = vst.msk [vmem:[%s298 + $0x62] sm:$0xff] %vm678, %v9523
      %9554 = vst.msk [vmem:[%s298 + $0x6a] sm:$0xff] %vm678, %v9524
      %9555 = vst.msk [vmem:[%s298 + $0x72] sm:$0xff] %vm678, %v9525
      %9556 = vst.msk [vmem:[%s298 + $0x7a] sm:$0xff] %vm678, %v9526
      %9557 = vst.msk [vmem:[%s298 + $0x82] sm:$0xff] %vm678, %v9527
      %9558 = vst.msk [vmem:[%s298 + $0x8a] sm:$0xff] %vm678, %v9528
      %9559 = vst.msk [vmem:[%s298 + $0x92] sm:$0xff] %vm678, %v9529
      %9560 = vst.msk [vmem:[%s298 + $0x9a] sm:$0xff] %vm678, %v9530
      %9561 = vst.msk [vmem:[%s298 + $0xa2] sm:$0xff] %vm678, %v9531
      %9562 = vst.msk [vmem:[%s298 + $0xaa] sm:$0xff] %vm678, %v9532
      %9563 = vst.msk [vmem:[%s298 + $0xb2] sm:$0xff] %vm678, %v9533
      %9564 = vst.msk [vmem:[%s298 + $0xba] sm:$0xff] %vm678, %v9534
      %9565 = vst.msk [vmem:[%s298 + $0xc2] sm:$0xff] %vm678, %v9535
      %9566 = vst.msk [vmem:[%s298 + $0xca] sm:$0xff] %vm678, %v9536
      %9567 = vst.msk [vmem:[%s298 + $0xd2] sm:$0xff] %vm678, %v9537
      %vm9568 = vcmask 60416
      %9569 = vst.msk [vmem:[%s298 + $0xda] sm:$0xf] %vm9568, %v9538
      %9570 = vst.msk [vmem:[%s298 + $0xde] sm:$0xff] %vm678, 0.0
      %9571 = vst.msk [vmem:[%s298 + $0xe6] sm:$0xff] %vm678, 0.0
      %9572 = vst.msk [vmem:[%s298 + $0xee] sm:$0xff] %vm678, 0.0
      %9573 = vst.msk [vmem:[%s298 + $0xf6] sm:$0xff] %vm678, 0.0
      %9574 = vst.msk [vmem:[%s298 + $0xfe] sm:$0x3] %vm9543, 0.0
      %p9575 = scmp.lt.s32.totalorder %s18, 1
      %s9576 = scalar_select %p9575, %s18, 1
      %s9577 = smul.addr %s9576, 32
      %s9578 = smul.addr %s9577, 8
      %s9579 = scalar_lea.vmem %s7, %s9578
      // Predicated region
      $region49: #{tpu_custom_call.1} parent=47 // pred_check
        %p9580 = pneg %p193
      $region50: #{tpu_custom_call.1} parent=47 // pred_check_branch
        %9582 = sbr.rel (%p9580) target = $region52
      $region51: #{tpu_custom_call.1} parent=47 // pred_region
        _
      $region52: #{tpu_custom_call.1} parent=47 // pred_fallthru
        _
    $region48: #{tpu_custom_call.1} parent=5 // pred_fallthru
      _
    %p9583 = scmp.le.s32.totalorder 2, %s13
    // Predicated region
    $region53: #{tpu_custom_call.1} parent=5 // pred_check
      %p9584 = pneg %p9583
    $region54: #{tpu_custom_call.1} parent=5 // pred_check_branch
      %9586 = sbr.rel (%p9584) target = $region56
    $region55: #{tpu_custom_call.1} parent=5 // pred_region
      %s9587 = ssub.s32 %s13, 2
      // Predicated region
      $region57: #{tpu_custom_call.1} parent=55 // pred_check
        %p9588 = pneg %p199
      $region58: #{tpu_custom_call.1} parent=55 // pred_check_branch
        %9590 = sbr.rel (%p9588) target = $region60
      $region59: #{tpu_custom_call.1} parent=55 // pred_region
        %p9591 = scmp.lt.s32.totalorder %s19, 1
        %s9592 = scalar_select %p9591, %s19, 1
        %s9593 = smul.addr %s9592, 32
        %s9594 = smul.addr %s9593, 8
        %s9595 = scalar_lea.vmem %s7, %s9594
      $region60: #{tpu_custom_call.1} parent=55 // pred_fallthru
        _
    $region56: #{tpu_custom_call.1} parent=5 // pred_fallthru
      _
  $region6: #{tpu_custom_call.1} parent=0 // loop_footer
    %s17 = sadd.s32 1, %s13
  $region7: #{tpu_custom_call.1} parent=0 // loop_footer_branch
    %12 = sbr.rel target = $region3
  $region8: #{tpu_custom_call.1} parent=0 // loop_exit
    _

</llo_original>
